<compile_context>
chip_gen: v6e
topology: v6e:2x2x1
jax: 0.10.0
libtpu: 0.0.40
codegen_flags: <defaults>
</compile_context>

<pallas_src>
import functools

import jax
import jax.numpy as jnp
from jax.experimental import pallas as pl
from jax.experimental.pallas import tpu as pltpu

NEG_INF = -1e30


# ----------------------------- fused kernel ----------------------------------


def _gat_layer(h, mask_ref, w_ref, wsc_ref, b_ref, e_ref, et_ref, *, heads, d_out):
    """One GATConv (concat=False -> head mean + bias) + ReLU.  h: [N, Din] f32."""
    f32, bf16 = jnp.float32, jnp.bfloat16
    n = h.shape[0]
    h_b = h.astype(bf16)

    # Attention scores from the host-folded weights: [N, 2H] = [s_dst | s_src].
    scores = jnp.dot(h_b, wsc_ref[...], preferred_element_type=f32)      # [N, 2H]
    s_dst = scores[:, :heads]                                            # [N, H]
    s_src = scores[:, heads:2 * heads]                                   # [N, H]

    if heads > 1:
        # dst scores expanded to the head-blocked lane layout on the MXU
        # (0/1 f32 E matrix -> exact replication, no lane-broadcast relayouts).
        dst_part = jnp.dot(s_dst, e_ref[...],
                           preferred_element_type=f32)                   # [N, H*N]
        # src scores: one tiny [N,H]->[H,N] transpose, rows lane-concatenated.
        s_src_t = jnp.transpose(s_src)                                   # [H, N]
        src_row = jnp.concatenate(
            [s_src_t[hh:hh + 1, :] for hh in range(heads)], axis=1)      # [1, H*N]
    else:
        dst_part = s_dst                                                 # [N, 1]
        src_row = jnp.transpose(s_src)                                   # [1, N]

    # ONE LeakyReLU + mask-add + exp over all heads (full 128-lane occupancy).
    logits = dst_part + src_row                                          # [N, H*N]
    logits = jnp.where(logits > 0, logits, f32(0.2) * logits)            # LeakyReLU
    logits = logits + mask_ref[...]                                      # additive mask (bf16 -> f32)

    # Single per-row max across all heads: per-head softmax is invariant to a
    # per-row constant shift, so this is exact math-wise; stability holds as
    # long as cross-head logit ranges stay < ~80 (true for trained-scale nets).
    m = jnp.max(logits, axis=-1, keepdims=True)                          # [N, 1]
    p = jnp.exp(logits - m)                                              # [N, H*N]
    p_b = p.astype(bf16)

    if heads > 1:
        # Row sums per head on the MXU (block-diagonal ones matrix).
        denom = jnp.dot(p_b, et_ref[...], preferred_element_type=f32)    # [N, H]
        recip = pl.reciprocal(denom * f32(heads), approx=True)           # [N, H]
        recip_exp = jnp.dot(recip, e_ref[...],
                            preferred_element_type=f32)                  # [N, H*N]
    else:
        denom = jnp.sum(p, axis=-1, keepdims=True)                       # [N, 1]
        recip_exp = pl.reciprocal(denom * f32(heads), approx=True)       # [N, 1]

    p_norm = (p * recip_exp).astype(bf16)                                # [N, H*N]

    # Block-stacked per-head values: H K=Din matmuls concatenated along
    # sublanes, then ONE K=H*N attention*value matmul that also sums over heads
    # (the 1/heads factor is already folded into recip).
    v_stack = jnp.concatenate(
        [jnp.dot(h_b, w_ref[:, hh * d_out:(hh + 1) * d_out],
                 preferred_element_type=f32).astype(bf16)
         for hh in range(heads)], axis=0)                                # [H*N, Do]
    out = jnp.dot(p_norm, v_stack, preferred_element_type=f32)           # [N, Do]
    return jnp.maximum(out + b_ref[...], 0.0)                            # bias + ReLU


def _gatnet2_kernel(*refs, layer_cfg, mask_slot, e_slot, n_per_graph, n_graphs):
    """Whole GATNet2 forward for one graph batch (everything resident in VMEM)."""
    f32, bf16 = jnp.float32, jnp.bfloat16

    idx = 0
    x_ref = refs[idx]; idx += 1
    mask_refs = refs[idx:idx + len(mask_slot)]; idx += len(mask_slot)
    e_refs = refs[idx:idx + 2 * len(e_slot)]; idx += 2 * len(e_slot)
    emb_w_ref, emb_b_ref = refs[idx], refs[idx + 1]; idx += 2
    gat_refs = refs[idx:idx + 3 * len(layer_cfg)]; idx += 3 * len(layer_cfg)
    ro_w_ref = refs[idx]; idx += 1
    o_ref = refs[idx]

    # embedding_h: Linear(in_dim, in_dim)
    h = (jnp.dot(x_ref[...], emb_w_ref[...], preferred_element_type=f32)
         + emb_b_ref[...])                                               # [N, Din]

    # GAT stack (has_bn=False, residual=False, concat=False -> head average),
    # each layer followed by ReLU (GATNet2.forward).
    for l, (heads, d_out) in enumerate(layer_cfg):
        w_ref, wsc_ref, b_ref = gat_refs[3 * l:3 * l + 3]
        mask_ref = mask_refs[mask_slot[heads]]
        if heads > 1:
            e_ref = e_refs[2 * e_slot[heads]]
            et_ref = e_refs[2 * e_slot[heads] + 1]
        else:
            e_ref = et_ref = None
        h = _gat_layer(h, mask_ref, w_ref, wsc_ref, b_ref, e_ref, et_ref,
                       heads=heads, d_out=d_out)

    # global_pool_2 == global_max_pool: sorted batch, equal-size graphs ->
    # reshape + sublane max, then one [G,D]@[D,C] readout matmul (bias=False).
    pooled = jnp.max(h.reshape(n_graphs, n_per_graph, h.shape[-1]), axis=1)
    o_ref[...] = jnp.dot(pooled.astype(bf16), ro_w_ref[...],
                         preferred_element_type=f32)


# ----------------------------- wrapper ----------------------------------------


def gatnet2_forward(x, masks, e_mats, emb_w, emb_b, gat_params, ro_w, *,
                    n_per_graph, n_graphs, mask_slot, e_slot):
    B, N, Din = x.shape
    layer_cfg = tuple((int(p["heads"]), int(p["d_out"])) for p in gat_params)

    def _const_spec(a):
        nd = a.ndim
        return pl.BlockSpec(a.shape, lambda b, _nd=nd: (0,) * _nd)

    def _batch_spec(a):
        return pl.BlockSpec((None,) + a.shape[1:], lambda b: (b, 0, 0))

    operands = [x]
    in_specs = [_batch_spec(x)]
    for m in masks:
        operands.append(m); in_specs.append(_batch_spec(m))
    for e in e_mats:
        operands.append(e); in_specs.append(_const_spec(e))
    operands += [emb_w, emb_b]
    in_specs += [_const_spec(emb_w), _const_spec(emb_b)]
    for p in gat_params:
        for key in ("w", "wsc", "bias"):
            operands.append(p[key]); in_specs.append(_const_spec(p[key]))
    operands.append(ro_w); in_specs.append(_const_spec(ro_w))

    n_classes = ro_w.shape[1]
    kernel = functools.partial(_gatnet2_kernel, layer_cfg=layer_cfg,
                               mask_slot=mask_slot, e_slot=e_slot,
                               n_per_graph=n_per_graph, n_graphs=n_graphs)
    return pl.pallas_call(
        kernel,
        grid=(B,),
        out_shape=jax.ShapeDtypeStruct((B, n_graphs, n_classes), jnp.float32),
        in_specs=in_specs,
        out_specs=pl.BlockSpec((None, n_graphs, n_classes), lambda b: (b, 0, 0)),
        compiler_params=pltpu.CompilerParams(
            dimension_semantics=("parallel",)),
    )(*operands)


# ----------------------------- driver ------------------------------------------


if __name__ == "__main__":
    in_dim = 128
    hidden_dims = [128, 128, 128, 128]
    n_classes = 10
    heads = 8
    n_per_graph = 32
    n_graphs = 2
    N = n_per_graph * n_graphs
    B = 4                      # independent graph batches -> "parallel" grid axis

    key = jax.random.PRNGKey(0)
    keys = iter(jax.random.split(key, 64))
    bf16 = jnp.bfloat16

    def init(shape, k, scale=0.1):
        return scale * jax.random.normal(k, shape, dtype=jnp.float32)

    # embedding_h: Linear(in_dim, in_dim)
    emb_w = init((in_dim, in_dim), next(keys)).astype(bf16)
    emb_b = init((1, in_dim), next(keys))

    # GATConv layers: hidden_dims[:-2] with 8 heads, then a final 1-head layer.
    layer_dims = [(in_dim, hidden_dims[0], heads),
                  (hidden_dims[0], hidden_dims[1], heads),
                  (hidden_dims[1], hidden_dims[-1], 1)]
    gat_params = []
    for (din, dout, h) in layer_dims:
        w = init((din, h * dout), next(keys))
        att_src = init((h, dout), next(keys))
        att_dst = init((h, dout), next(keys))
        w3 = w.reshape(din, h, dout)
        # Host fold: per-head a.(W x) projections become plain columns of wsc.
        wdf = jnp.einsum('dho,ho->dh', w3, att_dst)          # [din, h]  dst fold
        wsf = jnp.einsum('dho,ho->dh', w3, att_src)          # [din, h]  src fold
        gat_params.append(dict(
            w=w.astype(bf16),                                 # [din, h*dout]
            wsc=jnp.concatenate([wdf, wsf], axis=1).astype(bf16),   # [din, 2h]
            bias=init((1, dout), next(keys)),
            heads=h, d_out=dout))

    # readout_mlp: Linear(hidden_dims[-1], n_classes, bias=False)
    ro_w = init((hidden_dims[-1], n_classes), next(keys)).astype(bf16)

    # ------- synthetic batched graph data (replaces PyG `data`) -------
    x = jax.random.normal(next(keys), (B, N, in_dim), dtype=jnp.float32).astype(bf16)
    batch_vec = jnp.repeat(jnp.arange(n_graphs), n_per_graph)        # data.batch
    same_graph = (batch_vec[:, None] == batch_vec[None, :]).astype(jnp.float32)
    rand_adj = (jax.random.uniform(next(keys), (B, N, N)) < 0.15).astype(jnp.float32)
    adj = rand_adj * same_graph[None]                                # within-graph edges
    adj = jnp.maximum(adj, jnp.eye(N, dtype=jnp.float32)[None])      # add_self_loops=True
    mask_bias = jnp.where(adj > 0, 0.0, NEG_INF).astype(bf16)        # [B, N, N] additive mask

    # Per head-count: lane-tiled mask and exact 0/1 expansion matrices.
    head_counts = sorted({p["heads"] for p in gat_params})
    masks, mask_slot = [], {}
    for i, hc in enumerate(head_counts):
        masks.append(jnp.tile(mask_bias, (1, 1, hc)))                # [B, N, hc*N]
        mask_slot[hc] = i
    e_mats, e_slot = [], {}
    for hc in head_counts:
        if hc > 1:
            e_slot[hc] = len(e_mats) // 2
            e = jnp.repeat(jnp.eye(hc, dtype=jnp.float32), N, axis=1)   # [hc, hc*N]
            e_mats.append(e)                                            # f32 (exact)
            e_mats.append(e.T.astype(bf16))                             # [hc*N, hc]

    logits = gatnet2_forward(x, masks, e_mats, emb_w, emb_b, gat_params, ro_w,
                             n_per_graph=n_per_graph, n_graphs=n_graphs,
                             mask_slot=mask_slot, e_slot=e_slot)
    logits = jax.block_until_ready(logits)
    assert logits.shape == (B, n_graphs, n_classes)
    assert bool(jnp.all(jnp.isfinite(logits)))
    print("KERNEL_OK")
</pallas_src>

<mosaic_0001>
module attributes {stable_mosaic.version = 11 : i64} {
  func.func @_gatnet2_kernel(%arg0: i32, %arg1: memref<1x64x128xbf16, #tpu.memory_space<vmem>>, %arg2: memref<1x64x64xbf16, #tpu.memory_space<vmem>>, %arg3: memref<1x64x512xbf16, #tpu.memory_space<vmem>>, %arg4: memref<8x512xf32, #tpu.memory_space<vmem>>, %arg5: memref<512x8xbf16, #tpu.memory_space<vmem>>, %arg6: memref<128x128xbf16, #tpu.memory_space<vmem>>, %arg7: memref<1x128xf32, #tpu.memory_space<vmem>>, %arg8: memref<128x1024xbf16, #tpu.memory_space<vmem>>, %arg9: memref<128x16xbf16, #tpu.memory_space<vmem>>, %arg10: memref<1x128xf32, #tpu.memory_space<vmem>>, %arg11: memref<128x1024xbf16, #tpu.memory_space<vmem>>, %arg12: memref<128x16xbf16, #tpu.memory_space<vmem>>, %arg13: memref<1x128xf32, #tpu.memory_space<vmem>>, %arg14: memref<128x128xbf16, #tpu.memory_space<vmem>>, %arg15: memref<128x2xbf16, #tpu.memory_space<vmem>>, %arg16: memref<1x128xf32, #tpu.memory_space<vmem>>, %arg17: memref<128x10xbf16, #tpu.memory_space<vmem>>, %arg18: memref<1x2x10xf32, #tpu.memory_space<vmem>>) attributes {dimension_semantics = [#tpu.dimension_semantics<parallel>], iteration_bounds = array<i64: 4>, scalar_prefetch = 0 : i64, scratch_operands = 0 : i64, tpu.core_type = #tpu.core_type<tc>, window_params = [{transform_indices = @transform_0, window_bounds = array<i64: 1, 64, 128>}, {transform_indices = @transform_1, window_bounds = array<i64: 1, 64, 64>}, {transform_indices = @transform_2, window_bounds = array<i64: 1, 64, 512>}, {pipeline_mode = #tpu.pipeline_mode<synchronous>, transform_indices = @transform_3, window_bounds = array<i64: 8, 512>}, {pipeline_mode = #tpu.pipeline_mode<synchronous>, transform_indices = @transform_4, window_bounds = array<i64: 512, 8>}, {pipeline_mode = #tpu.pipeline_mode<synchronous>, transform_indices = @transform_5, window_bounds = array<i64: 128, 128>}, {pipeline_mode = #tpu.pipeline_mode<synchronous>, transform_indices = @transform_6, window_bounds = array<i64: 1, 128>}, {pipeline_mode = #tpu.pipeline_mode<synchronous>, transform_indices = @transform_7, window_bounds = array<i64: 128, 1024>}, {pipeline_mode = #tpu.pipeline_mode<synchronous>, transform_indices = @transform_8, window_bounds = array<i64: 128, 16>}, {pipeline_mode = #tpu.pipeline_mode<synchronous>, transform_indices = @transform_9, window_bounds = array<i64: 1, 128>}, {pipeline_mode = #tpu.pipeline_mode<synchronous>, transform_indices = @transform_10, window_bounds = array<i64: 128, 1024>}, {pipeline_mode = #tpu.pipeline_mode<synchronous>, transform_indices = @transform_11, window_bounds = array<i64: 128, 16>}, {pipeline_mode = #tpu.pipeline_mode<synchronous>, transform_indices = @transform_12, window_bounds = array<i64: 1, 128>}, {pipeline_mode = #tpu.pipeline_mode<synchronous>, transform_indices = @transform_13, window_bounds = array<i64: 128, 128>}, {pipeline_mode = #tpu.pipeline_mode<synchronous>, transform_indices = @transform_14, window_bounds = array<i64: 128, 2>}, {pipeline_mode = #tpu.pipeline_mode<synchronous>, transform_indices = @transform_15, window_bounds = array<i64: 1, 128>}, {pipeline_mode = #tpu.pipeline_mode<synchronous>, transform_indices = @transform_16, window_bounds = array<i64: 128, 10>}, {transform_indices = @transform_17, window_bounds = array<i64: 1, 2, 10>}]} {
    %c0 = arith.constant 0 : index
    %c0_0 = arith.constant 0 : index
    %c0_1 = arith.constant 0 : index
    %0 = vector.load %arg1[%c0, %c0_0, %c0_1] : memref<1x64x128xbf16, #tpu.memory_space<vmem>>, vector<1x64x128xbf16>
    %1 = vector.shape_cast %0 : vector<1x64x128xbf16> to vector<64x128xbf16>
    %c0_2 = arith.constant 0 : index
    %c0_3 = arith.constant 0 : index
    %2 = vector.load %arg6[%c0_2, %c0_3] : memref<128x128xbf16, #tpu.memory_space<vmem>>, vector<128x128xbf16>
    %cst = arith.constant dense<0.000000e+00> : vector<64x128xf32>
    %3 = tpu.matmul %1, %2, %cst {dimension_numbers = #tpu.dot_dimension_numbers<[1], [0], [0], [1], [0, 0, 1, 1], [], []>} : vector<64x128xbf16>, vector<128x128xbf16>, vector<64x128xf32> -> vector<64x128xf32>
    %c0_4 = arith.constant 0 : index
    %c0_5 = arith.constant 0 : index
    %4 = vector.load %arg7[%c0_4, %c0_5] : memref<1x128xf32, #tpu.memory_space<vmem>>, vector<1x128xf32>
    %5 = vector.broadcast %4 : vector<1x128xf32> to vector<64x128xf32>
    %6 = arith.addf %3, %5 : vector<64x128xf32>
    %7 = arith.truncf %6 : vector<64x128xf32> to vector<64x128xbf16>
    %c0_6 = arith.constant 0 : index
    %c0_7 = arith.constant 0 : index
    %8 = vector.load %arg9[%c0_6, %c0_7] : memref<128x16xbf16, #tpu.memory_space<vmem>>, vector<128x16xbf16>
    %cst_8 = arith.constant dense<0.000000e+00> : vector<64x16xf32>
    %9 = tpu.matmul %7, %8, %cst_8 {dimension_numbers = #tpu.dot_dimension_numbers<[1], [0], [0], [1], [0, 0, 1, 1], [], []>} : vector<64x128xbf16>, vector<128x16xbf16>, vector<64x16xf32> -> vector<64x16xf32>
    %10 = vector.extract_strided_slice %9 {offsets = [0, 0], sizes = [64, 8], strides = [1, 1]} : vector<64x16xf32> to vector<64x8xf32>
    %11 = vector.extract_strided_slice %9 {offsets = [0, 8], sizes = [64, 8], strides = [1, 1]} : vector<64x16xf32> to vector<64x8xf32>
    %c0_9 = arith.constant 0 : index
    %c0_10 = arith.constant 0 : index
    %12 = vector.load %arg4[%c0_9, %c0_10] : memref<8x512xf32, #tpu.memory_space<vmem>>, vector<8x512xf32>
    %cst_11 = arith.constant dense<0.000000e+00> : vector<64x512xf32>
    %13 = tpu.matmul %10, %12, %cst_11 {dimension_numbers = #tpu.dot_dimension_numbers<[1], [0], [0], [1], [0, 0, 1, 1], [], []>} : vector<64x8xf32>, vector<8x512xf32>, vector<64x512xf32> -> vector<64x512xf32>
    %14 = tpu.transpose %11, [1, 0] : vector<64x8xf32> -> vector<8x64xf32>
    %15 = vector.extract_strided_slice %14 {offsets = [0, 0], sizes = [1, 64], strides = [1, 1]} : vector<8x64xf32> to vector<1x64xf32>
    %16 = vector.extract_strided_slice %14 {offsets = [1, 0], sizes = [1, 64], strides = [1, 1]} : vector<8x64xf32> to vector<1x64xf32>
    %17 = vector.extract_strided_slice %14 {offsets = [2, 0], sizes = [1, 64], strides = [1, 1]} : vector<8x64xf32> to vector<1x64xf32>
    %18 = vector.extract_strided_slice %14 {offsets = [3, 0], sizes = [1, 64], strides = [1, 1]} : vector<8x64xf32> to vector<1x64xf32>
    %19 = vector.extract_strided_slice %14 {offsets = [4, 0], sizes = [1, 64], strides = [1, 1]} : vector<8x64xf32> to vector<1x64xf32>
    %20 = vector.extract_strided_slice %14 {offsets = [5, 0], sizes = [1, 64], strides = [1, 1]} : vector<8x64xf32> to vector<1x64xf32>
    %21 = vector.extract_strided_slice %14 {offsets = [6, 0], sizes = [1, 64], strides = [1, 1]} : vector<8x64xf32> to vector<1x64xf32>
    %22 = vector.extract_strided_slice %14 {offsets = [7, 0], sizes = [1, 64], strides = [1, 1]} : vector<8x64xf32> to vector<1x64xf32>
    %23 = tpu.concatenate %15, %16, %17, %18, %19, %20, %21, %22 in 1 : vector<1x64xf32>, vector<1x64xf32>, vector<1x64xf32>, vector<1x64xf32>, vector<1x64xf32>, vector<1x64xf32>, vector<1x64xf32>, vector<1x64xf32> -> vector<1x512xf32>
    %24 = vector.broadcast %23 : vector<1x512xf32> to vector<64x512xf32>
    %25 = arith.addf %13, %24 : vector<64x512xf32>
    %cst_12 = arith.constant 0.000000e+00 : f32
    %26 = vector.broadcast %cst_12 : f32 to vector<64x512xf32>
    %27 = arith.cmpf ogt, %25, %26 : vector<64x512xf32>
    %cst_13 = arith.constant 2.000000e-01 : f32
    %28 = vector.broadcast %cst_13 : f32 to vector<64x512xf32>
    %29 = arith.mulf %28, %25 : vector<64x512xf32>
    %30 = arith.select %27, %25, %29 : vector<64x512xi1>, vector<64x512xf32>
    %c0_14 = arith.constant 0 : index
    %c0_15 = arith.constant 0 : index
    %c0_16 = arith.constant 0 : index
    %31 = vector.load %arg3[%c0_14, %c0_15, %c0_16] : memref<1x64x512xbf16, #tpu.memory_space<vmem>>, vector<1x64x512xbf16>
    %32 = vector.shape_cast %31 : vector<1x64x512xbf16> to vector<64x512xbf16>
    %33 = arith.extf %32 : vector<64x512xbf16> to vector<64x512xf32>
    %34 = arith.addf %30, %33 : vector<64x512xf32>
    %cst_17 = arith.constant dense<0xFF800000> : vector<64xf32>
    %35 = vector.multi_reduction <maximumf>, %34, %cst_17 [1] : vector<64x512xf32> to vector<64xf32>
    %36 = vector.shape_cast %35 : vector<64xf32> to vector<64x1xf32>
    %37 = vector.broadcast %36 : vector<64x1xf32> to vector<64x512xf32>
    %38 = arith.subf %34, %37 : vector<64x512xf32>
    %39 = math.exp %38 : vector<64x512xf32>
    %40 = arith.truncf %39 : vector<64x512xf32> to vector<64x512xbf16>
    %c0_18 = arith.constant 0 : index
    %c0_19 = arith.constant 0 : index
    %41 = vector.load %arg5[%c0_18, %c0_19] : memref<512x8xbf16, #tpu.memory_space<vmem>>, vector<512x8xbf16>
    %cst_20 = arith.constant dense<0.000000e+00> : vector<64x8xf32>
    %42 = tpu.matmul %40, %41, %cst_20 {dimension_numbers = #tpu.dot_dimension_numbers<[1], [0], [0], [1], [0, 0, 1, 1], [], []>} : vector<64x512xbf16>, vector<512x8xbf16>, vector<64x8xf32> -> vector<64x8xf32>
    %cst_21 = arith.constant 8.000000e+00 : f32
    %43 = vector.broadcast %cst_21 : f32 to vector<64x8xf32>
    %44 = arith.mulf %42, %43 : vector<64x8xf32>
    %45 = tpu.reciprocal %44 {approx = true} : vector<64x8xf32> -> vector<64x8xf32>
    %c0_22 = arith.constant 0 : index
    %c0_23 = arith.constant 0 : index
    %46 = vector.load %arg4[%c0_22, %c0_23] : memref<8x512xf32, #tpu.memory_space<vmem>>, vector<8x512xf32>
    %cst_24 = arith.constant dense<0.000000e+00> : vector<64x512xf32>
    %47 = tpu.matmul %45, %46, %cst_24 {dimension_numbers = #tpu.dot_dimension_numbers<[1], [0], [0], [1], [0, 0, 1, 1], [], []>} : vector<64x8xf32>, vector<8x512xf32>, vector<64x512xf32> -> vector<64x512xf32>
    %48 = arith.mulf %39, %47 : vector<64x512xf32>
    %49 = arith.truncf %48 : vector<64x512xf32> to vector<64x512xbf16>
    %c0_25 = arith.constant 0 : index
    %c0_26 = arith.constant 0 : index
    %50 = vector.load %arg8[%c0_25, %c0_26] : memref<128x1024xbf16, #tpu.memory_space<vmem>>, vector<128x128xbf16>
    %cst_27 = arith.constant dense<0.000000e+00> : vector<64x128xf32>
    %51 = tpu.matmul %7, %50, %cst_27 {dimension_numbers = #tpu.dot_dimension_numbers<[1], [0], [0], [1], [0, 0, 1, 1], [], []>} : vector<64x128xbf16>, vector<128x128xbf16>, vector<64x128xf32> -> vector<64x128xf32>
    %52 = arith.truncf %51 : vector<64x128xf32> to vector<64x128xbf16>
    %c0_28 = arith.constant 0 : index
    %c128 = arith.constant 128 : index
    %53 = vector.load %arg8[%c0_28, %c128] : memref<128x1024xbf16, #tpu.memory_space<vmem>>, vector<128x128xbf16>
    %cst_29 = arith.constant dense<0.000000e+00> : vector<64x128xf32>
    %54 = tpu.matmul %7, %53, %cst_29 {dimension_numbers = #tpu.dot_dimension_numbers<[1], [0], [0], [1], [0, 0, 1, 1], [], []>} : vector<64x128xbf16>, vector<128x128xbf16>, vector<64x128xf32> -> vector<64x128xf32>
    %55 = arith.truncf %54 : vector<64x128xf32> to vector<64x128xbf16>
    %c0_30 = arith.constant 0 : index
    %c256 = arith.constant 256 : index
    %56 = vector.load %arg8[%c0_30, %c256] : memref<128x1024xbf16, #tpu.memory_space<vmem>>, vector<128x128xbf16>
    %cst_31 = arith.constant dense<0.000000e+00> : vector<64x128xf32>
    %57 = tpu.matmul %7, %56, %cst_31 {dimension_numbers = #tpu.dot_dimension_numbers<[1], [0], [0], [1], [0, 0, 1, 1], [], []>} : vector<64x128xbf16>, vector<128x128xbf16>, vector<64x128xf32> -> vector<64x128xf32>
    %58 = arith.truncf %57 : vector<64x128xf32> to vector<64x128xbf16>
    %c0_32 = arith.constant 0 : index
    %c384 = arith.constant 384 : index
    %59 = vector.load %arg8[%c0_32, %c384] : memref<128x1024xbf16, #tpu.memory_space<vmem>>, vector<128x128xbf16>
    %cst_33 = arith.constant dense<0.000000e+00> : vector<64x128xf32>
    %60 = tpu.matmul %7, %59, %cst_33 {dimension_numbers = #tpu.dot_dimension_numbers<[1], [0], [0], [1], [0, 0, 1, 1], [], []>} : vector<64x128xbf16>, vector<128x128xbf16>, vector<64x128xf32> -> vector<64x128xf32>
    %61 = arith.truncf %60 : vector<64x128xf32> to vector<64x128xbf16>
    %c0_34 = arith.constant 0 : index
    %c512 = arith.constant 512 : index
    %62 = vector.load %arg8[%c0_34, %c512] : memref<128x1024xbf16, #tpu.memory_space<vmem>>, vector<128x128xbf16>
    %cst_35 = arith.constant dense<0.000000e+00> : vector<64x128xf32>
    %63 = tpu.matmul %7, %62, %cst_35 {dimension_numbers = #tpu.dot_dimension_numbers<[1], [0], [0], [1], [0, 0, 1, 1], [], []>} : vector<64x128xbf16>, vector<128x128xbf16>, vector<64x128xf32> -> vector<64x128xf32>
    %64 = arith.truncf %63 : vector<64x128xf32> to vector<64x128xbf16>
    %c0_36 = arith.constant 0 : index
    %c640 = arith.constant 640 : index
    %65 = vector.load %arg8[%c0_36, %c640] : memref<128x1024xbf16, #tpu.memory_space<vmem>>, vector<128x128xbf16>
    %cst_37 = arith.constant dense<0.000000e+00> : vector<64x128xf32>
    %66 = tpu.matmul %7, %65, %cst_37 {dimension_numbers = #tpu.dot_dimension_numbers<[1], [0], [0], [1], [0, 0, 1, 1], [], []>} : vector<64x128xbf16>, vector<128x128xbf16>, vector<64x128xf32> -> vector<64x128xf32>
    %67 = arith.truncf %66 : vector<64x128xf32> to vector<64x128xbf16>
    %c0_38 = arith.constant 0 : index
    %c768 = arith.constant 768 : index
    %68 = vector.load %arg8[%c0_38, %c768] : memref<128x1024xbf16, #tpu.memory_space<vmem>>, vector<128x128xbf16>
    %cst_39 = arith.constant dense<0.000000e+00> : vector<64x128xf32>
    %69 = tpu.matmul %7, %68, %cst_39 {dimension_numbers = #tpu.dot_dimension_numbers<[1], [0], [0], [1], [0, 0, 1, 1], [], []>} : vector<64x128xbf16>, vector<128x128xbf16>, vector<64x128xf32> -> vector<64x128xf32>
    %70 = arith.truncf %69 : vector<64x128xf32> to vector<64x128xbf16>
    %c0_40 = arith.constant 0 : index
    %c896 = arith.constant 896 : index
    %71 = vector.load %arg8[%c0_40, %c896] : memref<128x1024xbf16, #tpu.memory_space<vmem>>, vector<128x128xbf16>
    %cst_41 = arith.constant dense<0.000000e+00> : vector<64x128xf32>
    %72 = tpu.matmul %7, %71, %cst_41 {dimension_numbers = #tpu.dot_dimension_numbers<[1], [0], [0], [1], [0, 0, 1, 1], [], []>} : vector<64x128xbf16>, vector<128x128xbf16>, vector<64x128xf32> -> vector<64x128xf32>
    %73 = arith.truncf %72 : vector<64x128xf32> to vector<64x128xbf16>
    %74 = tpu.concatenate %52, %55, %58, %61, %64, %67, %70, %73 in 0 : vector<64x128xbf16>, vector<64x128xbf16>, vector<64x128xbf16>, vector<64x128xbf16>, vector<64x128xbf16>, vector<64x128xbf16>, vector<64x128xbf16>, vector<64x128xbf16> -> vector<512x128xbf16>
    %cst_42 = arith.constant dense<0.000000e+00> : vector<64x128xf32>
    %75 = tpu.matmul %49, %74, %cst_42 {dimension_numbers = #tpu.dot_dimension_numbers<[1], [0], [0], [1], [0, 0, 1, 1], [], []>} : vector<64x512xbf16>, vector<512x128xbf16>, vector<64x128xf32> -> vector<64x128xf32>
    %c0_43 = arith.constant 0 : index
    %c0_44 = arith.constant 0 : index
    %76 = vector.load %arg10[%c0_43, %c0_44] : memref<1x128xf32, #tpu.memory_space<vmem>>, vector<1x128xf32>
    %77 = vector.broadcast %76 : vector<1x128xf32> to vector<64x128xf32>
    %78 = arith.addf %75, %77 : vector<64x128xf32>
    %cst_45 = arith.constant 0.000000e+00 : f32
    %79 = vector.broadcast %cst_45 : f32 to vector<64x128xf32>
    %80 = arith.maximumf %78, %79 : vector<64x128xf32>
    %81 = arith.truncf %80 : vector<64x128xf32> to vector<64x128xbf16>
    %c0_46 = arith.constant 0 : index
    %c0_47 = arith.constant 0 : index
    %82 = vector.load %arg12[%c0_46, %c0_47] : memref<128x16xbf16, #tpu.memory_space<vmem>>, vector<128x16xbf16>
    %cst_48 = arith.constant dense<0.000000e+00> : vector<64x16xf32>
    %83 = tpu.matmul %81, %82, %cst_48 {dimension_numbers = #tpu.dot_dimension_numbers<[1], [0], [0], [1], [0, 0, 1, 1], [], []>} : vector<64x128xbf16>, vector<128x16xbf16>, vector<64x16xf32> -> vector<64x16xf32>
    %84 = vector.extract_strided_slice %83 {offsets = [0, 0], sizes = [64, 8], strides = [1, 1]} : vector<64x16xf32> to vector<64x8xf32>
    %85 = vector.extract_strided_slice %83 {offsets = [0, 8], sizes = [64, 8], strides = [1, 1]} : vector<64x16xf32> to vector<64x8xf32>
    %c0_49 = arith.constant 0 : index
    %c0_50 = arith.constant 0 : index
    %86 = vector.load %arg4[%c0_49, %c0_50] : memref<8x512xf32, #tpu.memory_space<vmem>>, vector<8x512xf32>
    %cst_51 = arith.constant dense<0.000000e+00> : vector<64x512xf32>
    %87 = tpu.matmul %84, %86, %cst_51 {dimension_numbers = #tpu.dot_dimension_numbers<[1], [0], [0], [1], [0, 0, 1, 1], [], []>} : vector<64x8xf32>, vector<8x512xf32>, vector<64x512xf32> -> vector<64x512xf32>
    %88 = tpu.transpose %85, [1, 0] : vector<64x8xf32> -> vector<8x64xf32>
    %89 = vector.extract_strided_slice %88 {offsets = [0, 0], sizes = [1, 64], strides = [1, 1]} : vector<8x64xf32> to vector<1x64xf32>
    %90 = vector.extract_strided_slice %88 {offsets = [1, 0], sizes = [1, 64], strides = [1, 1]} : vector<8x64xf32> to vector<1x64xf32>
    %91 = vector.extract_strided_slice %88 {offsets = [2, 0], sizes = [1, 64], strides = [1, 1]} : vector<8x64xf32> to vector<1x64xf32>
    %92 = vector.extract_strided_slice %88 {offsets = [3, 0], sizes = [1, 64], strides = [1, 1]} : vector<8x64xf32> to vector<1x64xf32>
    %93 = vector.extract_strided_slice %88 {offsets = [4, 0], sizes = [1, 64], strides = [1, 1]} : vector<8x64xf32> to vector<1x64xf32>
    %94 = vector.extract_strided_slice %88 {offsets = [5, 0], sizes = [1, 64], strides = [1, 1]} : vector<8x64xf32> to vector<1x64xf32>
    %95 = vector.extract_strided_slice %88 {offsets = [6, 0], sizes = [1, 64], strides = [1, 1]} : vector<8x64xf32> to vector<1x64xf32>
    %96 = vector.extract_strided_slice %88 {offsets = [7, 0], sizes = [1, 64], strides = [1, 1]} : vector<8x64xf32> to vector<1x64xf32>
    %97 = tpu.concatenate %89, %90, %91, %92, %93, %94, %95, %96 in 1 : vector<1x64xf32>, vector<1x64xf32>, vector<1x64xf32>, vector<1x64xf32>, vector<1x64xf32>, vector<1x64xf32>, vector<1x64xf32>, vector<1x64xf32> -> vector<1x512xf32>
    %98 = vector.broadcast %97 : vector<1x512xf32> to vector<64x512xf32>
    %99 = arith.addf %87, %98 : vector<64x512xf32>
    %cst_52 = arith.constant 0.000000e+00 : f32
    %100 = vector.broadcast %cst_52 : f32 to vector<64x512xf32>
    %101 = arith.cmpf ogt, %99, %100 : vector<64x512xf32>
    %cst_53 = arith.constant 2.000000e-01 : f32
    %102 = vector.broadcast %cst_53 : f32 to vector<64x512xf32>
    %103 = arith.mulf %102, %99 : vector<64x512xf32>
    %104 = arith.select %101, %99, %103 : vector<64x512xi1>, vector<64x512xf32>
    %c0_54 = arith.constant 0 : index
    %c0_55 = arith.constant 0 : index
    %c0_56 = arith.constant 0 : index
    %105 = vector.load %arg3[%c0_54, %c0_55, %c0_56] : memref<1x64x512xbf16, #tpu.memory_space<vmem>>, vector<1x64x512xbf16>
    %106 = vector.shape_cast %105 : vector<1x64x512xbf16> to vector<64x512xbf16>
    %107 = arith.extf %106 : vector<64x512xbf16> to vector<64x512xf32>
    %108 = arith.addf %104, %107 : vector<64x512xf32>
    %cst_57 = arith.constant dense<0xFF800000> : vector<64xf32>
    %109 = vector.multi_reduction <maximumf>, %108, %cst_57 [1] : vector<64x512xf32> to vector<64xf32>
    %110 = vector.shape_cast %109 : vector<64xf32> to vector<64x1xf32>
    %111 = vector.broadcast %110 : vector<64x1xf32> to vector<64x512xf32>
    %112 = arith.subf %108, %111 : vector<64x512xf32>
    %113 = math.exp %112 : vector<64x512xf32>
    %114 = arith.truncf %113 : vector<64x512xf32> to vector<64x512xbf16>
    %c0_58 = arith.constant 0 : index
    %c0_59 = arith.constant 0 : index
    %115 = vector.load %arg5[%c0_58, %c0_59] : memref<512x8xbf16, #tpu.memory_space<vmem>>, vector<512x8xbf16>
    %cst_60 = arith.constant dense<0.000000e+00> : vector<64x8xf32>
    %116 = tpu.matmul %114, %115, %cst_60 {dimension_numbers = #tpu.dot_dimension_numbers<[1], [0], [0], [1], [0, 0, 1, 1], [], []>} : vector<64x512xbf16>, vector<512x8xbf16>, vector<64x8xf32> -> vector<64x8xf32>
    %cst_61 = arith.constant 8.000000e+00 : f32
    %117 = vector.broadcast %cst_61 : f32 to vector<64x8xf32>
    %118 = arith.mulf %116, %117 : vector<64x8xf32>
    %119 = tpu.reciprocal %118 {approx = true} : vector<64x8xf32> -> vector<64x8xf32>
    %c0_62 = arith.constant 0 : index
    %c0_63 = arith.constant 0 : index
    %120 = vector.load %arg4[%c0_62, %c0_63] : memref<8x512xf32, #tpu.memory_space<vmem>>, vector<8x512xf32>
    %cst_64 = arith.constant dense<0.000000e+00> : vector<64x512xf32>
    %121 = tpu.matmul %119, %120, %cst_64 {dimension_numbers = #tpu.dot_dimension_numbers<[1], [0], [0], [1], [0, 0, 1, 1], [], []>} : vector<64x8xf32>, vector<8x512xf32>, vector<64x512xf32> -> vector<64x512xf32>
    %122 = arith.mulf %113, %121 : vector<64x512xf32>
    %123 = arith.truncf %122 : vector<64x512xf32> to vector<64x512xbf16>
    %c0_65 = arith.constant 0 : index
    %c0_66 = arith.constant 0 : index
    %124 = vector.load %arg11[%c0_65, %c0_66] : memref<128x1024xbf16, #tpu.memory_space<vmem>>, vector<128x128xbf16>
    %cst_67 = arith.constant dense<0.000000e+00> : vector<64x128xf32>
    %125 = tpu.matmul %81, %124, %cst_67 {dimension_numbers = #tpu.dot_dimension_numbers<[1], [0], [0], [1], [0, 0, 1, 1], [], []>} : vector<64x128xbf16>, vector<128x128xbf16>, vector<64x128xf32> -> vector<64x128xf32>
    %126 = arith.truncf %125 : vector<64x128xf32> to vector<64x128xbf16>
    %c0_68 = arith.constant 0 : index
    %c128_69 = arith.constant 128 : index
    %127 = vector.load %arg11[%c0_68, %c128_69] : memref<128x1024xbf16, #tpu.memory_space<vmem>>, vector<128x128xbf16>
    %cst_70 = arith.constant dense<0.000000e+00> : vector<64x128xf32>
    %128 = tpu.matmul %81, %127, %cst_70 {dimension_numbers = #tpu.dot_dimension_numbers<[1], [0], [0], [1], [0, 0, 1, 1], [], []>} : vector<64x128xbf16>, vector<128x128xbf16>, vector<64x128xf32> -> vector<64x128xf32>
    %129 = arith.truncf %128 : vector<64x128xf32> to vector<64x128xbf16>
    %c0_71 = arith.constant 0 : index
    %c256_72 = arith.constant 256 : index
    %130 = vector.load %arg11[%c0_71, %c256_72] : memref<128x1024xbf16, #tpu.memory_space<vmem>>, vector<128x128xbf16>
    %cst_73 = arith.constant dense<0.000000e+00> : vector<64x128xf32>
    %131 = tpu.matmul %81, %130, %cst_73 {dimension_numbers = #tpu.dot_dimension_numbers<[1], [0], [0], [1], [0, 0, 1, 1], [], []>} : vector<64x128xbf16>, vector<128x128xbf16>, vector<64x128xf32> -> vector<64x128xf32>
    %132 = arith.truncf %131 : vector<64x128xf32> to vector<64x128xbf16>
    %c0_74 = arith.constant 0 : index
    %c384_75 = arith.constant 384 : index
    %133 = vector.load %arg11[%c0_74, %c384_75] : memref<128x1024xbf16, #tpu.memory_space<vmem>>, vector<128x128xbf16>
    %cst_76 = arith.constant dense<0.000000e+00> : vector<64x128xf32>
    %134 = tpu.matmul %81, %133, %cst_76 {dimension_numbers = #tpu.dot_dimension_numbers<[1], [0], [0], [1], [0, 0, 1, 1], [], []>} : vector<64x128xbf16>, vector<128x128xbf16>, vector<64x128xf32> -> vector<64x128xf32>
    %135 = arith.truncf %134 : vector<64x128xf32> to vector<64x128xbf16>
    %c0_77 = arith.constant 0 : index
    %c512_78 = arith.constant 512 : index
    %136 = vector.load %arg11[%c0_77, %c512_78] : memref<128x1024xbf16, #tpu.memory_space<vmem>>, vector<128x128xbf16>
    %cst_79 = arith.constant dense<0.000000e+00> : vector<64x128xf32>
    %137 = tpu.matmul %81, %136, %cst_79 {dimension_numbers = #tpu.dot_dimension_numbers<[1], [0], [0], [1], [0, 0, 1, 1], [], []>} : vector<64x128xbf16>, vector<128x128xbf16>, vector<64x128xf32> -> vector<64x128xf32>
    %138 = arith.truncf %137 : vector<64x128xf32> to vector<64x128xbf16>
    %c0_80 = arith.constant 0 : index
    %c640_81 = arith.constant 640 : index
    %139 = vector.load %arg11[%c0_80, %c640_81] : memref<128x1024xbf16, #tpu.memory_space<vmem>>, vector<128x128xbf16>
    %cst_82 = arith.constant dense<0.000000e+00> : vector<64x128xf32>
    %140 = tpu.matmul %81, %139, %cst_82 {dimension_numbers = #tpu.dot_dimension_numbers<[1], [0], [0], [1], [0, 0, 1, 1], [], []>} : vector<64x128xbf16>, vector<128x128xbf16>, vector<64x128xf32> -> vector<64x128xf32>
    %141 = arith.truncf %140 : vector<64x128xf32> to vector<64x128xbf16>
    %c0_83 = arith.constant 0 : index
    %c768_84 = arith.constant 768 : index
    %142 = vector.load %arg11[%c0_83, %c768_84] : memref<128x1024xbf16, #tpu.memory_space<vmem>>, vector<128x128xbf16>
    %cst_85 = arith.constant dense<0.000000e+00> : vector<64x128xf32>
    %143 = tpu.matmul %81, %142, %cst_85 {dimension_numbers = #tpu.dot_dimension_numbers<[1], [0], [0], [1], [0, 0, 1, 1], [], []>} : vector<64x128xbf16>, vector<128x128xbf16>, vector<64x128xf32> -> vector<64x128xf32>
    %144 = arith.truncf %143 : vector<64x128xf32> to vector<64x128xbf16>
    %c0_86 = arith.constant 0 : index
    %c896_87 = arith.constant 896 : index
    %145 = vector.load %arg11[%c0_86, %c896_87] : memref<128x1024xbf16, #tpu.memory_space<vmem>>, vector<128x128xbf16>
    %cst_88 = arith.constant dense<0.000000e+00> : vector<64x128xf32>
    %146 = tpu.matmul %81, %145, %cst_88 {dimension_numbers = #tpu.dot_dimension_numbers<[1], [0], [0], [1], [0, 0, 1, 1], [], []>} : vector<64x128xbf16>, vector<128x128xbf16>, vector<64x128xf32> -> vector<64x128xf32>
    %147 = arith.truncf %146 : vector<64x128xf32> to vector<64x128xbf16>
    %148 = tpu.concatenate %126, %129, %132, %135, %138, %141, %144, %147 in 0 : vector<64x128xbf16>, vector<64x128xbf16>, vector<64x128xbf16>, vector<64x128xbf16>, vector<64x128xbf16>, vector<64x128xbf16>, vector<64x128xbf16>, vector<64x128xbf16> -> vector<512x128xbf16>
    %cst_89 = arith.constant dense<0.000000e+00> : vector<64x128xf32>
    %149 = tpu.matmul %123, %148, %cst_89 {dimension_numbers = #tpu.dot_dimension_numbers<[1], [0], [0], [1], [0, 0, 1, 1], [], []>} : vector<64x512xbf16>, vector<512x128xbf16>, vector<64x128xf32> -> vector<64x128xf32>
    %c0_90 = arith.constant 0 : index
    %c0_91 = arith.constant 0 : index
    %150 = vector.load %arg13[%c0_90, %c0_91] : memref<1x128xf32, #tpu.memory_space<vmem>>, vector<1x128xf32>
    %151 = vector.broadcast %150 : vector<1x128xf32> to vector<64x128xf32>
    %152 = arith.addf %149, %151 : vector<64x128xf32>
    %cst_92 = arith.constant 0.000000e+00 : f32
    %153 = vector.broadcast %cst_92 : f32 to vector<64x128xf32>
    %154 = arith.maximumf %152, %153 : vector<64x128xf32>
    %155 = arith.truncf %154 : vector<64x128xf32> to vector<64x128xbf16>
    %c0_93 = arith.constant 0 : index
    %c0_94 = arith.constant 0 : index
    %156 = vector.load %arg15[%c0_93, %c0_94] : memref<128x2xbf16, #tpu.memory_space<vmem>>, vector<128x2xbf16>
    %cst_95 = arith.constant dense<0.000000e+00> : vector<64x2xf32>
    %157 = tpu.matmul %155, %156, %cst_95 {dimension_numbers = #tpu.dot_dimension_numbers<[1], [0], [0], [1], [0, 0, 1, 1], [], []>} : vector<64x128xbf16>, vector<128x2xbf16>, vector<64x2xf32> -> vector<64x2xf32>
    %158 = vector.extract_strided_slice %157 {offsets = [0, 0], sizes = [64, 1], strides = [1, 1]} : vector<64x2xf32> to vector<64x1xf32>
    %159 = vector.extract_strided_slice %157 {offsets = [0, 1], sizes = [64, 1], strides = [1, 1]} : vector<64x2xf32> to vector<64x1xf32>
    %160 = tpu.transpose %159, [1, 0] : vector<64x1xf32> -> vector<1x64xf32>
    %161 = vector.broadcast %158 : vector<64x1xf32> to vector<64x64xf32>
    %162 = vector.broadcast %160 : vector<1x64xf32> to vector<64x64xf32>
    %163 = arith.addf %161, %162 : vector<64x64xf32>
    %cst_96 = arith.constant 0.000000e+00 : f32
    %164 = vector.broadcast %cst_96 : f32 to vector<64x64xf32>
    %165 = arith.cmpf ogt, %163, %164 : vector<64x64xf32>
    %cst_97 = arith.constant 2.000000e-01 : f32
    %166 = vector.broadcast %cst_97 : f32 to vector<64x64xf32>
    %167 = arith.mulf %166, %163 : vector<64x64xf32>
    %168 = arith.select %165, %163, %167 : vector<64x64xi1>, vector<64x64xf32>
    %c0_98 = arith.constant 0 : index
    %c0_99 = arith.constant 0 : index
    %c0_100 = arith.constant 0 : index
    %169 = vector.load %arg2[%c0_98, %c0_99, %c0_100] : memref<1x64x64xbf16, #tpu.memory_space<vmem>>, vector<1x64x64xbf16>
    %170 = vector.shape_cast %169 : vector<1x64x64xbf16> to vector<64x64xbf16>
    %171 = arith.extf %170 : vector<64x64xbf16> to vector<64x64xf32>
    %172 = arith.addf %168, %171 : vector<64x64xf32>
    %cst_101 = arith.constant dense<0xFF800000> : vector<64xf32>
    %173 = vector.multi_reduction <maximumf>, %172, %cst_101 [1] : vector<64x64xf32> to vector<64xf32>
    %174 = vector.shape_cast %173 : vector<64xf32> to vector<64x1xf32>
    %175 = vector.broadcast %174 : vector<64x1xf32> to vector<64x64xf32>
    %176 = arith.subf %172, %175 : vector<64x64xf32>
    %177 = math.exp %176 : vector<64x64xf32>
    %cst_102 = arith.constant dense<0.000000e+00> : vector<64xf32>
    %178 = vector.multi_reduction <add>, %177, %cst_102 [1] : vector<64x64xf32> to vector<64xf32>
    %179 = vector.shape_cast %178 : vector<64xf32> to vector<64x1xf32>
    %cst_103 = arith.constant 1.000000e+00 : f32
    %180 = vector.broadcast %cst_103 : f32 to vector<64x1xf32>
    %181 = arith.mulf %179, %180 : vector<64x1xf32>
    %182 = tpu.reciprocal %181 {approx = true} : vector<64x1xf32> -> vector<64x1xf32>
    %183 = vector.broadcast %182 : vector<64x1xf32> to vector<64x64xf32>
    %184 = arith.mulf %177, %183 : vector<64x64xf32>
    %185 = arith.truncf %184 : vector<64x64xf32> to vector<64x64xbf16>
    %c0_104 = arith.constant 0 : index
    %c0_105 = arith.constant 0 : index
    %186 = vector.load %arg14[%c0_104, %c0_105] : memref<128x128xbf16, #tpu.memory_space<vmem>>, vector<128x128xbf16>
    %cst_106 = arith.constant dense<0.000000e+00> : vector<64x128xf32>
    %187 = tpu.matmul %155, %186, %cst_106 {dimension_numbers = #tpu.dot_dimension_numbers<[1], [0], [0], [1], [0, 0, 1, 1], [], []>} : vector<64x128xbf16>, vector<128x128xbf16>, vector<64x128xf32> -> vector<64x128xf32>
    %188 = arith.truncf %187 : vector<64x128xf32> to vector<64x128xbf16>
    %cst_107 = arith.constant dense<0.000000e+00> : vector<64x128xf32>
    %189 = tpu.matmul %185, %188, %cst_107 {dimension_numbers = #tpu.dot_dimension_numbers<[1], [0], [0], [1], [0, 0, 1, 1], [], []>} : vector<64x64xbf16>, vector<64x128xbf16>, vector<64x128xf32> -> vector<64x128xf32>
    %c0_108 = arith.constant 0 : index
    %c0_109 = arith.constant 0 : index
    %190 = vector.load %arg16[%c0_108, %c0_109] : memref<1x128xf32, #tpu.memory_space<vmem>>, vector<1x128xf32>
    %191 = vector.broadcast %190 : vector<1x128xf32> to vector<64x128xf32>
    %192 = arith.addf %189, %191 : vector<64x128xf32>
    %cst_110 = arith.constant 0.000000e+00 : f32
    %193 = vector.broadcast %cst_110 : f32 to vector<64x128xf32>
    %194 = arith.maximumf %192, %193 : vector<64x128xf32>
    %195 = vector.shape_cast %194 : vector<64x128xf32> to vector<2x32x128xf32>
    %cst_111 = arith.constant dense<0xFF800000> : vector<2x128xf32>
    %196 = vector.multi_reduction <maximumf>, %195, %cst_111 [1] : vector<2x32x128xf32> to vector<2x128xf32>
    %197 = arith.truncf %196 : vector<2x128xf32> to vector<2x128xbf16>
    %c0_112 = arith.constant 0 : index
    %c0_113 = arith.constant 0 : index
    %198 = vector.load %arg17[%c0_112, %c0_113] : memref<128x10xbf16, #tpu.memory_space<vmem>>, vector<128x10xbf16>
    %cst_114 = arith.constant dense<0.000000e+00> : vector<2x10xf32>
    %199 = tpu.matmul %197, %198, %cst_114 {dimension_numbers = #tpu.dot_dimension_numbers<[1], [0], [0], [1], [0, 0, 1, 1], [], []>} : vector<2x128xbf16>, vector<128x10xbf16>, vector<2x10xf32> -> vector<2x10xf32>
    %c0_115 = arith.constant 0 : index
    %c0_116 = arith.constant 0 : index
    %c0_117 = arith.constant 0 : index
    %200 = vector.load %arg18[%c0_115, %c0_116, %c0_117] : memref<1x2x10xf32, #tpu.memory_space<vmem>>, vector<1x2x10xf32>
    %201 = vector.shape_cast %200 : vector<1x2x10xf32> to vector<2x10xf32>
    %202 = vector.shape_cast %199 : vector<2x10xf32> to vector<1x2x10xf32>
    tpu.vector_store %arg18[%c0_115, %c0_116, %c0_117], %202 {strides = array<i32>} : memref<1x2x10xf32, #tpu.memory_space<vmem>>, vector<1x2x10xf32>,
    return
  }
  func.func @transform_0(%arg0: i32) -> (i32, i32, i32) {
    %c0_i32 = arith.constant 0 : i32
    %c0_i32_0 = arith.constant 0 : i32
    %c0_i32_1 = arith.constant 0 : i32
    return %arg0, %c0_i32, %c0_i32_0 : i32, i32, i32
  }
  func.func @transform_1(%arg0: i32) -> (i32, i32, i32) {
    %c0_i32 = arith.constant 0 : i32
    %c0_i32_0 = arith.constant 0 : i32
    %c0_i32_1 = arith.constant 0 : i32
    return %arg0, %c0_i32, %c0_i32_0 : i32, i32, i32
  }
  func.func @transform_2(%arg0: i32) -> (i32, i32, i32) {
    %c0_i32 = arith.constant 0 : i32
    %c0_i32_0 = arith.constant 0 : i32
    %c0_i32_1 = arith.constant 0 : i32
    return %arg0, %c0_i32, %c0_i32_0 : i32, i32, i32
  }
  func.func @transform_3(%arg0: i32) -> (i32, i32) {
    %c0_i32 = arith.constant 0 : i32
    %c0_i32_0 = arith.constant 0 : i32
    %c0_i32_1 = arith.constant 0 : i32
    return %c0_i32, %c0_i32_0 : i32, i32
  }
  func.func @transform_4(%arg0: i32) -> (i32, i32) {
    %c0_i32 = arith.constant 0 : i32
    %c0_i32_0 = arith.constant 0 : i32
    %c0_i32_1 = arith.constant 0 : i32
    return %c0_i32, %c0_i32_0 : i32, i32
  }
  func.func @transform_5(%arg0: i32) -> (i32, i32) {
    %c0_i32 = arith.constant 0 : i32
    %c0_i32_0 = arith.constant 0 : i32
    %c0_i32_1 = arith.constant 0 : i32
    return %c0_i32, %c0_i32_0 : i32, i32
  }
  func.func @transform_6(%arg0: i32) -> (i32, i32) {
    %c0_i32 = arith.constant 0 : i32
    %c0_i32_0 = arith.constant 0 : i32
    %c0_i32_1 = arith.constant 0 : i32
    return %c0_i32, %c0_i32_0 : i32, i32
  }
  func.func @transform_7(%arg0: i32) -> (i32, i32) {
    %c0_i32 = arith.constant 0 : i32
    %c0_i32_0 = arith.constant 0 : i32
    %c0_i32_1 = arith.constant 0 : i32
    return %c0_i32, %c0_i32_0 : i32, i32
  }
  func.func @transform_8(%arg0: i32) -> (i32, i32) {
    %c0_i32 = arith.constant 0 : i32
    %c0_i32_0 = arith.constant 0 : i32
    %c0_i32_1 = arith.constant 0 : i32
    return %c0_i32, %c0_i32_0 : i32, i32
  }
  func.func @transform_9(%arg0: i32) -> (i32, i32) {
    %c0_i32 = arith.constant 0 : i32
    %c0_i32_0 = arith.constant 0 : i32
    %c0_i32_1 = arith.constant 0 : i32
    return %c0_i32, %c0_i32_0 : i32, i32
  }
  func.func @transform_10(%arg0: i32) -> (i32, i32) {
    %c0_i32 = arith.constant 0 : i32
    %c0_i32_0 = arith.constant 0 : i32
    %c0_i32_1 = arith.constant 0 : i32
    return %c0_i32, %c0_i32_0 : i32, i32
  }
  func.func @transform_11(%arg0: i32) -> (i32, i32) {
    %c0_i32 = arith.constant 0 : i32
    %c0_i32_0 = arith.constant 0 : i32
    %c0_i32_1 = arith.constant 0 : i32
    return %c0_i32, %c0_i32_0 : i32, i32
  }
  func.func @transform_12(%arg0: i32) -> (i32, i32) {
    %c0_i32 = arith.constant 0 : i32
    %c0_i32_0 = arith.constant 0 : i32
    %c0_i32_1 = arith.constant 0 : i32
    return %c0_i32, %c0_i32_0 : i32, i32
  }
  func.func @transform_13(%arg0: i32) -> (i32, i32) {
    %c0_i32 = arith.constant 0 : i32
    %c0_i32_0 = arith.constant 0 : i32
    %c0_i32_1 = arith.constant 0 : i32
    return %c0_i32, %c0_i32_0 : i32, i32
  }
  func.func @transform_14(%arg0: i32) -> (i32, i32) {
    %c0_i32 = arith.constant 0 : i32
    %c0_i32_0 = arith.constant 0 : i32
    %c0_i32_1 = arith.constant 0 : i32
    return %c0_i32, %c0_i32_0 : i32, i32
  }
  func.func @transform_15(%arg0: i32) -> (i32, i32) {
    %c0_i32 = arith.constant 0 : i32
    %c0_i32_0 = arith.constant 0 : i32
    %c0_i32_1 = arith.constant 0 : i32
    return %c0_i32, %c0_i32_0 : i32, i32
  }
  func.func @transform_16(%arg0: i32) -> (i32, i32) {
    %c0_i32 = arith.constant 0 : i32
    %c0_i32_0 = arith.constant 0 : i32
    %c0_i32_1 = arith.constant 0 : i32
    return %c0_i32, %c0_i32_0 : i32, i32
  }
  func.func @transform_17(%arg0: i32) -> (i32, i32, i32) {
    %c0_i32 = arith.constant 0 : i32
    %c0_i32_0 = arith.constant 0 : i32
    %c0_i32_1 = arith.constant 0 : i32
    return %arg0, %c0_i32, %c0_i32_0 : i32, i32, i32
  }
}

</mosaic_0001>

<llo_original>
// kernel: tpu_custom_call.1
$region0: #{tpu_custom_call.1}
  #allocation0 [shape = 'u32[]', space=smem, size = 0x4, offset = 0x4, fixed_abs, tag = 'smem constant byte address 0x4 - core index']
  #allocation1 [shape = 'u32[144,128]{1,0:T(1,128)}', space=vmem, size = 0x12000, scoped, tag = 'internal scratch']
  %s0 = inlined_call_operand.hbm [shape: bf16[4,64,128], index: 0, kind: input, shape index: {}]
  %s1 = inlined_call_operand.hbm [shape: bf16[4,64,64], index: 1, kind: input, shape index: {}]
  %s2 = inlined_call_operand.vmem [shape: bf16[4,64,512], index: 2, kind: input, shape index: {}]
  %s3 = inlined_call_operand.vmem [shape: f32[8,512], index: 3, kind: input, shape index: {}]
  %s4 = inlined_call_operand.vmem [shape: bf16[512,8], index: 4, kind: input, shape index: {}]
  %s5 = inlined_call_operand.hbm [shape: bf16[128,128], index: 5, kind: input, shape index: {}]
  %s6 = inlined_call_operand.hbm [shape: f32[1,128], index: 6, kind: input, shape index: {}]
  %s7 = inlined_call_operand.hbm [shape: bf16[128,1024], index: 7, kind: input, shape index: {}]
  %s8 = inlined_call_operand.vmem [shape: bf16[128,16], index: 8, kind: input, shape index: {}]
  %s9 = inlined_call_operand.vmem [shape: f32[1,128], index: 9, kind: input, shape index: {}]
  %s10 = inlined_call_operand.hbm [shape: bf16[128,1024], index: 10, kind: input, shape index: {}]
  %s11 = inlined_call_operand.vmem [shape: bf16[128,16], index: 11, kind: input, shape index: {}]
  %s12 = inlined_call_operand.vmem [shape: f32[1,128], index: 12, kind: input, shape index: {}]
  %s13 = inlined_call_operand.hbm [shape: bf16[128,128], index: 13, kind: input, shape index: {}]
  %s14 = inlined_call_operand.vmem [shape: bf16[128,2], index: 14, kind: input, shape index: {}]
  %s15 = inlined_call_operand.hbm [shape: f32[1,128], index: 15, kind: input, shape index: {}]
  %s16 = inlined_call_operand.vmem [shape: bf16[128,10], index: 16, kind: input, shape index: {}]
  %s17 = inlined_call_operand.hbm [shape: f32[4,2,10], index: 17, kind: output, shape index: {}]
  %s18 = sld [smem:[#allocation0]]
  $region133: #{tpu_custom_call.1} parent=0
    _
  %s20 = ssub.s32 1, %s18
  %s21 = scalar_select 0, %s20, %s18
  $region1: #{tpu_custom_call.1} parent=0
    #allocation2 [shape = 'u8[32768]{0}', space=vmem, size = 0x8000, scoped, tag = 'input window, operand 0']
    #allocation3 [shape = 's32[2]{0}', space=sflag, size = 0x8, scoped, tag = 'scoped memory for tpu_custom_call.1']
    #allocation4 [shape = 's32[2]{0}', space=sflag, size = 0x8, scoped, tag = 'scoped memory for tpu_custom_call.1']
    #allocation5 [shape = 'u8[32768]{0}', space=vmem, size = 0x8000, scoped, tag = 'input window, operand 1']
    #allocation6 [shape = 's32[2]{0}', space=sflag, size = 0x8, scoped, tag = 'scoped memory for tpu_custom_call.1']
    #allocation7 [shape = 'u8[32768]{0}', space=vmem, size = 0x8000, scoped, tag = 'input window, operand 5, single buffered']
    #allocation8 [shape = 'u8[512]{0}', space=vmem, size = 0x400, scoped, tag = 'input window, operand 6, single buffered']
    #allocation9 [shape = 's32[1]{0}', space=sflag, size = 0x4, scoped, tag = 'scoped memory for tpu_custom_call.1']
    #allocation10 [shape = 'u8[262144]{0}', space=vmem, size = 0x40000, scoped, tag = 'input window, operand 7, single buffered']
    #allocation11 [shape = 'u8[262144]{0}', space=vmem, size = 0x40000, scoped, tag = 'input window, operand 10, single buffered']
    #allocation12 [shape = 's32[1]{0}', space=sflag, size = 0x4, scoped, tag = 'scoped memory for tpu_custom_call.1']
    #allocation13 [shape = 'u8[32768]{0}', space=vmem, size = 0x8000, scoped, tag = 'input window, operand 13, single buffered']
    #allocation14 [shape = 'u8[512]{0}', space=vmem, size = 0x400, scoped, tag = 'input window, operand 15, single buffered']
    #allocation15 [shape = 's32[1]{0}', space=sflag, size = 0x4, scoped, tag = 'scoped memory for tpu_custom_call.1']
    #allocation16 [shape = 'u8[2048]{0}', space=vmem, size = 0x800, scoped, tag = 'output window, operand 0']
    %22 = vsyncpa [#allocation3], 0
    %s23 = scalar_lea.sflag [#allocation3], 1
    %24 = vsyncpa %s23, 0
    %25 = vsyncpa [#allocation6], 0
    %s26 = scalar_lea.sflag [#allocation6], 1
    %27 = vsyncpa %s26, 0
    %28 = vsyncpa [#allocation9], 0
    %29 = vsyncpa [#allocation12], 0
    %30 = vsyncpa [#allocation15], 0
    %31 = vsyncpa [#allocation4], 0
    %s32 = scalar_lea.sflag [#allocation4], 1
    %33 = vsyncpa %s32, 0
    loop: start=0, step=1, limit=6
    $region2: #{tpu_custom_call.1} parent=1 // loop_pre_header
      _
    $region3: #{tpu_custom_call.1} parent=1 // loop_header
      %s35 = sphi 0, %s39
      %p36 = scmp.ge.s32.totalorder %s35, 6
      %s45 = sphi 0, %s47
      %s48 = sphi 0, %s45
      %s49 = sphi 0, %s48
      %s65 = sphi 0, %s49
      %s71 = sphi 0, %s73
      %s74 = sphi 0, %s71
      %s75 = sphi 0, %s74
      %s91 = sphi 0, %s75
      %s97 = sphi 0, %s99
      %s100 = sphi 0, %s97
      %s101 = sphi 0, %s100
      %s117 = sphi 0, %s101
      %s121 = sphi 0, %s121
      %s123 = sphi 0, %s121
      %s124 = sphi 0, %s123
      %s138 = sphi 0, %s124
      %s142 = sphi 0, %s142
      %s144 = sphi 0, %s142
      %s145 = sphi 0, %s144
      %s159 = sphi 0, %s145
      %s163 = sphi 0, %s163
      %s165 = sphi 0, %s163
      %s166 = sphi 0, %s165
      %s180 = sphi 0, %s166
      %s184 = sphi 0, %s184
      %s186 = sphi 0, %s184
      %s187 = sphi 0, %s186
      %s201 = sphi 0, %s187
      %s205 = sphi 0, %s205
      %s207 = sphi 0, %s205
      %s208 = sphi 0, %s207
      %s222 = sphi 0, %s208
      %s226 = sphi 0, %s226
      %s228 = sphi 0, %s226
      %s229 = sphi 0, %s228
      %s243 = sphi 0, %s229
      %s247 = sphi 0, %s247
      %s249 = sphi 0, %s247
      %s250 = sphi 0, %s249
      %s264 = sphi 0, %s250
      %s268 = sphi 0, %s268
      %s270 = sphi 0, %s268
      %s271 = sphi 0, %s270
      %s285 = sphi 0, %s271
      %s289 = sphi 0, %s289
      %s291 = sphi 0, %s289
      %s292 = sphi 0, %s291
      %s306 = sphi 0, %s292
      %s310 = sphi 0, %s310
      %s312 = sphi 0, %s310
      %s313 = sphi 0, %s312
      %s327 = sphi 0, %s313
      %s331 = sphi 0, %s331
      %s333 = sphi 0, %s331
      %s334 = sphi 0, %s333
      %s348 = sphi 0, %s334
      %s352 = sphi 0, %s352
      %s354 = sphi 0, %s352
      %s355 = sphi 0, %s354
      %s369 = sphi 0, %s355
      %s373 = sphi 0, %s373
      %s375 = sphi 0, %s373
      %s376 = sphi 0, %s375
      %s390 = sphi 0, %s376
      %s394 = sphi 0, %s394
      %s396 = sphi 0, %s394
      %s397 = sphi 0, %s396
      %s411 = sphi 0, %s397
      %s417 = sphi 0, %s419
      %s420 = sphi 0, %s417
      %s421 = sphi 0, %s420
      %s437 = sphi 0, %s421
    $region4: #{tpu_custom_call.1} parent=1 // loop_header_branch
      %38 = sbr.rel (%p36) target = $region8
    $region5: #{tpu_custom_call.1} parent=1 // loop_body
      %s40 = ssub.s32 %s35, 1
      %s41 = ssub.s32 %s35, 2
      %s42 = sadd.s32 %s35, 1
      %s43 = ssub.s32 %s35, %s42
      %p44 = scmp.eq.s32.totalorder %s43, 0
      %s46 = sadd.s32 %s45, 1
      %s47 = scalar_select %p44, %s45, %s46
      %p50 = pneg %p44
      %p51 = scmp.eq.s32.totalorder %s35, 3
      %p52 = por %p50, %p51
      %p53 = scmp.ne.s32.totalorder %s45, %s48
      %p54 = scmp.eq.s32.totalorder %s35, 0
      %p55 = por %p53, %p54
      %p56 = scmp.ne.s32.totalorder %s45, %s48
      %p57 = scmp.eq.s32.totalorder %s40, 3
      %p58 = por %p56, %p57
      %p59 = scmp.ne.s32.totalorder %s48, %s49
      %p60 = scmp.eq.s32.totalorder %s40, 0
      %p61 = por %p59, %p60
      %p62 = scmp.ne.s32.totalorder %s48, %s49
      %p63 = scmp.eq.s32.totalorder %s41, 3
      %p64 = por %p62, %p63
      %p66 = scmp.ne.s32.totalorder %s49, %s65
      %p67 = scmp.eq.s32.totalorder %s41, 0
      %p68 = por %p66, %p67
      %s69 = ssub.s32 %s35, %s42
      %p70 = scmp.eq.s32.totalorder %s69, 0
      %s72 = sadd.s32 %s71, 1
      %s73 = scalar_select %p70, %s71, %s72
      %p76 = pneg %p70
      %p77 = scmp.eq.s32.totalorder %s35, 3
      %p78 = por %p76, %p77
      %p79 = scmp.ne.s32.totalorder %s71, %s74
      %p80 = scmp.eq.s32.totalorder %s35, 0
      %p81 = por %p79, %p80
      %p82 = scmp.ne.s32.totalorder %s71, %s74
      %p83 = scmp.eq.s32.totalorder %s40, 3
      %p84 = por %p82, %p83
      %p85 = scmp.ne.s32.totalorder %s74, %s75
      %p86 = scmp.eq.s32.totalorder %s40, 0
      %p87 = por %p85, %p86
      %p88 = scmp.ne.s32.totalorder %s74, %s75
      %p89 = scmp.eq.s32.totalorder %s41, 3
      %p90 = por %p88, %p89
      %p92 = scmp.ne.s32.totalorder %s75, %s91
      %p93 = scmp.eq.s32.totalorder %s41, 0
      %p94 = por %p92, %p93
      %s95 = ssub.s32 %s35, %s42
      %p96 = scmp.eq.s32.totalorder %s95, 0
      %s98 = sadd.s32 %s97, 1
      %s99 = scalar_select %p96, %s97, %s98
      %p102 = pneg %p96
      %p103 = scmp.eq.s32.totalorder %s35, 3
      %p104 = por %p102, %p103
      %p105 = scmp.ne.s32.totalorder %s97, %s100
      %p106 = scmp.eq.s32.totalorder %s35, 0
      %p107 = por %p105, %p106
      %p108 = scmp.ne.s32.totalorder %s97, %s100
      %p109 = scmp.eq.s32.totalorder %s40, 3
      %p110 = por %p108, %p109
      %p111 = scmp.ne.s32.totalorder %s100, %s101
      %p112 = scmp.eq.s32.totalorder %s40, 0
      %p113 = por %p111, %p112
      %p114 = scmp.ne.s32.totalorder %s100, %s101
      %p115 = scmp.eq.s32.totalorder %s41, 3
      %p116 = por %p114, %p115
      %p118 = scmp.ne.s32.totalorder %s101, %s117
      %p119 = scmp.eq.s32.totalorder %s41, 0
      %p120 = por %p118, %p119
      %s122 = sadd.s32 %s121, 1
      %p125 = scmp.eq.s32.totalorder %s35, 3
      %p126 = scmp.ne.s32.totalorder %s121, %s123
      %p127 = scmp.eq.s32.totalorder %s35, 0
      %p128 = por %p126, %p127
      %p129 = scmp.ne.s32.totalorder %s121, %s123
      %p130 = scmp.eq.s32.totalorder %s40, 3
      %p131 = por %p129, %p130
      %p132 = scmp.ne.s32.totalorder %s123, %s124
      %p133 = scmp.eq.s32.totalorder %s40, 0
      %p134 = por %p132, %p133
      %p135 = scmp.ne.s32.totalorder %s123, %s124
      %p136 = scmp.eq.s32.totalorder %s41, 3
      %p137 = por %p135, %p136
      %p139 = scmp.ne.s32.totalorder %s124, %s138
      %p140 = scmp.eq.s32.totalorder %s41, 0
      %p141 = por %p139, %p140
      %s143 = sadd.s32 %s142, 1
      %p146 = scmp.eq.s32.totalorder %s35, 3
      %p147 = scmp.ne.s32.totalorder %s142, %s144
      %p148 = scmp.eq.s32.totalorder %s35, 0
      %p149 = por %p147, %p148
      %p150 = scmp.ne.s32.totalorder %s142, %s144
      %p151 = scmp.eq.s32.totalorder %s40, 3
      %p152 = por %p150, %p151
      %p153 = scmp.ne.s32.totalorder %s144, %s145
      %p154 = scmp.eq.s32.totalorder %s40, 0
      %p155 = por %p153, %p154
      %p156 = scmp.ne.s32.totalorder %s144, %s145
      %p157 = scmp.eq.s32.totalorder %s41, 3
      %p158 = por %p156, %p157
      %p160 = scmp.ne.s32.totalorder %s145, %s159
      %p161 = scmp.eq.s32.totalorder %s41, 0
      %p162 = por %p160, %p161
      %s164 = sadd.s32 %s163, 1
      %p167 = scmp.eq.s32.totalorder %s35, 3
      %p168 = scmp.ne.s32.totalorder %s163, %s165
      %p169 = scmp.eq.s32.totalorder %s35, 0
      %p170 = por %p168, %p169
      %p171 = scmp.ne.s32.totalorder %s163, %s165
      %p172 = scmp.eq.s32.totalorder %s40, 3
      %p173 = por %p171, %p172
      %p174 = scmp.ne.s32.totalorder %s165, %s166
      %p175 = scmp.eq.s32.totalorder %s40, 0
      %p176 = por %p174, %p175
      %p177 = scmp.ne.s32.totalorder %s165, %s166
      %p178 = scmp.eq.s32.totalorder %s41, 3
      %p179 = por %p177, %p178
      %p181 = scmp.ne.s32.totalorder %s166, %s180
      %p182 = scmp.eq.s32.totalorder %s41, 0
      %p183 = por %p181, %p182
      %s185 = sadd.s32 %s184, 1
      %p188 = scmp.eq.s32.totalorder %s35, 3
      %p189 = scmp.ne.s32.totalorder %s184, %s186
      %p190 = scmp.eq.s32.totalorder %s35, 0
      %p191 = por %p189, %p190
      %p192 = scmp.ne.s32.totalorder %s184, %s186
      %p193 = scmp.eq.s32.totalorder %s40, 3
      %p194 = por %p192, %p193
      %p195 = scmp.ne.s32.totalorder %s186, %s187
      %p196 = scmp.eq.s32.totalorder %s40, 0
      %p197 = por %p195, %p196
      %p198 = scmp.ne.s32.totalorder %s186, %s187
      %p199 = scmp.eq.s32.totalorder %s41, 3
      %p200 = por %p198, %p199
      %p202 = scmp.ne.s32.totalorder %s187, %s201
      %p203 = scmp.eq.s32.totalorder %s41, 0
      %p204 = por %p202, %p203
      %s206 = sadd.s32 %s205, 1
      %p209 = scmp.eq.s32.totalorder %s35, 3
      %p210 = scmp.ne.s32.totalorder %s205, %s207
      %p211 = scmp.eq.s32.totalorder %s35, 0
      %p212 = por %p210, %p211
      %p213 = scmp.ne.s32.totalorder %s205, %s207
      %p214 = scmp.eq.s32.totalorder %s40, 3
      %p215 = por %p213, %p214
      %p216 = scmp.ne.s32.totalorder %s207, %s208
      %p217 = scmp.eq.s32.totalorder %s40, 0
      %p218 = por %p216, %p217
      %p219 = scmp.ne.s32.totalorder %s207, %s208
      %p220 = scmp.eq.s32.totalorder %s41, 3
      %p221 = por %p219, %p220
      %p223 = scmp.ne.s32.totalorder %s208, %s222
      %p224 = scmp.eq.s32.totalorder %s41, 0
      %p225 = por %p223, %p224
      %s227 = sadd.s32 %s226, 1
      %p230 = scmp.eq.s32.totalorder %s35, 3
      %p231 = scmp.ne.s32.totalorder %s226, %s228
      %p232 = scmp.eq.s32.totalorder %s35, 0
      %p233 = por %p231, %p232
      %p234 = scmp.ne.s32.totalorder %s226, %s228
      %p235 = scmp.eq.s32.totalorder %s40, 3
      %p236 = por %p234, %p235
      %p237 = scmp.ne.s32.totalorder %s228, %s229
      %p238 = scmp.eq.s32.totalorder %s40, 0
      %p239 = por %p237, %p238
      %p240 = scmp.ne.s32.totalorder %s228, %s229
      %p241 = scmp.eq.s32.totalorder %s41, 3
      %p242 = por %p240, %p241
      %p244 = scmp.ne.s32.totalorder %s229, %s243
      %p245 = scmp.eq.s32.totalorder %s41, 0
      %p246 = por %p244, %p245
      %s248 = sadd.s32 %s247, 1
      %p251 = scmp.eq.s32.totalorder %s35, 3
      %p252 = scmp.ne.s32.totalorder %s247, %s249
      %p253 = scmp.eq.s32.totalorder %s35, 0
      %p254 = por %p252, %p253
      %p255 = scmp.ne.s32.totalorder %s247, %s249
      %p256 = scmp.eq.s32.totalorder %s40, 3
      %p257 = por %p255, %p256
      %p258 = scmp.ne.s32.totalorder %s249, %s250
      %p259 = scmp.eq.s32.totalorder %s40, 0
      %p260 = por %p258, %p259
      %p261 = scmp.ne.s32.totalorder %s249, %s250
      %p262 = scmp.eq.s32.totalorder %s41, 3
      %p263 = por %p261, %p262
      %p265 = scmp.ne.s32.totalorder %s250, %s264
      %p266 = scmp.eq.s32.totalorder %s41, 0
      %p267 = por %p265, %p266
      %s269 = sadd.s32 %s268, 1
      %p272 = scmp.eq.s32.totalorder %s35, 3
      %p273 = scmp.ne.s32.totalorder %s268, %s270
      %p274 = scmp.eq.s32.totalorder %s35, 0
      %p275 = por %p273, %p274
      %p276 = scmp.ne.s32.totalorder %s268, %s270
      %p277 = scmp.eq.s32.totalorder %s40, 3
      %p278 = por %p276, %p277
      %p279 = scmp.ne.s32.totalorder %s270, %s271
      %p280 = scmp.eq.s32.totalorder %s40, 0
      %p281 = por %p279, %p280
      %p282 = scmp.ne.s32.totalorder %s270, %s271
      %p283 = scmp.eq.s32.totalorder %s41, 3
      %p284 = por %p282, %p283
      %p286 = scmp.ne.s32.totalorder %s271, %s285
      %p287 = scmp.eq.s32.totalorder %s41, 0
      %p288 = por %p286, %p287
      %s290 = sadd.s32 %s289, 1
      %p293 = scmp.eq.s32.totalorder %s35, 3
      %p294 = scmp.ne.s32.totalorder %s289, %s291
      %p295 = scmp.eq.s32.totalorder %s35, 0
      %p296 = por %p294, %p295
      %p297 = scmp.ne.s32.totalorder %s289, %s291
      %p298 = scmp.eq.s32.totalorder %s40, 3
      %p299 = por %p297, %p298
      %p300 = scmp.ne.s32.totalorder %s291, %s292
      %p301 = scmp.eq.s32.totalorder %s40, 0
      %p302 = por %p300, %p301
      %p303 = scmp.ne.s32.totalorder %s291, %s292
      %p304 = scmp.eq.s32.totalorder %s41, 3
      %p305 = por %p303, %p304
      %p307 = scmp.ne.s32.totalorder %s292, %s306
      %p308 = scmp.eq.s32.totalorder %s41, 0
      %p309 = por %p307, %p308
      %s311 = sadd.s32 %s310, 1
      %p314 = scmp.eq.s32.totalorder %s35, 3
      %p315 = scmp.ne.s32.totalorder %s310, %s312
      %p316 = scmp.eq.s32.totalorder %s35, 0
      %p317 = por %p315, %p316
      %p318 = scmp.ne.s32.totalorder %s310, %s312
      %p319 = scmp.eq.s32.totalorder %s40, 3
      %p320 = por %p318, %p319
      %p321 = scmp.ne.s32.totalorder %s312, %s313
      %p322 = scmp.eq.s32.totalorder %s40, 0
      %p323 = por %p321, %p322
      %p324 = scmp.ne.s32.totalorder %s312, %s313
      %p325 = scmp.eq.s32.totalorder %s41, 3
      %p326 = por %p324, %p325
      %p328 = scmp.ne.s32.totalorder %s313, %s327
      %p329 = scmp.eq.s32.totalorder %s41, 0
      %p330 = por %p328, %p329
      %s332 = sadd.s32 %s331, 1
      %p335 = scmp.eq.s32.totalorder %s35, 3
      %p336 = scmp.ne.s32.totalorder %s331, %s333
      %p337 = scmp.eq.s32.totalorder %s35, 0
      %p338 = por %p336, %p337
      %p339 = scmp.ne.s32.totalorder %s331, %s333
      %p340 = scmp.eq.s32.totalorder %s40, 3
      %p341 = por %p339, %p340
      %p342 = scmp.ne.s32.totalorder %s333, %s334
      %p343 = scmp.eq.s32.totalorder %s40, 0
      %p344 = por %p342, %p343
      %p345 = scmp.ne.s32.totalorder %s333, %s334
      %p346 = scmp.eq.s32.totalorder %s41, 3
      %p347 = por %p345, %p346
      %p349 = scmp.ne.s32.totalorder %s334, %s348
      %p350 = scmp.eq.s32.totalorder %s41, 0
      %p351 = por %p349, %p350
      %s353 = sadd.s32 %s352, 1
      %p356 = scmp.eq.s32.totalorder %s35, 3
      %p357 = scmp.ne.s32.totalorder %s352, %s354
      %p358 = scmp.eq.s32.totalorder %s35, 0
      %p359 = por %p357, %p358
      %p360 = scmp.ne.s32.totalorder %s352, %s354
      %p361 = scmp.eq.s32.totalorder %s40, 3
      %p362 = por %p360, %p361
      %p363 = scmp.ne.s32.totalorder %s354, %s355
      %p364 = scmp.eq.s32.totalorder %s40, 0
      %p365 = por %p363, %p364
      %p366 = scmp.ne.s32.totalorder %s354, %s355
      %p367 = scmp.eq.s32.totalorder %s41, 3
      %p368 = por %p366, %p367
      %p370 = scmp.ne.s32.totalorder %s355, %s369
      %p371 = scmp.eq.s32.totalorder %s41, 0
      %p372 = por %p370, %p371
      %s374 = sadd.s32 %s373, 1
      %p377 = scmp.eq.s32.totalorder %s35, 3
      %p378 = scmp.ne.s32.totalorder %s373, %s375
      %p379 = scmp.eq.s32.totalorder %s35, 0
      %p380 = por %p378, %p379
      %p381 = scmp.ne.s32.totalorder %s373, %s375
      %p382 = scmp.eq.s32.totalorder %s40, 3
      %p383 = por %p381, %p382
      %p384 = scmp.ne.s32.totalorder %s375, %s376
      %p385 = scmp.eq.s32.totalorder %s40, 0
      %p386 = por %p384, %p385
      %p387 = scmp.ne.s32.totalorder %s375, %s376
      %p388 = scmp.eq.s32.totalorder %s41, 3
      %p389 = por %p387, %p388
      %p391 = scmp.ne.s32.totalorder %s376, %s390
      %p392 = scmp.eq.s32.totalorder %s41, 0
      %p393 = por %p391, %p392
      %s395 = sadd.s32 %s394, 1
      %p398 = scmp.eq.s32.totalorder %s35, 3
      %p399 = scmp.ne.s32.totalorder %s394, %s396
      %p400 = scmp.eq.s32.totalorder %s35, 0
      %p401 = por %p399, %p400
      %p402 = scmp.ne.s32.totalorder %s394, %s396
      %p403 = scmp.eq.s32.totalorder %s40, 3
      %p404 = por %p402, %p403
      %p405 = scmp.ne.s32.totalorder %s396, %s397
      %p406 = scmp.eq.s32.totalorder %s40, 0
      %p407 = por %p405, %p406
      %p408 = scmp.ne.s32.totalorder %s396, %s397
      %p409 = scmp.eq.s32.totalorder %s41, 3
      %p410 = por %p408, %p409
      %p412 = scmp.ne.s32.totalorder %s397, %s411
      %p413 = scmp.eq.s32.totalorder %s41, 0
      %p414 = por %p412, %p413
      %s415 = ssub.s32 %s35, %s42
      %p416 = scmp.eq.s32.totalorder %s415, 0
      %s418 = sadd.s32 %s417, 1
      %s419 = scalar_select %p416, %s417, %s418
      %p422 = pneg %p416
      %p423 = scmp.eq.s32.totalorder %s35, 3
      %p424 = por %p422, %p423
      %p425 = scmp.ne.s32.totalorder %s417, %s420
      %p426 = scmp.eq.s32.totalorder %s35, 0
      %p427 = por %p425, %p426
      %p428 = scmp.ne.s32.totalorder %s417, %s420
      %p429 = scmp.eq.s32.totalorder %s40, 3
      %p430 = por %p428, %p429
      %p431 = scmp.ne.s32.totalorder %s420, %s421
      %p432 = scmp.eq.s32.totalorder %s40, 0
      %p433 = por %p431, %p432
      %p434 = scmp.ne.s32.totalorder %s420, %s421
      %p435 = scmp.eq.s32.totalorder %s41, 3
      %p436 = por %p434, %p435
      %p438 = scmp.ne.s32.totalorder %s421, %s437
      %p439 = scmp.eq.s32.totalorder %s41, 0
      %p440 = por %p438, %p439
      %p441 = scmp.le.s32.totalorder 1, %s35
      %p442 = scmp.lt.s32.totalorder %s35, 5
      %p443 = pnand %p441, %p442
      %p444 = pneg %p443
      // Predicated region
      $region9: #{tpu_custom_call.1} parent=5 // pred_check
        _
      $region10: #{tpu_custom_call.1} parent=5 // pred_check_branch
        %446 = sbr.rel (%p443) target = $region12
      $region11: #{tpu_custom_call.1} parent=5 // pred_region
        %s447 = ssub.s32 %s35, 1
        // Predicated region
        $region13: #{tpu_custom_call.1} parent=11 // pred_check
          %p448 = pneg %p134
        $region14: #{tpu_custom_call.1} parent=11 // pred_check_branch
          %450 = sbr.rel (%p448) target = $region16
        $region15: #{tpu_custom_call.1} parent=11 // pred_region
          _
        $region16: #{tpu_custom_call.1} parent=11 // pred_fallthru
          _
        // Predicated region
        $region17: #{tpu_custom_call.1} parent=11 // pred_check
          %p451 = pneg %p155
        $region18: #{tpu_custom_call.1} parent=11 // pred_check_branch
          %453 = sbr.rel (%p451) target = $region20
        $region19: #{tpu_custom_call.1} parent=11 // pred_region
          _
        $region20: #{tpu_custom_call.1} parent=11 // pred_fallthru
          _
        // Predicated region
        $region21: #{tpu_custom_call.1} parent=11 // pred_check
          %p454 = pneg %p176
        $region22: #{tpu_custom_call.1} parent=11 // pred_check_branch
          %456 = sbr.rel (%p454) target = $region24
        $region23: #{tpu_custom_call.1} parent=11 // pred_region
          %s458 = ssub.s32 1024, 1024
          %459 = vsyncadd [#allocation6], %s458
          %s460 = sshll.u32 [#allocation7], 4
          %s461 = int_to_ptr.vmem [resolvable:$true] %s460
          %466 = dma.hbm_to_vmem [thread:$0]  %s5, 1024, %s461, [#allocation6], 64, 64, 4
        $region24: #{tpu_custom_call.1} parent=11 // pred_fallthru
          _
        // Predicated region
        $region25: #{tpu_custom_call.1} parent=11 // pred_check
          %p467 = pneg %p197
        $region26: #{tpu_custom_call.1} parent=11 // pred_check_branch
          %469 = sbr.rel (%p467) target = $region28
        $region27: #{tpu_custom_call.1} parent=11 // pred_region
          %s471 = ssub.s32 16, 16
          %472 = vsyncadd [#allocation9], %s471
          %s474 = sshll.u32 [#allocation8], 4
          %s475 = int_to_ptr.vmem [resolvable:$true] %s474
          %477 = dma.hbm_to_vmem [thread:$0]  %s6, 16, %s475, [#allocation9]
        $region28: #{tpu_custom_call.1} parent=11 // pred_fallthru
          _
        // Predicated region
        $region29: #{tpu_custom_call.1} parent=11 // pred_check
          %p478 = pneg %p218
        $region30: #{tpu_custom_call.1} parent=11 // pred_check_branch
          %480 = sbr.rel (%p478) target = $region32
        $region31: #{tpu_custom_call.1} parent=11 // pred_region
          %s482 = ssub.s32 8192, 8192
          %483 = vsyncadd [#allocation9], %s482
          %s484 = sshll.u32 [#allocation10], 4
          %s485 = int_to_ptr.vmem [resolvable:$true] %s484
          %490 = dma.hbm_to_vmem [thread:$0]  %s7, 8192, %s485, [#allocation9], 512, 512, 32
        $region32: #{tpu_custom_call.1} parent=11 // pred_fallthru
          _
        // Predicated region
        $region33: #{tpu_custom_call.1} parent=11 // pred_check
          %p491 = pneg %p239
        $region34: #{tpu_custom_call.1} parent=11 // pred_check_branch
          %493 = sbr.rel (%p491) target = $region36
        $region35: #{tpu_custom_call.1} parent=11 // pred_region
          _
        $region36: #{tpu_custom_call.1} parent=11 // pred_fallthru
          _
        // Predicated region
        $region37: #{tpu_custom_call.1} parent=11 // pred_check
          %p494 = pneg %p260
        $region38: #{tpu_custom_call.1} parent=11 // pred_check_branch
          %496 = sbr.rel (%p494) target = $region40
        $region39: #{tpu_custom_call.1} parent=11 // pred_region
          _
        $region40: #{tpu_custom_call.1} parent=11 // pred_fallthru
          _
        // Predicated region
        $region41: #{tpu_custom_call.1} parent=11 // pred_check
          %p497 = pneg %p281
        $region42: #{tpu_custom_call.1} parent=11 // pred_check_branch
          %499 = sbr.rel (%p497) target = $region44
        $region43: #{tpu_custom_call.1} parent=11 // pred_region
          %s501 = ssub.s32 8192, 8192
          %502 = vsyncadd [#allocation12], %s501
          %s503 = sshll.u32 [#allocation11], 4
          %s504 = int_to_ptr.vmem [resolvable:$true] %s503
          %509 = dma.hbm_to_vmem [thread:$0]  %s10, 8192, %s504, [#allocation12], 512, 512, 32
        $region44: #{tpu_custom_call.1} parent=11 // pred_fallthru
          _
        // Predicated region
        $region45: #{tpu_custom_call.1} parent=11 // pred_check
          %p510 = pneg %p302
        $region46: #{tpu_custom_call.1} parent=11 // pred_check_branch
          %512 = sbr.rel (%p510) target = $region48
        $region47: #{tpu_custom_call.1} parent=11 // pred_region
          _
        $region48: #{tpu_custom_call.1} parent=11 // pred_fallthru
          _
        // Predicated region
        $region49: #{tpu_custom_call.1} parent=11 // pred_check
          %p513 = pneg %p323
        $region50: #{tpu_custom_call.1} parent=11 // pred_check_branch
          %515 = sbr.rel (%p513) target = $region52
        $region51: #{tpu_custom_call.1} parent=11 // pred_region
          _
        $region52: #{tpu_custom_call.1} parent=11 // pred_fallthru
          _
        // Predicated region
        $region53: #{tpu_custom_call.1} parent=11 // pred_check
          %p516 = pneg %p344
        $region54: #{tpu_custom_call.1} parent=11 // pred_check_branch
          %518 = sbr.rel (%p516) target = $region56
        $region55: #{tpu_custom_call.1} parent=11 // pred_region
          %s520 = ssub.s32 1024, 1024
          %521 = vsyncadd [#allocation12], %s520
          %s522 = sshll.u32 [#allocation13], 4
          %s523 = int_to_ptr.vmem [resolvable:$true] %s522
          %528 = dma.hbm_to_vmem [thread:$0]  %s13, 1024, %s523, [#allocation12], 64, 64, 4
        $region56: #{tpu_custom_call.1} parent=11 // pred_fallthru
          _
        // Predicated region
        $region57: #{tpu_custom_call.1} parent=11 // pred_check
          %p529 = pneg %p365
        $region58: #{tpu_custom_call.1} parent=11 // pred_check_branch
          %531 = sbr.rel (%p529) target = $region60
        $region59: #{tpu_custom_call.1} parent=11 // pred_region
          _
        $region60: #{tpu_custom_call.1} parent=11 // pred_fallthru
          _
        // Predicated region
        $region61: #{tpu_custom_call.1} parent=11 // pred_check
          %p532 = pneg %p386
        $region62: #{tpu_custom_call.1} parent=11 // pred_check_branch
          %534 = sbr.rel (%p532) target = $region64
        $region63: #{tpu_custom_call.1} parent=11 // pred_region
          %s536 = ssub.s32 16, 16
          %537 = vsyncadd [#allocation15], %s536
          %s539 = sshll.u32 [#allocation14], 4
          %s540 = int_to_ptr.vmem [resolvable:$true] %s539
          %542 = dma.hbm_to_vmem [thread:$0]  %s15, 16, %s540, [#allocation15]
        $region64: #{tpu_custom_call.1} parent=11 // pred_fallthru
          _
        // Predicated region
        $region65: #{tpu_custom_call.1} parent=11 // pred_check
          %p543 = pneg %p407
        $region66: #{tpu_custom_call.1} parent=11 // pred_check_branch
          %545 = sbr.rel (%p543) target = $region68
        $region67: #{tpu_custom_call.1} parent=11 // pred_region
          _
        $region68: #{tpu_custom_call.1} parent=11 // pred_fallthru
          _
      $region12: #{tpu_custom_call.1} parent=5 // pred_fallthru
        _
      %p546 = scmp.lt.s32.totalorder %s35, 4
      // Predicated region
      $region69: #{tpu_custom_call.1} parent=5 // pred_check
        %p547 = pneg %p546
      $region70: #{tpu_custom_call.1} parent=5 // pred_check_branch
        %549 = sbr.rel (%p547) target = $region72
      $region71: #{tpu_custom_call.1} parent=5 // pred_region
        // Predicated region
        $region73: #{tpu_custom_call.1} parent=71 // pred_check
          %p550 = pneg %p55
        $region74: #{tpu_custom_call.1} parent=71 // pred_check_branch
          %552 = sbr.rel (%p550) target = $region76
        $region75: #{tpu_custom_call.1} parent=71 // pred_region
          %s553 = sand.u32 %s45, 1
          %s554 = scalar_lea.sflag [#allocation3], %s553
          %s555 = sand.u32 %s45, 1
          %s556 = smul.addr %s555, 32
          %s557 = scalar_lea.vmem [#allocation2], %s556
          %s559 = ssub.s32 512, 512
          %560 = vsyncadd %s554, %s559
          %s561 = smul.addr %s35, 8
          %s562 = smul.addr %s561, 64
          %s563 = scalar_lea.hbm %s0, %s562
          %s564 = sshll.u32 %s557, 4
          %s565 = int_to_ptr.vmem [resolvable:$true] %s564
          %570 = dma.hbm_to_vmem [thread:$0]  %s563, 512, %s565, %s554, 64, 64, 4
        $region76: #{tpu_custom_call.1} parent=71 // pred_fallthru
          _
        // Predicated region
        $region77: #{tpu_custom_call.1} parent=71 // pred_check
          %p571 = pneg %p81
        $region78: #{tpu_custom_call.1} parent=71 // pred_check_branch
          %573 = sbr.rel (%p571) target = $region80
        $region79: #{tpu_custom_call.1} parent=71 // pred_region
          %s574 = sand.u32 %s35, 1
          %s575 = scalar_lea.sflag [#allocation6], %s574
          %s576 = sand.u32 %s71, 1
          %s577 = smul.addr %s576, 32
          %s578 = scalar_lea.vmem [#allocation5], %s577
          %s580 = ssub.s32 512, 512
          %581 = vsyncadd %s575, %s580
          %s582 = smul.addr %s35, 8
          %s583 = smul.addr %s582, 64
          %s584 = scalar_lea.hbm %s1, %s583
          %s585 = sshll.u32 %s578, 4
          %s586 = int_to_ptr.vmem [resolvable:$true] %s585
          %591 = dma.hbm_to_vmem [thread:$0]  %s584, 512, %s586, %s575, 64, 64, 4
        $region80: #{tpu_custom_call.1} parent=71 // pred_fallthru
          _
        // Predicated region
        $region81: #{tpu_custom_call.1} parent=71 // pred_check
          %p592 = pneg %p107
        $region82: #{tpu_custom_call.1} parent=71 // pred_check_branch
          %594 = sbr.rel (%p592) target = $region84
        $region83: #{tpu_custom_call.1} parent=71 // pred_region
          %p595 = scmp.lt.s32.totalorder %s35, 3
          %s596 = scalar_select %p595, %s35, 3
          %s597 = smul.addr %s596, 32
          %s598 = smul.addr %s597, 4
          %s599 = scalar_lea.vmem %s2, %s598
        $region84: #{tpu_custom_call.1} parent=71 // pred_fallthru
          _
      $region72: #{tpu_custom_call.1} parent=5 // pred_fallthru
        _
      %p600 = scmp.le.s32.totalorder 1, %s35
      %p601 = scmp.lt.s32.totalorder %s35, 5
      %p602 = pnand %p600, %p601
      %p603 = pneg %p602
      // Predicated region
      $region85: #{tpu_custom_call.1} parent=5 // pred_check
        _
      $region86: #{tpu_custom_call.1} parent=5 // pred_check_branch
        %605 = sbr.rel (%p602) target = $region88
      $region87: #{tpu_custom_call.1} parent=5 // pred_region
        %s606 = ssub.s32 %s35, 1
        %s607 = sand.u32 %s48, 1
        %s608 = scalar_lea.sflag [#allocation3], %s607
        %s609 = sand.u32 %s48, 1
        %s610 = smul.addr %s609, 32
        %s611 = scalar_lea.vmem [#allocation2], %s610
        // Predicated region
        $region89: #{tpu_custom_call.1} parent=87 // pred_check
          %p612 = pneg %p61
        $region90: #{tpu_custom_call.1} parent=87 // pred_check_branch
          %614 = sbr.rel (%p612) target = $region92
        $region91: #{tpu_custom_call.1} parent=87 // pred_region
          %615 = dma.done %s608, 512
        $region92: #{tpu_custom_call.1} parent=87 // pred_fallthru
          _
        %s616 = sand.u32 %s40, 1
        %s617 = scalar_lea.sflag [#allocation6], %s616
        %s618 = sand.u32 %s74, 1
        %s619 = smul.addr %s618, 32
        %s620 = scalar_lea.vmem [#allocation5], %s619
        // Predicated region
        $region93: #{tpu_custom_call.1} parent=87 // pred_check
          %p621 = pneg %p87
        $region94: #{tpu_custom_call.1} parent=87 // pred_check_branch
          %623 = sbr.rel (%p621) target = $region96
        $region95: #{tpu_custom_call.1} parent=87 // pred_region
          %624 = dma.done %s617, 512
        $region96: #{tpu_custom_call.1} parent=87 // pred_fallthru
          _
        // Predicated region
        $region97: #{tpu_custom_call.1} parent=87 // pred_check
          %p625 = pneg %p176
        $region98: #{tpu_custom_call.1} parent=87 // pred_check_branch
          %627 = sbr.rel (%p625) target = $region100
        $region99: #{tpu_custom_call.1} parent=87 // pred_region
          %628 = dma.done [#allocation6], 1024
        $region100: #{tpu_custom_call.1} parent=87 // pred_fallthru
          _
        // Predicated region
        $region101: #{tpu_custom_call.1} parent=87 // pred_check
          %p629 = pneg %p197
        $region102: #{tpu_custom_call.1} parent=87 // pred_check_branch
          %631 = sbr.rel (%p629) target = $region104
        $region103: #{tpu_custom_call.1} parent=87 // pred_region
          %632 = dma.done [#allocation9], 16
        $region104: #{tpu_custom_call.1} parent=87 // pred_fallthru
          _
        // Predicated region
        $region105: #{tpu_custom_call.1} parent=87 // pred_check
          %p633 = pneg %p218
        $region106: #{tpu_custom_call.1} parent=87 // pred_check_branch
          %635 = sbr.rel (%p633) target = $region108
        $region107: #{tpu_custom_call.1} parent=87 // pred_region
          %636 = dma.done [#allocation9], 8192
        $region108: #{tpu_custom_call.1} parent=87 // pred_fallthru
          _
        // Predicated region
        $region109: #{tpu_custom_call.1} parent=87 // pred_check
          %p637 = pneg %p281
        $region110: #{tpu_custom_call.1} parent=87 // pred_check_branch
          %639 = sbr.rel (%p637) target = $region112
        $region111: #{tpu_custom_call.1} parent=87 // pred_region
          %640 = dma.done [#allocation12], 8192
        $region112: #{tpu_custom_call.1} parent=87 // pred_fallthru
          _
        // Predicated region
        $region113: #{tpu_custom_call.1} parent=87 // pred_check
          %p641 = pneg %p344
        $region114: #{tpu_custom_call.1} parent=87 // pred_check_branch
          %643 = sbr.rel (%p641) target = $region116
        $region115: #{tpu_custom_call.1} parent=87 // pred_region
          %644 = dma.done [#allocation12], 1024
        $region116: #{tpu_custom_call.1} parent=87 // pred_fallthru
          _
        // Predicated region
        $region117: #{tpu_custom_call.1} parent=87 // pred_check
          %p645 = pneg %p386
        $region118: #{tpu_custom_call.1} parent=87 // pred_check_branch
          %647 = sbr.rel (%p645) target = $region120
        $region119: #{tpu_custom_call.1} parent=87 // pred_region
          %648 = dma.done [#allocation15], 16
        $region120: #{tpu_custom_call.1} parent=87 // pred_fallthru
          _
        %s649 = sand.u32 %s48, 1
        %s650 = scalar_lea.sflag [#allocation3], %s649
        %s651 = sand.u32 %s48, 1
        %s652 = smul.addr %s651, 32
        %s653 = scalar_lea.vmem [#allocation2], %s652
        %p654 = pneg %p61
        %p655 = pneg %p58
        %s656 = sand.u32 %s40, 1
        %s657 = scalar_lea.sflag [#allocation6], %s656
        %s658 = sand.u32 %s74, 1
        %s659 = smul.addr %s658, 32
        %s660 = scalar_lea.vmem [#allocation5], %s659
        %p661 = pneg %p87
        %p662 = pneg %p84
        %p663 = scmp.lt.s32.totalorder %s40, 3
        %s664 = scalar_select %p663, %s40, 3
        %s665 = smul.addr %s664, 32
        %s666 = smul.addr %s665, 4
        %s667 = scalar_lea.vmem %s2, %s666
        %p668 = pneg %p113
        %p669 = pneg %p110
        %p670 = pneg %p134
        %p671 = pneg %p131
        %p672 = pneg %p155
        %p673 = pneg %p152
        %p674 = pneg %p176
        %p675 = pneg %p173
        %p676 = pneg %p197
        %p677 = pneg %p194
        %p678 = pneg %p218
        %p679 = pneg %p215
        %p680 = pneg %p239
        %p681 = pneg %p236
        %p682 = pneg %p260
        %p683 = pneg %p257
        %p684 = pneg %p281
        %p685 = pneg %p278
        %p686 = pneg %p302
        %p687 = pneg %p299
        %p688 = pneg %p323
        %p689 = pneg %p320
        %p690 = pneg %p344
        %p691 = pneg %p341
        %p692 = pneg %p365
        %p693 = pneg %p362
        %p694 = pneg %p386
        %p695 = pneg %p383
        %p696 = pneg %p407
        %p697 = pneg %p404
        %p698 = pneg %p433
        %p699 = pneg %p430
        %s700 = sand.u32 %s420, 1
        %s701 = scalar_lea.sflag [#allocation4], %s700
        %s702 = sand.u32 %s420, 1
        %s703 = smul.addr %s702, 2
        %s704 = scalar_lea.vmem [#allocation16], %s703
        %p705 = scmp.lt.s32.totalorder %s40, 3
        %s706 = scalar_select %p705, %s40, 3
        %s707 = smul.addr %s706, 32
        %s708 = smul.addr %s707, 4
        %s709 = scalar_lea.vmem %s2, %s708
        %v711 = vld [vmem:[%s611] sm:$0xf]
        %v712 = vld [vmem:[%s611 + $0x4] sm:$0xf]
        %v713 = vld [vmem:[%s611 + $0x8] sm:$0xf]
        %v714 = vld [vmem:[%s611 + $0xc] sm:$0xf]
        %v715 = vld [vmem:[%s611 + $0x10] sm:$0xf]
        %v716 = vld [vmem:[%s611 + $0x14] sm:$0xf]
        %v717 = vld [vmem:[%s611 + $0x18] sm:$0xf]
        %v718 = vld [vmem:[%s611 + $0x1c] sm:$0xf]
        %v719 = vld [vmem:[#allocation7] sm:$0xf]
        %v720 = vld [vmem:[#allocation7 + $0x4] sm:$0xf]
        %v721 = vld [vmem:[#allocation7 + $0x8] sm:$0xf]
        %v722 = vld [vmem:[#allocation7 + $0xc] sm:$0xf]
        %v723 = vld [vmem:[#allocation7 + $0x10] sm:$0xf]
        %v724 = vld [vmem:[#allocation7 + $0x14] sm:$0xf]
        %v725 = vld [vmem:[#allocation7 + $0x18] sm:$0xf]
        %v726 = vld [vmem:[#allocation7 + $0x1c] sm:$0xf]
        %v727 = vld [vmem:[#allocation7 + $0x20] sm:$0xf]
        %v728 = vld [vmem:[#allocation7 + $0x24] sm:$0xf]
        %v729 = vld [vmem:[#allocation7 + $0x28] sm:$0xf]
        %v730 = vld [vmem:[#allocation7 + $0x2c] sm:$0xf]
        %v731 = vld [vmem:[#allocation7 + $0x30] sm:$0xf]
        %v732 = vld [vmem:[#allocation7 + $0x34] sm:$0xf]
        %v733 = vld [vmem:[#allocation7 + $0x38] sm:$0xf]
        %v734 = vld [vmem:[#allocation7 + $0x3c] sm:$0xf]
        %v735 = vld [vmem:[#allocation8] sm:$0x1]
        %v737 = vlaneseq
        %v738 = vshrl.u32 %v737, 7
        %v739 = vsub.s32 0, %v738
        %v740 = vrot.slane %v735, %v739
        %v750 = vunpack.c.l.b16 %v711
        %v751 = vunpack.c.l.b16 %v712
        %v752 = vunpack.c.l.b16 %v713
        %v753 = vunpack.c.l.b16 %v714
        %v754 = vunpack.c.l.b16 %v715
        %v755 = vunpack.c.l.b16 %v716
        %v756 = vunpack.c.l.b16 %v717
        %v757 = vunpack.c.l.b16 %v718
        %v758 = vpack.c.b16 %v751, %v750
        %v759 = vpack.c.b16 %v753, %v752
        %v760 = vpack.c.b16 %v755, %v754
        %v761 = vpack.c.b16 %v757, %v756
        %v782 = vunpack.c.l.b16 %v719
        %v783 = vunpack.c.l.b16 %v720
        %v784 = vunpack.c.l.b16 %v721
        %v785 = vunpack.c.l.b16 %v722
        %v786 = vunpack.c.l.b16 %v723
        %v787 = vunpack.c.l.b16 %v724
        %v788 = vunpack.c.l.b16 %v725
        %v789 = vunpack.c.l.b16 %v726
        %v790 = vunpack.c.l.b16 %v727
        %v791 = vunpack.c.l.b16 %v728
        %v792 = vunpack.c.l.b16 %v729
        %v793 = vunpack.c.l.b16 %v730
        %v794 = vunpack.c.l.b16 %v731
        %v795 = vunpack.c.l.b16 %v732
        %v796 = vunpack.c.l.b16 %v733
        %v797 = vunpack.c.l.b16 %v734
        %v798 = vpack.c.b16 %v783, %v782
        %v799 = vpack.c.b16 %v785, %v784
        %v800 = vpack.c.b16 %v787, %v786
        %v801 = vpack.c.b16 %v789, %v788
        %v802 = vpack.c.b16 %v791, %v790
        %v803 = vpack.c.b16 %v793, %v792
        %v804 = vpack.c.b16 %v795, %v794
        %v805 = vpack.c.b16 %v797, %v796
        %814 = vmatprep.subr.bf16.mxu0 0
        %815 = vmatpush1.bf16.msra.mxu0 %v805
        %816 = vmatprep.subr.bf16.mxu0 0
        %817 = vmatpush1.bf16.msra.mxu0 %v804
        %818 = vmatprep.subr.bf16.mxu0 0
        %819 = vmatpush1.bf16.msra.mxu0 %v803
        %820 = vmatprep.subr.bf16.mxu0 0
        %821 = vmatpush1.bf16.msra.mxu0 %v802
        %822 = vmatprep.subr.bf16.mxu0 0
        %823 = vmatpush1.bf16.msra.mxu0 %v801
        %824 = vmatprep.subr.bf16.mxu0 0
        %825 = vmatpush1.bf16.msra.mxu0 %v800
        %826 = vmatprep.subr.bf16.mxu0 0
        %827 = vmatpush1.bf16.msra.mxu0 %v799
        %828 = vmatprep.subr.bf16.mxu0 0
        %829 = vmatpush1.bf16.msra.mxu0 %v798
        %830 = vmatprep.subr.bf16.mxu0 0
        %831 = vmatpush2.bf16.msra.mxu0 0
        %832 = vmatprep.subr.bf16.mxu0 0
        %833 = vmatpush2.bf16.msra.mxu0 0
        %834 = vmatprep.subr.bf16.mxu0 0
        %835 = vmatpush2.bf16.msra.mxu0 0
        %836 = vmatprep.subr.bf16.mxu0 0
        %837 = vmatpush2.bf16.msra.mxu0 0
        %838 = vmatprep.subr.bf16.mxu0 0
        %839 = vmatpush2.bf16.msra.mxu0 0
        %840 = vmatprep.subr.bf16.mxu0 0
        %841 = vmatpush2.bf16.msra.mxu0 0
        %842 = vmatprep.subr.bf16.mxu0 0
        %843 = vmatpush2.bf16.msra.mxu0 0
        %844 = vmatprep.subr.bf16.mxu0 0
        %845 = vmatpush2.bf16.msra.mxu0 0
        %846 = vmatprep.mubr.bf16.mxu0 0
        %847 = vmatmul.mubr.bf16.gmra.mxu0 %v758
        %v848 = vpop.f32.mrf.mxu0
        %v849 = vadd.f32 %v740, %v848
        %v850 = vpop.f32.mrf.mxu0
        %v851 = vpop.f32.mrf.mxu0
        %v852 = vadd.f32 %v740, %v851
        %v853 = vpop.f32.mrf.mxu0
        %854 = vmatprep.mubr.bf16.mxu0 0
        %855 = vmatmul.mubr.bf16.gmra.mxu0 %v759
        %v856 = vpop.f32.mrf.mxu0
        %v857 = vadd.f32 %v740, %v856
        %v858 = vpop.f32.mrf.mxu0
        %v859 = vpop.f32.mrf.mxu0
        %v860 = vadd.f32 %v740, %v859
        %v861 = vpop.f32.mrf.mxu0
        %862 = vmatprep.mubr.bf16.mxu0 0
        %863 = vmatmul.mubr.bf16.gmra.mxu0 %v760
        %v864 = vpop.f32.mrf.mxu0
        %v865 = vadd.f32 %v740, %v864
        %v866 = vpop.f32.mrf.mxu0
        %v867 = vpop.f32.mrf.mxu0
        %v868 = vadd.f32 %v740, %v867
        %v869 = vpop.f32.mrf.mxu0
        %870 = vmatprep.mubr.bf16.mxu0 0
        %871 = vmatmul.mubr.bf16.gmra.mxu0 %v761
        %v872 = vpop.f32.mrf.mxu0
        %v873 = vadd.f32 %v740, %v872
        %v874 = vpop.f32.mrf.mxu0
        %v875 = vpop.f32.mrf.mxu0
        %v876 = vadd.f32 %v740, %v875
        %v877 = vpop.f32.mrf.mxu0
        %878 = vdwg.mxu0
        %v879 = vpack.c.bf16 %v852, %v849
        %v880 = vpack.c.bf16 %v860, %v857
        %v881 = vpack.c.bf16 %v868, %v865
        %v882 = vpack.c.bf16 %v876, %v873
        %v883 = vld [vmem:[%s8] sm:$0xf]
        %v884 = vld [vmem:[%s8 + $0x4] sm:$0xf]
        %v885 = vld [vmem:[%s8 + $0x8] sm:$0xf]
        %v886 = vld [vmem:[%s8 + $0xc] sm:$0xf]
        %v887 = vld [vmem:[%s8 + $0x10] sm:$0xf]
        %v888 = vld [vmem:[%s8 + $0x14] sm:$0xf]
        %v889 = vld [vmem:[%s8 + $0x18] sm:$0xf]
        %v890 = vld [vmem:[%s8 + $0x1c] sm:$0xf]
        %v891 = vld [vmem:[%s8 + $0x20] sm:$0xf]
        %v892 = vld [vmem:[%s8 + $0x24] sm:$0xf]
        %v893 = vld [vmem:[%s8 + $0x28] sm:$0xf]
        %v894 = vld [vmem:[%s8 + $0x2c] sm:$0xf]
        %v895 = vld [vmem:[%s8 + $0x30] sm:$0xf]
        %v896 = vld [vmem:[%s8 + $0x34] sm:$0xf]
        %v897 = vld [vmem:[%s8 + $0x38] sm:$0xf]
        %v898 = vld [vmem:[%s8 + $0x3c] sm:$0xf]
        %v915 = vunpack.c.l.b16 %v883
        %v916 = vunpack.c.l.b16 %v884
        %v917 = vunpack.c.l.b16 %v885
        %v918 = vunpack.c.l.b16 %v886
        %v919 = vunpack.c.l.b16 %v887
        %v920 = vunpack.c.l.b16 %v888
        %v921 = vunpack.c.l.b16 %v889
        %v922 = vunpack.c.l.b16 %v890
        %v923 = vunpack.c.l.b16 %v891
        %v924 = vunpack.c.l.b16 %v892
        %v925 = vunpack.c.l.b16 %v893
        %v926 = vunpack.c.l.b16 %v894
        %v927 = vunpack.c.l.b16 %v895
        %v928 = vunpack.c.l.b16 %v896
        %v929 = vunpack.c.l.b16 %v897
        %v930 = vunpack.c.l.b16 %v898
        %v931 = vpack.c.b16 %v916, %v915
        %v932 = vpack.c.b16 %v918, %v917
        %v933 = vpack.c.b16 %v920, %v919
        %v934 = vpack.c.b16 %v922, %v921
        %v935 = vpack.c.b16 %v924, %v923
        %v936 = vpack.c.b16 %v926, %v925
        %v937 = vpack.c.b16 %v928, %v927
        %v938 = vpack.c.b16 %v930, %v929
        %947 = vmatprep.subr.bf16.mxu0 0
        %948 = vmatpush1.bf16.msra.mxu0 %v938
        %949 = vmatprep.subr.bf16.mxu0 0
        %950 = vmatpush1.bf16.msra.mxu0 %v937
        %951 = vmatprep.subr.bf16.mxu0 0
        %952 = vmatpush1.bf16.msra.mxu0 %v936
        %953 = vmatprep.subr.bf16.mxu0 0
        %954 = vmatpush1.bf16.msra.mxu0 %v935
        %955 = vmatprep.subr.bf16.mxu0 0
        %956 = vmatpush1.bf16.msra.mxu0 %v934
        %957 = vmatprep.subr.bf16.mxu0 0
        %958 = vmatpush1.bf16.msra.mxu0 %v933
        %959 = vmatprep.subr.bf16.mxu0 0
        %960 = vmatpush1.bf16.msra.mxu0 %v932
        %961 = vmatprep.subr.bf16.mxu0 0
        %962 = vmatpush1.bf16.msra.mxu0 %v931
        %963 = vmatprep.subr.bf16.mxu0 0
        %964 = vmatpush2.bf16.msra.mxu0 0
        %965 = vmatprep.subr.bf16.mxu0 0
        %966 = vmatpush2.bf16.msra.mxu0 0
        %967 = vmatprep.subr.bf16.mxu0 0
        %968 = vmatpush2.bf16.msra.mxu0 0
        %969 = vmatprep.subr.bf16.mxu0 0
        %970 = vmatpush2.bf16.msra.mxu0 0
        %971 = vmatprep.subr.bf16.mxu0 0
        %972 = vmatpush2.bf16.msra.mxu0 0
        %973 = vmatprep.subr.bf16.mxu0 0
        %974 = vmatpush2.bf16.msra.mxu0 0
        %975 = vmatprep.subr.bf16.mxu0 0
        %976 = vmatpush2.bf16.msra.mxu0 0
        %977 = vmatprep.subr.bf16.mxu0 0
        %978 = vmatpush2.bf16.msra.mxu0 0
        %979 = vmatprep.mubr.bf16.mxu0 0
        %980 = vmatmul.mubr.bf16.gmra.mxu0 %v879
        %v981 = vpop.f32.mrf.mxu0
        %v982 = vadd.f32 0.0, %v981
        %v983 = vpop.f32.mrf.mxu0
        %v984 = vpop.f32.mrf.mxu0
        %v985 = vadd.f32 0.0, %v984
        %v986 = vpop.f32.mrf.mxu0
        %987 = vmatprep.mubr.bf16.mxu0 0
        %988 = vmatmul.mubr.bf16.gmra.mxu0 %v880
        %v989 = vpop.f32.mrf.mxu0
        %v990 = vadd.f32 0.0, %v989
        %v991 = vpop.f32.mrf.mxu0
        %v992 = vpop.f32.mrf.mxu0
        %v993 = vadd.f32 0.0, %v992
        %v994 = vpop.f32.mrf.mxu0
        %995 = vmatprep.mubr.bf16.mxu0 0
        %996 = vmatmul.mubr.bf16.gmra.mxu0 %v881
        %v997 = vpop.f32.mrf.mxu0
        %v998 = vadd.f32 0.0, %v997
        %v999 = vpop.f32.mrf.mxu0
        %v1000 = vpop.f32.mrf.mxu0
        %v1001 = vadd.f32 0.0, %v1000
        %v1002 = vpop.f32.mrf.mxu0
        %1003 = vmatprep.mubr.bf16.mxu0 0
        %1004 = vmatmul.mubr.bf16.gmra.mxu0 %v882
        %v1005 = vpop.f32.mrf.mxu0
        %v1006 = vadd.f32 0.0, %v1005
        %v1007 = vpop.f32.mrf.mxu0
        %v1008 = vpop.f32.mrf.mxu0
        %v1009 = vadd.f32 0.0, %v1008
        %v1010 = vpop.f32.mrf.mxu0
        %1011 = vdwg.mxu0
        %v1012 = vld [vmem:[%s3] sm:$0xff]
        %v1013 = vld [vmem:[%s3 + $0x8] sm:$0xff]
        %v1014 = vld [vmem:[%s3 + $0x10] sm:$0xff]
        %v1015 = vld [vmem:[%s3 + $0x18] sm:$0xff]
        %1024 = vrot.lane.b32.xlu0 %v982, 120
        %v1025 = vpop.permute.xlu0 %1024
        %1026 = vrot.lane.b32.xlu0 %v985, 120
        %v1027 = vpop.permute.xlu0 %1026
        %1028 = vrot.lane.b32.xlu0 %v990, 120
        %v1029 = vpop.permute.xlu0 %1028
        %1030 = vrot.lane.b32.xlu0 %v993, 120
        %v1031 = vpop.permute.xlu0 %1030
        %1032 = vrot.lane.b32.xlu0 %v998, 120
        %v1033 = vpop.permute.xlu0 %1032
        %1034 = vrot.lane.b32.xlu0 %v1001, 120
        %v1035 = vpop.permute.xlu0 %1034
        %1036 = vrot.lane.b32.xlu0 %v1006, 120
        %v1037 = vpop.permute.xlu0 %1036
        %1038 = vrot.lane.b32.xlu0 %v1009, 120
        %v1039 = vpop.permute.xlu0 %1038
        %1048 = vxpose.xlu0.b32.start [1/16] %v1025, 128
        %1049 = vxpose.xlu0.b32.cont [2/16] %v1027, 128
        %1050 = vxpose.xlu0.b32.cont [3/16] %v1029, 128
        %1051 = vxpose.xlu0.b32.cont [4/16] %v1031, 128
        %1052 = vxpose.xlu0.b32.cont [5/16] %v1033, 128
        %1053 = vxpose.xlu0.b32.cont [6/16] %v1035, 128
        %1054 = vxpose.xlu0.b32.cont [7/16] %v1037, 128
        %1055 = vxpose.xlu0.b32.cont [8/16] %v1039, 128
        %1056 = vxpose.xlu0.b32.cont [9/16] 0.0, 128
        %1057 = vxpose.xlu0.b32.cont [10/16] 0.0, 128
        %1058 = vxpose.xlu0.b32.cont [11/16] 0.0, 128
        %1059 = vxpose.xlu0.b32.cont [12/16] 0.0, 128
        %1060 = vxpose.xlu0.b32.cont [13/16] 0.0, 128
        %1061 = vxpose.xlu0.b32.cont [14/16] 0.0, 128
        %1062 = vxpose.xlu0.b32.cont [15/16] 0.0, 128
        %1063 = vxpose.xlu0.b32.end [16/16] 0.0, 128
        %v1064 = vpop.trf.xlu0
        %v1065 = vpop.trf.xlu0
        %v1066 = vpop.trf.xlu0
        %v1067 = vpop.trf.xlu0
        %v1068 = vpop.trf.xlu0
        %v1069 = vpop.trf.xlu0
        %v1070 = vpop.trf.xlu0
        %v1071 = vpop.trf.xlu0
        %v1072 = vpop.trf.xlu0
        %v1073 = vpop.trf.xlu0
        %v1074 = vpop.trf.xlu0
        %v1075 = vpop.trf.xlu0
        %v1076 = vpop.trf.xlu0
        %v1077 = vpop.trf.xlu0
        %v1078 = vpop.trf.xlu0
        %v1079 = vpop.trf.xlu0
        %v1081 = vrot.slane %v1064, 1
        %1082 = vrot.lane.b32.xlu0 %v1081, 64
        %v1083 = vpop.permute.xlu0 %1082
        %v1085 = vrot.slane %v1064, 2
        %v1087 = vrot.slane %v1064, 3
        %1088 = vrot.lane.b32.xlu0 %v1087, 64
        %v1089 = vpop.permute.xlu0 %1088
        %v1091 = vrot.slane %v1064, 4
        %v1093 = vrot.slane %v1064, 5
        %1094 = vrot.lane.b32.xlu0 %v1093, 64
        %v1095 = vpop.permute.xlu0 %1094
        %v1097 = vrot.slane %v1064, 6
        %v1099 = vrot.slane %v1064, 7
        %1100 = vrot.lane.b32.xlu0 %v1099, 64
        %v1101 = vpop.permute.xlu0 %1100
        %vm1103 = vcmask 523264
        %v1104 = vsel %vm1103, %v1064, %v1083
        %v1105 = vsel %vm1103, %v1085, %v1089
        %v1106 = vsel %vm1103, %v1091, %v1095
        %v1107 = vsel %vm1103, %v1097, %v1101
        %v1108 = vlaneseq
        %v1109 = vshrl.u32 %v1108, 7
        %v1110 = vsub.s32 0, %v1109
        %v1111 = vrot.slane %v1104, %v1110
        %v1112 = vlaneseq
        %v1113 = vshrl.u32 %v1112, 7
        %v1114 = vsub.s32 0, %v1113
        %v1115 = vrot.slane %v1105, %v1114
        %v1116 = vlaneseq
        %v1117 = vshrl.u32 %v1116, 7
        %v1118 = vsub.s32 0, %v1117
        %v1119 = vrot.slane %v1106, %v1118
        %v1120 = vlaneseq
        %v1121 = vshrl.u32 %v1120, 7
        %v1122 = vsub.s32 0, %v1121
        %v1123 = vrot.slane %v1107, %v1122
        %vm1124 = vcmask 64512
        %v1125 = vsel %vm1124, %v982, 0
        %v1127 = vsel %vm1124, %v985, 0
        %v1129 = vsel %vm1124, %v990, 0
        %v1131 = vsel %vm1124, %v993, 0
        %v1133 = vsel %vm1124, %v998, 0
        %v1135 = vsel %vm1124, %v1001, 0
        %v1137 = vsel %vm1124, %v1006, 0
        %v1139 = vsel %vm1124, %v1009, 0
        %1141 = vmatprep.subr.mxu0 0.0
        %1142 = vmatpush1.msra.mxu0 0.0
        %1143 = vmatprep.subr.mxu0 0.0
        %1144 = vmatpush1.msra.mxu0 0.0
        %1145 = vmatprep.subr.mxu0 0.0
        %1146 = vmatpush1.msra.mxu0 0.0
        %1147 = vmatprep.subr.mxu0 0.0
        %1148 = vmatpush1.msra.mxu0 0.0
        %1149 = vmatprep.subr.mxu0 0.0
        %1150 = vmatpush1.msra.mxu0 0.0
        %1151 = vmatprep.subr.mxu0 0.0
        %1152 = vmatpush1.msra.mxu0 0.0
        %1153 = vmatprep.subr.mxu0 0.0
        %1154 = vmatpush1.msra.mxu0 0.0
        %1155 = vmatprep.subr.mxu0 0.0
        %1156 = vmatpush1.msra.mxu0 0.0
        %1157 = vmatprep.subr.mxu0 0.0
        %1158 = vmatpush1.msra.mxu0 0.0
        %1159 = vmatprep.subr.mxu0 0.0
        %1160 = vmatpush1.msra.mxu0 0.0
        %1161 = vmatprep.subr.mxu0 0.0
        %1162 = vmatpush1.msra.mxu0 0.0
        %1163 = vmatprep.subr.mxu0 0.0
        %1164 = vmatpush1.msra.mxu0 0.0
        %1165 = vmatprep.subr.mxu0 0.0
        %1166 = vmatpush1.msra.mxu0 0.0
        %1167 = vmatprep.subr.mxu0 0.0
        %1168 = vmatpush1.msra.mxu0 0.0
        %1169 = vmatprep.subr.mxu0 0.0
        %1170 = vmatpush1.msra.mxu0 0.0
        %1171 = vmatprep.subr.mxu0 %v1013
        %1172 = vmatpush1.msra.mxu0 %v1012
        %1173 = vmatprep.subr.mxu0 0.0
        %1174 = vmatpush2.msra.mxu0 0.0
        %1175 = vmatprep.subr.mxu0 0.0
        %1176 = vmatpush2.msra.mxu0 0.0
        %1177 = vmatprep.subr.mxu0 0.0
        %1178 = vmatpush2.msra.mxu0 0.0
        %1179 = vmatprep.subr.mxu0 0.0
        %1180 = vmatpush2.msra.mxu0 0.0
        %1181 = vmatprep.subr.mxu0 0.0
        %1182 = vmatpush2.msra.mxu0 0.0
        %1183 = vmatprep.subr.mxu0 0.0
        %1184 = vmatpush2.msra.mxu0 0.0
        %1185 = vmatprep.subr.mxu0 0.0
        %1186 = vmatpush2.msra.mxu0 0.0
        %1187 = vmatprep.subr.mxu0 0.0
        %1188 = vmatpush2.msra.mxu0 0.0
        %1189 = vmatprep.subr.mxu0 0.0
        %1190 = vmatpush2.msra.mxu0 0.0
        %1191 = vmatprep.subr.mxu0 0.0
        %1192 = vmatpush2.msra.mxu0 0.0
        %1193 = vmatprep.subr.mxu0 0.0
        %1194 = vmatpush2.msra.mxu0 0.0
        %1195 = vmatprep.subr.mxu0 0.0
        %1196 = vmatpush2.msra.mxu0 0.0
        %1197 = vmatprep.subr.mxu0 0.0
        %1198 = vmatpush2.msra.mxu0 0.0
        %1199 = vmatprep.subr.mxu0 0.0
        %1200 = vmatpush2.msra.mxu0 0.0
        %1201 = vmatprep.subr.mxu0 0.0
        %1202 = vmatpush2.msra.mxu0 0.0
        %1203 = vmatprep.subr.mxu0 0.0
        %1204 = vmatpush2.msra.mxu0 0.0
        %1205 = vmatprep.mubr.f32.mxu0 0.0
        %1206 = vmatmul.mubr.f32.gmra.mxu0 %v1125
        %v1207 = vpop.f32.mrf.mxu0
        %v1208 = vadd.f32 %v1111, %v1207
        %v1209 = vpop.f32.mrf.mxu0
        %v1210 = vadd.f32 %v1115, %v1209
        %1211 = vmatprep.mubr.f32.mxu0 0.0
        %1212 = vmatmul.mubr.f32.gmra.mxu0 %v1127
        %v1213 = vpop.f32.mrf.mxu0
        %v1214 = vadd.f32 %v1111, %v1213
        %v1215 = vpop.f32.mrf.mxu0
        %v1216 = vadd.f32 %v1115, %v1215
        %1217 = vmatprep.mubr.f32.mxu0 0.0
        %1218 = vmatmul.mubr.f32.gmra.mxu0 %v1129
        %v1219 = vpop.f32.mrf.mxu0
        %v1220 = vadd.f32 %v1111, %v1219
        %v1221 = vpop.f32.mrf.mxu0
        %v1222 = vadd.f32 %v1115, %v1221
        %1223 = vmatprep.mubr.f32.mxu0 0.0
        %1224 = vmatmul.mubr.f32.gmra.mxu0 %v1131
        %v1225 = vpop.f32.mrf.mxu0
        %v1226 = vadd.f32 %v1111, %v1225
        %v1227 = vpop.f32.mrf.mxu0
        %v1228 = vadd.f32 %v1115, %v1227
        %1229 = vmatprep.mubr.f32.mxu0 0.0
        %1230 = vmatmul.mubr.f32.gmra.mxu0 %v1133
        %v1231 = vpop.f32.mrf.mxu0
        %v1232 = vadd.f32 %v1111, %v1231
        %v1233 = vpop.f32.mrf.mxu0
        %v1234 = vadd.f32 %v1115, %v1233
        %1235 = vmatprep.mubr.f32.mxu0 0.0
        %1236 = vmatmul.mubr.f32.gmra.mxu0 %v1135
        %v1237 = vpop.f32.mrf.mxu0
        %v1238 = vadd.f32 %v1111, %v1237
        %v1239 = vpop.f32.mrf.mxu0
        %v1240 = vadd.f32 %v1115, %v1239
        %1241 = vmatprep.mubr.f32.mxu0 0.0
        %1242 = vmatmul.mubr.f32.gmra.mxu0 %v1137
        %v1243 = vpop.f32.mrf.mxu0
        %v1244 = vadd.f32 %v1111, %v1243
        %v1245 = vpop.f32.mrf.mxu0
        %v1246 = vadd.f32 %v1115, %v1245
        %1247 = vmatprep.mubr.f32.mxu0 0.0
        %1248 = vmatmul.mubr.f32.gmra.mxu0 %v1139
        %v1249 = vpop.f32.mrf.mxu0
        %v1250 = vadd.f32 %v1111, %v1249
        %v1251 = vpop.f32.mrf.mxu0
        %v1252 = vadd.f32 %v1115, %v1251
        %1253 = vdwg.mxu0
        %1254 = vmatprep.subr.mxu0 0.0
        %1255 = vmatpush1.msra.mxu0 0.0
        %1256 = vmatprep.subr.mxu0 0.0
        %1257 = vmatpush1.msra.mxu0 0.0
        %1258 = vmatprep.subr.mxu0 0.0
        %1259 = vmatpush1.msra.mxu0 0.0
        %1260 = vmatprep.subr.mxu0 0.0
        %1261 = vmatpush1.msra.mxu0 0.0
        %1262 = vmatprep.subr.mxu0 0.0
        %1263 = vmatpush1.msra.mxu0 0.0
        %1264 = vmatprep.subr.mxu0 0.0
        %1265 = vmatpush1.msra.mxu0 0.0
        %1266 = vmatprep.subr.mxu0 0.0
        %1267 = vmatpush1.msra.mxu0 0.0
        %1268 = vmatprep.subr.mxu0 0.0
        %1269 = vmatpush1.msra.mxu0 0.0
        %1270 = vmatprep.subr.mxu0 0.0
        %1271 = vmatpush1.msra.mxu0 0.0
        %1272 = vmatprep.subr.mxu0 0.0
        %1273 = vmatpush1.msra.mxu0 0.0
        %1274 = vmatprep.subr.mxu0 0.0
        %1275 = vmatpush1.msra.mxu0 0.0
        %1276 = vmatprep.subr.mxu0 0.0
        %1277 = vmatpush1.msra.mxu0 0.0
        %1278 = vmatprep.subr.mxu0 0.0
        %1279 = vmatpush1.msra.mxu0 0.0
        %1280 = vmatprep.subr.mxu0 0.0
        %1281 = vmatpush1.msra.mxu0 0.0
        %1282 = vmatprep.subr.mxu0 0.0
        %1283 = vmatpush1.msra.mxu0 0.0
        %1284 = vmatprep.subr.mxu0 %v1015
        %1285 = vmatpush1.msra.mxu0 %v1014
        %1286 = vmatprep.subr.mxu0 0.0
        %1287 = vmatpush2.msra.mxu0 0.0
        %1288 = vmatprep.subr.mxu0 0.0
        %1289 = vmatpush2.msra.mxu0 0.0
        %1290 = vmatprep.subr.mxu0 0.0
        %1291 = vmatpush2.msra.mxu0 0.0
        %1292 = vmatprep.subr.mxu0 0.0
        %1293 = vmatpush2.msra.mxu0 0.0
        %1294 = vmatprep.subr.mxu0 0.0
        %1295 = vmatpush2.msra.mxu0 0.0
        %1296 = vmatprep.subr.mxu0 0.0
        %1297 = vmatpush2.msra.mxu0 0.0
        %1298 = vmatprep.subr.mxu0 0.0
        %1299 = vmatpush2.msra.mxu0 0.0
        %1300 = vmatprep.subr.mxu0 0.0
        %1301 = vmatpush2.msra.mxu0 0.0
        %1302 = vmatprep.subr.mxu0 0.0
        %1303 = vmatpush2.msra.mxu0 0.0
        %1304 = vmatprep.subr.mxu0 0.0
        %1305 = vmatpush2.msra.mxu0 0.0
        %1306 = vmatprep.subr.mxu0 0.0
        %1307 = vmatpush2.msra.mxu0 0.0
        %1308 = vmatprep.subr.mxu0 0.0
        %1309 = vmatpush2.msra.mxu0 0.0
        %1310 = vmatprep.subr.mxu0 0.0
        %1311 = vmatpush2.msra.mxu0 0.0
        %1312 = vmatprep.subr.mxu0 0.0
        %1313 = vmatpush2.msra.mxu0 0.0
        %1314 = vmatprep.subr.mxu0 0.0
        %1315 = vmatpush2.msra.mxu0 0.0
        %1316 = vmatprep.subr.mxu0 0.0
        %1317 = vmatpush2.msra.mxu0 0.0
        %1318 = vmatprep.mubr.f32.mxu0 0.0
        %1319 = vmatmul.mubr.f32.gmra.mxu0 %v1125
        %v1320 = vpop.f32.mrf.mxu0
        %v1321 = vadd.f32 %v1119, %v1320
        %v1322 = vpop.f32.mrf.mxu0
        %v1323 = vadd.f32 %v1123, %v1322
        %1324 = vmatprep.mubr.f32.mxu0 0.0
        %1325 = vmatmul.mubr.f32.gmra.mxu0 %v1127
        %v1326 = vpop.f32.mrf.mxu0
        %v1327 = vadd.f32 %v1119, %v1326
        %v1328 = vpop.f32.mrf.mxu0
        %v1329 = vadd.f32 %v1123, %v1328
        %1330 = vmatprep.mubr.f32.mxu0 0.0
        %1331 = vmatmul.mubr.f32.gmra.mxu0 %v1129
        %v1332 = vpop.f32.mrf.mxu0
        %v1333 = vadd.f32 %v1119, %v1332
        %v1334 = vpop.f32.mrf.mxu0
        %v1335 = vadd.f32 %v1123, %v1334
        %1336 = vmatprep.mubr.f32.mxu0 0.0
        %1337 = vmatmul.mubr.f32.gmra.mxu0 %v1131
        %v1338 = vpop.f32.mrf.mxu0
        %v1339 = vadd.f32 %v1119, %v1338
        %v1340 = vpop.f32.mrf.mxu0
        %v1341 = vadd.f32 %v1123, %v1340
        %1342 = vmatprep.mubr.f32.mxu0 0.0
        %1343 = vmatmul.mubr.f32.gmra.mxu0 %v1133
        %v1344 = vpop.f32.mrf.mxu0
        %v1345 = vadd.f32 %v1119, %v1344
        %v1346 = vpop.f32.mrf.mxu0
        %v1347 = vadd.f32 %v1123, %v1346
        %1348 = vmatprep.mubr.f32.mxu0 0.0
        %1349 = vmatmul.mubr.f32.gmra.mxu0 %v1135
        %v1350 = vpop.f32.mrf.mxu0
        %v1351 = vadd.f32 %v1119, %v1350
        %v1352 = vpop.f32.mrf.mxu0
        %v1353 = vadd.f32 %v1123, %v1352
        %1354 = vmatprep.mubr.f32.mxu0 0.0
        %1355 = vmatmul.mubr.f32.gmra.mxu0 %v1137
        %v1356 = vpop.f32.mrf.mxu0
        %v1357 = vadd.f32 %v1119, %v1356
        %v1358 = vpop.f32.mrf.mxu0
        %v1359 = vadd.f32 %v1123, %v1358
        %1360 = vmatprep.mubr.f32.mxu0 0.0
        %1361 = vmatmul.mubr.f32.gmra.mxu0 %v1139
        %v1362 = vpop.f32.mrf.mxu0
        %v1363 = vadd.f32 %v1119, %v1362
        %v1364 = vpop.f32.mrf.mxu0
        %v1365 = vadd.f32 %v1123, %v1364
        %1366 = vdwg.mxu0
        %vm1367 = vcmp.gt.f32.partialorder %v1208, 0.0
        %vm1368 = vcmp.gt.f32.partialorder %v1210, 0.0
        %vm1369 = vcmp.gt.f32.partialorder %v1321, 0.0
        %vm1370 = vcmp.gt.f32.partialorder %v1323, 0.0
        %vm1371 = vcmp.gt.f32.partialorder %v1214, 0.0
        %vm1372 = vcmp.gt.f32.partialorder %v1216, 0.0
        %vm1373 = vcmp.gt.f32.partialorder %v1327, 0.0
        %vm1374 = vcmp.gt.f32.partialorder %v1329, 0.0
        %vm1375 = vcmp.gt.f32.partialorder %v1220, 0.0
        %vm1376 = vcmp.gt.f32.partialorder %v1222, 0.0
        %vm1377 = vcmp.gt.f32.partialorder %v1333, 0.0
        %vm1378 = vcmp.gt.f32.partialorder %v1335, 0.0
        %vm1379 = vcmp.gt.f32.partialorder %v1226, 0.0
        %vm1380 = vcmp.gt.f32.partialorder %v1228, 0.0
        %vm1381 = vcmp.gt.f32.partialorder %v1339, 0.0
        %vm1382 = vcmp.gt.f32.partialorder %v1341, 0.0
        %vm1383 = vcmp.gt.f32.partialorder %v1232, 0.0
        %vm1384 = vcmp.gt.f32.partialorder %v1234, 0.0
        %vm1385 = vcmp.gt.f32.partialorder %v1345, 0.0
        %vm1386 = vcmp.gt.f32.partialorder %v1347, 0.0
        %vm1387 = vcmp.gt.f32.partialorder %v1238, 0.0
        %vm1388 = vcmp.gt.f32.partialorder %v1240, 0.0
        %vm1389 = vcmp.gt.f32.partialorder %v1351, 0.0
        %vm1390 = vcmp.gt.f32.partialorder %v1353, 0.0
        %vm1391 = vcmp.gt.f32.partialorder %v1244, 0.0
        %vm1392 = vcmp.gt.f32.partialorder %v1246, 0.0
        %vm1393 = vcmp.gt.f32.partialorder %v1357, 0.0
        %vm1394 = vcmp.gt.f32.partialorder %v1359, 0.0
        %vm1395 = vcmp.gt.f32.partialorder %v1250, 0.0
        %vm1396 = vcmp.gt.f32.partialorder %v1252, 0.0
        %vm1397 = vcmp.gt.f32.partialorder %v1363, 0.0
        %vm1398 = vcmp.gt.f32.partialorder %v1365, 0.0
        %v1399 = vmul.f32 %v1208, 0.2
        %v1400 = vmul.f32 %v1210, 0.2
        %v1401 = vmul.f32 %v1321, 0.2
        %v1402 = vmul.f32 %v1323, 0.2
        %v1403 = vmul.f32 %v1214, 0.2
        %v1404 = vmul.f32 %v1216, 0.2
        %v1405 = vmul.f32 %v1327, 0.2
        %v1406 = vmul.f32 %v1329, 0.2
        %v1407 = vmul.f32 %v1220, 0.2
        %v1408 = vmul.f32 %v1222, 0.2
        %v1409 = vmul.f32 %v1333, 0.2
        %v1410 = vmul.f32 %v1335, 0.2
        %v1411 = vmul.f32 %v1226, 0.2
        %v1412 = vmul.f32 %v1228, 0.2
        %v1413 = vmul.f32 %v1339, 0.2
        %v1414 = vmul.f32 %v1341, 0.2
        %v1415 = vmul.f32 %v1232, 0.2
        %v1416 = vmul.f32 %v1234, 0.2
        %v1417 = vmul.f32 %v1345, 0.2
        %v1418 = vmul.f32 %v1347, 0.2
        %v1419 = vmul.f32 %v1238, 0.2
        %v1420 = vmul.f32 %v1240, 0.2
        %v1421 = vmul.f32 %v1351, 0.2
        %v1422 = vmul.f32 %v1353, 0.2
        %v1423 = vmul.f32 %v1244, 0.2
        %v1424 = vmul.f32 %v1246, 0.2
        %v1425 = vmul.f32 %v1357, 0.2
        %v1426 = vmul.f32 %v1359, 0.2
        %v1427 = vmul.f32 %v1250, 0.2
        %v1428 = vmul.f32 %v1252, 0.2
        %v1429 = vmul.f32 %v1363, 0.2
        %v1430 = vmul.f32 %v1365, 0.2
        %v1431 = vsel %vm1367, %v1208, %v1399
        %v1432 = vsel %vm1368, %v1210, %v1400
        %v1433 = vsel %vm1369, %v1321, %v1401
        %v1434 = vsel %vm1370, %v1323, %v1402
        %v1435 = vsel %vm1371, %v1214, %v1403
        %v1436 = vsel %vm1372, %v1216, %v1404
        %v1437 = vsel %vm1373, %v1327, %v1405
        %v1438 = vsel %vm1374, %v1329, %v1406
        %v1439 = vsel %vm1375, %v1220, %v1407
        %v1440 = vsel %vm1376, %v1222, %v1408
        %v1441 = vsel %vm1377, %v1333, %v1409
        %v1442 = vsel %vm1378, %v1335, %v1410
        %v1443 = vsel %vm1379, %v1226, %v1411
        %v1444 = vsel %vm1380, %v1228, %v1412
        %v1445 = vsel %vm1381, %v1339, %v1413
        %v1446 = vsel %vm1382, %v1341, %v1414
        %v1447 = vsel %vm1383, %v1232, %v1415
        %v1448 = vsel %vm1384, %v1234, %v1416
        %v1449 = vsel %vm1385, %v1345, %v1417
        %v1450 = vsel %vm1386, %v1347, %v1418
        %v1451 = vsel %vm1387, %v1238, %v1419
        %v1452 = vsel %vm1388, %v1240, %v1420
        %v1453 = vsel %vm1389, %v1351, %v1421
        %v1454 = vsel %vm1390, %v1353, %v1422
        %v1455 = vsel %vm1391, %v1244, %v1423
        %v1456 = vsel %vm1392, %v1246, %v1424
        %v1457 = vsel %vm1393, %v1357, %v1425
        %v1458 = vsel %vm1394, %v1359, %v1426
        %v1459 = vsel %vm1395, %v1250, %v1427
        %v1460 = vsel %vm1396, %v1252, %v1428
        %v1461 = vsel %vm1397, %v1363, %v1429
        %v1462 = vsel %vm1398, %v1365, %v1430
        %v1463 = vld [vmem:[%s709] sm:$0xff]
        %v1464 = vld [vmem:[%s709 + $0x8] sm:$0xff]
        %v1465 = vld [vmem:[%s709 + $0x10] sm:$0xff]
        %v1466 = vld [vmem:[%s709 + $0x18] sm:$0xff]
        %v1467 = vld [vmem:[%s709 + $0x20] sm:$0xff]
        %v1468 = vld [vmem:[%s709 + $0x28] sm:$0xff]
        %v1469 = vld [vmem:[%s709 + $0x30] sm:$0xff]
        %v1470 = vld [vmem:[%s709 + $0x38] sm:$0xff]
        %v1471 = vld [vmem:[%s709 + $0x40] sm:$0xff]
        %v1472 = vld [vmem:[%s709 + $0x48] sm:$0xff]
        %v1473 = vld [vmem:[%s709 + $0x50] sm:$0xff]
        %v1474 = vld [vmem:[%s709 + $0x58] sm:$0xff]
        %v1475 = vld [vmem:[%s709 + $0x60] sm:$0xff]
        %v1476 = vld [vmem:[%s709 + $0x68] sm:$0xff]
        %v1477 = vld [vmem:[%s709 + $0x70] sm:$0xff]
        %v1478 = vld [vmem:[%s709 + $0x78] sm:$0xff]
        %v1479 = vunpack.c.l.bf16 %v1463
        %v1480 = vunpack.c.h.bf16 %v1463
        %v1481 = vunpack.c.l.bf16 %v1464
        %v1482 = vunpack.c.h.bf16 %v1464
        %v1483 = vunpack.c.l.bf16 %v1465
        %v1484 = vunpack.c.h.bf16 %v1465
        %v1485 = vunpack.c.l.bf16 %v1466
        %v1486 = vunpack.c.h.bf16 %v1466
        %v1487 = vunpack.c.l.bf16 %v1467
        %v1488 = vunpack.c.h.bf16 %v1467
        %v1489 = vunpack.c.l.bf16 %v1468
        %v1490 = vunpack.c.h.bf16 %v1468
        %v1491 = vunpack.c.l.bf16 %v1469
        %v1492 = vunpack.c.h.bf16 %v1469
        %v1493 = vunpack.c.l.bf16 %v1470
        %v1494 = vunpack.c.h.bf16 %v1470
        %v1495 = vunpack.c.l.bf16 %v1471
        %v1496 = vunpack.c.h.bf16 %v1471
        %v1497 = vunpack.c.l.bf16 %v1472
        %v1498 = vunpack.c.h.bf16 %v1472
        %v1499 = vunpack.c.l.bf16 %v1473
        %v1500 = vunpack.c.h.bf16 %v1473
        %v1501 = vunpack.c.l.bf16 %v1474
        %v1502 = vunpack.c.h.bf16 %v1474
        %v1503 = vunpack.c.l.bf16 %v1475
        %v1504 = vunpack.c.h.bf16 %v1475
        %v1505 = vunpack.c.l.bf16 %v1476
        %v1506 = vunpack.c.h.bf16 %v1476
        %v1507 = vunpack.c.l.bf16 %v1477
        %v1508 = vunpack.c.h.bf16 %v1477
        %v1509 = vunpack.c.l.bf16 %v1478
        %v1510 = vunpack.c.h.bf16 %v1478
        %v1511 = vadd.f32 %v1431, %v1479
        %v1512 = vadd.f32 %v1432, %v1480
        %v1513 = vadd.f32 %v1433, %v1481
        %v1514 = vadd.f32 %v1434, %v1482
        %v1515 = vadd.f32 %v1435, %v1483
        %v1516 = vadd.f32 %v1436, %v1484
        %v1517 = vadd.f32 %v1437, %v1485
        %v1518 = vadd.f32 %v1438, %v1486
        %v1519 = vadd.f32 %v1439, %v1487
        %v1520 = vadd.f32 %v1440, %v1488
        %v1521 = vadd.f32 %v1441, %v1489
        %v1522 = vadd.f32 %v1442, %v1490
        %v1523 = vadd.f32 %v1443, %v1491
        %v1524 = vadd.f32 %v1444, %v1492
        %v1525 = vadd.f32 %v1445, %v1493
        %v1526 = vadd.f32 %v1446, %v1494
        %v1527 = vadd.f32 %v1447, %v1495
        %v1528 = vadd.f32 %v1448, %v1496
        %v1529 = vadd.f32 %v1449, %v1497
        %v1530 = vadd.f32 %v1450, %v1498
        %v1531 = vadd.f32 %v1451, %v1499
        %v1532 = vadd.f32 %v1452, %v1500
        %v1533 = vadd.f32 %v1453, %v1501
        %v1534 = vadd.f32 %v1454, %v1502
        %v1535 = vadd.f32 %v1455, %v1503
        %v1536 = vadd.f32 %v1456, %v1504
        %v1537 = vadd.f32 %v1457, %v1505
        %v1538 = vadd.f32 %v1458, %v1506
        %v1539 = vadd.f32 %v1459, %v1507
        %v1540 = vadd.f32 %v1460, %v1508
        %v1541 = vadd.f32 %v1461, %v1509
        %v1542 = vadd.f32 %v1462, %v1510
        %v1543 = vmax.f32 %v1511, %v1512
        %v1544 = vmax.f32 %v1543, %v1513
        %v1545 = vmax.f32 %v1544, %v1514
        %1546 = vmax.xlane.f32.xlu0 %v1545
        %v1547 = vpop.xlane.xlu0 %1546
        %v1548 = vmax.f32 %v1515, %v1516
        %v1549 = vmax.f32 %v1548, %v1517
        %v1550 = vmax.f32 %v1549, %v1518
        %1551 = vmax.xlane.f32.xlu0 %v1550
        %v1552 = vpop.xlane.xlu0 %1551
        %v1553 = vmax.f32 %v1519, %v1520
        %v1554 = vmax.f32 %v1553, %v1521
        %v1555 = vmax.f32 %v1554, %v1522
        %1556 = vmax.xlane.f32.xlu0 %v1555
        %v1557 = vpop.xlane.xlu0 %1556
        %v1558 = vmax.f32 %v1523, %v1524
        %v1559 = vmax.f32 %v1558, %v1525
        %v1560 = vmax.f32 %v1559, %v1526
        %1561 = vmax.xlane.f32.xlu0 %v1560
        %v1562 = vpop.xlane.xlu0 %1561
        %v1563 = vmax.f32 %v1527, %v1528
        %v1564 = vmax.f32 %v1563, %v1529
        %v1565 = vmax.f32 %v1564, %v1530
        %1566 = vmax.xlane.f32.xlu0 %v1565
        %v1567 = vpop.xlane.xlu0 %1566
        %v1568 = vmax.f32 %v1531, %v1532
        %v1569 = vmax.f32 %v1568, %v1533
        %v1570 = vmax.f32 %v1569, %v1534
        %1571 = vmax.xlane.f32.xlu0 %v1570
        %v1572 = vpop.xlane.xlu0 %1571
        %v1573 = vmax.f32 %v1535, %v1536
        %v1574 = vmax.f32 %v1573, %v1537
        %v1575 = vmax.f32 %v1574, %v1538
        %1576 = vmax.xlane.f32.xlu0 %v1575
        %v1577 = vpop.xlane.xlu0 %1576
        %v1578 = vmax.f32 %v1539, %v1540
        %v1579 = vmax.f32 %v1578, %v1541
        %v1580 = vmax.f32 %v1579, %v1542
        %1581 = vmax.xlane.f32.xlu0 %v1580
        %v1582 = vpop.xlane.xlu0 %1581
        %v1583 = vsub.f32 %v1511, %v1547
        %v1584 = vsub.f32 %v1512, %v1547
        %v1585 = vsub.f32 %v1513, %v1547
        %v1586 = vsub.f32 %v1514, %v1547
        %v1587 = vsub.f32 %v1515, %v1552
        %v1588 = vsub.f32 %v1516, %v1552
        %v1589 = vsub.f32 %v1517, %v1552
        %v1590 = vsub.f32 %v1518, %v1552
        %v1591 = vsub.f32 %v1519, %v1557
        %v1592 = vsub.f32 %v1520, %v1557
        %v1593 = vsub.f32 %v1521, %v1557
        %v1594 = vsub.f32 %v1522, %v1557
        %v1595 = vsub.f32 %v1523, %v1562
        %v1596 = vsub.f32 %v1524, %v1562
        %v1597 = vsub.f32 %v1525, %v1562
        %v1598 = vsub.f32 %v1526, %v1562
        %v1599 = vsub.f32 %v1527, %v1567
        %v1600 = vsub.f32 %v1528, %v1567
        %v1601 = vsub.f32 %v1529, %v1567
        %v1602 = vsub.f32 %v1530, %v1567
        %v1603 = vsub.f32 %v1531, %v1572
        %v1604 = vsub.f32 %v1532, %v1572
        %v1605 = vsub.f32 %v1533, %v1572
        %v1606 = vsub.f32 %v1534, %v1572
        %v1607 = vsub.f32 %v1535, %v1577
        %v1608 = vsub.f32 %v1536, %v1577
        %v1609 = vsub.f32 %v1537, %v1577
        %v1610 = vsub.f32 %v1538, %v1577
        %v1611 = vsub.f32 %v1539, %v1582
        %v1612 = vsub.f32 %v1540, %v1582
        %v1613 = vsub.f32 %v1541, %v1582
        %v1614 = vsub.f32 %v1542, %v1582
        %v1615 = vmul.f32 %v1583, 1.442695
        %v1616 = vpow.pop %v1615
        %v1617 = vmul.f32 %v1584, 1.442695
        %v1618 = vpow.pop %v1617
        %v1619 = vmul.f32 %v1585, 1.442695
        %v1620 = vpow.pop %v1619
        %v1621 = vmul.f32 %v1586, 1.442695
        %v1622 = vpow.pop %v1621
        %v1623 = vmul.f32 %v1587, 1.442695
        %v1624 = vpow.pop %v1623
        %v1625 = vmul.f32 %v1588, 1.442695
        %v1626 = vpow.pop %v1625
        %v1627 = vmul.f32 %v1589, 1.442695
        %v1628 = vpow.pop %v1627
        %v1629 = vmul.f32 %v1590, 1.442695
        %v1630 = vpow.pop %v1629
        %v1631 = vmul.f32 %v1591, 1.442695
        %v1632 = vpow.pop %v1631
        %v1633 = vmul.f32 %v1592, 1.442695
        %v1634 = vpow.pop %v1633
        %v1635 = vmul.f32 %v1593, 1.442695
        %v1636 = vpow.pop %v1635
        %v1637 = vmul.f32 %v1594, 1.442695
        %v1638 = vpow.pop %v1637
        %v1639 = vmul.f32 %v1595, 1.442695
        %v1640 = vpow.pop %v1639
        %v1641 = vmul.f32 %v1596, 1.442695
        %v1642 = vpow.pop %v1641
        %v1643 = vmul.f32 %v1597, 1.442695
        %v1644 = vpow.pop %v1643
        %v1645 = vmul.f32 %v1598, 1.442695
        %v1646 = vpow.pop %v1645
        %v1647 = vmul.f32 %v1599, 1.442695
        %v1648 = vpow.pop %v1647
        %v1649 = vmul.f32 %v1600, 1.442695
        %v1650 = vpow.pop %v1649
        %v1651 = vmul.f32 %v1601, 1.442695
        %v1652 = vpow.pop %v1651
        %v1653 = vmul.f32 %v1602, 1.442695
        %v1654 = vpow.pop %v1653
        %v1655 = vmul.f32 %v1603, 1.442695
        %v1656 = vpow.pop %v1655
        %v1657 = vmul.f32 %v1604, 1.442695
        %v1658 = vpow.pop %v1657
        %v1659 = vmul.f32 %v1605, 1.442695
        %v1660 = vpow.pop %v1659
        %v1661 = vmul.f32 %v1606, 1.442695
        %v1662 = vpow.pop %v1661
        %v1663 = vmul.f32 %v1607, 1.442695
        %v1664 = vpow.pop %v1663
        %v1665 = vmul.f32 %v1608, 1.442695
        %v1666 = vpow.pop %v1665
        %v1667 = vmul.f32 %v1609, 1.442695
        %v1668 = vpow.pop %v1667
        %v1669 = vmul.f32 %v1610, 1.442695
        %v1670 = vpow.pop %v1669
        %v1671 = vmul.f32 %v1611, 1.442695
        %v1672 = vpow.pop %v1671
        %v1673 = vmul.f32 %v1612, 1.442695
        %v1674 = vpow.pop %v1673
        %v1675 = vmul.f32 %v1613, 1.442695
        %v1676 = vpow.pop %v1675
        %v1677 = vmul.f32 %v1614, 1.442695
        %v1678 = vpow.pop %v1677
        %v1679 = vpack.c.bf16 %v1624, %v1616
        %v1680 = vpack.c.bf16 %v1626, %v1618
        %v1681 = vpack.c.bf16 %v1628, %v1620
        %v1682 = vpack.c.bf16 %v1630, %v1622
        %v1683 = vpack.c.bf16 %v1640, %v1632
        %v1684 = vpack.c.bf16 %v1642, %v1634
        %v1685 = vpack.c.bf16 %v1644, %v1636
        %v1686 = vpack.c.bf16 %v1646, %v1638
        %v1687 = vpack.c.bf16 %v1656, %v1648
        %v1688 = vpack.c.bf16 %v1658, %v1650
        %v1689 = vpack.c.bf16 %v1660, %v1652
        %v1690 = vpack.c.bf16 %v1662, %v1654
        %v1691 = vpack.c.bf16 %v1672, %v1664
        %v1692 = vpack.c.bf16 %v1674, %v1666
        %v1693 = vpack.c.bf16 %v1676, %v1668
        %v1694 = vpack.c.bf16 %v1678, %v1670
        %v1695 = vld [vmem:[%s4] sm:$0xf]
        %v1696 = vld [vmem:[%s4 + $0x4] sm:$0xf]
        %v1697 = vld [vmem:[%s4 + $0x8] sm:$0xf]
        %v1698 = vld [vmem:[%s4 + $0xc] sm:$0xf]
        %v1699 = vld [vmem:[%s4 + $0x10] sm:$0xf]
        %v1700 = vld [vmem:[%s4 + $0x14] sm:$0xf]
        %v1701 = vld [vmem:[%s4 + $0x18] sm:$0xf]
        %v1702 = vld [vmem:[%s4 + $0x1c] sm:$0xf]
        %v1703 = vld [vmem:[%s4 + $0x20] sm:$0xf]
        %v1704 = vld [vmem:[%s4 + $0x24] sm:$0xf]
        %v1705 = vld [vmem:[%s4 + $0x28] sm:$0xf]
        %v1706 = vld [vmem:[%s4 + $0x2c] sm:$0xf]
        %v1707 = vld [vmem:[%s4 + $0x30] sm:$0xf]
        %v1708 = vld [vmem:[%s4 + $0x34] sm:$0xf]
        %v1709 = vld [vmem:[%s4 + $0x38] sm:$0xf]
        %v1710 = vld [vmem:[%s4 + $0x3c] sm:$0xf]
        %v1711 = vld [vmem:[%s4 + $0x40] sm:$0xf]
        %v1712 = vld [vmem:[%s4 + $0x44] sm:$0xf]
        %v1713 = vld [vmem:[%s4 + $0x48] sm:$0xf]
        %v1714 = vld [vmem:[%s4 + $0x4c] sm:$0xf]
        %v1715 = vld [vmem:[%s4 + $0x50] sm:$0xf]
        %v1716 = vld [vmem:[%s4 + $0x54] sm:$0xf]
        %v1717 = vld [vmem:[%s4 + $0x58] sm:$0xf]
        %v1718 = vld [vmem:[%s4 + $0x5c] sm:$0xf]
        %v1719 = vld [vmem:[%s4 + $0x60] sm:$0xf]
        %v1720 = vld [vmem:[%s4 + $0x64] sm:$0xf]
        %v1721 = vld [vmem:[%s4 + $0x68] sm:$0xf]
        %v1722 = vld [vmem:[%s4 + $0x6c] sm:$0xf]
        %v1723 = vld [vmem:[%s4 + $0x70] sm:$0xf]
        %v1724 = vld [vmem:[%s4 + $0x74] sm:$0xf]
        %v1725 = vld [vmem:[%s4 + $0x78] sm:$0xf]
        %v1726 = vld [vmem:[%s4 + $0x7c] sm:$0xf]
        %v1727 = vld [vmem:[%s4 + $0x80] sm:$0xf]
        %v1728 = vld [vmem:[%s4 + $0x84] sm:$0xf]
        %v1729 = vld [vmem:[%s4 + $0x88] sm:$0xf]
        %v1730 = vld [vmem:[%s4 + $0x8c] sm:$0xf]
        %v1731 = vld [vmem:[%s4 + $0x90] sm:$0xf]
        %v1732 = vld [vmem:[%s4 + $0x94] sm:$0xf]
        %v1733 = vld [vmem:[%s4 + $0x98] sm:$0xf]
        %v1734 = vld [vmem:[%s4 + $0x9c] sm:$0xf]
        %v1735 = vld [vmem:[%s4 + $0xa0] sm:$0xf]
        %v1736 = vld [vmem:[%s4 + $0xa4] sm:$0xf]
        %v1737 = vld [vmem:[%s4 + $0xa8] sm:$0xf]
        %v1738 = vld [vmem:[%s4 + $0xac] sm:$0xf]
        %v1739 = vld [vmem:[%s4 + $0xb0] sm:$0xf]
        %v1740 = vld [vmem:[%s4 + $0xb4] sm:$0xf]
        %v1741 = vld [vmem:[%s4 + $0xb8] sm:$0xf]
        %v1742 = vld [vmem:[%s4 + $0xbc] sm:$0xf]
        %v1743 = vld [vmem:[%s4 + $0xc0] sm:$0xf]
        %v1744 = vld [vmem:[%s4 + $0xc4] sm:$0xf]
        %v1745 = vld [vmem:[%s4 + $0xc8] sm:$0xf]
        %v1746 = vld [vmem:[%s4 + $0xcc] sm:$0xf]
        %v1747 = vld [vmem:[%s4 + $0xd0] sm:$0xf]
        %v1748 = vld [vmem:[%s4 + $0xd4] sm:$0xf]
        %v1749 = vld [vmem:[%s4 + $0xd8] sm:$0xf]
        %v1750 = vld [vmem:[%s4 + $0xdc] sm:$0xf]
        %v1751 = vld [vmem:[%s4 + $0xe0] sm:$0xf]
        %v1752 = vld [vmem:[%s4 + $0xe4] sm:$0xf]
        %v1753 = vld [vmem:[%s4 + $0xe8] sm:$0xf]
        %v1754 = vld [vmem:[%s4 + $0xec] sm:$0xf]
        %v1755 = vld [vmem:[%s4 + $0xf0] sm:$0xf]
        %v1756 = vld [vmem:[%s4 + $0xf4] sm:$0xf]
        %v1757 = vld [vmem:[%s4 + $0xf8] sm:$0xf]
        %v1758 = vld [vmem:[%s4 + $0xfc] sm:$0xf]
        %v1823 = vunpack.c.l.b16 %v1695
        %v1824 = vunpack.c.l.b16 %v1696
        %v1825 = vunpack.c.l.b16 %v1697
        %v1826 = vunpack.c.l.b16 %v1698
        %v1827 = vunpack.c.l.b16 %v1699
        %v1828 = vunpack.c.l.b16 %v1700
        %v1829 = vunpack.c.l.b16 %v1701
        %v1830 = vunpack.c.l.b16 %v1702
        %v1831 = vunpack.c.l.b16 %v1703
        %v1832 = vunpack.c.l.b16 %v1704
        %v1833 = vunpack.c.l.b16 %v1705
        %v1834 = vunpack.c.l.b16 %v1706
        %v1835 = vunpack.c.l.b16 %v1707
        %v1836 = vunpack.c.l.b16 %v1708
        %v1837 = vunpack.c.l.b16 %v1709
        %v1838 = vunpack.c.l.b16 %v1710
        %v1839 = vunpack.c.l.b16 %v1711
        %v1840 = vunpack.c.l.b16 %v1712
        %v1841 = vunpack.c.l.b16 %v1713
        %v1842 = vunpack.c.l.b16 %v1714
        %v1843 = vunpack.c.l.b16 %v1715
        %v1844 = vunpack.c.l.b16 %v1716
        %v1845 = vunpack.c.l.b16 %v1717
        %v1846 = vunpack.c.l.b16 %v1718
        %v1847 = vunpack.c.l.b16 %v1719
        %v1848 = vunpack.c.l.b16 %v1720
        %v1849 = vunpack.c.l.b16 %v1721
        %v1850 = vunpack.c.l.b16 %v1722
        %v1851 = vunpack.c.l.b16 %v1723
        %v1852 = vunpack.c.l.b16 %v1724
        %v1853 = vunpack.c.l.b16 %v1725
        %v1854 = vunpack.c.l.b16 %v1726
        %v1855 = vunpack.c.l.b16 %v1727
        %v1856 = vunpack.c.l.b16 %v1728
        %v1857 = vunpack.c.l.b16 %v1729
        %v1858 = vunpack.c.l.b16 %v1730
        %v1859 = vunpack.c.l.b16 %v1731
        %v1860 = vunpack.c.l.b16 %v1732
        %v1861 = vunpack.c.l.b16 %v1733
        %v1862 = vunpack.c.l.b16 %v1734
        %v1863 = vunpack.c.l.b16 %v1735
        %v1864 = vunpack.c.l.b16 %v1736
        %v1865 = vunpack.c.l.b16 %v1737
        %v1866 = vunpack.c.l.b16 %v1738
        %v1867 = vunpack.c.l.b16 %v1739
        %v1868 = vunpack.c.l.b16 %v1740
        %v1869 = vunpack.c.l.b16 %v1741
        %v1870 = vunpack.c.l.b16 %v1742
        %v1871 = vunpack.c.l.b16 %v1743
        %v1872 = vunpack.c.l.b16 %v1744
        %v1873 = vunpack.c.l.b16 %v1745
        %v1874 = vunpack.c.l.b16 %v1746
        %v1875 = vunpack.c.l.b16 %v1747
        %v1876 = vunpack.c.l.b16 %v1748
        %v1877 = vunpack.c.l.b16 %v1749
        %v1878 = vunpack.c.l.b16 %v1750
        %v1879 = vunpack.c.l.b16 %v1751
        %v1880 = vunpack.c.l.b16 %v1752
        %v1881 = vunpack.c.l.b16 %v1753
        %v1882 = vunpack.c.l.b16 %v1754
        %v1883 = vunpack.c.l.b16 %v1755
        %v1884 = vunpack.c.l.b16 %v1756
        %v1885 = vunpack.c.l.b16 %v1757
        %v1886 = vunpack.c.l.b16 %v1758
        %v1887 = vpack.c.b16 %v1824, %v1823
        %v1888 = vpack.c.b16 %v1826, %v1825
        %v1889 = vpack.c.b16 %v1828, %v1827
        %v1890 = vpack.c.b16 %v1830, %v1829
        %v1891 = vpack.c.b16 %v1832, %v1831
        %v1892 = vpack.c.b16 %v1834, %v1833
        %v1893 = vpack.c.b16 %v1836, %v1835
        %v1894 = vpack.c.b16 %v1838, %v1837
        %v1895 = vpack.c.b16 %v1840, %v1839
        %v1896 = vpack.c.b16 %v1842, %v1841
        %v1897 = vpack.c.b16 %v1844, %v1843
        %v1898 = vpack.c.b16 %v1846, %v1845
        %v1899 = vpack.c.b16 %v1848, %v1847
        %v1900 = vpack.c.b16 %v1850, %v1849
        %v1901 = vpack.c.b16 %v1852, %v1851
        %v1902 = vpack.c.b16 %v1854, %v1853
        %v1903 = vpack.c.b16 %v1856, %v1855
        %v1904 = vpack.c.b16 %v1858, %v1857
        %v1905 = vpack.c.b16 %v1860, %v1859
        %v1906 = vpack.c.b16 %v1862, %v1861
        %v1907 = vpack.c.b16 %v1864, %v1863
        %v1908 = vpack.c.b16 %v1866, %v1865
        %v1909 = vpack.c.b16 %v1868, %v1867
        %v1910 = vpack.c.b16 %v1870, %v1869
        %v1911 = vpack.c.b16 %v1872, %v1871
        %v1912 = vpack.c.b16 %v1874, %v1873
        %v1913 = vpack.c.b16 %v1876, %v1875
        %v1914 = vpack.c.b16 %v1878, %v1877
        %v1915 = vpack.c.b16 %v1880, %v1879
        %v1916 = vpack.c.b16 %v1882, %v1881
        %v1917 = vpack.c.b16 %v1884, %v1883
        %v1918 = vpack.c.b16 %v1886, %v1885
        %1951 = vmatprep.subr.bf16.mxu0 0
        %1952 = vmatpush1.bf16.msra.mxu0 %v1894
        %1953 = vmatprep.subr.bf16.mxu0 0
        %1954 = vmatpush1.bf16.msra.mxu0 %v1893
        %1955 = vmatprep.subr.bf16.mxu0 0
        %1956 = vmatpush1.bf16.msra.mxu0 %v1892
        %1957 = vmatprep.subr.bf16.mxu0 0
        %1958 = vmatpush1.bf16.msra.mxu0 %v1891
        %1959 = vmatprep.subr.bf16.mxu0 0
        %1960 = vmatpush1.bf16.msra.mxu0 %v1890
        %1961 = vmatprep.subr.bf16.mxu0 0
        %1962 = vmatpush1.bf16.msra.mxu0 %v1889
        %1963 = vmatprep.subr.bf16.mxu0 0
        %1964 = vmatpush1.bf16.msra.mxu0 %v1888
        %1965 = vmatprep.subr.bf16.mxu0 0
        %1966 = vmatpush1.bf16.msra.mxu0 %v1887
        %1967 = vmatprep.subr.bf16.mxu0 0
        %1968 = vmatpush2.bf16.msra.mxu0 %v1902
        %1969 = vmatprep.subr.bf16.mxu0 0
        %1970 = vmatpush2.bf16.msra.mxu0 %v1901
        %1971 = vmatprep.subr.bf16.mxu0 0
        %1972 = vmatpush2.bf16.msra.mxu0 %v1900
        %1973 = vmatprep.subr.bf16.mxu0 0
        %1974 = vmatpush2.bf16.msra.mxu0 %v1899
        %1975 = vmatprep.subr.bf16.mxu0 0
        %1976 = vmatpush2.bf16.msra.mxu0 %v1898
        %1977 = vmatprep.subr.bf16.mxu0 0
        %1978 = vmatpush2.bf16.msra.mxu0 %v1897
        %1979 = vmatprep.subr.bf16.mxu0 0
        %1980 = vmatpush2.bf16.msra.mxu0 %v1896
        %1981 = vmatprep.subr.bf16.mxu0 0
        %1982 = vmatpush2.bf16.msra.mxu0 %v1895
        %1983 = vmatprep.mubr.bf16.mxu0 %v1680
        %1984 = vmatmul.mubr.bf16.gmra.mxu0 %v1679
        %v1985 = vpop.f32.mrf.mxu0
        %v1986 = vadd.f32 0.0, %v1985
        %v1987 = vpop.f32.mrf.mxu0
        %v1988 = vpop.f32.mrf.mxu0
        %v1989 = vadd.f32 0.0, %v1988
        %v1990 = vpop.f32.mrf.mxu0
        %1991 = vmatprep.mubr.bf16.mxu0 %v1684
        %1992 = vmatmul.mubr.bf16.gmra.mxu0 %v1683
        %v1993 = vpop.f32.mrf.mxu0
        %v1994 = vadd.f32 0.0, %v1993
        %v1995 = vpop.f32.mrf.mxu0
        %v1996 = vpop.f32.mrf.mxu0
        %v1997 = vadd.f32 0.0, %v1996
        %v1998 = vpop.f32.mrf.mxu0
        %1999 = vmatprep.mubr.bf16.mxu0 %v1688
        %2000 = vmatmul.mubr.bf16.gmra.mxu0 %v1687
        %v2001 = vpop.f32.mrf.mxu0
        %v2002 = vadd.f32 0.0, %v2001
        %v2003 = vpop.f32.mrf.mxu0
        %v2004 = vpop.f32.mrf.mxu0
        %v2005 = vadd.f32 0.0, %v2004
        %v2006 = vpop.f32.mrf.mxu0
        %2007 = vmatprep.mubr.bf16.mxu0 %v1692
        %2008 = vmatmul.mubr.bf16.gmra.mxu0 %v1691
        %v2009 = vpop.f32.mrf.mxu0
        %v2010 = vadd.f32 0.0, %v2009
        %v2011 = vpop.f32.mrf.mxu0
        %v2012 = vpop.f32.mrf.mxu0
        %v2013 = vadd.f32 0.0, %v2012
        %v2014 = vpop.f32.mrf.mxu0
        %2015 = vdwg.mxu0
        %2016 = vmatprep.subr.bf16.mxu0 0
        %2017 = vmatpush1.bf16.msra.mxu0 %v1910
        %2018 = vmatprep.subr.bf16.mxu0 0
        %2019 = vmatpush1.bf16.msra.mxu0 %v1909
        %2020 = vmatprep.subr.bf16.mxu0 0
        %2021 = vmatpush1.bf16.msra.mxu0 %v1908
        %2022 = vmatprep.subr.bf16.mxu0 0
        %2023 = vmatpush1.bf16.msra.mxu0 %v1907
        %2024 = vmatprep.subr.bf16.mxu0 0
        %2025 = vmatpush1.bf16.msra.mxu0 %v1906
        %2026 = vmatprep.subr.bf16.mxu0 0
        %2027 = vmatpush1.bf16.msra.mxu0 %v1905
        %2028 = vmatprep.subr.bf16.mxu0 0
        %2029 = vmatpush1.bf16.msra.mxu0 %v1904
        %2030 = vmatprep.subr.bf16.mxu0 0
        %2031 = vmatpush1.bf16.msra.mxu0 %v1903
        %2032 = vmatprep.subr.bf16.mxu0 0
        %2033 = vmatpush2.bf16.msra.mxu0 %v1918
        %2034 = vmatprep.subr.bf16.mxu0 0
        %2035 = vmatpush2.bf16.msra.mxu0 %v1917
        %2036 = vmatprep.subr.bf16.mxu0 0
        %2037 = vmatpush2.bf16.msra.mxu0 %v1916
        %2038 = vmatprep.subr.bf16.mxu0 0
        %2039 = vmatpush2.bf16.msra.mxu0 %v1915
        %2040 = vmatprep.subr.bf16.mxu0 0
        %2041 = vmatpush2.bf16.msra.mxu0 %v1914
        %2042 = vmatprep.subr.bf16.mxu0 0
        %2043 = vmatpush2.bf16.msra.mxu0 %v1913
        %2044 = vmatprep.subr.bf16.mxu0 0
        %2045 = vmatpush2.bf16.msra.mxu0 %v1912
        %2046 = vmatprep.subr.bf16.mxu0 0
        %2047 = vmatpush2.bf16.msra.mxu0 %v1911
        %2048 = vmatprep.mubr.bf16.mxu0 %v1682
        %2049 = vmatmul.mubr.bf16.gmra.mxu0 %v1681
        %v2050 = vpop.f32.mrf.mxu0
        %v2051 = vadd.f32 %v1986, %v2050
        %v2052 = vpop.f32.mrf.mxu0
        %v2053 = vpop.f32.mrf.mxu0
        %v2054 = vadd.f32 %v1989, %v2053
        %v2055 = vpop.f32.mrf.mxu0
        %2056 = vmatprep.mubr.bf16.mxu0 %v1686
        %2057 = vmatmul.mubr.bf16.gmra.mxu0 %v1685
        %v2058 = vpop.f32.mrf.mxu0
        %v2059 = vadd.f32 %v1994, %v2058
        %v2060 = vpop.f32.mrf.mxu0
        %v2061 = vpop.f32.mrf.mxu0
        %v2062 = vadd.f32 %v1997, %v2061
        %v2063 = vpop.f32.mrf.mxu0
        %2064 = vmatprep.mubr.bf16.mxu0 %v1690
        %2065 = vmatmul.mubr.bf16.gmra.mxu0 %v1689
        %v2066 = vpop.f32.mrf.mxu0
        %v2067 = vadd.f32 %v2002, %v2066
        %v2068 = vpop.f32.mrf.mxu0
        %v2069 = vpop.f32.mrf.mxu0
        %v2070 = vadd.f32 %v2005, %v2069
        %v2071 = vpop.f32.mrf.mxu0
        %2072 = vmatprep.mubr.bf16.mxu0 %v1694
        %2073 = vmatmul.mubr.bf16.gmra.mxu0 %v1693
        %v2074 = vpop.f32.mrf.mxu0
        %v2075 = vadd.f32 %v2010, %v2074
        %v2076 = vpop.f32.mrf.mxu0
        %v2077 = vpop.f32.mrf.mxu0
        %v2078 = vadd.f32 %v2013, %v2077
        %v2079 = vpop.f32.mrf.mxu0
        %2080 = vdwg.mxu0
        %v2081 = vmul.f32 %v2051, 8.0
        %v2082 = vmul.f32 %v2054, 8.0
        %v2083 = vmul.f32 %v2059, 8.0
        %v2084 = vmul.f32 %v2062, 8.0
        %v2085 = vmul.f32 %v2067, 8.0
        %v2086 = vmul.f32 %v2070, 8.0
        %v2087 = vmul.f32 %v2075, 8.0
        %v2088 = vmul.f32 %v2078, 8.0
        %v2089 = vrcp.pop %v2081
        %v2090 = vrcp.pop %v2082
        %v2091 = vrcp.pop %v2083
        %v2092 = vrcp.pop %v2084
        %v2093 = vrcp.pop %v2085
        %v2094 = vrcp.pop %v2086
        %v2095 = vrcp.pop %v2087
        %v2096 = vrcp.pop %v2088
        %v2098 = vsel %vm1124, %v2089, 0
        %v2101 = vsel %vm1124, %v2090, 0
        %v2104 = vsel %vm1124, %v2091, 0
        %v2107 = vsel %vm1124, %v2092, 0
        %v2110 = vsel %vm1124, %v2093, 0
        %v2113 = vsel %vm1124, %v2094, 0
        %v2116 = vsel %vm1124, %v2095, 0
        %v2119 = vsel %vm1124, %v2096, 0
        %2121 = vmatprep.subr.mxu0 0.0
        %2122 = vmatpush1.msra.mxu0 0.0
        %2123 = vmatprep.subr.mxu0 0.0
        %2124 = vmatpush1.msra.mxu0 0.0
        %2125 = vmatprep.subr.mxu0 0.0
        %2126 = vmatpush1.msra.mxu0 0.0
        %2127 = vmatprep.subr.mxu0 0.0
        %2128 = vmatpush1.msra.mxu0 0.0
        %2129 = vmatprep.subr.mxu0 0.0
        %2130 = vmatpush1.msra.mxu0 0.0
        %2131 = vmatprep.subr.mxu0 0.0
        %2132 = vmatpush1.msra.mxu0 0.0
        %2133 = vmatprep.subr.mxu0 0.0
        %2134 = vmatpush1.msra.mxu0 0.0
        %2135 = vmatprep.subr.mxu0 0.0
        %2136 = vmatpush1.msra.mxu0 0.0
        %2137 = vmatprep.subr.mxu0 0.0
        %2138 = vmatpush1.msra.mxu0 0.0
        %2139 = vmatprep.subr.mxu0 0.0
        %2140 = vmatpush1.msra.mxu0 0.0
        %2141 = vmatprep.subr.mxu0 0.0
        %2142 = vmatpush1.msra.mxu0 0.0
        %2143 = vmatprep.subr.mxu0 0.0
        %2144 = vmatpush1.msra.mxu0 0.0
        %2145 = vmatprep.subr.mxu0 0.0
        %2146 = vmatpush1.msra.mxu0 0.0
        %2147 = vmatprep.subr.mxu0 0.0
        %2148 = vmatpush1.msra.mxu0 0.0
        %2149 = vmatprep.subr.mxu0 0.0
        %2150 = vmatpush1.msra.mxu0 0.0
        %2151 = vmatprep.subr.mxu0 %v1013
        %2152 = vmatpush1.msra.mxu0 %v1012
        %2153 = vmatprep.subr.mxu0 0.0
        %2154 = vmatpush2.msra.mxu0 0.0
        %2155 = vmatprep.subr.mxu0 0.0
        %2156 = vmatpush2.msra.mxu0 0.0
        %2157 = vmatprep.subr.mxu0 0.0
        %2158 = vmatpush2.msra.mxu0 0.0
        %2159 = vmatprep.subr.mxu0 0.0
        %2160 = vmatpush2.msra.mxu0 0.0
        %2161 = vmatprep.subr.mxu0 0.0
        %2162 = vmatpush2.msra.mxu0 0.0
        %2163 = vmatprep.subr.mxu0 0.0
        %2164 = vmatpush2.msra.mxu0 0.0
        %2165 = vmatprep.subr.mxu0 0.0
        %2166 = vmatpush2.msra.mxu0 0.0
        %2167 = vmatprep.subr.mxu0 0.0
        %2168 = vmatpush2.msra.mxu0 0.0
        %2169 = vmatprep.subr.mxu0 0.0
        %2170 = vmatpush2.msra.mxu0 0.0
        %2171 = vmatprep.subr.mxu0 0.0
        %2172 = vmatpush2.msra.mxu0 0.0
        %2173 = vmatprep.subr.mxu0 0.0
        %2174 = vmatpush2.msra.mxu0 0.0
        %2175 = vmatprep.subr.mxu0 0.0
        %2176 = vmatpush2.msra.mxu0 0.0
        %2177 = vmatprep.subr.mxu0 0.0
        %2178 = vmatpush2.msra.mxu0 0.0
        %2179 = vmatprep.subr.mxu0 0.0
        %2180 = vmatpush2.msra.mxu0 0.0
        %2181 = vmatprep.subr.mxu0 0.0
        %2182 = vmatpush2.msra.mxu0 0.0
        %2183 = vmatprep.subr.mxu0 0.0
        %2184 = vmatpush2.msra.mxu0 0.0
        %2185 = vmatprep.mubr.f32.mxu0 0.0
        %2186 = vmatmul.mubr.f32.gmra.mxu0 %v2098
        %v2187 = vpop.f32.mrf.mxu0
        %v2188 = vadd.f32 0.0, %v2187
        %v2189 = vpop.f32.mrf.mxu0
        %v2190 = vadd.f32 0.0, %v2189
        %2191 = vmatprep.mubr.f32.mxu0 0.0
        %2192 = vmatmul.mubr.f32.gmra.mxu0 %v2101
        %v2193 = vpop.f32.mrf.mxu0
        %v2194 = vadd.f32 0.0, %v2193
        %v2195 = vpop.f32.mrf.mxu0
        %v2196 = vadd.f32 0.0, %v2195
        %2197 = vmatprep.mubr.f32.mxu0 0.0
        %2198 = vmatmul.mubr.f32.gmra.mxu0 %v2104
        %v2199 = vpop.f32.mrf.mxu0
        %v2200 = vadd.f32 0.0, %v2199
        %v2201 = vpop.f32.mrf.mxu0
        %v2202 = vadd.f32 0.0, %v2201
        %2203 = vmatprep.mubr.f32.mxu0 0.0
        %2204 = vmatmul.mubr.f32.gmra.mxu0 %v2107
        %v2205 = vpop.f32.mrf.mxu0
        %v2206 = vadd.f32 0.0, %v2205
        %v2207 = vpop.f32.mrf.mxu0
        %v2208 = vadd.f32 0.0, %v2207
        %2209 = vmatprep.mubr.f32.mxu0 0.0
        %2210 = vmatmul.mubr.f32.gmra.mxu0 %v2110
        %v2211 = vpop.f32.mrf.mxu0
        %v2212 = vadd.f32 0.0, %v2211
        %v2213 = vpop.f32.mrf.mxu0
        %v2214 = vadd.f32 0.0, %v2213
        %2215 = vmatprep.mubr.f32.mxu0 0.0
        %2216 = vmatmul.mubr.f32.gmra.mxu0 %v2113
        %v2217 = vpop.f32.mrf.mxu0
        %v2218 = vadd.f32 0.0, %v2217
        %v2219 = vpop.f32.mrf.mxu0
        %v2220 = vadd.f32 0.0, %v2219
        %2221 = vmatprep.mubr.f32.mxu0 0.0
        %2222 = vmatmul.mubr.f32.gmra.mxu0 %v2116
        %v2223 = vpop.f32.mrf.mxu0
        %v2224 = vadd.f32 0.0, %v2223
        %v2225 = vpop.f32.mrf.mxu0
        %v2226 = vadd.f32 0.0, %v2225
        %2227 = vmatprep.mubr.f32.mxu0 0.0
        %2228 = vmatmul.mubr.f32.gmra.mxu0 %v2119
        %v2229 = vpop.f32.mrf.mxu0
        %v2230 = vadd.f32 0.0, %v2229
        %v2231 = vpop.f32.mrf.mxu0
        %v2232 = vadd.f32 0.0, %v2231
        %2233 = vdwg.mxu0
        %2234 = vmatprep.subr.mxu0 0.0
        %2235 = vmatpush1.msra.mxu0 0.0
        %2236 = vmatprep.subr.mxu0 0.0
        %2237 = vmatpush1.msra.mxu0 0.0
        %2238 = vmatprep.subr.mxu0 0.0
        %2239 = vmatpush1.msra.mxu0 0.0
        %2240 = vmatprep.subr.mxu0 0.0
        %2241 = vmatpush1.msra.mxu0 0.0
        %2242 = vmatprep.subr.mxu0 0.0
        %2243 = vmatpush1.msra.mxu0 0.0
        %2244 = vmatprep.subr.mxu0 0.0
        %2245 = vmatpush1.msra.mxu0 0.0
        %2246 = vmatprep.subr.mxu0 0.0
        %2247 = vmatpush1.msra.mxu0 0.0
        %2248 = vmatprep.subr.mxu0 0.0
        %2249 = vmatpush1.msra.mxu0 0.0
        %2250 = vmatprep.subr.mxu0 0.0
        %2251 = vmatpush1.msra.mxu0 0.0
        %2252 = vmatprep.subr.mxu0 0.0
        %2253 = vmatpush1.msra.mxu0 0.0
        %2254 = vmatprep.subr.mxu0 0.0
        %2255 = vmatpush1.msra.mxu0 0.0
        %2256 = vmatprep.subr.mxu0 0.0
        %2257 = vmatpush1.msra.mxu0 0.0
        %2258 = vmatprep.subr.mxu0 0.0
        %2259 = vmatpush1.msra.mxu0 0.0
        %2260 = vmatprep.subr.mxu0 0.0
        %2261 = vmatpush1.msra.mxu0 0.0
        %2262 = vmatprep.subr.mxu0 0.0
        %2263 = vmatpush1.msra.mxu0 0.0
        %2264 = vmatprep.subr.mxu0 %v1015
        %2265 = vmatpush1.msra.mxu0 %v1014
        %2266 = vmatprep.subr.mxu0 0.0
        %2267 = vmatpush2.msra.mxu0 0.0
        %2268 = vmatprep.subr.mxu0 0.0
        %2269 = vmatpush2.msra.mxu0 0.0
        %2270 = vmatprep.subr.mxu0 0.0
        %2271 = vmatpush2.msra.mxu0 0.0
        %2272 = vmatprep.subr.mxu0 0.0
        %2273 = vmatpush2.msra.mxu0 0.0
        %2274 = vmatprep.subr.mxu0 0.0
        %2275 = vmatpush2.msra.mxu0 0.0
        %2276 = vmatprep.subr.mxu0 0.0
        %2277 = vmatpush2.msra.mxu0 0.0
        %2278 = vmatprep.subr.mxu0 0.0
        %2279 = vmatpush2.msra.mxu0 0.0
        %2280 = vmatprep.subr.mxu0 0.0
        %2281 = vmatpush2.msra.mxu0 0.0
        %2282 = vmatprep.subr.mxu0 0.0
        %2283 = vmatpush2.msra.mxu0 0.0
        %2284 = vmatprep.subr.mxu0 0.0
        %2285 = vmatpush2.msra.mxu0 0.0
        %2286 = vmatprep.subr.mxu0 0.0
        %2287 = vmatpush2.msra.mxu0 0.0
        %2288 = vmatprep.subr.mxu0 0.0
        %2289 = vmatpush2.msra.mxu0 0.0
        %2290 = vmatprep.subr.mxu0 0.0
        %2291 = vmatpush2.msra.mxu0 0.0
        %2292 = vmatprep.subr.mxu0 0.0
        %2293 = vmatpush2.msra.mxu0 0.0
        %2294 = vmatprep.subr.mxu0 0.0
        %2295 = vmatpush2.msra.mxu0 0.0
        %2296 = vmatprep.subr.mxu0 0.0
        %2297 = vmatpush2.msra.mxu0 0.0
        %2298 = vmatprep.mubr.f32.mxu0 0.0
        %2299 = vmatmul.mubr.f32.gmra.mxu0 %v2098
        %v2300 = vpop.f32.mrf.mxu0
        %v2301 = vadd.f32 0.0, %v2300
        %v2302 = vpop.f32.mrf.mxu0
        %v2303 = vadd.f32 0.0, %v2302
        %2304 = vmatprep.mubr.f32.mxu0 0.0
        %2305 = vmatmul.mubr.f32.gmra.mxu0 %v2101
        %v2306 = vpop.f32.mrf.mxu0
        %v2307 = vadd.f32 0.0, %v2306
        %v2308 = vpop.f32.mrf.mxu0
        %v2309 = vadd.f32 0.0, %v2308
        %2310 = vmatprep.mubr.f32.mxu0 0.0
        %2311 = vmatmul.mubr.f32.gmra.mxu0 %v2104
        %v2312 = vpop.f32.mrf.mxu0
        %v2313 = vadd.f32 0.0, %v2312
        %v2314 = vpop.f32.mrf.mxu0
        %v2315 = vadd.f32 0.0, %v2314
        %2316 = vmatprep.mubr.f32.mxu0 0.0
        %2317 = vmatmul.mubr.f32.gmra.mxu0 %v2107
        %v2318 = vpop.f32.mrf.mxu0
        %v2319 = vadd.f32 0.0, %v2318
        %v2320 = vpop.f32.mrf.mxu0
        %v2321 = vadd.f32 0.0, %v2320
        %2322 = vmatprep.mubr.f32.mxu0 0.0
        %2323 = vmatmul.mubr.f32.gmra.mxu0 %v2110
        %v2324 = vpop.f32.mrf.mxu0
        %v2325 = vadd.f32 0.0, %v2324
        %v2326 = vpop.f32.mrf.mxu0
        %v2327 = vadd.f32 0.0, %v2326
        %2328 = vmatprep.mubr.f32.mxu0 0.0
        %2329 = vmatmul.mubr.f32.gmra.mxu0 %v2113
        %v2330 = vpop.f32.mrf.mxu0
        %v2331 = vadd.f32 0.0, %v2330
        %v2332 = vpop.f32.mrf.mxu0
        %v2333 = vadd.f32 0.0, %v2332
        %2334 = vmatprep.mubr.f32.mxu0 0.0
        %2335 = vmatmul.mubr.f32.gmra.mxu0 %v2116
        %v2336 = vpop.f32.mrf.mxu0
        %v2337 = vadd.f32 0.0, %v2336
        %v2338 = vpop.f32.mrf.mxu0
        %v2339 = vadd.f32 0.0, %v2338
        %2340 = vmatprep.mubr.f32.mxu0 0.0
        %2341 = vmatmul.mubr.f32.gmra.mxu0 %v2119
        %v2342 = vpop.f32.mrf.mxu0
        %v2343 = vadd.f32 0.0, %v2342
        %v2344 = vpop.f32.mrf.mxu0
        %v2345 = vadd.f32 0.0, %v2344
        %2346 = vdwg.mxu0
        %v2347 = vmul.f32 %v1616, %v2188
        %v2348 = vmul.f32 %v1618, %v2190
        %v2349 = vmul.f32 %v1620, %v2301
        %v2350 = vmul.f32 %v1622, %v2303
        %v2351 = vmul.f32 %v1624, %v2194
        %v2352 = vmul.f32 %v1626, %v2196
        %v2353 = vmul.f32 %v1628, %v2307
        %v2354 = vmul.f32 %v1630, %v2309
        %v2355 = vmul.f32 %v1632, %v2200
        %v2356 = vmul.f32 %v1634, %v2202
        %v2357 = vmul.f32 %v1636, %v2313
        %v2358 = vmul.f32 %v1638, %v2315
        %v2359 = vmul.f32 %v1640, %v2206
        %v2360 = vmul.f32 %v1642, %v2208
        %v2361 = vmul.f32 %v1644, %v2319
        %v2362 = vmul.f32 %v1646, %v2321
        %v2363 = vmul.f32 %v1648, %v2212
        %v2364 = vmul.f32 %v1650, %v2214
        %v2365 = vmul.f32 %v1652, %v2325
        %v2366 = vmul.f32 %v1654, %v2327
        %v2367 = vmul.f32 %v1656, %v2218
        %v2368 = vmul.f32 %v1658, %v2220
        %v2369 = vmul.f32 %v1660, %v2331
        %v2370 = vmul.f32 %v1662, %v2333
        %v2371 = vmul.f32 %v1664, %v2224
        %v2372 = vmul.f32 %v1666, %v2226
        %v2373 = vmul.f32 %v1668, %v2337
        %v2374 = vmul.f32 %v1670, %v2339
        %v2375 = vmul.f32 %v1672, %v2230
        %v2376 = vmul.f32 %v1674, %v2232
        %v2377 = vmul.f32 %v1676, %v2343
        %v2378 = vmul.f32 %v1678, %v2345
        %v2379 = vpack.c.bf16 %v2351, %v2347
        %v2380 = vpack.c.bf16 %v2352, %v2348
        %v2381 = vpack.c.bf16 %v2353, %v2349
        %v2382 = vpack.c.bf16 %v2354, %v2350
        %v2383 = vpack.c.bf16 %v2359, %v2355
        %v2384 = vpack.c.bf16 %v2360, %v2356
        %v2385 = vpack.c.bf16 %v2361, %v2357
        %v2386 = vpack.c.bf16 %v2362, %v2358
        %v2387 = vpack.c.bf16 %v2367, %v2363
        %v2388 = vpack.c.bf16 %v2368, %v2364
        %v2389 = vpack.c.bf16 %v2369, %v2365
        %v2390 = vpack.c.bf16 %v2370, %v2366
        %v2391 = vpack.c.bf16 %v2375, %v2371
        %v2392 = vpack.c.bf16 %v2376, %v2372
        %v2393 = vpack.c.bf16 %v2377, %v2373
        %v2394 = vpack.c.bf16 %v2378, %v2374
        %v2395 = vld [vmem:[#allocation10] sm:$0xf]
        %v2396 = vld [vmem:[#allocation10 + $0x20] sm:$0xf]
        %v2397 = vld [vmem:[#allocation10 + $0x40] sm:$0xf]
        %v2398 = vld [vmem:[#allocation10 + $0x60] sm:$0xf]
        %v2399 = vld [vmem:[#allocation10 + $0x80] sm:$0xf]
        %v2400 = vld [vmem:[#allocation10 + $0xa0] sm:$0xf]
        %v2401 = vld [vmem:[#allocation10 + $0xc0] sm:$0xf]
        %v2402 = vld [vmem:[#allocation10 + $0xe0] sm:$0xf]
        %v2403 = vld [vmem:[#allocation10 + $0x100] sm:$0xf]
        %v2404 = vld [vmem:[#allocation10 + $0x120] sm:$0xf]
        %v2405 = vld [vmem:[#allocation10 + $0x140] sm:$0xf]
        %v2406 = vld [vmem:[#allocation10 + $0x160] sm:$0xf]
        %v2407 = vld [vmem:[#allocation10 + $0x180] sm:$0xf]
        %v2408 = vld [vmem:[#allocation10 + $0x1a0] sm:$0xf]
        %v2409 = vld [vmem:[#allocation10 + $0x1c0] sm:$0xf]
        %v2410 = vld [vmem:[#allocation10 + $0x1e0] sm:$0xf]
        %v2427 = vunpack.c.l.b16 %v2395
        %v2428 = vunpack.c.l.b16 %v2396
        %v2429 = vunpack.c.l.b16 %v2397
        %v2430 = vunpack.c.l.b16 %v2398
        %v2431 = vunpack.c.l.b16 %v2399
        %v2432 = vunpack.c.l.b16 %v2400
        %v2433 = vunpack.c.l.b16 %v2401
        %v2434 = vunpack.c.l.b16 %v2402
        %v2435 = vunpack.c.l.b16 %v2403
        %v2436 = vunpack.c.l.b16 %v2404
        %v2437 = vunpack.c.l.b16 %v2405
        %v2438 = vunpack.c.l.b16 %v2406
        %v2439 = vunpack.c.l.b16 %v2407
        %v2440 = vunpack.c.l.b16 %v2408
        %v2441 = vunpack.c.l.b16 %v2409
        %v2442 = vunpack.c.l.b16 %v2410
        %v2443 = vpack.c.b16 %v2428, %v2427
        %v2444 = vpack.c.b16 %v2430, %v2429
        %v2445 = vpack.c.b16 %v2432, %v2431
        %v2446 = vpack.c.b16 %v2434, %v2433
        %v2447 = vpack.c.b16 %v2436, %v2435
        %v2448 = vpack.c.b16 %v2438, %v2437
        %v2449 = vpack.c.b16 %v2440, %v2439
        %v2450 = vpack.c.b16 %v2442, %v2441
        %2459 = vmatprep.subr.bf16.mxu0 0
        %2460 = vmatpush1.bf16.msra.mxu0 %v2450
        %2461 = vmatprep.subr.bf16.mxu0 0
        %2462 = vmatpush1.bf16.msra.mxu0 %v2449
        %2463 = vmatprep.subr.bf16.mxu0 0
        %2464 = vmatpush1.bf16.msra.mxu0 %v2448
        %2465 = vmatprep.subr.bf16.mxu0 0
        %2466 = vmatpush1.bf16.msra.mxu0 %v2447
        %2467 = vmatprep.subr.bf16.mxu0 0
        %2468 = vmatpush1.bf16.msra.mxu0 %v2446
        %2469 = vmatprep.subr.bf16.mxu0 0
        %2470 = vmatpush1.bf16.msra.mxu0 %v2445
        %2471 = vmatprep.subr.bf16.mxu0 0
        %2472 = vmatpush1.bf16.msra.mxu0 %v2444
        %2473 = vmatprep.subr.bf16.mxu0 0
        %2474 = vmatpush1.bf16.msra.mxu0 %v2443
        %2475 = vmatprep.subr.bf16.mxu0 0
        %2476 = vmatpush2.bf16.msra.mxu0 0
        %2477 = vmatprep.subr.bf16.mxu0 0
        %2478 = vmatpush2.bf16.msra.mxu0 0
        %2479 = vmatprep.subr.bf16.mxu0 0
        %2480 = vmatpush2.bf16.msra.mxu0 0
        %2481 = vmatprep.subr.bf16.mxu0 0
        %2482 = vmatpush2.bf16.msra.mxu0 0
        %2483 = vmatprep.subr.bf16.mxu0 0
        %2484 = vmatpush2.bf16.msra.mxu0 0
        %2485 = vmatprep.subr.bf16.mxu0 0
        %2486 = vmatpush2.bf16.msra.mxu0 0
        %2487 = vmatprep.subr.bf16.mxu0 0
        %2488 = vmatpush2.bf16.msra.mxu0 0
        %2489 = vmatprep.subr.bf16.mxu0 0
        %2490 = vmatpush2.bf16.msra.mxu0 0
        %2491 = vmatprep.mubr.bf16.mxu0 0
        %2492 = vmatmul.mubr.bf16.gmra.mxu0 %v879
        %v2493 = vpop.f32.mrf.mxu0
        %v2494 = vadd.f32 0.0, %v2493
        %v2495 = vpop.f32.mrf.mxu0
        %v2496 = vpop.f32.mrf.mxu0
        %v2497 = vadd.f32 0.0, %v2496
        %v2498 = vpop.f32.mrf.mxu0
        %2499 = vmatprep.mubr.bf16.mxu0 0
        %2500 = vmatmul.mubr.bf16.gmra.mxu0 %v880
        %v2501 = vpop.f32.mrf.mxu0
        %v2502 = vadd.f32 0.0, %v2501
        %v2503 = vpop.f32.mrf.mxu0
        %v2504 = vpop.f32.mrf.mxu0
        %v2505 = vadd.f32 0.0, %v2504
        %v2506 = vpop.f32.mrf.mxu0
        %2507 = vmatprep.mubr.bf16.mxu0 0
        %2508 = vmatmul.mubr.bf16.gmra.mxu0 %v881
        %v2509 = vpop.f32.mrf.mxu0
        %v2510 = vadd.f32 0.0, %v2509
        %v2511 = vpop.f32.mrf.mxu0
        %v2512 = vpop.f32.mrf.mxu0
        %v2513 = vadd.f32 0.0, %v2512
        %v2514 = vpop.f32.mrf.mxu0
        %2515 = vmatprep.mubr.bf16.mxu0 0
        %2516 = vmatmul.mubr.bf16.gmra.mxu0 %v882
        %v2517 = vpop.f32.mrf.mxu0
        %v2518 = vadd.f32 0.0, %v2517
        %v2519 = vpop.f32.mrf.mxu0
        %v2520 = vpop.f32.mrf.mxu0
        %v2521 = vadd.f32 0.0, %v2520
        %v2522 = vpop.f32.mrf.mxu0
        %2523 = vdwg.mxu0
        %v2524 = vpack.c.bf16 %v2497, %v2494
        %v2525 = vpack.c.bf16 %v2505, %v2502
        %v2526 = vpack.c.bf16 %v2513, %v2510
        %v2527 = vpack.c.bf16 %v2521, %v2518
        %v2528 = vld [vmem:[#allocation10 + $0x4] sm:$0xf]
        %v2529 = vld [vmem:[#allocation10 + $0x24] sm:$0xf]
        %v2530 = vld [vmem:[#allocation10 + $0x44] sm:$0xf]
        %v2531 = vld [vmem:[#allocation10 + $0x64] sm:$0xf]
        %v2532 = vld [vmem:[#allocation10 + $0x84] sm:$0xf]
        %v2533 = vld [vmem:[#allocation10 + $0xa4] sm:$0xf]
        %v2534 = vld [vmem:[#allocation10 + $0xc4] sm:$0xf]
        %v2535 = vld [vmem:[#allocation10 + $0xe4] sm:$0xf]
        %v2536 = vld [vmem:[#allocation10 + $0x104] sm:$0xf]
        %v2537 = vld [vmem:[#allocation10 + $0x124] sm:$0xf]
        %v2538 = vld [vmem:[#allocation10 + $0x144] sm:$0xf]
        %v2539 = vld [vmem:[#allocation10 + $0x164] sm:$0xf]
        %v2540 = vld [vmem:[#allocation10 + $0x184] sm:$0xf]
        %v2541 = vld [vmem:[#allocation10 + $0x1a4] sm:$0xf]
        %v2542 = vld [vmem:[#allocation10 + $0x1c4] sm:$0xf]
        %v2543 = vld [vmem:[#allocation10 + $0x1e4] sm:$0xf]
        %v2560 = vunpack.c.l.b16 %v2528
        %v2561 = vunpack.c.l.b16 %v2529
        %v2562 = vunpack.c.l.b16 %v2530
        %v2563 = vunpack.c.l.b16 %v2531
        %v2564 = vunpack.c.l.b16 %v2532
        %v2565 = vunpack.c.l.b16 %v2533
        %v2566 = vunpack.c.l.b16 %v2534
        %v2567 = vunpack.c.l.b16 %v2535
        %v2568 = vunpack.c.l.b16 %v2536
        %v2569 = vunpack.c.l.b16 %v2537
        %v2570 = vunpack.c.l.b16 %v2538
        %v2571 = vunpack.c.l.b16 %v2539
        %v2572 = vunpack.c.l.b16 %v2540
        %v2573 = vunpack.c.l.b16 %v2541
        %v2574 = vunpack.c.l.b16 %v2542
        %v2575 = vunpack.c.l.b16 %v2543
        %v2576 = vpack.c.b16 %v2561, %v2560
        %v2577 = vpack.c.b16 %v2563, %v2562
        %v2578 = vpack.c.b16 %v2565, %v2564
        %v2579 = vpack.c.b16 %v2567, %v2566
        %v2580 = vpack.c.b16 %v2569, %v2568
        %v2581 = vpack.c.b16 %v2571, %v2570
        %v2582 = vpack.c.b16 %v2573, %v2572
        %v2583 = vpack.c.b16 %v2575, %v2574
        %2592 = vmatprep.subr.bf16.mxu0 0
        %2593 = vmatpush1.bf16.msra.mxu0 %v2583
        %2594 = vmatprep.subr.bf16.mxu0 0
        %2595 = vmatpush1.bf16.msra.mxu0 %v2582
        %2596 = vmatprep.subr.bf16.mxu0 0
        %2597 = vmatpush1.bf16.msra.mxu0 %v2581
        %2598 = vmatprep.subr.bf16.mxu0 0
        %2599 = vmatpush1.bf16.msra.mxu0 %v2580
        %2600 = vmatprep.subr.bf16.mxu0 0
        %2601 = vmatpush1.bf16.msra.mxu0 %v2579
        %2602 = vmatprep.subr.bf16.mxu0 0
        %2603 = vmatpush1.bf16.msra.mxu0 %v2578
        %2604 = vmatprep.subr.bf16.mxu0 0
        %2605 = vmatpush1.bf16.msra.mxu0 %v2577
        %2606 = vmatprep.subr.bf16.mxu0 0
        %2607 = vmatpush1.bf16.msra.mxu0 %v2576
        %2608 = vmatprep.subr.bf16.mxu0 0
        %2609 = vmatpush2.bf16.msra.mxu0 0
        %2610 = vmatprep.subr.bf16.mxu0 0
        %2611 = vmatpush2.bf16.msra.mxu0 0
        %2612 = vmatprep.subr.bf16.mxu0 0
        %2613 = vmatpush2.bf16.msra.mxu0 0
        %2614 = vmatprep.subr.bf16.mxu0 0
        %2615 = vmatpush2.bf16.msra.mxu0 0
        %2616 = vmatprep.subr.bf16.mxu0 0
        %2617 = vmatpush2.bf16.msra.mxu0 0
        %2618 = vmatprep.subr.bf16.mxu0 0
        %2619 = vmatpush2.bf16.msra.mxu0 0
        %2620 = vmatprep.subr.bf16.mxu0 0
        %2621 = vmatpush2.bf16.msra.mxu0 0
        %2622 = vmatprep.subr.bf16.mxu0 0
        %2623 = vmatpush2.bf16.msra.mxu0 0
        %2624 = vmatprep.mubr.bf16.mxu0 0
        %2625 = vmatmul.mubr.bf16.gmra.mxu0 %v879
        %v2626 = vpop.f32.mrf.mxu0
        %v2627 = vadd.f32 0.0, %v2626
        %v2628 = vpop.f32.mrf.mxu0
        %v2629 = vpop.f32.mrf.mxu0
        %v2630 = vadd.f32 0.0, %v2629
        %v2631 = vpop.f32.mrf.mxu0
        %2632 = vmatprep.mubr.bf16.mxu0 0
        %2633 = vmatmul.mubr.bf16.gmra.mxu0 %v880
        %v2634 = vpop.f32.mrf.mxu0
        %v2635 = vadd.f32 0.0, %v2634
        %v2636 = vpop.f32.mrf.mxu0
        %v2637 = vpop.f32.mrf.mxu0
        %v2638 = vadd.f32 0.0, %v2637
        %v2639 = vpop.f32.mrf.mxu0
        %2640 = vmatprep.mubr.bf16.mxu0 0
        %2641 = vmatmul.mubr.bf16.gmra.mxu0 %v881
        %v2642 = vpop.f32.mrf.mxu0
        %v2643 = vadd.f32 0.0, %v2642
        %v2644 = vpop.f32.mrf.mxu0
        %v2645 = vpop.f32.mrf.mxu0
        %v2646 = vadd.f32 0.0, %v2645
        %v2647 = vpop.f32.mrf.mxu0
        %2648 = vmatprep.mubr.bf16.mxu0 0
        %2649 = vmatmul.mubr.bf16.gmra.mxu0 %v882
        %v2650 = vpop.f32.mrf.mxu0
        %v2651 = vadd.f32 0.0, %v2650
        %v2652 = vpop.f32.mrf.mxu0
        %v2653 = vpop.f32.mrf.mxu0
        %v2654 = vadd.f32 0.0, %v2653
        %v2655 = vpop.f32.mrf.mxu0
        %2656 = vdwg.mxu0
        %v2657 = vpack.c.bf16 %v2630, %v2627
        %v2658 = vpack.c.bf16 %v2638, %v2635
        %v2659 = vpack.c.bf16 %v2646, %v2643
        %v2660 = vpack.c.bf16 %v2654, %v2651
        %v2661 = vld [vmem:[#allocation10 + $0x8] sm:$0xf]
        %v2662 = vld [vmem:[#allocation10 + $0x28] sm:$0xf]
        %v2663 = vld [vmem:[#allocation10 + $0x48] sm:$0xf]
        %v2664 = vld [vmem:[#allocation10 + $0x68] sm:$0xf]
        %v2665 = vld [vmem:[#allocation10 + $0x88] sm:$0xf]
        %v2666 = vld [vmem:[#allocation10 + $0xa8] sm:$0xf]
        %v2667 = vld [vmem:[#allocation10 + $0xc8] sm:$0xf]
        %v2668 = vld [vmem:[#allocation10 + $0xe8] sm:$0xf]
        %v2669 = vld [vmem:[#allocation10 + $0x108] sm:$0xf]
        %v2670 = vld [vmem:[#allocation10 + $0x128] sm:$0xf]
        %v2671 = vld [vmem:[#allocation10 + $0x148] sm:$0xf]
        %v2672 = vld [vmem:[#allocation10 + $0x168] sm:$0xf]
        %v2673 = vld [vmem:[#allocation10 + $0x188] sm:$0xf]
        %v2674 = vld [vmem:[#allocation10 + $0x1a8] sm:$0xf]
        %v2675 = vld [vmem:[#allocation10 + $0x1c8] sm:$0xf]
        %v2676 = vld [vmem:[#allocation10 + $0x1e8] sm:$0xf]
        %v2693 = vunpack.c.l.b16 %v2661
        %v2694 = vunpack.c.l.b16 %v2662
        %v2695 = vunpack.c.l.b16 %v2663
        %v2696 = vunpack.c.l.b16 %v2664
        %v2697 = vunpack.c.l.b16 %v2665
        %v2698 = vunpack.c.l.b16 %v2666
        %v2699 = vunpack.c.l.b16 %v2667
        %v2700 = vunpack.c.l.b16 %v2668
        %v2701 = vunpack.c.l.b16 %v2669
        %v2702 = vunpack.c.l.b16 %v2670
        %v2703 = vunpack.c.l.b16 %v2671
        %v2704 = vunpack.c.l.b16 %v2672
        %v2705 = vunpack.c.l.b16 %v2673
        %v2706 = vunpack.c.l.b16 %v2674
        %v2707 = vunpack.c.l.b16 %v2675
        %v2708 = vunpack.c.l.b16 %v2676
        %v2709 = vpack.c.b16 %v2694, %v2693
        %v2710 = vpack.c.b16 %v2696, %v2695
        %v2711 = vpack.c.b16 %v2698, %v2697
        %v2712 = vpack.c.b16 %v2700, %v2699
        %v2713 = vpack.c.b16 %v2702, %v2701
        %v2714 = vpack.c.b16 %v2704, %v2703
        %v2715 = vpack.c.b16 %v2706, %v2705
        %v2716 = vpack.c.b16 %v2708, %v2707
        %2725 = vmatprep.subr.bf16.mxu0 0
        %2726 = vmatpush1.bf16.msra.mxu0 %v2716
        %2727 = vmatprep.subr.bf16.mxu0 0
        %2728 = vmatpush1.bf16.msra.mxu0 %v2715
        %2729 = vmatprep.subr.bf16.mxu0 0
        %2730 = vmatpush1.bf16.msra.mxu0 %v2714
        %2731 = vmatprep.subr.bf16.mxu0 0
        %2732 = vmatpush1.bf16.msra.mxu0 %v2713
        %2733 = vmatprep.subr.bf16.mxu0 0
        %2734 = vmatpush1.bf16.msra.mxu0 %v2712
        %2735 = vmatprep.subr.bf16.mxu0 0
        %2736 = vmatpush1.bf16.msra.mxu0 %v2711
        %2737 = vmatprep.subr.bf16.mxu0 0
        %2738 = vmatpush1.bf16.msra.mxu0 %v2710
        %2739 = vmatprep.subr.bf16.mxu0 0
        %2740 = vmatpush1.bf16.msra.mxu0 %v2709
        %2741 = vmatprep.subr.bf16.mxu0 0
        %2742 = vmatpush2.bf16.msra.mxu0 0
        %2743 = vmatprep.subr.bf16.mxu0 0
        %2744 = vmatpush2.bf16.msra.mxu0 0
        %2745 = vmatprep.subr.bf16.mxu0 0
        %2746 = vmatpush2.bf16.msra.mxu0 0
        %2747 = vmatprep.subr.bf16.mxu0 0
        %2748 = vmatpush2.bf16.msra.mxu0 0
        %2749 = vmatprep.subr.bf16.mxu0 0
        %2750 = vmatpush2.bf16.msra.mxu0 0
        %2751 = vmatprep.subr.bf16.mxu0 0
        %2752 = vmatpush2.bf16.msra.mxu0 0
        %2753 = vmatprep.subr.bf16.mxu0 0
        %2754 = vmatpush2.bf16.msra.mxu0 0
        %2755 = vmatprep.subr.bf16.mxu0 0
        %2756 = vmatpush2.bf16.msra.mxu0 0
        %2757 = vmatprep.mubr.bf16.mxu0 0
        %2758 = vmatmul.mubr.bf16.gmra.mxu0 %v879
        %v2759 = vpop.f32.mrf.mxu0
        %v2760 = vadd.f32 0.0, %v2759
        %v2761 = vpop.f32.mrf.mxu0
        %v2762 = vpop.f32.mrf.mxu0
        %v2763 = vadd.f32 0.0, %v2762
        %v2764 = vpop.f32.mrf.mxu0
        %2765 = vmatprep.mubr.bf16.mxu0 0
        %2766 = vmatmul.mubr.bf16.gmra.mxu0 %v880
        %v2767 = vpop.f32.mrf.mxu0
        %v2768 = vadd.f32 0.0, %v2767
        %v2769 = vpop.f32.mrf.mxu0
        %v2770 = vpop.f32.mrf.mxu0
        %v2771 = vadd.f32 0.0, %v2770
        %v2772 = vpop.f32.mrf.mxu0
        %2773 = vmatprep.mubr.bf16.mxu0 0
        %2774 = vmatmul.mubr.bf16.gmra.mxu0 %v881
        %v2775 = vpop.f32.mrf.mxu0
        %v2776 = vadd.f32 0.0, %v2775
        %v2777 = vpop.f32.mrf.mxu0
        %v2778 = vpop.f32.mrf.mxu0
        %v2779 = vadd.f32 0.0, %v2778
        %v2780 = vpop.f32.mrf.mxu0
        %2781 = vmatprep.mubr.bf16.mxu0 0
        %2782 = vmatmul.mubr.bf16.gmra.mxu0 %v882
        %v2783 = vpop.f32.mrf.mxu0
        %v2784 = vadd.f32 0.0, %v2783
        %v2785 = vpop.f32.mrf.mxu0
        %v2786 = vpop.f32.mrf.mxu0
        %v2787 = vadd.f32 0.0, %v2786
        %v2788 = vpop.f32.mrf.mxu0
        %2789 = vdwg.mxu0
        %v2790 = vpack.c.bf16 %v2763, %v2760
        %v2791 = vpack.c.bf16 %v2771, %v2768
        %v2792 = vpack.c.bf16 %v2779, %v2776
        %v2793 = vpack.c.bf16 %v2787, %v2784
        %v2794 = vld [vmem:[#allocation10 + $0xc] sm:$0xf]
        %v2795 = vld [vmem:[#allocation10 + $0x2c] sm:$0xf]
        %v2796 = vld [vmem:[#allocation10 + $0x4c] sm:$0xf]
        %v2797 = vld [vmem:[#allocation10 + $0x6c] sm:$0xf]
        %v2798 = vld [vmem:[#allocation10 + $0x8c] sm:$0xf]
        %v2799 = vld [vmem:[#allocation10 + $0xac] sm:$0xf]
        %v2800 = vld [vmem:[#allocation10 + $0xcc] sm:$0xf]
        %v2801 = vld [vmem:[#allocation10 + $0xec] sm:$0xf]
        %v2802 = vld [vmem:[#allocation10 + $0x10c] sm:$0xf]
        %v2803 = vld [vmem:[#allocation10 + $0x12c] sm:$0xf]
        %v2804 = vld [vmem:[#allocation10 + $0x14c] sm:$0xf]
        %v2805 = vld [vmem:[#allocation10 + $0x16c] sm:$0xf]
        %v2806 = vld [vmem:[#allocation10 + $0x18c] sm:$0xf]
        %v2807 = vld [vmem:[#allocation10 + $0x1ac] sm:$0xf]
        %v2808 = vld [vmem:[#allocation10 + $0x1cc] sm:$0xf]
        %v2809 = vld [vmem:[#allocation10 + $0x1ec] sm:$0xf]
        %v2826 = vunpack.c.l.b16 %v2794
        %v2827 = vunpack.c.l.b16 %v2795
        %v2828 = vunpack.c.l.b16 %v2796
        %v2829 = vunpack.c.l.b16 %v2797
        %v2830 = vunpack.c.l.b16 %v2798
        %v2831 = vunpack.c.l.b16 %v2799
        %v2832 = vunpack.c.l.b16 %v2800
        %v2833 = vunpack.c.l.b16 %v2801
        %v2834 = vunpack.c.l.b16 %v2802
        %v2835 = vunpack.c.l.b16 %v2803
        %v2836 = vunpack.c.l.b16 %v2804
        %v2837 = vunpack.c.l.b16 %v2805
        %v2838 = vunpack.c.l.b16 %v2806
        %v2839 = vunpack.c.l.b16 %v2807
        %v2840 = vunpack.c.l.b16 %v2808
        %v2841 = vunpack.c.l.b16 %v2809
        %v2842 = vpack.c.b16 %v2827, %v2826
        %v2843 = vpack.c.b16 %v2829, %v2828
        %v2844 = vpack.c.b16 %v2831, %v2830
        %v2845 = vpack.c.b16 %v2833, %v2832
        %v2846 = vpack.c.b16 %v2835, %v2834
        %v2847 = vpack.c.b16 %v2837, %v2836
        %v2848 = vpack.c.b16 %v2839, %v2838
        %v2849 = vpack.c.b16 %v2841, %v2840
        %2858 = vmatprep.subr.bf16.mxu0 0
        %2859 = vmatpush1.bf16.msra.mxu0 %v2849
        %2860 = vmatprep.subr.bf16.mxu0 0
        %2861 = vmatpush1.bf16.msra.mxu0 %v2848
        %2862 = vmatprep.subr.bf16.mxu0 0
        %2863 = vmatpush1.bf16.msra.mxu0 %v2847
        %2864 = vmatprep.subr.bf16.mxu0 0
        %2865 = vmatpush1.bf16.msra.mxu0 %v2846
        %2866 = vmatprep.subr.bf16.mxu0 0
        %2867 = vmatpush1.bf16.msra.mxu0 %v2845
        %2868 = vmatprep.subr.bf16.mxu0 0
        %2869 = vmatpush1.bf16.msra.mxu0 %v2844
        %2870 = vmatprep.subr.bf16.mxu0 0
        %2871 = vmatpush1.bf16.msra.mxu0 %v2843
        %2872 = vmatprep.subr.bf16.mxu0 0
        %2873 = vmatpush1.bf16.msra.mxu0 %v2842
        %2874 = vmatprep.subr.bf16.mxu0 0
        %2875 = vmatpush2.bf16.msra.mxu0 0
        %2876 = vmatprep.subr.bf16.mxu0 0
        %2877 = vmatpush2.bf16.msra.mxu0 0
        %2878 = vmatprep.subr.bf16.mxu0 0
        %2879 = vmatpush2.bf16.msra.mxu0 0
        %2880 = vmatprep.subr.bf16.mxu0 0
        %2881 = vmatpush2.bf16.msra.mxu0 0
        %2882 = vmatprep.subr.bf16.mxu0 0
        %2883 = vmatpush2.bf16.msra.mxu0 0
        %2884 = vmatprep.subr.bf16.mxu0 0
        %2885 = vmatpush2.bf16.msra.mxu0 0
        %2886 = vmatprep.subr.bf16.mxu0 0
        %2887 = vmatpush2.bf16.msra.mxu0 0
        %2888 = vmatprep.subr.bf16.mxu0 0
        %2889 = vmatpush2.bf16.msra.mxu0 0
        %2890 = vmatprep.mubr.bf16.mxu0 0
        %2891 = vmatmul.mubr.bf16.gmra.mxu0 %v879
        %v2892 = vpop.f32.mrf.mxu0
        %v2893 = vadd.f32 0.0, %v2892
        %v2894 = vpop.f32.mrf.mxu0
        %v2895 = vpop.f32.mrf.mxu0
        %v2896 = vadd.f32 0.0, %v2895
        %v2897 = vpop.f32.mrf.mxu0
        %2898 = vmatprep.mubr.bf16.mxu0 0
        %2899 = vmatmul.mubr.bf16.gmra.mxu0 %v880
        %v2900 = vpop.f32.mrf.mxu0
        %v2901 = vadd.f32 0.0, %v2900
        %v2902 = vpop.f32.mrf.mxu0
        %v2903 = vpop.f32.mrf.mxu0
        %v2904 = vadd.f32 0.0, %v2903
        %v2905 = vpop.f32.mrf.mxu0
        %2906 = vmatprep.mubr.bf16.mxu0 0
        %2907 = vmatmul.mubr.bf16.gmra.mxu0 %v881
        %v2908 = vpop.f32.mrf.mxu0
        %v2909 = vadd.f32 0.0, %v2908
        %v2910 = vpop.f32.mrf.mxu0
        %v2911 = vpop.f32.mrf.mxu0
        %v2912 = vadd.f32 0.0, %v2911
        %v2913 = vpop.f32.mrf.mxu0
        %2914 = vmatprep.mubr.bf16.mxu0 0
        %2915 = vmatmul.mubr.bf16.gmra.mxu0 %v882
        %v2916 = vpop.f32.mrf.mxu0
        %v2917 = vadd.f32 0.0, %v2916
        %v2918 = vpop.f32.mrf.mxu0
        %v2919 = vpop.f32.mrf.mxu0
        %v2920 = vadd.f32 0.0, %v2919
        %v2921 = vpop.f32.mrf.mxu0
        %2922 = vdwg.mxu0
        %v2923 = vpack.c.bf16 %v2896, %v2893
        %v2924 = vpack.c.bf16 %v2904, %v2901
        %v2925 = vpack.c.bf16 %v2912, %v2909
        %v2926 = vpack.c.bf16 %v2920, %v2917
        %v2927 = vld [vmem:[#allocation10 + $0x10] sm:$0xf]
        %v2928 = vld [vmem:[#allocation10 + $0x30] sm:$0xf]
        %v2929 = vld [vmem:[#allocation10 + $0x50] sm:$0xf]
        %v2930 = vld [vmem:[#allocation10 + $0x70] sm:$0xf]
        %v2931 = vld [vmem:[#allocation10 + $0x90] sm:$0xf]
        %v2932 = vld [vmem:[#allocation10 + $0xb0] sm:$0xf]
        %v2933 = vld [vmem:[#allocation10 + $0xd0] sm:$0xf]
        %v2934 = vld [vmem:[#allocation10 + $0xf0] sm:$0xf]
        %v2935 = vld [vmem:[#allocation10 + $0x110] sm:$0xf]
        %v2936 = vld [vmem:[#allocation10 + $0x130] sm:$0xf]
        %v2937 = vld [vmem:[#allocation10 + $0x150] sm:$0xf]
        %v2938 = vld [vmem:[#allocation10 + $0x170] sm:$0xf]
        %v2939 = vld [vmem:[#allocation10 + $0x190] sm:$0xf]
        %v2940 = vld [vmem:[#allocation10 + $0x1b0] sm:$0xf]
        %v2941 = vld [vmem:[#allocation10 + $0x1d0] sm:$0xf]
        %v2942 = vld [vmem:[#allocation10 + $0x1f0] sm:$0xf]
        %v2959 = vunpack.c.l.b16 %v2927
        %v2960 = vunpack.c.l.b16 %v2928
        %v2961 = vunpack.c.l.b16 %v2929
        %v2962 = vunpack.c.l.b16 %v2930
        %v2963 = vunpack.c.l.b16 %v2931
        %v2964 = vunpack.c.l.b16 %v2932
        %v2965 = vunpack.c.l.b16 %v2933
        %v2966 = vunpack.c.l.b16 %v2934
        %v2967 = vunpack.c.l.b16 %v2935
        %v2968 = vunpack.c.l.b16 %v2936
        %v2969 = vunpack.c.l.b16 %v2937
        %v2970 = vunpack.c.l.b16 %v2938
        %v2971 = vunpack.c.l.b16 %v2939
        %v2972 = vunpack.c.l.b16 %v2940
        %v2973 = vunpack.c.l.b16 %v2941
        %v2974 = vunpack.c.l.b16 %v2942
        %v2975 = vpack.c.b16 %v2960, %v2959
        %v2976 = vpack.c.b16 %v2962, %v2961
        %v2977 = vpack.c.b16 %v2964, %v2963
        %v2978 = vpack.c.b16 %v2966, %v2965
        %v2979 = vpack.c.b16 %v2968, %v2967
        %v2980 = vpack.c.b16 %v2970, %v2969
        %v2981 = vpack.c.b16 %v2972, %v2971
        %v2982 = vpack.c.b16 %v2974, %v2973
        %2991 = vmatprep.subr.bf16.mxu0 0
        %2992 = vmatpush1.bf16.msra.mxu0 %v2982
        %2993 = vmatprep.subr.bf16.mxu0 0
        %2994 = vmatpush1.bf16.msra.mxu0 %v2981
        %2995 = vmatprep.subr.bf16.mxu0 0
        %2996 = vmatpush1.bf16.msra.mxu0 %v2980
        %2997 = vmatprep.subr.bf16.mxu0 0
        %2998 = vmatpush1.bf16.msra.mxu0 %v2979
        %2999 = vmatprep.subr.bf16.mxu0 0
        %3000 = vmatpush1.bf16.msra.mxu0 %v2978
        %3001 = vmatprep.subr.bf16.mxu0 0
        %3002 = vmatpush1.bf16.msra.mxu0 %v2977
        %3003 = vmatprep.subr.bf16.mxu0 0
        %3004 = vmatpush1.bf16.msra.mxu0 %v2976
        %3005 = vmatprep.subr.bf16.mxu0 0
        %3006 = vmatpush1.bf16.msra.mxu0 %v2975
        %3007 = vmatprep.subr.bf16.mxu0 0
        %3008 = vmatpush2.bf16.msra.mxu0 0
        %3009 = vmatprep.subr.bf16.mxu0 0
        %3010 = vmatpush2.bf16.msra.mxu0 0
        %3011 = vmatprep.subr.bf16.mxu0 0
        %3012 = vmatpush2.bf16.msra.mxu0 0
        %3013 = vmatprep.subr.bf16.mxu0 0
        %3014 = vmatpush2.bf16.msra.mxu0 0
        %3015 = vmatprep.subr.bf16.mxu0 0
        %3016 = vmatpush2.bf16.msra.mxu0 0
        %3017 = vmatprep.subr.bf16.mxu0 0
        %3018 = vmatpush2.bf16.msra.mxu0 0
        %3019 = vmatprep.subr.bf16.mxu0 0
        %3020 = vmatpush2.bf16.msra.mxu0 0
        %3021 = vmatprep.subr.bf16.mxu0 0
        %3022 = vmatpush2.bf16.msra.mxu0 0
        %3023 = vmatprep.mubr.bf16.mxu0 0
        %3024 = vmatmul.mubr.bf16.gmra.mxu0 %v879
        %v3025 = vpop.f32.mrf.mxu0
        %v3026 = vadd.f32 0.0, %v3025
        %v3027 = vpop.f32.mrf.mxu0
        %v3028 = vpop.f32.mrf.mxu0
        %v3029 = vadd.f32 0.0, %v3028
        %v3030 = vpop.f32.mrf.mxu0
        %3031 = vmatprep.mubr.bf16.mxu0 0
        %3032 = vmatmul.mubr.bf16.gmra.mxu0 %v880
        %v3033 = vpop.f32.mrf.mxu0
        %v3034 = vadd.f32 0.0, %v3033
        %v3035 = vpop.f32.mrf.mxu0
        %v3036 = vpop.f32.mrf.mxu0
        %v3037 = vadd.f32 0.0, %v3036
        %v3038 = vpop.f32.mrf.mxu0
        %3039 = vmatprep.mubr.bf16.mxu0 0
        %3040 = vmatmul.mubr.bf16.gmra.mxu0 %v881
        %v3041 = vpop.f32.mrf.mxu0
        %v3042 = vadd.f32 0.0, %v3041
        %v3043 = vpop.f32.mrf.mxu0
        %v3044 = vpop.f32.mrf.mxu0
        %v3045 = vadd.f32 0.0, %v3044
        %v3046 = vpop.f32.mrf.mxu0
        %3047 = vmatprep.mubr.bf16.mxu0 0
        %3048 = vmatmul.mubr.bf16.gmra.mxu0 %v882
        %v3049 = vpop.f32.mrf.mxu0
        %v3050 = vadd.f32 0.0, %v3049
        %v3051 = vpop.f32.mrf.mxu0
        %v3052 = vpop.f32.mrf.mxu0
        %v3053 = vadd.f32 0.0, %v3052
        %v3054 = vpop.f32.mrf.mxu0
        %3055 = vdwg.mxu0
        %v3056 = vpack.c.bf16 %v3029, %v3026
        %v3057 = vpack.c.bf16 %v3037, %v3034
        %v3058 = vpack.c.bf16 %v3045, %v3042
        %v3059 = vpack.c.bf16 %v3053, %v3050
        %v3060 = vld [vmem:[#allocation10 + $0x14] sm:$0xf]
        %v3061 = vld [vmem:[#allocation10 + $0x34] sm:$0xf]
        %v3062 = vld [vmem:[#allocation10 + $0x54] sm:$0xf]
        %v3063 = vld [vmem:[#allocation10 + $0x74] sm:$0xf]
        %v3064 = vld [vmem:[#allocation10 + $0x94] sm:$0xf]
        %v3065 = vld [vmem:[#allocation10 + $0xb4] sm:$0xf]
        %v3066 = vld [vmem:[#allocation10 + $0xd4] sm:$0xf]
        %v3067 = vld [vmem:[#allocation10 + $0xf4] sm:$0xf]
        %v3068 = vld [vmem:[#allocation10 + $0x114] sm:$0xf]
        %v3069 = vld [vmem:[#allocation10 + $0x134] sm:$0xf]
        %v3070 = vld [vmem:[#allocation10 + $0x154] sm:$0xf]
        %v3071 = vld [vmem:[#allocation10 + $0x174] sm:$0xf]
        %v3072 = vld [vmem:[#allocation10 + $0x194] sm:$0xf]
        %v3073 = vld [vmem:[#allocation10 + $0x1b4] sm:$0xf]
        %v3074 = vld [vmem:[#allocation10 + $0x1d4] sm:$0xf]
        %v3075 = vld [vmem:[#allocation10 + $0x1f4] sm:$0xf]
        %v3092 = vunpack.c.l.b16 %v3060
        %v3093 = vunpack.c.l.b16 %v3061
        %v3094 = vunpack.c.l.b16 %v3062
        %v3095 = vunpack.c.l.b16 %v3063
        %v3096 = vunpack.c.l.b16 %v3064
        %v3097 = vunpack.c.l.b16 %v3065
        %v3098 = vunpack.c.l.b16 %v3066
        %v3099 = vunpack.c.l.b16 %v3067
        %v3100 = vunpack.c.l.b16 %v3068
        %v3101 = vunpack.c.l.b16 %v3069
        %v3102 = vunpack.c.l.b16 %v3070
        %v3103 = vunpack.c.l.b16 %v3071
        %v3104 = vunpack.c.l.b16 %v3072
        %v3105 = vunpack.c.l.b16 %v3073
        %v3106 = vunpack.c.l.b16 %v3074
        %v3107 = vunpack.c.l.b16 %v3075
        %v3108 = vpack.c.b16 %v3093, %v3092
        %v3109 = vpack.c.b16 %v3095, %v3094
        %v3110 = vpack.c.b16 %v3097, %v3096
        %v3111 = vpack.c.b16 %v3099, %v3098
        %v3112 = vpack.c.b16 %v3101, %v3100
        %v3113 = vpack.c.b16 %v3103, %v3102
        %v3114 = vpack.c.b16 %v3105, %v3104
        %v3115 = vpack.c.b16 %v3107, %v3106
        %3124 = vmatprep.subr.bf16.mxu0 0
        %3125 = vmatpush1.bf16.msra.mxu0 %v3115
        %3126 = vmatprep.subr.bf16.mxu0 0
        %3127 = vmatpush1.bf16.msra.mxu0 %v3114
        %3128 = vmatprep.subr.bf16.mxu0 0
        %3129 = vmatpush1.bf16.msra.mxu0 %v3113
        %3130 = vmatprep.subr.bf16.mxu0 0
        %3131 = vmatpush1.bf16.msra.mxu0 %v3112
        %3132 = vmatprep.subr.bf16.mxu0 0
        %3133 = vmatpush1.bf16.msra.mxu0 %v3111
        %3134 = vmatprep.subr.bf16.mxu0 0
        %3135 = vmatpush1.bf16.msra.mxu0 %v3110
        %3136 = vmatprep.subr.bf16.mxu0 0
        %3137 = vmatpush1.bf16.msra.mxu0 %v3109
        %3138 = vmatprep.subr.bf16.mxu0 0
        %3139 = vmatpush1.bf16.msra.mxu0 %v3108
        %3140 = vmatprep.subr.bf16.mxu0 0
        %3141 = vmatpush2.bf16.msra.mxu0 0
        %3142 = vmatprep.subr.bf16.mxu0 0
        %3143 = vmatpush2.bf16.msra.mxu0 0
        %3144 = vmatprep.subr.bf16.mxu0 0
        %3145 = vmatpush2.bf16.msra.mxu0 0
        %3146 = vmatprep.subr.bf16.mxu0 0
        %3147 = vmatpush2.bf16.msra.mxu0 0
        %3148 = vmatprep.subr.bf16.mxu0 0
        %3149 = vmatpush2.bf16.msra.mxu0 0
        %3150 = vmatprep.subr.bf16.mxu0 0
        %3151 = vmatpush2.bf16.msra.mxu0 0
        %3152 = vmatprep.subr.bf16.mxu0 0
        %3153 = vmatpush2.bf16.msra.mxu0 0
        %3154 = vmatprep.subr.bf16.mxu0 0
        %3155 = vmatpush2.bf16.msra.mxu0 0
        %3156 = vmatprep.mubr.bf16.mxu0 0
        %3157 = vmatmul.mubr.bf16.gmra.mxu0 %v879
        %v3158 = vpop.f32.mrf.mxu0
        %v3159 = vadd.f32 0.0, %v3158
        %v3160 = vpop.f32.mrf.mxu0
        %v3161 = vpop.f32.mrf.mxu0
        %v3162 = vadd.f32 0.0, %v3161
        %v3163 = vpop.f32.mrf.mxu0
        %3164 = vmatprep.mubr.bf16.mxu0 0
        %3165 = vmatmul.mubr.bf16.gmra.mxu0 %v880
        %v3166 = vpop.f32.mrf.mxu0
        %v3167 = vadd.f32 0.0, %v3166
        %v3168 = vpop.f32.mrf.mxu0
        %v3169 = vpop.f32.mrf.mxu0
        %v3170 = vadd.f32 0.0, %v3169
        %v3171 = vpop.f32.mrf.mxu0
        %3172 = vmatprep.mubr.bf16.mxu0 0
        %3173 = vmatmul.mubr.bf16.gmra.mxu0 %v881
        %v3174 = vpop.f32.mrf.mxu0
        %v3175 = vadd.f32 0.0, %v3174
        %v3176 = vpop.f32.mrf.mxu0
        %v3177 = vpop.f32.mrf.mxu0
        %v3178 = vadd.f32 0.0, %v3177
        %v3179 = vpop.f32.mrf.mxu0
        %3180 = vmatprep.mubr.bf16.mxu0 0
        %3181 = vmatmul.mubr.bf16.gmra.mxu0 %v882
        %v3182 = vpop.f32.mrf.mxu0
        %v3183 = vadd.f32 0.0, %v3182
        %v3184 = vpop.f32.mrf.mxu0
        %v3185 = vpop.f32.mrf.mxu0
        %v3186 = vadd.f32 0.0, %v3185
        %v3187 = vpop.f32.mrf.mxu0
        %3188 = vdwg.mxu0
        %v3189 = vpack.c.bf16 %v3162, %v3159
        %v3190 = vpack.c.bf16 %v3170, %v3167
        %v3191 = vpack.c.bf16 %v3178, %v3175
        %v3192 = vpack.c.bf16 %v3186, %v3183
        %v3193 = vld [vmem:[#allocation10 + $0x18] sm:$0xf]
        %v3194 = vld [vmem:[#allocation10 + $0x38] sm:$0xf]
        %v3195 = vld [vmem:[#allocation10 + $0x58] sm:$0xf]
        %v3196 = vld [vmem:[#allocation10 + $0x78] sm:$0xf]
        %v3197 = vld [vmem:[#allocation10 + $0x98] sm:$0xf]
        %v3198 = vld [vmem:[#allocation10 + $0xb8] sm:$0xf]
        %v3199 = vld [vmem:[#allocation10 + $0xd8] sm:$0xf]
        %v3200 = vld [vmem:[#allocation10 + $0xf8] sm:$0xf]
        %v3201 = vld [vmem:[#allocation10 + $0x118] sm:$0xf]
        %v3202 = vld [vmem:[#allocation10 + $0x138] sm:$0xf]
        %v3203 = vld [vmem:[#allocation10 + $0x158] sm:$0xf]
        %v3204 = vld [vmem:[#allocation10 + $0x178] sm:$0xf]
        %v3205 = vld [vmem:[#allocation10 + $0x198] sm:$0xf]
        %v3206 = vld [vmem:[#allocation10 + $0x1b8] sm:$0xf]
        %v3207 = vld [vmem:[#allocation10 + $0x1d8] sm:$0xf]
        %v3208 = vld [vmem:[#allocation10 + $0x1f8] sm:$0xf]
        %v3225 = vunpack.c.l.b16 %v3193
        %v3226 = vunpack.c.l.b16 %v3194
        %v3227 = vunpack.c.l.b16 %v3195
        %v3228 = vunpack.c.l.b16 %v3196
        %v3229 = vunpack.c.l.b16 %v3197
        %v3230 = vunpack.c.l.b16 %v3198
        %v3231 = vunpack.c.l.b16 %v3199
        %v3232 = vunpack.c.l.b16 %v3200
        %v3233 = vunpack.c.l.b16 %v3201
        %v3234 = vunpack.c.l.b16 %v3202
        %v3235 = vunpack.c.l.b16 %v3203
        %v3236 = vunpack.c.l.b16 %v3204
        %v3237 = vunpack.c.l.b16 %v3205
        %v3238 = vunpack.c.l.b16 %v3206
        %v3239 = vunpack.c.l.b16 %v3207
        %v3240 = vunpack.c.l.b16 %v3208
        %v3241 = vpack.c.b16 %v3226, %v3225
        %v3242 = vpack.c.b16 %v3228, %v3227
        %v3243 = vpack.c.b16 %v3230, %v3229
        %v3244 = vpack.c.b16 %v3232, %v3231
        %v3245 = vpack.c.b16 %v3234, %v3233
        %v3246 = vpack.c.b16 %v3236, %v3235
        %v3247 = vpack.c.b16 %v3238, %v3237
        %v3248 = vpack.c.b16 %v3240, %v3239
        %3257 = vmatprep.subr.bf16.mxu0 0
        %3258 = vmatpush1.bf16.msra.mxu0 %v3248
        %3259 = vmatprep.subr.bf16.mxu0 0
        %3260 = vmatpush1.bf16.msra.mxu0 %v3247
        %3261 = vmatprep.subr.bf16.mxu0 0
        %3262 = vmatpush1.bf16.msra.mxu0 %v3246
        %3263 = vmatprep.subr.bf16.mxu0 0
        %3264 = vmatpush1.bf16.msra.mxu0 %v3245
        %3265 = vmatprep.subr.bf16.mxu0 0
        %3266 = vmatpush1.bf16.msra.mxu0 %v3244
        %3267 = vmatprep.subr.bf16.mxu0 0
        %3268 = vmatpush1.bf16.msra.mxu0 %v3243
        %3269 = vmatprep.subr.bf16.mxu0 0
        %3270 = vmatpush1.bf16.msra.mxu0 %v3242
        %3271 = vmatprep.subr.bf16.mxu0 0
        %3272 = vmatpush1.bf16.msra.mxu0 %v3241
        %3273 = vmatprep.subr.bf16.mxu0 0
        %3274 = vmatpush2.bf16.msra.mxu0 0
        %3275 = vmatprep.subr.bf16.mxu0 0
        %3276 = vmatpush2.bf16.msra.mxu0 0
        %3277 = vmatprep.subr.bf16.mxu0 0
        %3278 = vmatpush2.bf16.msra.mxu0 0
        %3279 = vmatprep.subr.bf16.mxu0 0
        %3280 = vmatpush2.bf16.msra.mxu0 0
        %3281 = vmatprep.subr.bf16.mxu0 0
        %3282 = vmatpush2.bf16.msra.mxu0 0
        %3283 = vmatprep.subr.bf16.mxu0 0
        %3284 = vmatpush2.bf16.msra.mxu0 0
        %3285 = vmatprep.subr.bf16.mxu0 0
        %3286 = vmatpush2.bf16.msra.mxu0 0
        %3287 = vmatprep.subr.bf16.mxu0 0
        %3288 = vmatpush2.bf16.msra.mxu0 0
        %3289 = vmatprep.mubr.bf16.mxu0 0
        %3290 = vmatmul.mubr.bf16.gmra.mxu0 %v879
        %v3291 = vpop.f32.mrf.mxu0
        %v3292 = vadd.f32 0.0, %v3291
        %v3293 = vpop.f32.mrf.mxu0
        %v3294 = vpop.f32.mrf.mxu0
        %v3295 = vadd.f32 0.0, %v3294
        %v3296 = vpop.f32.mrf.mxu0
        %3297 = vmatprep.mubr.bf16.mxu0 0
        %3298 = vmatmul.mubr.bf16.gmra.mxu0 %v880
        %v3299 = vpop.f32.mrf.mxu0
        %v3300 = vadd.f32 0.0, %v3299
        %v3301 = vpop.f32.mrf.mxu0
        %v3302 = vpop.f32.mrf.mxu0
        %v3303 = vadd.f32 0.0, %v3302
        %v3304 = vpop.f32.mrf.mxu0
        %3305 = vmatprep.mubr.bf16.mxu0 0
        %3306 = vmatmul.mubr.bf16.gmra.mxu0 %v881
        %v3307 = vpop.f32.mrf.mxu0
        %v3308 = vadd.f32 0.0, %v3307
        %v3309 = vpop.f32.mrf.mxu0
        %v3310 = vpop.f32.mrf.mxu0
        %v3311 = vadd.f32 0.0, %v3310
        %v3312 = vpop.f32.mrf.mxu0
        %3313 = vmatprep.mubr.bf16.mxu0 0
        %3314 = vmatmul.mubr.bf16.gmra.mxu0 %v882
        %v3315 = vpop.f32.mrf.mxu0
        %v3316 = vadd.f32 0.0, %v3315
        %v3317 = vpop.f32.mrf.mxu0
        %v3318 = vpop.f32.mrf.mxu0
        %v3319 = vadd.f32 0.0, %v3318
        %v3320 = vpop.f32.mrf.mxu0
        %3321 = vdwg.mxu0
        %v3322 = vpack.c.bf16 %v3295, %v3292
        %v3323 = vpack.c.bf16 %v3303, %v3300
        %v3324 = vpack.c.bf16 %v3311, %v3308
        %v3325 = vpack.c.bf16 %v3319, %v3316
        %v3326 = vld [vmem:[#allocation10 + $0x1c] sm:$0xf]
        %v3327 = vld [vmem:[#allocation10 + $0x3c] sm:$0xf]
        %v3328 = vld [vmem:[#allocation10 + $0x5c] sm:$0xf]
        %v3329 = vld [vmem:[#allocation10 + $0x7c] sm:$0xf]
        %v3330 = vld [vmem:[#allocation10 + $0x9c] sm:$0xf]
        %v3331 = vld [vmem:[#allocation10 + $0xbc] sm:$0xf]
        %v3332 = vld [vmem:[#allocation10 + $0xdc] sm:$0xf]
        %v3333 = vld [vmem:[#allocation10 + $0xfc] sm:$0xf]
        %v3334 = vld [vmem:[#allocation10 + $0x11c] sm:$0xf]
        %v3335 = vld [vmem:[#allocation10 + $0x13c] sm:$0xf]
        %v3336 = vld [vmem:[#allocation10 + $0x15c] sm:$0xf]
        %v3337 = vld [vmem:[#allocation10 + $0x17c] sm:$0xf]
        %v3338 = vld [vmem:[#allocation10 + $0x19c] sm:$0xf]
        %v3339 = vld [vmem:[#allocation10 + $0x1bc] sm:$0xf]
        %v3340 = vld [vmem:[#allocation10 + $0x1dc] sm:$0xf]
        %v3341 = vld [vmem:[#allocation10 + $0x1fc] sm:$0xf]
        %v3358 = vunpack.c.l.b16 %v3326
        %v3359 = vunpack.c.l.b16 %v3327
        %v3360 = vunpack.c.l.b16 %v3328
        %v3361 = vunpack.c.l.b16 %v3329
        %v3362 = vunpack.c.l.b16 %v3330
        %v3363 = vunpack.c.l.b16 %v3331
        %v3364 = vunpack.c.l.b16 %v3332
        %v3365 = vunpack.c.l.b16 %v3333
        %v3366 = vunpack.c.l.b16 %v3334
        %v3367 = vunpack.c.l.b16 %v3335
        %v3368 = vunpack.c.l.b16 %v3336
        %v3369 = vunpack.c.l.b16 %v3337
        %v3370 = vunpack.c.l.b16 %v3338
        %v3371 = vunpack.c.l.b16 %v3339
        %v3372 = vunpack.c.l.b16 %v3340
        %v3373 = vunpack.c.l.b16 %v3341
        %v3374 = vpack.c.b16 %v3359, %v3358
        %v3375 = vpack.c.b16 %v3361, %v3360
        %v3376 = vpack.c.b16 %v3363, %v3362
        %v3377 = vpack.c.b16 %v3365, %v3364
        %v3378 = vpack.c.b16 %v3367, %v3366
        %v3379 = vpack.c.b16 %v3369, %v3368
        %v3380 = vpack.c.b16 %v3371, %v3370
        %v3381 = vpack.c.b16 %v3373, %v3372
        %3390 = vmatprep.subr.bf16.mxu0 0
        %3391 = vmatpush1.bf16.msra.mxu0 %v3381
        %3392 = vmatprep.subr.bf16.mxu0 0
        %3393 = vmatpush1.bf16.msra.mxu0 %v3380
        %3394 = vmatprep.subr.bf16.mxu0 0
        %3395 = vmatpush1.bf16.msra.mxu0 %v3379
        %3396 = vmatprep.subr.bf16.mxu0 0
        %3397 = vmatpush1.bf16.msra.mxu0 %v3378
        %3398 = vmatprep.subr.bf16.mxu0 0
        %3399 = vmatpush1.bf16.msra.mxu0 %v3377
        %3400 = vmatprep.subr.bf16.mxu0 0
        %3401 = vmatpush1.bf16.msra.mxu0 %v3376
        %3402 = vmatprep.subr.bf16.mxu0 0
        %3403 = vmatpush1.bf16.msra.mxu0 %v3375
        %3404 = vmatprep.subr.bf16.mxu0 0
        %3405 = vmatpush1.bf16.msra.mxu0 %v3374
        %3406 = vmatprep.subr.bf16.mxu0 0
        %3407 = vmatpush2.bf16.msra.mxu0 0
        %3408 = vmatprep.subr.bf16.mxu0 0
        %3409 = vmatpush2.bf16.msra.mxu0 0
        %3410 = vmatprep.subr.bf16.mxu0 0
        %3411 = vmatpush2.bf16.msra.mxu0 0
        %3412 = vmatprep.subr.bf16.mxu0 0
        %3413 = vmatpush2.bf16.msra.mxu0 0
        %3414 = vmatprep.subr.bf16.mxu0 0
        %3415 = vmatpush2.bf16.msra.mxu0 0
        %3416 = vmatprep.subr.bf16.mxu0 0
        %3417 = vmatpush2.bf16.msra.mxu0 0
        %3418 = vmatprep.subr.bf16.mxu0 0
        %3419 = vmatpush2.bf16.msra.mxu0 0
        %3420 = vmatprep.subr.bf16.mxu0 0
        %3421 = vmatpush2.bf16.msra.mxu0 0
        %3422 = vmatprep.mubr.bf16.mxu0 0
        %3423 = vmatmul.mubr.bf16.gmra.mxu0 %v879
        %v3424 = vpop.f32.mrf.mxu0
        %v3425 = vadd.f32 0.0, %v3424
        %v3426 = vpop.f32.mrf.mxu0
        %v3427 = vpop.f32.mrf.mxu0
        %v3428 = vadd.f32 0.0, %v3427
        %v3429 = vpop.f32.mrf.mxu0
        %3430 = vmatprep.mubr.bf16.mxu0 0
        %3431 = vmatmul.mubr.bf16.gmra.mxu0 %v880
        %v3432 = vpop.f32.mrf.mxu0
        %v3433 = vadd.f32 0.0, %v3432
        %v3434 = vpop.f32.mrf.mxu0
        %v3435 = vpop.f32.mrf.mxu0
        %v3436 = vadd.f32 0.0, %v3435
        %v3437 = vpop.f32.mrf.mxu0
        %3438 = vmatprep.mubr.bf16.mxu0 0
        %3439 = vmatmul.mubr.bf16.gmra.mxu0 %v881
        %v3440 = vpop.f32.mrf.mxu0
        %v3441 = vadd.f32 0.0, %v3440
        %v3442 = vpop.f32.mrf.mxu0
        %v3443 = vpop.f32.mrf.mxu0
        %v3444 = vadd.f32 0.0, %v3443
        %v3445 = vpop.f32.mrf.mxu0
        %3446 = vmatprep.mubr.bf16.mxu0 0
        %3447 = vmatmul.mubr.bf16.gmra.mxu0 %v882
        %v3448 = vpop.f32.mrf.mxu0
        %v3449 = vadd.f32 0.0, %v3448
        %v3450 = vpop.f32.mrf.mxu0
        %v3451 = vpop.f32.mrf.mxu0
        %v3452 = vadd.f32 0.0, %v3451
        %v3453 = vpop.f32.mrf.mxu0
        %3454 = vdwg.mxu0
        %v3455 = vpack.c.bf16 %v3428, %v3425
        %v3456 = vpack.c.bf16 %v3436, %v3433
        %v3457 = vpack.c.bf16 %v3444, %v3441
        %v3458 = vpack.c.bf16 %v3452, %v3449
        %v3459 = vld [vmem:[%s9] sm:$0x1]
        %v3461 = vlaneseq
        %v3462 = vshrl.u32 %v3461, 7
        %v3463 = vsub.s32 0, %v3462
        %v3464 = vrot.slane %v3459, %v3463
        %3466 = vmatprep.subr.bf16.mxu0 0
        %3467 = vmatpush1.bf16.msra.mxu0 %v2660
        %3468 = vmatprep.subr.bf16.mxu0 0
        %3469 = vmatpush1.bf16.msra.mxu0 %v2659
        %3470 = vmatprep.subr.bf16.mxu0 0
        %3471 = vmatpush1.bf16.msra.mxu0 %v2658
        %3472 = vmatprep.subr.bf16.mxu0 0
        %3473 = vmatpush1.bf16.msra.mxu0 %v2657
        %3474 = vmatprep.subr.bf16.mxu0 0
        %3475 = vmatpush1.bf16.msra.mxu0 %v2527
        %3476 = vmatprep.subr.bf16.mxu0 0
        %3477 = vmatpush1.bf16.msra.mxu0 %v2526
        %3478 = vmatprep.subr.bf16.mxu0 0
        %3479 = vmatpush1.bf16.msra.mxu0 %v2525
        %3480 = vmatprep.subr.bf16.mxu0 0
        %3481 = vmatpush1.bf16.msra.mxu0 %v2524
        %3482 = vmatprep.subr.bf16.mxu0 0
        %3483 = vmatpush2.bf16.msra.mxu0 %v2926
        %3484 = vmatprep.subr.bf16.mxu0 0
        %3485 = vmatpush2.bf16.msra.mxu0 %v2925
        %3486 = vmatprep.subr.bf16.mxu0 0
        %3487 = vmatpush2.bf16.msra.mxu0 %v2924
        %3488 = vmatprep.subr.bf16.mxu0 0
        %3489 = vmatpush2.bf16.msra.mxu0 %v2923
        %3490 = vmatprep.subr.bf16.mxu0 0
        %3491 = vmatpush2.bf16.msra.mxu0 %v2793
        %3492 = vmatprep.subr.bf16.mxu0 0
        %3493 = vmatpush2.bf16.msra.mxu0 %v2792
        %3494 = vmatprep.subr.bf16.mxu0 0
        %3495 = vmatpush2.bf16.msra.mxu0 %v2791
        %3496 = vmatprep.subr.bf16.mxu0 0
        %3497 = vmatpush2.bf16.msra.mxu0 %v2790
        %3498 = vmatprep.mubr.bf16.mxu0 %v2380
        %3499 = vmatmul.mubr.bf16.gmra.mxu0 %v2379
        %v3500 = vpop.f32.mrf.mxu0
        %v3501 = vadd.f32 %v3464, %v3500
        %v3502 = vpop.f32.mrf.mxu0
        %v3503 = vpop.f32.mrf.mxu0
        %v3504 = vadd.f32 %v3464, %v3503
        %v3505 = vpop.f32.mrf.mxu0
        %3506 = vmatprep.mubr.bf16.mxu0 %v2384
        %3507 = vmatmul.mubr.bf16.gmra.mxu0 %v2383
        %v3508 = vpop.f32.mrf.mxu0
        %v3509 = vadd.f32 %v3464, %v3508
        %v3510 = vpop.f32.mrf.mxu0
        %v3511 = vpop.f32.mrf.mxu0
        %v3512 = vadd.f32 %v3464, %v3511
        %v3513 = vpop.f32.mrf.mxu0
        %3514 = vmatprep.mubr.bf16.mxu0 %v2388
        %3515 = vmatmul.mubr.bf16.gmra.mxu0 %v2387
        %v3516 = vpop.f32.mrf.mxu0
        %v3517 = vadd.f32 %v3464, %v3516
        %v3518 = vpop.f32.mrf.mxu0
        %v3519 = vpop.f32.mrf.mxu0
        %v3520 = vadd.f32 %v3464, %v3519
        %v3521 = vpop.f32.mrf.mxu0
        %3522 = vmatprep.mubr.bf16.mxu0 %v2392
        %3523 = vmatmul.mubr.bf16.gmra.mxu0 %v2391
        %v3524 = vpop.f32.mrf.mxu0
        %v3525 = vadd.f32 %v3464, %v3524
        %v3526 = vpop.f32.mrf.mxu0
        %v3527 = vpop.f32.mrf.mxu0
        %v3528 = vadd.f32 %v3464, %v3527
        %v3529 = vpop.f32.mrf.mxu0
        %3530 = vdwg.mxu0
        %3531 = vmatprep.subr.bf16.mxu0 0
        %3532 = vmatpush1.bf16.msra.mxu0 %v3192
        %3533 = vmatprep.subr.bf16.mxu0 0
        %3534 = vmatpush1.bf16.msra.mxu0 %v3191
        %3535 = vmatprep.subr.bf16.mxu0 0
        %3536 = vmatpush1.bf16.msra.mxu0 %v3190
        %3537 = vmatprep.subr.bf16.mxu0 0
        %3538 = vmatpush1.bf16.msra.mxu0 %v3189
        %3539 = vmatprep.subr.bf16.mxu0 0
        %3540 = vmatpush1.bf16.msra.mxu0 %v3059
        %3541 = vmatprep.subr.bf16.mxu0 0
        %3542 = vmatpush1.bf16.msra.mxu0 %v3058
        %3543 = vmatprep.subr.bf16.mxu0 0
        %3544 = vmatpush1.bf16.msra.mxu0 %v3057
        %3545 = vmatprep.subr.bf16.mxu0 0
        %3546 = vmatpush1.bf16.msra.mxu0 %v3056
        %3547 = vmatprep.subr.bf16.mxu0 0
        %3548 = vmatpush2.bf16.msra.mxu0 %v3458
        %3549 = vmatprep.subr.bf16.mxu0 0
        %3550 = vmatpush2.bf16.msra.mxu0 %v3457
        %3551 = vmatprep.subr.bf16.mxu0 0
        %3552 = vmatpush2.bf16.msra.mxu0 %v3456
        %3553 = vmatprep.subr.bf16.mxu0 0
        %3554 = vmatpush2.bf16.msra.mxu0 %v3455
        %3555 = vmatprep.subr.bf16.mxu0 0
        %3556 = vmatpush2.bf16.msra.mxu0 %v3325
        %3557 = vmatprep.subr.bf16.mxu0 0
        %3558 = vmatpush2.bf16.msra.mxu0 %v3324
        %3559 = vmatprep.subr.bf16.mxu0 0
        %3560 = vmatpush2.bf16.msra.mxu0 %v3323
        %3561 = vmatprep.subr.bf16.mxu0 0
        %3562 = vmatpush2.bf16.msra.mxu0 %v3322
        %3563 = vmatprep.mubr.bf16.mxu0 %v2382
        %3564 = vmatmul.mubr.bf16.gmra.mxu0 %v2381
        %v3565 = vpop.f32.mrf.mxu0
        %v3566 = vadd.f32 %v3501, %v3565
        %v3567 = vpop.f32.mrf.mxu0
        %v3568 = vpop.f32.mrf.mxu0
        %v3569 = vadd.f32 %v3504, %v3568
        %v3570 = vpop.f32.mrf.mxu0
        %3571 = vmatprep.mubr.bf16.mxu0 %v2386
        %3572 = vmatmul.mubr.bf16.gmra.mxu0 %v2385
        %v3573 = vpop.f32.mrf.mxu0
        %v3574 = vadd.f32 %v3509, %v3573
        %v3575 = vpop.f32.mrf.mxu0
        %v3576 = vpop.f32.mrf.mxu0
        %v3577 = vadd.f32 %v3512, %v3576
        %v3578 = vpop.f32.mrf.mxu0
        %3579 = vmatprep.mubr.bf16.mxu0 %v2390
        %3580 = vmatmul.mubr.bf16.gmra.mxu0 %v2389
        %v3581 = vpop.f32.mrf.mxu0
        %v3582 = vadd.f32 %v3517, %v3581
        %v3583 = vpop.f32.mrf.mxu0
        %v3584 = vpop.f32.mrf.mxu0
        %v3585 = vadd.f32 %v3520, %v3584
        %v3586 = vpop.f32.mrf.mxu0
        %3587 = vmatprep.mubr.bf16.mxu0 %v2394
        %3588 = vmatmul.mubr.bf16.gmra.mxu0 %v2393
        %v3589 = vpop.f32.mrf.mxu0
        %v3590 = vadd.f32 %v3525, %v3589
        %v3591 = vpop.f32.mrf.mxu0
        %v3592 = vpop.f32.mrf.mxu0
        %v3593 = vadd.f32 %v3528, %v3592
        %v3594 = vpop.f32.mrf.mxu0
        %3595 = vdwg.mxu0
        %v3596 = vmax.f32 %v3566, 0.0
        %v3597 = vmax.f32 %v3569, 0.0
        %v3598 = vmax.f32 %v3574, 0.0
        %v3599 = vmax.f32 %v3577, 0.0
        %v3600 = vmax.f32 %v3582, 0.0
        %v3601 = vmax.f32 %v3585, 0.0
        %v3602 = vmax.f32 %v3590, 0.0
        %v3603 = vmax.f32 %v3593, 0.0
        %v3604 = vpack.c.bf16 %v3597, %v3596
        %v3605 = vpack.c.bf16 %v3599, %v3598
        %v3606 = vpack.c.bf16 %v3601, %v3600
        %v3607 = vpack.c.bf16 %v3603, %v3602
        %v3608 = vld [vmem:[%s11] sm:$0xf]
        %v3609 = vld [vmem:[%s11 + $0x4] sm:$0xf]
        %v3610 = vld [vmem:[%s11 + $0x8] sm:$0xf]
        %v3611 = vld [vmem:[%s11 + $0xc] sm:$0xf]
        %v3612 = vld [vmem:[%s11 + $0x10] sm:$0xf]
        %v3613 = vld [vmem:[%s11 + $0x14] sm:$0xf]
        %v3614 = vld [vmem:[%s11 + $0x18] sm:$0xf]
        %v3615 = vld [vmem:[%s11 + $0x1c] sm:$0xf]
        %v3616 = vld [vmem:[%s11 + $0x20] sm:$0xf]
        %v3617 = vld [vmem:[%s11 + $0x24] sm:$0xf]
        %v3618 = vld [vmem:[%s11 + $0x28] sm:$0xf]
        %v3619 = vld [vmem:[%s11 + $0x2c] sm:$0xf]
        %v3620 = vld [vmem:[%s11 + $0x30] sm:$0xf]
        %v3621 = vld [vmem:[%s11 + $0x34] sm:$0xf]
        %v3622 = vld [vmem:[%s11 + $0x38] sm:$0xf]
        %v3623 = vld [vmem:[%s11 + $0x3c] sm:$0xf]
        %v3640 = vunpack.c.l.b16 %v3608
        %v3641 = vunpack.c.l.b16 %v3609
        %v3642 = vunpack.c.l.b16 %v3610
        %v3643 = vunpack.c.l.b16 %v3611
        %v3644 = vunpack.c.l.b16 %v3612
        %v3645 = vunpack.c.l.b16 %v3613
        %v3646 = vunpack.c.l.b16 %v3614
        %v3647 = vunpack.c.l.b16 %v3615
        %v3648 = vunpack.c.l.b16 %v3616
        %v3649 = vunpack.c.l.b16 %v3617
        %v3650 = vunpack.c.l.b16 %v3618
        %v3651 = vunpack.c.l.b16 %v3619
        %v3652 = vunpack.c.l.b16 %v3620
        %v3653 = vunpack.c.l.b16 %v3621
        %v3654 = vunpack.c.l.b16 %v3622
        %v3655 = vunpack.c.l.b16 %v3623
        %v3656 = vpack.c.b16 %v3641, %v3640
        %v3657 = vpack.c.b16 %v3643, %v3642
        %v3658 = vpack.c.b16 %v3645, %v3644
        %v3659 = vpack.c.b16 %v3647, %v3646
        %v3660 = vpack.c.b16 %v3649, %v3648
        %v3661 = vpack.c.b16 %v3651, %v3650
        %v3662 = vpack.c.b16 %v3653, %v3652
        %v3663 = vpack.c.b16 %v3655, %v3654
        %3672 = vmatprep.subr.bf16.mxu0 0
        %3673 = vmatpush1.bf16.msra.mxu0 %v3663
        %3674 = vmatprep.subr.bf16.mxu0 0
        %3675 = vmatpush1.bf16.msra.mxu0 %v3662
        %3676 = vmatprep.subr.bf16.mxu0 0
        %3677 = vmatpush1.bf16.msra.mxu0 %v3661
        %3678 = vmatprep.subr.bf16.mxu0 0
        %3679 = vmatpush1.bf16.msra.mxu0 %v3660
        %3680 = vmatprep.subr.bf16.mxu0 0
        %3681 = vmatpush1.bf16.msra.mxu0 %v3659
        %3682 = vmatprep.subr.bf16.mxu0 0
        %3683 = vmatpush1.bf16.msra.mxu0 %v3658
        %3684 = vmatprep.subr.bf16.mxu0 0
        %3685 = vmatpush1.bf16.msra.mxu0 %v3657
        %3686 = vmatprep.subr.bf16.mxu0 0
        %3687 = vmatpush1.bf16.msra.mxu0 %v3656
        %3688 = vmatprep.subr.bf16.mxu0 0
        %3689 = vmatpush2.bf16.msra.mxu0 0
        %3690 = vmatprep.subr.bf16.mxu0 0
        %3691 = vmatpush2.bf16.msra.mxu0 0
        %3692 = vmatprep.subr.bf16.mxu0 0
        %3693 = vmatpush2.bf16.msra.mxu0 0
        %3694 = vmatprep.subr.bf16.mxu0 0
        %3695 = vmatpush2.bf16.msra.mxu0 0
        %3696 = vmatprep.subr.bf16.mxu0 0
        %3697 = vmatpush2.bf16.msra.mxu0 0
        %3698 = vmatprep.subr.bf16.mxu0 0
        %3699 = vmatpush2.bf16.msra.mxu0 0
        %3700 = vmatprep.subr.bf16.mxu0 0
        %3701 = vmatpush2.bf16.msra.mxu0 0
        %3702 = vmatprep.subr.bf16.mxu0 0
        %3703 = vmatpush2.bf16.msra.mxu0 0
        %3704 = vmatprep.mubr.bf16.mxu0 0
        %3705 = vmatmul.mubr.bf16.gmra.mxu0 %v3604
        %v3706 = vpop.f32.mrf.mxu0
        %v3707 = vadd.f32 0.0, %v3706
        %v3708 = vpop.f32.mrf.mxu0
        %v3709 = vpop.f32.mrf.mxu0
        %v3710 = vadd.f32 0.0, %v3709
        %v3711 = vpop.f32.mrf.mxu0
        %3712 = vmatprep.mubr.bf16.mxu0 0
        %3713 = vmatmul.mubr.bf16.gmra.mxu0 %v3605
        %v3714 = vpop.f32.mrf.mxu0
        %v3715 = vadd.f32 0.0, %v3714
        %v3716 = vpop.f32.mrf.mxu0
        %v3717 = vpop.f32.mrf.mxu0
        %v3718 = vadd.f32 0.0, %v3717
        %v3719 = vpop.f32.mrf.mxu0
        %3720 = vmatprep.mubr.bf16.mxu0 0
        %3721 = vmatmul.mubr.bf16.gmra.mxu0 %v3606
        %v3722 = vpop.f32.mrf.mxu0
        %v3723 = vadd.f32 0.0, %v3722
        %v3724 = vpop.f32.mrf.mxu0
        %v3725 = vpop.f32.mrf.mxu0
        %v3726 = vadd.f32 0.0, %v3725
        %v3727 = vpop.f32.mrf.mxu0
        %3728 = vmatprep.mubr.bf16.mxu0 0
        %3729 = vmatmul.mubr.bf16.gmra.mxu0 %v3607
        %v3730 = vpop.f32.mrf.mxu0
        %v3731 = vadd.f32 0.0, %v3730
        %v3732 = vpop.f32.mrf.mxu0
        %v3733 = vpop.f32.mrf.mxu0
        %v3734 = vadd.f32 0.0, %v3733
        %v3735 = vpop.f32.mrf.mxu0
        %3736 = vdwg.mxu0
        %3745 = vrot.lane.b32.xlu0 %v3707, 120
        %v3746 = vpop.permute.xlu0 %3745
        %3747 = vrot.lane.b32.xlu0 %v3710, 120
        %v3748 = vpop.permute.xlu0 %3747
        %3749 = vrot.lane.b32.xlu0 %v3715, 120
        %v3750 = vpop.permute.xlu0 %3749
        %3751 = vrot.lane.b32.xlu0 %v3718, 120
        %v3752 = vpop.permute.xlu0 %3751
        %3753 = vrot.lane.b32.xlu0 %v3723, 120
        %v3754 = vpop.permute.xlu0 %3753
        %3755 = vrot.lane.b32.xlu0 %v3726, 120
        %v3756 = vpop.permute.xlu0 %3755
        %3757 = vrot.lane.b32.xlu0 %v3731, 120
        %v3758 = vpop.permute.xlu0 %3757
        %3759 = vrot.lane.b32.xlu0 %v3734, 120
        %v3760 = vpop.permute.xlu0 %3759
        %3769 = vxpose.xlu0.b32.start [1/16] %v3746, 128
        %3770 = vxpose.xlu0.b32.cont [2/16] %v3748, 128
        %3771 = vxpose.xlu0.b32.cont [3/16] %v3750, 128
        %3772 = vxpose.xlu0.b32.cont [4/16] %v3752, 128
        %3773 = vxpose.xlu0.b32.cont [5/16] %v3754, 128
        %3774 = vxpose.xlu0.b32.cont [6/16] %v3756, 128
        %3775 = vxpose.xlu0.b32.cont [7/16] %v3758, 128
        %3776 = vxpose.xlu0.b32.cont [8/16] %v3760, 128
        %3777 = vxpose.xlu0.b32.cont [9/16] 0.0, 128
        %3778 = vxpose.xlu0.b32.cont [10/16] 0.0, 128
        %3779 = vxpose.xlu0.b32.cont [11/16] 0.0, 128
        %3780 = vxpose.xlu0.b32.cont [12/16] 0.0, 128
        %3781 = vxpose.xlu0.b32.cont [13/16] 0.0, 128
        %3782 = vxpose.xlu0.b32.cont [14/16] 0.0, 128
        %3783 = vxpose.xlu0.b32.cont [15/16] 0.0, 128
        %3784 = vxpose.xlu0.b32.end [16/16] 0.0, 128
        %v3785 = vpop.trf.xlu0
        %v3786 = vpop.trf.xlu0
        %v3787 = vpop.trf.xlu0
        %v3788 = vpop.trf.xlu0
        %v3789 = vpop.trf.xlu0
        %v3790 = vpop.trf.xlu0
        %v3791 = vpop.trf.xlu0
        %v3792 = vpop.trf.xlu0
        %v3793 = vpop.trf.xlu0
        %v3794 = vpop.trf.xlu0
        %v3795 = vpop.trf.xlu0
        %v3796 = vpop.trf.xlu0
        %v3797 = vpop.trf.xlu0
        %v3798 = vpop.trf.xlu0
        %v3799 = vpop.trf.xlu0
        %v3800 = vpop.trf.xlu0
        %v3802 = vrot.slane %v3785, 1
        %3803 = vrot.lane.b32.xlu0 %v3802, 64
        %v3804 = vpop.permute.xlu0 %3803
        %v3806 = vrot.slane %v3785, 2
        %v3808 = vrot.slane %v3785, 3
        %3809 = vrot.lane.b32.xlu0 %v3808, 64
        %v3810 = vpop.permute.xlu0 %3809
        %v3812 = vrot.slane %v3785, 4
        %v3814 = vrot.slane %v3785, 5
        %3815 = vrot.lane.b32.xlu0 %v3814, 64
        %v3816 = vpop.permute.xlu0 %3815
        %v3818 = vrot.slane %v3785, 6
        %v3820 = vrot.slane %v3785, 7
        %3821 = vrot.lane.b32.xlu0 %v3820, 64
        %v3822 = vpop.permute.xlu0 %3821
        %v3824 = vsel %vm1103, %v3785, %v3804
        %v3825 = vsel %vm1103, %v3806, %v3810
        %v3826 = vsel %vm1103, %v3812, %v3816
        %v3827 = vsel %vm1103, %v3818, %v3822
        %v3828 = vlaneseq
        %v3829 = vshrl.u32 %v3828, 7
        %v3830 = vsub.s32 0, %v3829
        %v3831 = vrot.slane %v3824, %v3830
        %v3832 = vlaneseq
        %v3833 = vshrl.u32 %v3832, 7
        %v3834 = vsub.s32 0, %v3833
        %v3835 = vrot.slane %v3825, %v3834
        %v3836 = vlaneseq
        %v3837 = vshrl.u32 %v3836, 7
        %v3838 = vsub.s32 0, %v3837
        %v3839 = vrot.slane %v3826, %v3838
        %v3840 = vlaneseq
        %v3841 = vshrl.u32 %v3840, 7
        %v3842 = vsub.s32 0, %v3841
        %v3843 = vrot.slane %v3827, %v3842
        %v3844 = vsel %vm1124, %v3707, 0
        %v3846 = vsel %vm1124, %v3710, 0
        %v3848 = vsel %vm1124, %v3715, 0
        %v3850 = vsel %vm1124, %v3718, 0
        %v3852 = vsel %vm1124, %v3723, 0
        %v3854 = vsel %vm1124, %v3726, 0
        %v3856 = vsel %vm1124, %v3731, 0
        %v3858 = vsel %vm1124, %v3734, 0
        %3860 = vmatprep.subr.mxu0 0.0
        %3861 = vmatpush1.msra.mxu0 0.0
        %3862 = vmatprep.subr.mxu0 0.0
        %3863 = vmatpush1.msra.mxu0 0.0
        %3864 = vmatprep.subr.mxu0 0.0
        %3865 = vmatpush1.msra.mxu0 0.0
        %3866 = vmatprep.subr.mxu0 0.0
        %3867 = vmatpush1.msra.mxu0 0.0
        %3868 = vmatprep.subr.mxu0 0.0
        %3869 = vmatpush1.msra.mxu0 0.0
        %3870 = vmatprep.subr.mxu0 0.0
        %3871 = vmatpush1.msra.mxu0 0.0
        %3872 = vmatprep.subr.mxu0 0.0
        %3873 = vmatpush1.msra.mxu0 0.0
        %3874 = vmatprep.subr.mxu0 0.0
        %3875 = vmatpush1.msra.mxu0 0.0
        %3876 = vmatprep.subr.mxu0 0.0
        %3877 = vmatpush1.msra.mxu0 0.0
        %3878 = vmatprep.subr.mxu0 0.0
        %3879 = vmatpush1.msra.mxu0 0.0
        %3880 = vmatprep.subr.mxu0 0.0
        %3881 = vmatpush1.msra.mxu0 0.0
        %3882 = vmatprep.subr.mxu0 0.0
        %3883 = vmatpush1.msra.mxu0 0.0
        %3884 = vmatprep.subr.mxu0 0.0
        %3885 = vmatpush1.msra.mxu0 0.0
        %3886 = vmatprep.subr.mxu0 0.0
        %3887 = vmatpush1.msra.mxu0 0.0
        %3888 = vmatprep.subr.mxu0 0.0
        %3889 = vmatpush1.msra.mxu0 0.0
        %3890 = vmatprep.subr.mxu0 %v1013
        %3891 = vmatpush1.msra.mxu0 %v1012
        %3892 = vmatprep.subr.mxu0 0.0
        %3893 = vmatpush2.msra.mxu0 0.0
        %3894 = vmatprep.subr.mxu0 0.0
        %3895 = vmatpush2.msra.mxu0 0.0
        %3896 = vmatprep.subr.mxu0 0.0
        %3897 = vmatpush2.msra.mxu0 0.0
        %3898 = vmatprep.subr.mxu0 0.0
        %3899 = vmatpush2.msra.mxu0 0.0
        %3900 = vmatprep.subr.mxu0 0.0
        %3901 = vmatpush2.msra.mxu0 0.0
        %3902 = vmatprep.subr.mxu0 0.0
        %3903 = vmatpush2.msra.mxu0 0.0
        %3904 = vmatprep.subr.mxu0 0.0
        %3905 = vmatpush2.msra.mxu0 0.0
        %3906 = vmatprep.subr.mxu0 0.0
        %3907 = vmatpush2.msra.mxu0 0.0
        %3908 = vmatprep.subr.mxu0 0.0
        %3909 = vmatpush2.msra.mxu0 0.0
        %3910 = vmatprep.subr.mxu0 0.0
        %3911 = vmatpush2.msra.mxu0 0.0
        %3912 = vmatprep.subr.mxu0 0.0
        %3913 = vmatpush2.msra.mxu0 0.0
        %3914 = vmatprep.subr.mxu0 0.0
        %3915 = vmatpush2.msra.mxu0 0.0
        %3916 = vmatprep.subr.mxu0 0.0
        %3917 = vmatpush2.msra.mxu0 0.0
        %3918 = vmatprep.subr.mxu0 0.0
        %3919 = vmatpush2.msra.mxu0 0.0
        %3920 = vmatprep.subr.mxu0 0.0
        %3921 = vmatpush2.msra.mxu0 0.0
        %3922 = vmatprep.subr.mxu0 0.0
        %3923 = vmatpush2.msra.mxu0 0.0
        %3924 = vmatprep.mubr.f32.mxu0 0.0
        %3925 = vmatmul.mubr.f32.gmra.mxu0 %v3844
        %v3926 = vpop.f32.mrf.mxu0
        %v3927 = vadd.f32 %v3831, %v3926
        %v3928 = vpop.f32.mrf.mxu0
        %v3929 = vadd.f32 %v3835, %v3928
        %3930 = vmatprep.mubr.f32.mxu0 0.0
        %3931 = vmatmul.mubr.f32.gmra.mxu0 %v3846
        %v3932 = vpop.f32.mrf.mxu0
        %v3933 = vadd.f32 %v3831, %v3932
        %v3934 = vpop.f32.mrf.mxu0
        %v3935 = vadd.f32 %v3835, %v3934
        %3936 = vmatprep.mubr.f32.mxu0 0.0
        %3937 = vmatmul.mubr.f32.gmra.mxu0 %v3848
        %v3938 = vpop.f32.mrf.mxu0
        %v3939 = vadd.f32 %v3831, %v3938
        %v3940 = vpop.f32.mrf.mxu0
        %v3941 = vadd.f32 %v3835, %v3940
        %3942 = vmatprep.mubr.f32.mxu0 0.0
        %3943 = vmatmul.mubr.f32.gmra.mxu0 %v3850
        %v3944 = vpop.f32.mrf.mxu0
        %v3945 = vadd.f32 %v3831, %v3944
        %v3946 = vpop.f32.mrf.mxu0
        %v3947 = vadd.f32 %v3835, %v3946
        %3948 = vmatprep.mubr.f32.mxu0 0.0
        %3949 = vmatmul.mubr.f32.gmra.mxu0 %v3852
        %v3950 = vpop.f32.mrf.mxu0
        %v3951 = vadd.f32 %v3831, %v3950
        %v3952 = vpop.f32.mrf.mxu0
        %v3953 = vadd.f32 %v3835, %v3952
        %3954 = vmatprep.mubr.f32.mxu0 0.0
        %3955 = vmatmul.mubr.f32.gmra.mxu0 %v3854
        %v3956 = vpop.f32.mrf.mxu0
        %v3957 = vadd.f32 %v3831, %v3956
        %v3958 = vpop.f32.mrf.mxu0
        %v3959 = vadd.f32 %v3835, %v3958
        %3960 = vmatprep.mubr.f32.mxu0 0.0
        %3961 = vmatmul.mubr.f32.gmra.mxu0 %v3856
        %v3962 = vpop.f32.mrf.mxu0
        %v3963 = vadd.f32 %v3831, %v3962
        %v3964 = vpop.f32.mrf.mxu0
        %v3965 = vadd.f32 %v3835, %v3964
        %3966 = vmatprep.mubr.f32.mxu0 0.0
        %3967 = vmatmul.mubr.f32.gmra.mxu0 %v3858
        %v3968 = vpop.f32.mrf.mxu0
        %v3969 = vadd.f32 %v3831, %v3968
        %v3970 = vpop.f32.mrf.mxu0
        %v3971 = vadd.f32 %v3835, %v3970
        %3972 = vdwg.mxu0
        %3973 = vmatprep.subr.mxu0 0.0
        %3974 = vmatpush1.msra.mxu0 0.0
        %3975 = vmatprep.subr.mxu0 0.0
        %3976 = vmatpush1.msra.mxu0 0.0
        %3977 = vmatprep.subr.mxu0 0.0
        %3978 = vmatpush1.msra.mxu0 0.0
        %3979 = vmatprep.subr.mxu0 0.0
        %3980 = vmatpush1.msra.mxu0 0.0
        %3981 = vmatprep.subr.mxu0 0.0
        %3982 = vmatpush1.msra.mxu0 0.0
        %3983 = vmatprep.subr.mxu0 0.0
        %3984 = vmatpush1.msra.mxu0 0.0
        %3985 = vmatprep.subr.mxu0 0.0
        %3986 = vmatpush1.msra.mxu0 0.0
        %3987 = vmatprep.subr.mxu0 0.0
        %3988 = vmatpush1.msra.mxu0 0.0
        %3989 = vmatprep.subr.mxu0 0.0
        %3990 = vmatpush1.msra.mxu0 0.0
        %3991 = vmatprep.subr.mxu0 0.0
        %3992 = vmatpush1.msra.mxu0 0.0
        %3993 = vmatprep.subr.mxu0 0.0
        %3994 = vmatpush1.msra.mxu0 0.0
        %3995 = vmatprep.subr.mxu0 0.0
        %3996 = vmatpush1.msra.mxu0 0.0
        %3997 = vmatprep.subr.mxu0 0.0
        %3998 = vmatpush1.msra.mxu0 0.0
        %3999 = vmatprep.subr.mxu0 0.0
        %4000 = vmatpush1.msra.mxu0 0.0
        %4001 = vmatprep.subr.mxu0 0.0
        %4002 = vmatpush1.msra.mxu0 0.0
        %4003 = vmatprep.subr.mxu0 %v1015
        %4004 = vmatpush1.msra.mxu0 %v1014
        %4005 = vmatprep.subr.mxu0 0.0
        %4006 = vmatpush2.msra.mxu0 0.0
        %4007 = vmatprep.subr.mxu0 0.0
        %4008 = vmatpush2.msra.mxu0 0.0
        %4009 = vmatprep.subr.mxu0 0.0
        %4010 = vmatpush2.msra.mxu0 0.0
        %4011 = vmatprep.subr.mxu0 0.0
        %4012 = vmatpush2.msra.mxu0 0.0
        %4013 = vmatprep.subr.mxu0 0.0
        %4014 = vmatpush2.msra.mxu0 0.0
        %4015 = vmatprep.subr.mxu0 0.0
        %4016 = vmatpush2.msra.mxu0 0.0
        %4017 = vmatprep.subr.mxu0 0.0
        %4018 = vmatpush2.msra.mxu0 0.0
        %4019 = vmatprep.subr.mxu0 0.0
        %4020 = vmatpush2.msra.mxu0 0.0
        %4021 = vmatprep.subr.mxu0 0.0
        %4022 = vmatpush2.msra.mxu0 0.0
        %4023 = vmatprep.subr.mxu0 0.0
        %4024 = vmatpush2.msra.mxu0 0.0
        %4025 = vmatprep.subr.mxu0 0.0
        %4026 = vmatpush2.msra.mxu0 0.0
        %4027 = vmatprep.subr.mxu0 0.0
        %4028 = vmatpush2.msra.mxu0 0.0
        %4029 = vmatprep.subr.mxu0 0.0
        %4030 = vmatpush2.msra.mxu0 0.0
        %4031 = vmatprep.subr.mxu0 0.0
        %4032 = vmatpush2.msra.mxu0 0.0
        %4033 = vmatprep.subr.mxu0 0.0
        %4034 = vmatpush2.msra.mxu0 0.0
        %4035 = vmatprep.subr.mxu0 0.0
        %4036 = vmatpush2.msra.mxu0 0.0
        %4037 = vmatprep.mubr.f32.mxu0 0.0
        %4038 = vmatmul.mubr.f32.gmra.mxu0 %v3844
        %v4039 = vpop.f32.mrf.mxu0
        %v4040 = vadd.f32 %v3839, %v4039
        %v4041 = vpop.f32.mrf.mxu0
        %v4042 = vadd.f32 %v3843, %v4041
        %4043 = vmatprep.mubr.f32.mxu0 0.0
        %4044 = vmatmul.mubr.f32.gmra.mxu0 %v3846
        %v4045 = vpop.f32.mrf.mxu0
        %v4046 = vadd.f32 %v3839, %v4045
        %v4047 = vpop.f32.mrf.mxu0
        %v4048 = vadd.f32 %v3843, %v4047
        %4049 = vmatprep.mubr.f32.mxu0 0.0
        %4050 = vmatmul.mubr.f32.gmra.mxu0 %v3848
        %v4051 = vpop.f32.mrf.mxu0
        %v4052 = vadd.f32 %v3839, %v4051
        %v4053 = vpop.f32.mrf.mxu0
        %v4054 = vadd.f32 %v3843, %v4053
        %4055 = vmatprep.mubr.f32.mxu0 0.0
        %4056 = vmatmul.mubr.f32.gmra.mxu0 %v3850
        %v4057 = vpop.f32.mrf.mxu0
        %v4058 = vadd.f32 %v3839, %v4057
        %v4059 = vpop.f32.mrf.mxu0
        %v4060 = vadd.f32 %v3843, %v4059
        %4061 = vmatprep.mubr.f32.mxu0 0.0
        %4062 = vmatmul.mubr.f32.gmra.mxu0 %v3852
        %v4063 = vpop.f32.mrf.mxu0
        %v4064 = vadd.f32 %v3839, %v4063
        %v4065 = vpop.f32.mrf.mxu0
        %v4066 = vadd.f32 %v3843, %v4065
        %4067 = vmatprep.mubr.f32.mxu0 0.0
        %4068 = vmatmul.mubr.f32.gmra.mxu0 %v3854
        %v4069 = vpop.f32.mrf.mxu0
        %v4070 = vadd.f32 %v3839, %v4069
        %v4071 = vpop.f32.mrf.mxu0
        %v4072 = vadd.f32 %v3843, %v4071
        %4073 = vmatprep.mubr.f32.mxu0 0.0
        %4074 = vmatmul.mubr.f32.gmra.mxu0 %v3856
        %v4075 = vpop.f32.mrf.mxu0
        %v4076 = vadd.f32 %v3839, %v4075
        %v4077 = vpop.f32.mrf.mxu0
        %v4078 = vadd.f32 %v3843, %v4077
        %4079 = vmatprep.mubr.f32.mxu0 0.0
        %4080 = vmatmul.mubr.f32.gmra.mxu0 %v3858
        %v4081 = vpop.f32.mrf.mxu0
        %v4082 = vadd.f32 %v3839, %v4081
        %v4083 = vpop.f32.mrf.mxu0
        %v4084 = vadd.f32 %v3843, %v4083
        %4085 = vdwg.mxu0
        %vm4086 = vcmp.gt.f32.partialorder %v3927, 0.0
        %vm4087 = vcmp.gt.f32.partialorder %v3929, 0.0
        %vm4088 = vcmp.gt.f32.partialorder %v4040, 0.0
        %vm4089 = vcmp.gt.f32.partialorder %v4042, 0.0
        %vm4090 = vcmp.gt.f32.partialorder %v3933, 0.0
        %vm4091 = vcmp.gt.f32.partialorder %v3935, 0.0
        %vm4092 = vcmp.gt.f32.partialorder %v4046, 0.0
        %vm4093 = vcmp.gt.f32.partialorder %v4048, 0.0
        %vm4094 = vcmp.gt.f32.partialorder %v3939, 0.0
        %vm4095 = vcmp.gt.f32.partialorder %v3941, 0.0
        %vm4096 = vcmp.gt.f32.partialorder %v4052, 0.0
        %vm4097 = vcmp.gt.f32.partialorder %v4054, 0.0
        %vm4098 = vcmp.gt.f32.partialorder %v3945, 0.0
        %vm4099 = vcmp.gt.f32.partialorder %v3947, 0.0
        %vm4100 = vcmp.gt.f32.partialorder %v4058, 0.0
        %vm4101 = vcmp.gt.f32.partialorder %v4060, 0.0
        %vm4102 = vcmp.gt.f32.partialorder %v3951, 0.0
        %vm4103 = vcmp.gt.f32.partialorder %v3953, 0.0
        %vm4104 = vcmp.gt.f32.partialorder %v4064, 0.0
        %vm4105 = vcmp.gt.f32.partialorder %v4066, 0.0
        %vm4106 = vcmp.gt.f32.partialorder %v3957, 0.0
        %vm4107 = vcmp.gt.f32.partialorder %v3959, 0.0
        %vm4108 = vcmp.gt.f32.partialorder %v4070, 0.0
        %vm4109 = vcmp.gt.f32.partialorder %v4072, 0.0
        %vm4110 = vcmp.gt.f32.partialorder %v3963, 0.0
        %vm4111 = vcmp.gt.f32.partialorder %v3965, 0.0
        %vm4112 = vcmp.gt.f32.partialorder %v4076, 0.0
        %vm4113 = vcmp.gt.f32.partialorder %v4078, 0.0
        %vm4114 = vcmp.gt.f32.partialorder %v3969, 0.0
        %vm4115 = vcmp.gt.f32.partialorder %v3971, 0.0
        %vm4116 = vcmp.gt.f32.partialorder %v4082, 0.0
        %vm4117 = vcmp.gt.f32.partialorder %v4084, 0.0
        %v4118 = vmul.f32 %v3927, 0.2
        %v4119 = vmul.f32 %v3929, 0.2
        %v4120 = vmul.f32 %v4040, 0.2
        %v4121 = vmul.f32 %v4042, 0.2
        %v4122 = vmul.f32 %v3933, 0.2
        %v4123 = vmul.f32 %v3935, 0.2
        %v4124 = vmul.f32 %v4046, 0.2
        %v4125 = vmul.f32 %v4048, 0.2
        %v4126 = vmul.f32 %v3939, 0.2
        %v4127 = vmul.f32 %v3941, 0.2
        %v4128 = vmul.f32 %v4052, 0.2
        %v4129 = vmul.f32 %v4054, 0.2
        %v4130 = vmul.f32 %v3945, 0.2
        %v4131 = vmul.f32 %v3947, 0.2
        %v4132 = vmul.f32 %v4058, 0.2
        %v4133 = vmul.f32 %v4060, 0.2
        %v4134 = vmul.f32 %v3951, 0.2
        %v4135 = vmul.f32 %v3953, 0.2
        %v4136 = vmul.f32 %v4064, 0.2
        %v4137 = vmul.f32 %v4066, 0.2
        %v4138 = vmul.f32 %v3957, 0.2
        %v4139 = vmul.f32 %v3959, 0.2
        %v4140 = vmul.f32 %v4070, 0.2
        %v4141 = vmul.f32 %v4072, 0.2
        %v4142 = vmul.f32 %v3963, 0.2
        %v4143 = vmul.f32 %v3965, 0.2
        %v4144 = vmul.f32 %v4076, 0.2
        %v4145 = vmul.f32 %v4078, 0.2
        %v4146 = vmul.f32 %v3969, 0.2
        %v4147 = vmul.f32 %v3971, 0.2
        %v4148 = vmul.f32 %v4082, 0.2
        %v4149 = vmul.f32 %v4084, 0.2
        %v4150 = vsel %vm4086, %v3927, %v4118
        %v4151 = vsel %vm4087, %v3929, %v4119
        %v4152 = vsel %vm4088, %v4040, %v4120
        %v4153 = vsel %vm4089, %v4042, %v4121
        %v4154 = vsel %vm4090, %v3933, %v4122
        %v4155 = vsel %vm4091, %v3935, %v4123
        %v4156 = vsel %vm4092, %v4046, %v4124
        %v4157 = vsel %vm4093, %v4048, %v4125
        %v4158 = vsel %vm4094, %v3939, %v4126
        %v4159 = vsel %vm4095, %v3941, %v4127
        %v4160 = vsel %vm4096, %v4052, %v4128
        %v4161 = vsel %vm4097, %v4054, %v4129
        %v4162 = vsel %vm4098, %v3945, %v4130
        %v4163 = vsel %vm4099, %v3947, %v4131
        %v4164 = vsel %vm4100, %v4058, %v4132
        %v4165 = vsel %vm4101, %v4060, %v4133
        %v4166 = vsel %vm4102, %v3951, %v4134
        %v4167 = vsel %vm4103, %v3953, %v4135
        %v4168 = vsel %vm4104, %v4064, %v4136
        %v4169 = vsel %vm4105, %v4066, %v4137
        %v4170 = vsel %vm4106, %v3957, %v4138
        %v4171 = vsel %vm4107, %v3959, %v4139
        %v4172 = vsel %vm4108, %v4070, %v4140
        %v4173 = vsel %vm4109, %v4072, %v4141
        %v4174 = vsel %vm4110, %v3963, %v4142
        %v4175 = vsel %vm4111, %v3965, %v4143
        %v4176 = vsel %vm4112, %v4076, %v4144
        %v4177 = vsel %vm4113, %v4078, %v4145
        %v4178 = vsel %vm4114, %v3969, %v4146
        %v4179 = vsel %vm4115, %v3971, %v4147
        %v4180 = vsel %vm4116, %v4082, %v4148
        %v4181 = vsel %vm4117, %v4084, %v4149
        %v4182 = vadd.f32 %v4150, %v1479
        %v4183 = vadd.f32 %v4151, %v1480
        %v4184 = vadd.f32 %v4152, %v1481
        %v4185 = vadd.f32 %v4153, %v1482
        %v4186 = vadd.f32 %v4154, %v1483
        %v4187 = vadd.f32 %v4155, %v1484
        %v4188 = vadd.f32 %v4156, %v1485
        %v4189 = vadd.f32 %v4157, %v1486
        %v4190 = vadd.f32 %v4158, %v1487
        %v4191 = vadd.f32 %v4159, %v1488
        %v4192 = vadd.f32 %v4160, %v1489
        %v4193 = vadd.f32 %v4161, %v1490
        %v4194 = vadd.f32 %v4162, %v1491
        %v4195 = vadd.f32 %v4163, %v1492
        %v4196 = vadd.f32 %v4164, %v1493
        %v4197 = vadd.f32 %v4165, %v1494
        %v4198 = vadd.f32 %v4166, %v1495
        %v4199 = vadd.f32 %v4167, %v1496
        %v4200 = vadd.f32 %v4168, %v1497
        %v4201 = vadd.f32 %v4169, %v1498
        %v4202 = vadd.f32 %v4170, %v1499
        %v4203 = vadd.f32 %v4171, %v1500
        %v4204 = vadd.f32 %v4172, %v1501
        %v4205 = vadd.f32 %v4173, %v1502
        %v4206 = vadd.f32 %v4174, %v1503
        %v4207 = vadd.f32 %v4175, %v1504
        %v4208 = vadd.f32 %v4176, %v1505
        %v4209 = vadd.f32 %v4177, %v1506
        %v4210 = vadd.f32 %v4178, %v1507
        %v4211 = vadd.f32 %v4179, %v1508
        %v4212 = vadd.f32 %v4180, %v1509
        %v4213 = vadd.f32 %v4181, %v1510
        %v4214 = vmax.f32 %v4182, %v4183
        %v4215 = vmax.f32 %v4214, %v4184
        %v4216 = vmax.f32 %v4215, %v4185
        %4217 = vmax.xlane.f32.xlu0 %v4216
        %v4218 = vpop.xlane.xlu0 %4217
        %v4219 = vmax.f32 %v4186, %v4187
        %v4220 = vmax.f32 %v4219, %v4188
        %v4221 = vmax.f32 %v4220, %v4189
        %4222 = vmax.xlane.f32.xlu0 %v4221
        %v4223 = vpop.xlane.xlu0 %4222
        %v4224 = vmax.f32 %v4190, %v4191
        %v4225 = vmax.f32 %v4224, %v4192
        %v4226 = vmax.f32 %v4225, %v4193
        %4227 = vmax.xlane.f32.xlu0 %v4226
        %v4228 = vpop.xlane.xlu0 %4227
        %v4229 = vmax.f32 %v4194, %v4195
        %v4230 = vmax.f32 %v4229, %v4196
        %v4231 = vmax.f32 %v4230, %v4197
        %4232 = vmax.xlane.f32.xlu0 %v4231
        %v4233 = vpop.xlane.xlu0 %4232
        %v4234 = vmax.f32 %v4198, %v4199
        %v4235 = vmax.f32 %v4234, %v4200
        %v4236 = vmax.f32 %v4235, %v4201
        %4237 = vmax.xlane.f32.xlu0 %v4236
        %v4238 = vpop.xlane.xlu0 %4237
        %v4239 = vmax.f32 %v4202, %v4203
        %v4240 = vmax.f32 %v4239, %v4204
        %v4241 = vmax.f32 %v4240, %v4205
        %4242 = vmax.xlane.f32.xlu0 %v4241
        %v4243 = vpop.xlane.xlu0 %4242
        %v4244 = vmax.f32 %v4206, %v4207
        %v4245 = vmax.f32 %v4244, %v4208
        %v4246 = vmax.f32 %v4245, %v4209
        %4247 = vmax.xlane.f32.xlu0 %v4246
        %v4248 = vpop.xlane.xlu0 %4247
        %v4249 = vmax.f32 %v4210, %v4211
        %v4250 = vmax.f32 %v4249, %v4212
        %v4251 = vmax.f32 %v4250, %v4213
        %4252 = vmax.xlane.f32.xlu0 %v4251
        %v4253 = vpop.xlane.xlu0 %4252
        %v4254 = vsub.f32 %v4182, %v4218
        %v4255 = vsub.f32 %v4183, %v4218
        %v4256 = vsub.f32 %v4184, %v4218
        %v4257 = vsub.f32 %v4185, %v4218
        %v4258 = vsub.f32 %v4186, %v4223
        %v4259 = vsub.f32 %v4187, %v4223
        %v4260 = vsub.f32 %v4188, %v4223
        %v4261 = vsub.f32 %v4189, %v4223
        %v4262 = vsub.f32 %v4190, %v4228
        %v4263 = vsub.f32 %v4191, %v4228
        %v4264 = vsub.f32 %v4192, %v4228
        %v4265 = vsub.f32 %v4193, %v4228
        %v4266 = vsub.f32 %v4194, %v4233
        %v4267 = vsub.f32 %v4195, %v4233
        %v4268 = vsub.f32 %v4196, %v4233
        %v4269 = vsub.f32 %v4197, %v4233
        %v4270 = vsub.f32 %v4198, %v4238
        %v4271 = vsub.f32 %v4199, %v4238
        %v4272 = vsub.f32 %v4200, %v4238
        %v4273 = vsub.f32 %v4201, %v4238
        %v4274 = vsub.f32 %v4202, %v4243
        %v4275 = vsub.f32 %v4203, %v4243
        %v4276 = vsub.f32 %v4204, %v4243
        %v4277 = vsub.f32 %v4205, %v4243
        %v4278 = vsub.f32 %v4206, %v4248
        %v4279 = vsub.f32 %v4207, %v4248
        %v4280 = vsub.f32 %v4208, %v4248
        %v4281 = vsub.f32 %v4209, %v4248
        %v4282 = vsub.f32 %v4210, %v4253
        %v4283 = vsub.f32 %v4211, %v4253
        %v4284 = vsub.f32 %v4212, %v4253
        %v4285 = vsub.f32 %v4213, %v4253
        %v4286 = vmul.f32 %v4254, 1.442695
        %v4287 = vpow.pop %v4286
        %v4288 = vmul.f32 %v4255, 1.442695
        %v4289 = vpow.pop %v4288
        %v4290 = vmul.f32 %v4256, 1.442695
        %v4291 = vpow.pop %v4290
        %v4292 = vmul.f32 %v4257, 1.442695
        %v4293 = vpow.pop %v4292
        %v4294 = vmul.f32 %v4258, 1.442695
        %v4295 = vpow.pop %v4294
        %v4296 = vmul.f32 %v4259, 1.442695
        %v4297 = vpow.pop %v4296
        %v4298 = vmul.f32 %v4260, 1.442695
        %v4299 = vpow.pop %v4298
        %v4300 = vmul.f32 %v4261, 1.442695
        %v4301 = vpow.pop %v4300
        %v4302 = vmul.f32 %v4262, 1.442695
        %v4303 = vpow.pop %v4302
        %v4304 = vmul.f32 %v4263, 1.442695
        %v4305 = vpow.pop %v4304
        %v4306 = vmul.f32 %v4264, 1.442695
        %v4307 = vpow.pop %v4306
        %v4308 = vmul.f32 %v4265, 1.442695
        %v4309 = vpow.pop %v4308
        %v4310 = vmul.f32 %v4266, 1.442695
        %v4311 = vpow.pop %v4310
        %v4312 = vmul.f32 %v4267, 1.442695
        %v4313 = vpow.pop %v4312
        %v4314 = vmul.f32 %v4268, 1.442695
        %v4315 = vpow.pop %v4314
        %v4316 = vmul.f32 %v4269, 1.442695
        %v4317 = vpow.pop %v4316
        %v4318 = vmul.f32 %v4270, 1.442695
        %v4319 = vpow.pop %v4318
        %v4320 = vmul.f32 %v4271, 1.442695
        %v4321 = vpow.pop %v4320
        %v4322 = vmul.f32 %v4272, 1.442695
        %v4323 = vpow.pop %v4322
        %v4324 = vmul.f32 %v4273, 1.442695
        %v4325 = vpow.pop %v4324
        %v4326 = vmul.f32 %v4274, 1.442695
        %v4327 = vpow.pop %v4326
        %v4328 = vmul.f32 %v4275, 1.442695
        %v4329 = vpow.pop %v4328
        %v4330 = vmul.f32 %v4276, 1.442695
        %v4331 = vpow.pop %v4330
        %v4332 = vmul.f32 %v4277, 1.442695
        %v4333 = vpow.pop %v4332
        %v4334 = vmul.f32 %v4278, 1.442695
        %v4335 = vpow.pop %v4334
        %v4336 = vmul.f32 %v4279, 1.442695
        %v4337 = vpow.pop %v4336
        %v4338 = vmul.f32 %v4280, 1.442695
        %v4339 = vpow.pop %v4338
        %v4340 = vmul.f32 %v4281, 1.442695
        %v4341 = vpow.pop %v4340
        %v4342 = vmul.f32 %v4282, 1.442695
        %v4343 = vpow.pop %v4342
        %v4344 = vmul.f32 %v4283, 1.442695
        %v4345 = vpow.pop %v4344
        %v4346 = vmul.f32 %v4284, 1.442695
        %v4347 = vpow.pop %v4346
        %v4348 = vmul.f32 %v4285, 1.442695
        %v4349 = vpow.pop %v4348
        %v4350 = vpack.c.bf16 %v4295, %v4287
        %v4351 = vpack.c.bf16 %v4297, %v4289
        %v4352 = vpack.c.bf16 %v4299, %v4291
        %v4353 = vpack.c.bf16 %v4301, %v4293
        %v4354 = vpack.c.bf16 %v4311, %v4303
        %v4355 = vpack.c.bf16 %v4313, %v4305
        %v4356 = vpack.c.bf16 %v4315, %v4307
        %v4357 = vpack.c.bf16 %v4317, %v4309
        %v4358 = vpack.c.bf16 %v4327, %v4319
        %v4359 = vpack.c.bf16 %v4329, %v4321
        %v4360 = vpack.c.bf16 %v4331, %v4323
        %v4361 = vpack.c.bf16 %v4333, %v4325
        %v4362 = vpack.c.bf16 %v4343, %v4335
        %v4363 = vpack.c.bf16 %v4345, %v4337
        %v4364 = vpack.c.bf16 %v4347, %v4339
        %v4365 = vpack.c.bf16 %v4349, %v4341
        %4366 = vmatprep.subr.bf16.mxu0 0
        %4367 = vmatpush1.bf16.msra.mxu0 %v1894
        %4368 = vmatprep.subr.bf16.mxu0 0
        %4369 = vmatpush1.bf16.msra.mxu0 %v1893
        %4370 = vmatprep.subr.bf16.mxu0 0
        %4371 = vmatpush1.bf16.msra.mxu0 %v1892
        %4372 = vmatprep.subr.bf16.mxu0 0
        %4373 = vmatpush1.bf16.msra.mxu0 %v1891
        %4374 = vmatprep.subr.bf16.mxu0 0
        %4375 = vmatpush1.bf16.msra.mxu0 %v1890
        %4376 = vmatprep.subr.bf16.mxu0 0
        %4377 = vmatpush1.bf16.msra.mxu0 %v1889
        %4378 = vmatprep.subr.bf16.mxu0 0
        %4379 = vmatpush1.bf16.msra.mxu0 %v1888
        %4380 = vmatprep.subr.bf16.mxu0 0
        %4381 = vmatpush1.bf16.msra.mxu0 %v1887
        %4382 = vmatprep.subr.bf16.mxu0 0
        %4383 = vmatpush2.bf16.msra.mxu0 %v1902
        %4384 = vmatprep.subr.bf16.mxu0 0
        %4385 = vmatpush2.bf16.msra.mxu0 %v1901
        %4386 = vmatprep.subr.bf16.mxu0 0
        %4387 = vmatpush2.bf16.msra.mxu0 %v1900
        %4388 = vmatprep.subr.bf16.mxu0 0
        %4389 = vmatpush2.bf16.msra.mxu0 %v1899
        %4390 = vmatprep.subr.bf16.mxu0 0
        %4391 = vmatpush2.bf16.msra.mxu0 %v1898
        %4392 = vmatprep.subr.bf16.mxu0 0
        %4393 = vmatpush2.bf16.msra.mxu0 %v1897
        %4394 = vmatprep.subr.bf16.mxu0 0
        %4395 = vmatpush2.bf16.msra.mxu0 %v1896
        %4396 = vmatprep.subr.bf16.mxu0 0
        %4397 = vmatpush2.bf16.msra.mxu0 %v1895
        %4398 = vmatprep.mubr.bf16.mxu0 %v4351
        %4399 = vmatmul.mubr.bf16.gmra.mxu0 %v4350
        %v4400 = vpop.f32.mrf.mxu0
        %v4401 = vadd.f32 0.0, %v4400
        %v4402 = vpop.f32.mrf.mxu0
        %v4403 = vpop.f32.mrf.mxu0
        %v4404 = vadd.f32 0.0, %v4403
        %v4405 = vpop.f32.mrf.mxu0
        %4406 = vmatprep.mubr.bf16.mxu0 %v4355
        %4407 = vmatmul.mubr.bf16.gmra.mxu0 %v4354
        %v4408 = vpop.f32.mrf.mxu0
        %v4409 = vadd.f32 0.0, %v4408
        %v4410 = vpop.f32.mrf.mxu0
        %v4411 = vpop.f32.mrf.mxu0
        %v4412 = vadd.f32 0.0, %v4411
        %v4413 = vpop.f32.mrf.mxu0
        %4414 = vmatprep.mubr.bf16.mxu0 %v4359
        %4415 = vmatmul.mubr.bf16.gmra.mxu0 %v4358
        %v4416 = vpop.f32.mrf.mxu0
        %v4417 = vadd.f32 0.0, %v4416
        %v4418 = vpop.f32.mrf.mxu0
        %v4419 = vpop.f32.mrf.mxu0
        %v4420 = vadd.f32 0.0, %v4419
        %v4421 = vpop.f32.mrf.mxu0
        %4422 = vmatprep.mubr.bf16.mxu0 %v4363
        %4423 = vmatmul.mubr.bf16.gmra.mxu0 %v4362
        %v4424 = vpop.f32.mrf.mxu0
        %v4425 = vadd.f32 0.0, %v4424
        %v4426 = vpop.f32.mrf.mxu0
        %v4427 = vpop.f32.mrf.mxu0
        %v4428 = vadd.f32 0.0, %v4427
        %v4429 = vpop.f32.mrf.mxu0
        %4430 = vdwg.mxu0
        %4431 = vmatprep.subr.bf16.mxu0 0
        %4432 = vmatpush1.bf16.msra.mxu0 %v1910
        %4433 = vmatprep.subr.bf16.mxu0 0
        %4434 = vmatpush1.bf16.msra.mxu0 %v1909
        %4435 = vmatprep.subr.bf16.mxu0 0
        %4436 = vmatpush1.bf16.msra.mxu0 %v1908
        %4437 = vmatprep.subr.bf16.mxu0 0
        %4438 = vmatpush1.bf16.msra.mxu0 %v1907
        %4439 = vmatprep.subr.bf16.mxu0 0
        %4440 = vmatpush1.bf16.msra.mxu0 %v1906
        %4441 = vmatprep.subr.bf16.mxu0 0
        %4442 = vmatpush1.bf16.msra.mxu0 %v1905
        %4443 = vmatprep.subr.bf16.mxu0 0
        %4444 = vmatpush1.bf16.msra.mxu0 %v1904
        %4445 = vmatprep.subr.bf16.mxu0 0
        %4446 = vmatpush1.bf16.msra.mxu0 %v1903
        %4447 = vmatprep.subr.bf16.mxu0 0
        %4448 = vmatpush2.bf16.msra.mxu0 %v1918
        %4449 = vmatprep.subr.bf16.mxu0 0
        %4450 = vmatpush2.bf16.msra.mxu0 %v1917
        %4451 = vmatprep.subr.bf16.mxu0 0
        %4452 = vmatpush2.bf16.msra.mxu0 %v1916
        %4453 = vmatprep.subr.bf16.mxu0 0
        %4454 = vmatpush2.bf16.msra.mxu0 %v1915
        %4455 = vmatprep.subr.bf16.mxu0 0
        %4456 = vmatpush2.bf16.msra.mxu0 %v1914
        %4457 = vmatprep.subr.bf16.mxu0 0
        %4458 = vmatpush2.bf16.msra.mxu0 %v1913
        %4459 = vmatprep.subr.bf16.mxu0 0
        %4460 = vmatpush2.bf16.msra.mxu0 %v1912
        %4461 = vmatprep.subr.bf16.mxu0 0
        %4462 = vmatpush2.bf16.msra.mxu0 %v1911
        %4463 = vmatprep.mubr.bf16.mxu0 %v4353
        %4464 = vmatmul.mubr.bf16.gmra.mxu0 %v4352
        %v4465 = vpop.f32.mrf.mxu0
        %v4466 = vadd.f32 %v4401, %v4465
        %v4467 = vpop.f32.mrf.mxu0
        %v4468 = vpop.f32.mrf.mxu0
        %v4469 = vadd.f32 %v4404, %v4468
        %v4470 = vpop.f32.mrf.mxu0
        %4471 = vmatprep.mubr.bf16.mxu0 %v4357
        %4472 = vmatmul.mubr.bf16.gmra.mxu0 %v4356
        %v4473 = vpop.f32.mrf.mxu0
        %v4474 = vadd.f32 %v4409, %v4473
        %v4475 = vpop.f32.mrf.mxu0
        %v4476 = vpop.f32.mrf.mxu0
        %v4477 = vadd.f32 %v4412, %v4476
        %v4478 = vpop.f32.mrf.mxu0
        %4479 = vmatprep.mubr.bf16.mxu0 %v4361
        %4480 = vmatmul.mubr.bf16.gmra.mxu0 %v4360
        %v4481 = vpop.f32.mrf.mxu0
        %v4482 = vadd.f32 %v4417, %v4481
        %v4483 = vpop.f32.mrf.mxu0
        %v4484 = vpop.f32.mrf.mxu0
        %v4485 = vadd.f32 %v4420, %v4484
        %v4486 = vpop.f32.mrf.mxu0
        %4487 = vmatprep.mubr.bf16.mxu0 %v4365
        %4488 = vmatmul.mubr.bf16.gmra.mxu0 %v4364
        %v4489 = vpop.f32.mrf.mxu0
        %v4490 = vadd.f32 %v4425, %v4489
        %v4491 = vpop.f32.mrf.mxu0
        %v4492 = vpop.f32.mrf.mxu0
        %v4493 = vadd.f32 %v4428, %v4492
        %v4494 = vpop.f32.mrf.mxu0
        %4495 = vdwg.mxu0
        %v4496 = vmul.f32 %v4466, 8.0
        %v4497 = vmul.f32 %v4469, 8.0
        %v4498 = vmul.f32 %v4474, 8.0
        %v4499 = vmul.f32 %v4477, 8.0
        %v4500 = vmul.f32 %v4482, 8.0
        %v4501 = vmul.f32 %v4485, 8.0
        %v4502 = vmul.f32 %v4490, 8.0
        %v4503 = vmul.f32 %v4493, 8.0
        %v4504 = vrcp.pop %v4496
        %v4505 = vrcp.pop %v4497
        %v4506 = vrcp.pop %v4498
        %v4507 = vrcp.pop %v4499
        %v4508 = vrcp.pop %v4500
        %v4509 = vrcp.pop %v4501
        %v4510 = vrcp.pop %v4502
        %v4511 = vrcp.pop %v4503
        %v4513 = vsel %vm1124, %v4504, 0
        %v4516 = vsel %vm1124, %v4505, 0
        %v4519 = vsel %vm1124, %v4506, 0
        %v4522 = vsel %vm1124, %v4507, 0
        %v4525 = vsel %vm1124, %v4508, 0
        %v4528 = vsel %vm1124, %v4509, 0
        %v4531 = vsel %vm1124, %v4510, 0
        %v4534 = vsel %vm1124, %v4511, 0
        %4536 = vmatprep.subr.mxu0 0.0
        %4537 = vmatpush1.msra.mxu0 0.0
        %4538 = vmatprep.subr.mxu0 0.0
        %4539 = vmatpush1.msra.mxu0 0.0
        %4540 = vmatprep.subr.mxu0 0.0
        %4541 = vmatpush1.msra.mxu0 0.0
        %4542 = vmatprep.subr.mxu0 0.0
        %4543 = vmatpush1.msra.mxu0 0.0
        %4544 = vmatprep.subr.mxu0 0.0
        %4545 = vmatpush1.msra.mxu0 0.0
        %4546 = vmatprep.subr.mxu0 0.0
        %4547 = vmatpush1.msra.mxu0 0.0
        %4548 = vmatprep.subr.mxu0 0.0
        %4549 = vmatpush1.msra.mxu0 0.0
        %4550 = vmatprep.subr.mxu0 0.0
        %4551 = vmatpush1.msra.mxu0 0.0
        %4552 = vmatprep.subr.mxu0 0.0
        %4553 = vmatpush1.msra.mxu0 0.0
        %4554 = vmatprep.subr.mxu0 0.0
        %4555 = vmatpush1.msra.mxu0 0.0
        %4556 = vmatprep.subr.mxu0 0.0
        %4557 = vmatpush1.msra.mxu0 0.0
        %4558 = vmatprep.subr.mxu0 0.0
        %4559 = vmatpush1.msra.mxu0 0.0
        %4560 = vmatprep.subr.mxu0 0.0
        %4561 = vmatpush1.msra.mxu0 0.0
        %4562 = vmatprep.subr.mxu0 0.0
        %4563 = vmatpush1.msra.mxu0 0.0
        %4564 = vmatprep.subr.mxu0 0.0
        %4565 = vmatpush1.msra.mxu0 0.0
        %4566 = vmatprep.subr.mxu0 %v1013
        %4567 = vmatpush1.msra.mxu0 %v1012
        %4568 = vmatprep.subr.mxu0 0.0
        %4569 = vmatpush2.msra.mxu0 0.0
        %4570 = vmatprep.subr.mxu0 0.0
        %4571 = vmatpush2.msra.mxu0 0.0
        %4572 = vmatprep.subr.mxu0 0.0
        %4573 = vmatpush2.msra.mxu0 0.0
        %4574 = vmatprep.subr.mxu0 0.0
        %4575 = vmatpush2.msra.mxu0 0.0
        %4576 = vmatprep.subr.mxu0 0.0
        %4577 = vmatpush2.msra.mxu0 0.0
        %4578 = vmatprep.subr.mxu0 0.0
        %4579 = vmatpush2.msra.mxu0 0.0
        %4580 = vmatprep.subr.mxu0 0.0
        %4581 = vmatpush2.msra.mxu0 0.0
        %4582 = vmatprep.subr.mxu0 0.0
        %4583 = vmatpush2.msra.mxu0 0.0
        %4584 = vmatprep.subr.mxu0 0.0
        %4585 = vmatpush2.msra.mxu0 0.0
        %4586 = vmatprep.subr.mxu0 0.0
        %4587 = vmatpush2.msra.mxu0 0.0
        %4588 = vmatprep.subr.mxu0 0.0
        %4589 = vmatpush2.msra.mxu0 0.0
        %4590 = vmatprep.subr.mxu0 0.0
        %4591 = vmatpush2.msra.mxu0 0.0
        %4592 = vmatprep.subr.mxu0 0.0
        %4593 = vmatpush2.msra.mxu0 0.0
        %4594 = vmatprep.subr.mxu0 0.0
        %4595 = vmatpush2.msra.mxu0 0.0
        %4596 = vmatprep.subr.mxu0 0.0
        %4597 = vmatpush2.msra.mxu0 0.0
        %4598 = vmatprep.subr.mxu0 0.0
        %4599 = vmatpush2.msra.mxu0 0.0
        %4600 = vmatprep.mubr.f32.mxu0 0.0
        %4601 = vmatmul.mubr.f32.gmra.mxu0 %v4513
        %v4602 = vpop.f32.mrf.mxu0
        %v4603 = vadd.f32 0.0, %v4602
        %v4604 = vpop.f32.mrf.mxu0
        %v4605 = vadd.f32 0.0, %v4604
        %4606 = vmatprep.mubr.f32.mxu0 0.0
        %4607 = vmatmul.mubr.f32.gmra.mxu0 %v4516
        %v4608 = vpop.f32.mrf.mxu0
        %v4609 = vadd.f32 0.0, %v4608
        %v4610 = vpop.f32.mrf.mxu0
        %v4611 = vadd.f32 0.0, %v4610
        %4612 = vmatprep.mubr.f32.mxu0 0.0
        %4613 = vmatmul.mubr.f32.gmra.mxu0 %v4519
        %v4614 = vpop.f32.mrf.mxu0
        %v4615 = vadd.f32 0.0, %v4614
        %v4616 = vpop.f32.mrf.mxu0
        %v4617 = vadd.f32 0.0, %v4616
        %4618 = vmatprep.mubr.f32.mxu0 0.0
        %4619 = vmatmul.mubr.f32.gmra.mxu0 %v4522
        %v4620 = vpop.f32.mrf.mxu0
        %v4621 = vadd.f32 0.0, %v4620
        %v4622 = vpop.f32.mrf.mxu0
        %v4623 = vadd.f32 0.0, %v4622
        %4624 = vmatprep.mubr.f32.mxu0 0.0
        %4625 = vmatmul.mubr.f32.gmra.mxu0 %v4525
        %v4626 = vpop.f32.mrf.mxu0
        %v4627 = vadd.f32 0.0, %v4626
        %v4628 = vpop.f32.mrf.mxu0
        %v4629 = vadd.f32 0.0, %v4628
        %4630 = vmatprep.mubr.f32.mxu0 0.0
        %4631 = vmatmul.mubr.f32.gmra.mxu0 %v4528
        %v4632 = vpop.f32.mrf.mxu0
        %v4633 = vadd.f32 0.0, %v4632
        %v4634 = vpop.f32.mrf.mxu0
        %v4635 = vadd.f32 0.0, %v4634
        %4636 = vmatprep.mubr.f32.mxu0 0.0
        %4637 = vmatmul.mubr.f32.gmra.mxu0 %v4531
        %v4638 = vpop.f32.mrf.mxu0
        %v4639 = vadd.f32 0.0, %v4638
        %v4640 = vpop.f32.mrf.mxu0
        %v4641 = vadd.f32 0.0, %v4640
        %4642 = vmatprep.mubr.f32.mxu0 0.0
        %4643 = vmatmul.mubr.f32.gmra.mxu0 %v4534
        %v4644 = vpop.f32.mrf.mxu0
        %v4645 = vadd.f32 0.0, %v4644
        %v4646 = vpop.f32.mrf.mxu0
        %v4647 = vadd.f32 0.0, %v4646
        %4648 = vdwg.mxu0
        %4649 = vmatprep.subr.mxu0 0.0
        %4650 = vmatpush1.msra.mxu0 0.0
        %4651 = vmatprep.subr.mxu0 0.0
        %4652 = vmatpush1.msra.mxu0 0.0
        %4653 = vmatprep.subr.mxu0 0.0
        %4654 = vmatpush1.msra.mxu0 0.0
        %4655 = vmatprep.subr.mxu0 0.0
        %4656 = vmatpush1.msra.mxu0 0.0
        %4657 = vmatprep.subr.mxu0 0.0
        %4658 = vmatpush1.msra.mxu0 0.0
        %4659 = vmatprep.subr.mxu0 0.0
        %4660 = vmatpush1.msra.mxu0 0.0
        %4661 = vmatprep.subr.mxu0 0.0
        %4662 = vmatpush1.msra.mxu0 0.0
        %4663 = vmatprep.subr.mxu0 0.0
        %4664 = vmatpush1.msra.mxu0 0.0
        %4665 = vmatprep.subr.mxu0 0.0
        %4666 = vmatpush1.msra.mxu0 0.0
        %4667 = vmatprep.subr.mxu0 0.0
        %4668 = vmatpush1.msra.mxu0 0.0
        %4669 = vmatprep.subr.mxu0 0.0
        %4670 = vmatpush1.msra.mxu0 0.0
        %4671 = vmatprep.subr.mxu0 0.0
        %4672 = vmatpush1.msra.mxu0 0.0
        %4673 = vmatprep.subr.mxu0 0.0
        %4674 = vmatpush1.msra.mxu0 0.0
        %4675 = vmatprep.subr.mxu0 0.0
        %4676 = vmatpush1.msra.mxu0 0.0
        %4677 = vmatprep.subr.mxu0 0.0
        %4678 = vmatpush1.msra.mxu0 0.0
        %4679 = vmatprep.subr.mxu0 %v1015
        %4680 = vmatpush1.msra.mxu0 %v1014
        %4681 = vmatprep.subr.mxu0 0.0
        %4682 = vmatpush2.msra.mxu0 0.0
        %4683 = vmatprep.subr.mxu0 0.0
        %4684 = vmatpush2.msra.mxu0 0.0
        %4685 = vmatprep.subr.mxu0 0.0
        %4686 = vmatpush2.msra.mxu0 0.0
        %4687 = vmatprep.subr.mxu0 0.0
        %4688 = vmatpush2.msra.mxu0 0.0
        %4689 = vmatprep.subr.mxu0 0.0
        %4690 = vmatpush2.msra.mxu0 0.0
        %4691 = vmatprep.subr.mxu0 0.0
        %4692 = vmatpush2.msra.mxu0 0.0
        %4693 = vmatprep.subr.mxu0 0.0
        %4694 = vmatpush2.msra.mxu0 0.0
        %4695 = vmatprep.subr.mxu0 0.0
        %4696 = vmatpush2.msra.mxu0 0.0
        %4697 = vmatprep.subr.mxu0 0.0
        %4698 = vmatpush2.msra.mxu0 0.0
        %4699 = vmatprep.subr.mxu0 0.0
        %4700 = vmatpush2.msra.mxu0 0.0
        %4701 = vmatprep.subr.mxu0 0.0
        %4702 = vmatpush2.msra.mxu0 0.0
        %4703 = vmatprep.subr.mxu0 0.0
        %4704 = vmatpush2.msra.mxu0 0.0
        %4705 = vmatprep.subr.mxu0 0.0
        %4706 = vmatpush2.msra.mxu0 0.0
        %4707 = vmatprep.subr.mxu0 0.0
        %4708 = vmatpush2.msra.mxu0 0.0
        %4709 = vmatprep.subr.mxu0 0.0
        %4710 = vmatpush2.msra.mxu0 0.0
        %4711 = vmatprep.subr.mxu0 0.0
        %4712 = vmatpush2.msra.mxu0 0.0
        %4713 = vmatprep.mubr.f32.mxu0 0.0
        %4714 = vmatmul.mubr.f32.gmra.mxu0 %v4513
        %v4715 = vpop.f32.mrf.mxu0
        %v4716 = vadd.f32 0.0, %v4715
        %v4717 = vpop.f32.mrf.mxu0
        %v4718 = vadd.f32 0.0, %v4717
        %4719 = vmatprep.mubr.f32.mxu0 0.0
        %4720 = vmatmul.mubr.f32.gmra.mxu0 %v4516
        %v4721 = vpop.f32.mrf.mxu0
        %v4722 = vadd.f32 0.0, %v4721
        %v4723 = vpop.f32.mrf.mxu0
        %v4724 = vadd.f32 0.0, %v4723
        %4725 = vmatprep.mubr.f32.mxu0 0.0
        %4726 = vmatmul.mubr.f32.gmra.mxu0 %v4519
        %v4727 = vpop.f32.mrf.mxu0
        %v4728 = vadd.f32 0.0, %v4727
        %v4729 = vpop.f32.mrf.mxu0
        %v4730 = vadd.f32 0.0, %v4729
        %4731 = vmatprep.mubr.f32.mxu0 0.0
        %4732 = vmatmul.mubr.f32.gmra.mxu0 %v4522
        %v4733 = vpop.f32.mrf.mxu0
        %v4734 = vadd.f32 0.0, %v4733
        %v4735 = vpop.f32.mrf.mxu0
        %v4736 = vadd.f32 0.0, %v4735
        %4737 = vmatprep.mubr.f32.mxu0 0.0
        %4738 = vmatmul.mubr.f32.gmra.mxu0 %v4525
        %v4739 = vpop.f32.mrf.mxu0
        %v4740 = vadd.f32 0.0, %v4739
        %v4741 = vpop.f32.mrf.mxu0
        %v4742 = vadd.f32 0.0, %v4741
        %4743 = vmatprep.mubr.f32.mxu0 0.0
        %4744 = vmatmul.mubr.f32.gmra.mxu0 %v4528
        %v4745 = vpop.f32.mrf.mxu0
        %v4746 = vadd.f32 0.0, %v4745
        %v4747 = vpop.f32.mrf.mxu0
        %v4748 = vadd.f32 0.0, %v4747
        %4749 = vmatprep.mubr.f32.mxu0 0.0
        %4750 = vmatmul.mubr.f32.gmra.mxu0 %v4531
        %v4751 = vpop.f32.mrf.mxu0
        %v4752 = vadd.f32 0.0, %v4751
        %v4753 = vpop.f32.mrf.mxu0
        %v4754 = vadd.f32 0.0, %v4753
        %4755 = vmatprep.mubr.f32.mxu0 0.0
        %4756 = vmatmul.mubr.f32.gmra.mxu0 %v4534
        %v4757 = vpop.f32.mrf.mxu0
        %v4758 = vadd.f32 0.0, %v4757
        %v4759 = vpop.f32.mrf.mxu0
        %v4760 = vadd.f32 0.0, %v4759
        %4761 = vdwg.mxu0
        %v4762 = vmul.f32 %v4287, %v4603
        %v4763 = vmul.f32 %v4289, %v4605
        %v4764 = vmul.f32 %v4291, %v4716
        %v4765 = vmul.f32 %v4293, %v4718
        %v4766 = vmul.f32 %v4295, %v4609
        %v4767 = vmul.f32 %v4297, %v4611
        %v4768 = vmul.f32 %v4299, %v4722
        %v4769 = vmul.f32 %v4301, %v4724
        %v4770 = vmul.f32 %v4303, %v4615
        %v4771 = vmul.f32 %v4305, %v4617
        %v4772 = vmul.f32 %v4307, %v4728
        %v4773 = vmul.f32 %v4309, %v4730
        %v4774 = vmul.f32 %v4311, %v4621
        %v4775 = vmul.f32 %v4313, %v4623
        %v4776 = vmul.f32 %v4315, %v4734
        %v4777 = vmul.f32 %v4317, %v4736
        %v4778 = vmul.f32 %v4319, %v4627
        %v4779 = vmul.f32 %v4321, %v4629
        %v4780 = vmul.f32 %v4323, %v4740
        %v4781 = vmul.f32 %v4325, %v4742
        %v4782 = vmul.f32 %v4327, %v4633
        %v4783 = vmul.f32 %v4329, %v4635
        %v4784 = vmul.f32 %v4331, %v4746
        %v4785 = vmul.f32 %v4333, %v4748
        %v4786 = vmul.f32 %v4335, %v4639
        %v4787 = vmul.f32 %v4337, %v4641
        %v4788 = vmul.f32 %v4339, %v4752
        %v4789 = vmul.f32 %v4341, %v4754
        %v4790 = vmul.f32 %v4343, %v4645
        %v4791 = vmul.f32 %v4345, %v4647
        %v4792 = vmul.f32 %v4347, %v4758
        %v4793 = vmul.f32 %v4349, %v4760
        %v4794 = vpack.c.bf16 %v4766, %v4762
        %v4795 = vpack.c.bf16 %v4767, %v4763
        %v4796 = vpack.c.bf16 %v4768, %v4764
        %v4797 = vpack.c.bf16 %v4769, %v4765
        %v4798 = vpack.c.bf16 %v4774, %v4770
        %v4799 = vpack.c.bf16 %v4775, %v4771
        %v4800 = vpack.c.bf16 %v4776, %v4772
        %v4801 = vpack.c.bf16 %v4777, %v4773
        %v4802 = vpack.c.bf16 %v4782, %v4778
        %v4803 = vpack.c.bf16 %v4783, %v4779
        %v4804 = vpack.c.bf16 %v4784, %v4780
        %v4805 = vpack.c.bf16 %v4785, %v4781
        %v4806 = vpack.c.bf16 %v4790, %v4786
        %v4807 = vpack.c.bf16 %v4791, %v4787
        %v4808 = vpack.c.bf16 %v4792, %v4788
        %v4809 = vpack.c.bf16 %v4793, %v4789
        %v4810 = vld [vmem:[#allocation11] sm:$0xf]
        %v4811 = vld [vmem:[#allocation11 + $0x20] sm:$0xf]
        %v4812 = vld [vmem:[#allocation11 + $0x40] sm:$0xf]
        %v4813 = vld [vmem:[#allocation11 + $0x60] sm:$0xf]
        %v4814 = vld [vmem:[#allocation11 + $0x80] sm:$0xf]
        %v4815 = vld [vmem:[#allocation11 + $0xa0] sm:$0xf]
        %v4816 = vld [vmem:[#allocation11 + $0xc0] sm:$0xf]
        %v4817 = vld [vmem:[#allocation11 + $0xe0] sm:$0xf]
        %v4818 = vld [vmem:[#allocation11 + $0x100] sm:$0xf]
        %v4819 = vld [vmem:[#allocation11 + $0x120] sm:$0xf]
        %v4820 = vld [vmem:[#allocation11 + $0x140] sm:$0xf]
        %v4821 = vld [vmem:[#allocation11 + $0x160] sm:$0xf]
        %v4822 = vld [vmem:[#allocation11 + $0x180] sm:$0xf]
        %v4823 = vld [vmem:[#allocation11 + $0x1a0] sm:$0xf]
        %v4824 = vld [vmem:[#allocation11 + $0x1c0] sm:$0xf]
        %v4825 = vld [vmem:[#allocation11 + $0x1e0] sm:$0xf]
        %v4842 = vunpack.c.l.b16 %v4810
        %v4843 = vunpack.c.l.b16 %v4811
        %v4844 = vunpack.c.l.b16 %v4812
        %v4845 = vunpack.c.l.b16 %v4813
        %v4846 = vunpack.c.l.b16 %v4814
        %v4847 = vunpack.c.l.b16 %v4815
        %v4848 = vunpack.c.l.b16 %v4816
        %v4849 = vunpack.c.l.b16 %v4817
        %v4850 = vunpack.c.l.b16 %v4818
        %v4851 = vunpack.c.l.b16 %v4819
        %v4852 = vunpack.c.l.b16 %v4820
        %v4853 = vunpack.c.l.b16 %v4821
        %v4854 = vunpack.c.l.b16 %v4822
        %v4855 = vunpack.c.l.b16 %v4823
        %v4856 = vunpack.c.l.b16 %v4824
        %v4857 = vunpack.c.l.b16 %v4825
        %v4858 = vpack.c.b16 %v4843, %v4842
        %v4859 = vpack.c.b16 %v4845, %v4844
        %v4860 = vpack.c.b16 %v4847, %v4846
        %v4861 = vpack.c.b16 %v4849, %v4848
        %v4862 = vpack.c.b16 %v4851, %v4850
        %v4863 = vpack.c.b16 %v4853, %v4852
        %v4864 = vpack.c.b16 %v4855, %v4854
        %v4865 = vpack.c.b16 %v4857, %v4856
        %4874 = vmatprep.subr.bf16.mxu0 0
        %4875 = vmatpush1.bf16.msra.mxu0 %v4865
        %4876 = vmatprep.subr.bf16.mxu0 0
        %4877 = vmatpush1.bf16.msra.mxu0 %v4864
        %4878 = vmatprep.subr.bf16.mxu0 0
        %4879 = vmatpush1.bf16.msra.mxu0 %v4863
        %4880 = vmatprep.subr.bf16.mxu0 0
        %4881 = vmatpush1.bf16.msra.mxu0 %v4862
        %4882 = vmatprep.subr.bf16.mxu0 0
        %4883 = vmatpush1.bf16.msra.mxu0 %v4861
        %4884 = vmatprep.subr.bf16.mxu0 0
        %4885 = vmatpush1.bf16.msra.mxu0 %v4860
        %4886 = vmatprep.subr.bf16.mxu0 0
        %4887 = vmatpush1.bf16.msra.mxu0 %v4859
        %4888 = vmatprep.subr.bf16.mxu0 0
        %4889 = vmatpush1.bf16.msra.mxu0 %v4858
        %4890 = vmatprep.subr.bf16.mxu0 0
        %4891 = vmatpush2.bf16.msra.mxu0 0
        %4892 = vmatprep.subr.bf16.mxu0 0
        %4893 = vmatpush2.bf16.msra.mxu0 0
        %4894 = vmatprep.subr.bf16.mxu0 0
        %4895 = vmatpush2.bf16.msra.mxu0 0
        %4896 = vmatprep.subr.bf16.mxu0 0
        %4897 = vmatpush2.bf16.msra.mxu0 0
        %4898 = vmatprep.subr.bf16.mxu0 0
        %4899 = vmatpush2.bf16.msra.mxu0 0
        %4900 = vmatprep.subr.bf16.mxu0 0
        %4901 = vmatpush2.bf16.msra.mxu0 0
        %4902 = vmatprep.subr.bf16.mxu0 0
        %4903 = vmatpush2.bf16.msra.mxu0 0
        %4904 = vmatprep.subr.bf16.mxu0 0
        %4905 = vmatpush2.bf16.msra.mxu0 0
        %4906 = vmatprep.mubr.bf16.mxu0 0
        %4907 = vmatmul.mubr.bf16.gmra.mxu0 %v3604
        %v4908 = vpop.f32.mrf.mxu0
        %v4909 = vadd.f32 0.0, %v4908
        %v4910 = vpop.f32.mrf.mxu0
        %v4911 = vpop.f32.mrf.mxu0
        %v4912 = vadd.f32 0.0, %v4911
        %v4913 = vpop.f32.mrf.mxu0
        %4914 = vmatprep.mubr.bf16.mxu0 0
        %4915 = vmatmul.mubr.bf16.gmra.mxu0 %v3605
        %v4916 = vpop.f32.mrf.mxu0
        %v4917 = vadd.f32 0.0, %v4916
        %v4918 = vpop.f32.mrf.mxu0
        %v4919 = vpop.f32.mrf.mxu0
        %v4920 = vadd.f32 0.0, %v4919
        %v4921 = vpop.f32.mrf.mxu0
        %4922 = vmatprep.mubr.bf16.mxu0 0
        %4923 = vmatmul.mubr.bf16.gmra.mxu0 %v3606
        %v4924 = vpop.f32.mrf.mxu0
        %v4925 = vadd.f32 0.0, %v4924
        %v4926 = vpop.f32.mrf.mxu0
        %v4927 = vpop.f32.mrf.mxu0
        %v4928 = vadd.f32 0.0, %v4927
        %v4929 = vpop.f32.mrf.mxu0
        %4930 = vmatprep.mubr.bf16.mxu0 0
        %4931 = vmatmul.mubr.bf16.gmra.mxu0 %v3607
        %v4932 = vpop.f32.mrf.mxu0
        %v4933 = vadd.f32 0.0, %v4932
        %v4934 = vpop.f32.mrf.mxu0
        %v4935 = vpop.f32.mrf.mxu0
        %v4936 = vadd.f32 0.0, %v4935
        %v4937 = vpop.f32.mrf.mxu0
        %4938 = vdwg.mxu0
        %v4939 = vpack.c.bf16 %v4912, %v4909
        %v4940 = vpack.c.bf16 %v4920, %v4917
        %v4941 = vpack.c.bf16 %v4928, %v4925
        %v4942 = vpack.c.bf16 %v4936, %v4933
        %v4943 = vld [vmem:[#allocation11 + $0x4] sm:$0xf]
        %v4944 = vld [vmem:[#allocation11 + $0x24] sm:$0xf]
        %v4945 = vld [vmem:[#allocation11 + $0x44] sm:$0xf]
        %v4946 = vld [vmem:[#allocation11 + $0x64] sm:$0xf]
        %v4947 = vld [vmem:[#allocation11 + $0x84] sm:$0xf]
        %v4948 = vld [vmem:[#allocation11 + $0xa4] sm:$0xf]
        %v4949 = vld [vmem:[#allocation11 + $0xc4] sm:$0xf]
        %v4950 = vld [vmem:[#allocation11 + $0xe4] sm:$0xf]
        %v4951 = vld [vmem:[#allocation11 + $0x104] sm:$0xf]
        %v4952 = vld [vmem:[#allocation11 + $0x124] sm:$0xf]
        %v4953 = vld [vmem:[#allocation11 + $0x144] sm:$0xf]
        %v4954 = vld [vmem:[#allocation11 + $0x164] sm:$0xf]
        %v4955 = vld [vmem:[#allocation11 + $0x184] sm:$0xf]
        %v4956 = vld [vmem:[#allocation11 + $0x1a4] sm:$0xf]
        %v4957 = vld [vmem:[#allocation11 + $0x1c4] sm:$0xf]
        %v4958 = vld [vmem:[#allocation11 + $0x1e4] sm:$0xf]
        %v4975 = vunpack.c.l.b16 %v4943
        %v4976 = vunpack.c.l.b16 %v4944
        %v4977 = vunpack.c.l.b16 %v4945
        %v4978 = vunpack.c.l.b16 %v4946
        %v4979 = vunpack.c.l.b16 %v4947
        %v4980 = vunpack.c.l.b16 %v4948
        %v4981 = vunpack.c.l.b16 %v4949
        %v4982 = vunpack.c.l.b16 %v4950
        %v4983 = vunpack.c.l.b16 %v4951
        %v4984 = vunpack.c.l.b16 %v4952
        %v4985 = vunpack.c.l.b16 %v4953
        %v4986 = vunpack.c.l.b16 %v4954
        %v4987 = vunpack.c.l.b16 %v4955
        %v4988 = vunpack.c.l.b16 %v4956
        %v4989 = vunpack.c.l.b16 %v4957
        %v4990 = vunpack.c.l.b16 %v4958
        %v4991 = vpack.c.b16 %v4976, %v4975
        %v4992 = vpack.c.b16 %v4978, %v4977
        %v4993 = vpack.c.b16 %v4980, %v4979
        %v4994 = vpack.c.b16 %v4982, %v4981
        %v4995 = vpack.c.b16 %v4984, %v4983
        %v4996 = vpack.c.b16 %v4986, %v4985
        %v4997 = vpack.c.b16 %v4988, %v4987
        %v4998 = vpack.c.b16 %v4990, %v4989
        %5007 = vmatprep.subr.bf16.mxu0 0
        %5008 = vmatpush1.bf16.msra.mxu0 %v4998
        %5009 = vmatprep.subr.bf16.mxu0 0
        %5010 = vmatpush1.bf16.msra.mxu0 %v4997
        %5011 = vmatprep.subr.bf16.mxu0 0
        %5012 = vmatpush1.bf16.msra.mxu0 %v4996
        %5013 = vmatprep.subr.bf16.mxu0 0
        %5014 = vmatpush1.bf16.msra.mxu0 %v4995
        %5015 = vmatprep.subr.bf16.mxu0 0
        %5016 = vmatpush1.bf16.msra.mxu0 %v4994
        %5017 = vmatprep.subr.bf16.mxu0 0
        %5018 = vmatpush1.bf16.msra.mxu0 %v4993
        %5019 = vmatprep.subr.bf16.mxu0 0
        %5020 = vmatpush1.bf16.msra.mxu0 %v4992
        %5021 = vmatprep.subr.bf16.mxu0 0
        %5022 = vmatpush1.bf16.msra.mxu0 %v4991
        %5023 = vmatprep.subr.bf16.mxu0 0
        %5024 = vmatpush2.bf16.msra.mxu0 0
        %5025 = vmatprep.subr.bf16.mxu0 0
        %5026 = vmatpush2.bf16.msra.mxu0 0
        %5027 = vmatprep.subr.bf16.mxu0 0
        %5028 = vmatpush2.bf16.msra.mxu0 0
        %5029 = vmatprep.subr.bf16.mxu0 0
        %5030 = vmatpush2.bf16.msra.mxu0 0
        %5031 = vmatprep.subr.bf16.mxu0 0
        %5032 = vmatpush2.bf16.msra.mxu0 0
        %5033 = vmatprep.subr.bf16.mxu0 0
        %5034 = vmatpush2.bf16.msra.mxu0 0
        %5035 = vmatprep.subr.bf16.mxu0 0
        %5036 = vmatpush2.bf16.msra.mxu0 0
        %5037 = vmatprep.subr.bf16.mxu0 0
        %5038 = vmatpush2.bf16.msra.mxu0 0
        %5039 = vmatprep.mubr.bf16.mxu0 0
        %5040 = vmatmul.mubr.bf16.gmra.mxu0 %v3604
        %v5041 = vpop.f32.mrf.mxu0
        %v5042 = vadd.f32 0.0, %v5041
        %v5043 = vpop.f32.mrf.mxu0
        %v5044 = vpop.f32.mrf.mxu0
        %v5045 = vadd.f32 0.0, %v5044
        %v5046 = vpop.f32.mrf.mxu0
        %5047 = vmatprep.mubr.bf16.mxu0 0
        %5048 = vmatmul.mubr.bf16.gmra.mxu0 %v3605
        %v5049 = vpop.f32.mrf.mxu0
        %v5050 = vadd.f32 0.0, %v5049
        %v5051 = vpop.f32.mrf.mxu0
        %v5052 = vpop.f32.mrf.mxu0
        %v5053 = vadd.f32 0.0, %v5052
        %v5054 = vpop.f32.mrf.mxu0
        %5055 = vmatprep.mubr.bf16.mxu0 0
        %5056 = vmatmul.mubr.bf16.gmra.mxu0 %v3606
        %v5057 = vpop.f32.mrf.mxu0
        %v5058 = vadd.f32 0.0, %v5057
        %v5059 = vpop.f32.mrf.mxu0
        %v5060 = vpop.f32.mrf.mxu0
        %v5061 = vadd.f32 0.0, %v5060
        %v5062 = vpop.f32.mrf.mxu0
        %5063 = vmatprep.mubr.bf16.mxu0 0
        %5064 = vmatmul.mubr.bf16.gmra.mxu0 %v3607
        %v5065 = vpop.f32.mrf.mxu0
        %v5066 = vadd.f32 0.0, %v5065
        %v5067 = vpop.f32.mrf.mxu0
        %v5068 = vpop.f32.mrf.mxu0
        %v5069 = vadd.f32 0.0, %v5068
        %v5070 = vpop.f32.mrf.mxu0
        %5071 = vdwg.mxu0
        %v5072 = vpack.c.bf16 %v5045, %v5042
        %v5073 = vpack.c.bf16 %v5053, %v5050
        %v5074 = vpack.c.bf16 %v5061, %v5058
        %v5075 = vpack.c.bf16 %v5069, %v5066
        %v5076 = vld [vmem:[#allocation11 + $0x8] sm:$0xf]
        %v5077 = vld [vmem:[#allocation11 + $0x28] sm:$0xf]
        %v5078 = vld [vmem:[#allocation11 + $0x48] sm:$0xf]
        %v5079 = vld [vmem:[#allocation11 + $0x68] sm:$0xf]
        %v5080 = vld [vmem:[#allocation11 + $0x88] sm:$0xf]
        %v5081 = vld [vmem:[#allocation11 + $0xa8] sm:$0xf]
        %v5082 = vld [vmem:[#allocation11 + $0xc8] sm:$0xf]
        %v5083 = vld [vmem:[#allocation11 + $0xe8] sm:$0xf]
        %v5084 = vld [vmem:[#allocation11 + $0x108] sm:$0xf]
        %v5085 = vld [vmem:[#allocation11 + $0x128] sm:$0xf]
        %v5086 = vld [vmem:[#allocation11 + $0x148] sm:$0xf]
        %v5087 = vld [vmem:[#allocation11 + $0x168] sm:$0xf]
        %v5088 = vld [vmem:[#allocation11 + $0x188] sm:$0xf]
        %v5089 = vld [vmem:[#allocation11 + $0x1a8] sm:$0xf]
        %v5090 = vld [vmem:[#allocation11 + $0x1c8] sm:$0xf]
        %v5091 = vld [vmem:[#allocation11 + $0x1e8] sm:$0xf]
        %v5108 = vunpack.c.l.b16 %v5076
        %v5109 = vunpack.c.l.b16 %v5077
        %v5110 = vunpack.c.l.b16 %v5078
        %v5111 = vunpack.c.l.b16 %v5079
        %v5112 = vunpack.c.l.b16 %v5080
        %v5113 = vunpack.c.l.b16 %v5081
        %v5114 = vunpack.c.l.b16 %v5082
        %v5115 = vunpack.c.l.b16 %v5083
        %v5116 = vunpack.c.l.b16 %v5084
        %v5117 = vunpack.c.l.b16 %v5085
        %v5118 = vunpack.c.l.b16 %v5086
        %v5119 = vunpack.c.l.b16 %v5087
        %v5120 = vunpack.c.l.b16 %v5088
        %v5121 = vunpack.c.l.b16 %v5089
        %v5122 = vunpack.c.l.b16 %v5090
        %v5123 = vunpack.c.l.b16 %v5091
        %v5124 = vpack.c.b16 %v5109, %v5108
        %v5125 = vpack.c.b16 %v5111, %v5110
        %v5126 = vpack.c.b16 %v5113, %v5112
        %v5127 = vpack.c.b16 %v5115, %v5114
        %v5128 = vpack.c.b16 %v5117, %v5116
        %v5129 = vpack.c.b16 %v5119, %v5118
        %v5130 = vpack.c.b16 %v5121, %v5120
        %v5131 = vpack.c.b16 %v5123, %v5122
        %5140 = vmatprep.subr.bf16.mxu0 0
        %5141 = vmatpush1.bf16.msra.mxu0 %v5131
        %5142 = vmatprep.subr.bf16.mxu0 0
        %5143 = vmatpush1.bf16.msra.mxu0 %v5130
        %5144 = vmatprep.subr.bf16.mxu0 0
        %5145 = vmatpush1.bf16.msra.mxu0 %v5129
        %5146 = vmatprep.subr.bf16.mxu0 0
        %5147 = vmatpush1.bf16.msra.mxu0 %v5128
        %5148 = vmatprep.subr.bf16.mxu0 0
        %5149 = vmatpush1.bf16.msra.mxu0 %v5127
        %5150 = vmatprep.subr.bf16.mxu0 0
        %5151 = vmatpush1.bf16.msra.mxu0 %v5126
        %5152 = vmatprep.subr.bf16.mxu0 0
        %5153 = vmatpush1.bf16.msra.mxu0 %v5125
        %5154 = vmatprep.subr.bf16.mxu0 0
        %5155 = vmatpush1.bf16.msra.mxu0 %v5124
        %5156 = vmatprep.subr.bf16.mxu0 0
        %5157 = vmatpush2.bf16.msra.mxu0 0
        %5158 = vmatprep.subr.bf16.mxu0 0
        %5159 = vmatpush2.bf16.msra.mxu0 0
        %5160 = vmatprep.subr.bf16.mxu0 0
        %5161 = vmatpush2.bf16.msra.mxu0 0
        %5162 = vmatprep.subr.bf16.mxu0 0
        %5163 = vmatpush2.bf16.msra.mxu0 0
        %5164 = vmatprep.subr.bf16.mxu0 0
        %5165 = vmatpush2.bf16.msra.mxu0 0
        %5166 = vmatprep.subr.bf16.mxu0 0
        %5167 = vmatpush2.bf16.msra.mxu0 0
        %5168 = vmatprep.subr.bf16.mxu0 0
        %5169 = vmatpush2.bf16.msra.mxu0 0
        %5170 = vmatprep.subr.bf16.mxu0 0
        %5171 = vmatpush2.bf16.msra.mxu0 0
        %5172 = vmatprep.mubr.bf16.mxu0 0
        %5173 = vmatmul.mubr.bf16.gmra.mxu0 %v3604
        %v5174 = vpop.f32.mrf.mxu0
        %v5175 = vadd.f32 0.0, %v5174
        %v5176 = vpop.f32.mrf.mxu0
        %v5177 = vpop.f32.mrf.mxu0
        %v5178 = vadd.f32 0.0, %v5177
        %v5179 = vpop.f32.mrf.mxu0
        %5180 = vmatprep.mubr.bf16.mxu0 0
        %5181 = vmatmul.mubr.bf16.gmra.mxu0 %v3605
        %v5182 = vpop.f32.mrf.mxu0
        %v5183 = vadd.f32 0.0, %v5182
        %v5184 = vpop.f32.mrf.mxu0
        %v5185 = vpop.f32.mrf.mxu0
        %v5186 = vadd.f32 0.0, %v5185
        %v5187 = vpop.f32.mrf.mxu0
        %5188 = vmatprep.mubr.bf16.mxu0 0
        %5189 = vmatmul.mubr.bf16.gmra.mxu0 %v3606
        %v5190 = vpop.f32.mrf.mxu0
        %v5191 = vadd.f32 0.0, %v5190
        %v5192 = vpop.f32.mrf.mxu0
        %v5193 = vpop.f32.mrf.mxu0
        %v5194 = vadd.f32 0.0, %v5193
        %v5195 = vpop.f32.mrf.mxu0
        %5196 = vmatprep.mubr.bf16.mxu0 0
        %5197 = vmatmul.mubr.bf16.gmra.mxu0 %v3607
        %v5198 = vpop.f32.mrf.mxu0
        %v5199 = vadd.f32 0.0, %v5198
        %v5200 = vpop.f32.mrf.mxu0
        %v5201 = vpop.f32.mrf.mxu0
        %v5202 = vadd.f32 0.0, %v5201
        %v5203 = vpop.f32.mrf.mxu0
        %5204 = vdwg.mxu0
        %v5205 = vpack.c.bf16 %v5178, %v5175
        %v5206 = vpack.c.bf16 %v5186, %v5183
        %v5207 = vpack.c.bf16 %v5194, %v5191
        %v5208 = vpack.c.bf16 %v5202, %v5199
        %v5209 = vld [vmem:[#allocation11 + $0xc] sm:$0xf]
        %v5210 = vld [vmem:[#allocation11 + $0x2c] sm:$0xf]
        %v5211 = vld [vmem:[#allocation11 + $0x4c] sm:$0xf]
        %v5212 = vld [vmem:[#allocation11 + $0x6c] sm:$0xf]
        %v5213 = vld [vmem:[#allocation11 + $0x8c] sm:$0xf]
        %v5214 = vld [vmem:[#allocation11 + $0xac] sm:$0xf]
        %v5215 = vld [vmem:[#allocation11 + $0xcc] sm:$0xf]
        %v5216 = vld [vmem:[#allocation11 + $0xec] sm:$0xf]
        %v5217 = vld [vmem:[#allocation11 + $0x10c] sm:$0xf]
        %v5218 = vld [vmem:[#allocation11 + $0x12c] sm:$0xf]
        %v5219 = vld [vmem:[#allocation11 + $0x14c] sm:$0xf]
        %v5220 = vld [vmem:[#allocation11 + $0x16c] sm:$0xf]
        %v5221 = vld [vmem:[#allocation11 + $0x18c] sm:$0xf]
        %v5222 = vld [vmem:[#allocation11 + $0x1ac] sm:$0xf]
        %v5223 = vld [vmem:[#allocation11 + $0x1cc] sm:$0xf]
        %v5224 = vld [vmem:[#allocation11 + $0x1ec] sm:$0xf]
        %v5241 = vunpack.c.l.b16 %v5209
        %v5242 = vunpack.c.l.b16 %v5210
        %v5243 = vunpack.c.l.b16 %v5211
        %v5244 = vunpack.c.l.b16 %v5212
        %v5245 = vunpack.c.l.b16 %v5213
        %v5246 = vunpack.c.l.b16 %v5214
        %v5247 = vunpack.c.l.b16 %v5215
        %v5248 = vunpack.c.l.b16 %v5216
        %v5249 = vunpack.c.l.b16 %v5217
        %v5250 = vunpack.c.l.b16 %v5218
        %v5251 = vunpack.c.l.b16 %v5219
        %v5252 = vunpack.c.l.b16 %v5220
        %v5253 = vunpack.c.l.b16 %v5221
        %v5254 = vunpack.c.l.b16 %v5222
        %v5255 = vunpack.c.l.b16 %v5223
        %v5256 = vunpack.c.l.b16 %v5224
        %v5257 = vpack.c.b16 %v5242, %v5241
        %v5258 = vpack.c.b16 %v5244, %v5243
        %v5259 = vpack.c.b16 %v5246, %v5245
        %v5260 = vpack.c.b16 %v5248, %v5247
        %v5261 = vpack.c.b16 %v5250, %v5249
        %v5262 = vpack.c.b16 %v5252, %v5251
        %v5263 = vpack.c.b16 %v5254, %v5253
        %v5264 = vpack.c.b16 %v5256, %v5255
        %5273 = vmatprep.subr.bf16.mxu0 0
        %5274 = vmatpush1.bf16.msra.mxu0 %v5264
        %5275 = vmatprep.subr.bf16.mxu0 0
        %5276 = vmatpush1.bf16.msra.mxu0 %v5263
        %5277 = vmatprep.subr.bf16.mxu0 0
        %5278 = vmatpush1.bf16.msra.mxu0 %v5262
        %5279 = vmatprep.subr.bf16.mxu0 0
        %5280 = vmatpush1.bf16.msra.mxu0 %v5261
        %5281 = vmatprep.subr.bf16.mxu0 0
        %5282 = vmatpush1.bf16.msra.mxu0 %v5260
        %5283 = vmatprep.subr.bf16.mxu0 0
        %5284 = vmatpush1.bf16.msra.mxu0 %v5259
        %5285 = vmatprep.subr.bf16.mxu0 0
        %5286 = vmatpush1.bf16.msra.mxu0 %v5258
        %5287 = vmatprep.subr.bf16.mxu0 0
        %5288 = vmatpush1.bf16.msra.mxu0 %v5257
        %5289 = vmatprep.subr.bf16.mxu0 0
        %5290 = vmatpush2.bf16.msra.mxu0 0
        %5291 = vmatprep.subr.bf16.mxu0 0
        %5292 = vmatpush2.bf16.msra.mxu0 0
        %5293 = vmatprep.subr.bf16.mxu0 0
        %5294 = vmatpush2.bf16.msra.mxu0 0
        %5295 = vmatprep.subr.bf16.mxu0 0
        %5296 = vmatpush2.bf16.msra.mxu0 0
        %5297 = vmatprep.subr.bf16.mxu0 0
        %5298 = vmatpush2.bf16.msra.mxu0 0
        %5299 = vmatprep.subr.bf16.mxu0 0
        %5300 = vmatpush2.bf16.msra.mxu0 0
        %5301 = vmatprep.subr.bf16.mxu0 0
        %5302 = vmatpush2.bf16.msra.mxu0 0
        %5303 = vmatprep.subr.bf16.mxu0 0
        %5304 = vmatpush2.bf16.msra.mxu0 0
        %5305 = vmatprep.mubr.bf16.mxu0 0
        %5306 = vmatmul.mubr.bf16.gmra.mxu0 %v3604
        %v5307 = vpop.f32.mrf.mxu0
        %v5308 = vadd.f32 0.0, %v5307
        %v5309 = vpop.f32.mrf.mxu0
        %v5310 = vpop.f32.mrf.mxu0
        %v5311 = vadd.f32 0.0, %v5310
        %v5312 = vpop.f32.mrf.mxu0
        %5313 = vmatprep.mubr.bf16.mxu0 0
        %5314 = vmatmul.mubr.bf16.gmra.mxu0 %v3605
        %v5315 = vpop.f32.mrf.mxu0
        %v5316 = vadd.f32 0.0, %v5315
        %v5317 = vpop.f32.mrf.mxu0
        %v5318 = vpop.f32.mrf.mxu0
        %v5319 = vadd.f32 0.0, %v5318
        %v5320 = vpop.f32.mrf.mxu0
        %5321 = vmatprep.mubr.bf16.mxu0 0
        %5322 = vmatmul.mubr.bf16.gmra.mxu0 %v3606
        %v5323 = vpop.f32.mrf.mxu0
        %v5324 = vadd.f32 0.0, %v5323
        %v5325 = vpop.f32.mrf.mxu0
        %v5326 = vpop.f32.mrf.mxu0
        %v5327 = vadd.f32 0.0, %v5326
        %v5328 = vpop.f32.mrf.mxu0
        %5329 = vmatprep.mubr.bf16.mxu0 0
        %5330 = vmatmul.mubr.bf16.gmra.mxu0 %v3607
        %v5331 = vpop.f32.mrf.mxu0
        %v5332 = vadd.f32 0.0, %v5331
        %v5333 = vpop.f32.mrf.mxu0
        %v5334 = vpop.f32.mrf.mxu0
        %v5335 = vadd.f32 0.0, %v5334
        %v5336 = vpop.f32.mrf.mxu0
        %5337 = vdwg.mxu0
        %v5338 = vpack.c.bf16 %v5311, %v5308
        %v5339 = vpack.c.bf16 %v5319, %v5316
        %v5340 = vpack.c.bf16 %v5327, %v5324
        %v5341 = vpack.c.bf16 %v5335, %v5332
        %v5342 = vld [vmem:[#allocation11 + $0x10] sm:$0xf]
        %v5343 = vld [vmem:[#allocation11 + $0x30] sm:$0xf]
        %v5344 = vld [vmem:[#allocation11 + $0x50] sm:$0xf]
        %v5345 = vld [vmem:[#allocation11 + $0x70] sm:$0xf]
        %v5346 = vld [vmem:[#allocation11 + $0x90] sm:$0xf]
        %v5347 = vld [vmem:[#allocation11 + $0xb0] sm:$0xf]
        %v5348 = vld [vmem:[#allocation11 + $0xd0] sm:$0xf]
        %v5349 = vld [vmem:[#allocation11 + $0xf0] sm:$0xf]
        %v5350 = vld [vmem:[#allocation11 + $0x110] sm:$0xf]
        %v5351 = vld [vmem:[#allocation11 + $0x130] sm:$0xf]
        %v5352 = vld [vmem:[#allocation11 + $0x150] sm:$0xf]
        %v5353 = vld [vmem:[#allocation11 + $0x170] sm:$0xf]
        %v5354 = vld [vmem:[#allocation11 + $0x190] sm:$0xf]
        %v5355 = vld [vmem:[#allocation11 + $0x1b0] sm:$0xf]
        %v5356 = vld [vmem:[#allocation11 + $0x1d0] sm:$0xf]
        %v5357 = vld [vmem:[#allocation11 + $0x1f0] sm:$0xf]
        %v5374 = vunpack.c.l.b16 %v5342
        %v5375 = vunpack.c.l.b16 %v5343
        %v5376 = vunpack.c.l.b16 %v5344
        %v5377 = vunpack.c.l.b16 %v5345
        %v5378 = vunpack.c.l.b16 %v5346
        %v5379 = vunpack.c.l.b16 %v5347
        %v5380 = vunpack.c.l.b16 %v5348
        %v5381 = vunpack.c.l.b16 %v5349
        %v5382 = vunpack.c.l.b16 %v5350
        %v5383 = vunpack.c.l.b16 %v5351
        %v5384 = vunpack.c.l.b16 %v5352
        %v5385 = vunpack.c.l.b16 %v5353
        %v5386 = vunpack.c.l.b16 %v5354
        %v5387 = vunpack.c.l.b16 %v5355
        %v5388 = vunpack.c.l.b16 %v5356
        %v5389 = vunpack.c.l.b16 %v5357
        %v5390 = vpack.c.b16 %v5375, %v5374
        %v5391 = vpack.c.b16 %v5377, %v5376
        %v5392 = vpack.c.b16 %v5379, %v5378
        %v5393 = vpack.c.b16 %v5381, %v5380
        %v5394 = vpack.c.b16 %v5383, %v5382
        %v5395 = vpack.c.b16 %v5385, %v5384
        %v5396 = vpack.c.b16 %v5387, %v5386
        %v5397 = vpack.c.b16 %v5389, %v5388
        %5406 = vmatprep.subr.bf16.mxu0 0
        %5407 = vmatpush1.bf16.msra.mxu0 %v5397
        %5408 = vmatprep.subr.bf16.mxu0 0
        %5409 = vmatpush1.bf16.msra.mxu0 %v5396
        %5410 = vmatprep.subr.bf16.mxu0 0
        %5411 = vmatpush1.bf16.msra.mxu0 %v5395
        %5412 = vmatprep.subr.bf16.mxu0 0
        %5413 = vmatpush1.bf16.msra.mxu0 %v5394
        %5414 = vmatprep.subr.bf16.mxu0 0
        %5415 = vmatpush1.bf16.msra.mxu0 %v5393
        %5416 = vmatprep.subr.bf16.mxu0 0
        %5417 = vmatpush1.bf16.msra.mxu0 %v5392
        %5418 = vmatprep.subr.bf16.mxu0 0
        %5419 = vmatpush1.bf16.msra.mxu0 %v5391
        %5420 = vmatprep.subr.bf16.mxu0 0
        %5421 = vmatpush1.bf16.msra.mxu0 %v5390
        %5422 = vmatprep.subr.bf16.mxu0 0
        %5423 = vmatpush2.bf16.msra.mxu0 0
        %5424 = vmatprep.subr.bf16.mxu0 0
        %5425 = vmatpush2.bf16.msra.mxu0 0
        %5426 = vmatprep.subr.bf16.mxu0 0
        %5427 = vmatpush2.bf16.msra.mxu0 0
        %5428 = vmatprep.subr.bf16.mxu0 0
        %5429 = vmatpush2.bf16.msra.mxu0 0
        %5430 = vmatprep.subr.bf16.mxu0 0
        %5431 = vmatpush2.bf16.msra.mxu0 0
        %5432 = vmatprep.subr.bf16.mxu0 0
        %5433 = vmatpush2.bf16.msra.mxu0 0
        %5434 = vmatprep.subr.bf16.mxu0 0
        %5435 = vmatpush2.bf16.msra.mxu0 0
        %5436 = vmatprep.subr.bf16.mxu0 0
        %5437 = vmatpush2.bf16.msra.mxu0 0
        %5438 = vmatprep.mubr.bf16.mxu0 0
        %5439 = vmatmul.mubr.bf16.gmra.mxu0 %v3604
        %v5440 = vpop.f32.mrf.mxu0
        %v5441 = vadd.f32 0.0, %v5440
        %v5442 = vpop.f32.mrf.mxu0
        %v5443 = vpop.f32.mrf.mxu0
        %v5444 = vadd.f32 0.0, %v5443
        %v5445 = vpop.f32.mrf.mxu0
        %5446 = vmatprep.mubr.bf16.mxu0 0
        %5447 = vmatmul.mubr.bf16.gmra.mxu0 %v3605
        %v5448 = vpop.f32.mrf.mxu0
        %v5449 = vadd.f32 0.0, %v5448
        %v5450 = vpop.f32.mrf.mxu0
        %v5451 = vpop.f32.mrf.mxu0
        %v5452 = vadd.f32 0.0, %v5451
        %v5453 = vpop.f32.mrf.mxu0
        %5454 = vmatprep.mubr.bf16.mxu0 0
        %5455 = vmatmul.mubr.bf16.gmra.mxu0 %v3606
        %v5456 = vpop.f32.mrf.mxu0
        %v5457 = vadd.f32 0.0, %v5456
        %v5458 = vpop.f32.mrf.mxu0
        %v5459 = vpop.f32.mrf.mxu0
        %v5460 = vadd.f32 0.0, %v5459
        %v5461 = vpop.f32.mrf.mxu0
        %5462 = vmatprep.mubr.bf16.mxu0 0
        %5463 = vmatmul.mubr.bf16.gmra.mxu0 %v3607
        %v5464 = vpop.f32.mrf.mxu0
        %v5465 = vadd.f32 0.0, %v5464
        %v5466 = vpop.f32.mrf.mxu0
        %v5467 = vpop.f32.mrf.mxu0
        %v5468 = vadd.f32 0.0, %v5467
        %v5469 = vpop.f32.mrf.mxu0
        %5470 = vdwg.mxu0
        %v5471 = vpack.c.bf16 %v5444, %v5441
        %v5472 = vpack.c.bf16 %v5452, %v5449
        %v5473 = vpack.c.bf16 %v5460, %v5457
        %v5474 = vpack.c.bf16 %v5468, %v5465
        %v5475 = vld [vmem:[#allocation11 + $0x14] sm:$0xf]
        %v5476 = vld [vmem:[#allocation11 + $0x34] sm:$0xf]
        %v5477 = vld [vmem:[#allocation11 + $0x54] sm:$0xf]
        %v5478 = vld [vmem:[#allocation11 + $0x74] sm:$0xf]
        %v5479 = vld [vmem:[#allocation11 + $0x94] sm:$0xf]
        %v5480 = vld [vmem:[#allocation11 + $0xb4] sm:$0xf]
        %v5481 = vld [vmem:[#allocation11 + $0xd4] sm:$0xf]
        %v5482 = vld [vmem:[#allocation11 + $0xf4] sm:$0xf]
        %v5483 = vld [vmem:[#allocation11 + $0x114] sm:$0xf]
        %v5484 = vld [vmem:[#allocation11 + $0x134] sm:$0xf]
        %v5485 = vld [vmem:[#allocation11 + $0x154] sm:$0xf]
        %v5486 = vld [vmem:[#allocation11 + $0x174] sm:$0xf]
        %v5487 = vld [vmem:[#allocation11 + $0x194] sm:$0xf]
        %v5488 = vld [vmem:[#allocation11 + $0x1b4] sm:$0xf]
        %v5489 = vld [vmem:[#allocation11 + $0x1d4] sm:$0xf]
        %v5490 = vld [vmem:[#allocation11 + $0x1f4] sm:$0xf]
        %v5507 = vunpack.c.l.b16 %v5475
        %v5508 = vunpack.c.l.b16 %v5476
        %v5509 = vunpack.c.l.b16 %v5477
        %v5510 = vunpack.c.l.b16 %v5478
        %v5511 = vunpack.c.l.b16 %v5479
        %v5512 = vunpack.c.l.b16 %v5480
        %v5513 = vunpack.c.l.b16 %v5481
        %v5514 = vunpack.c.l.b16 %v5482
        %v5515 = vunpack.c.l.b16 %v5483
        %v5516 = vunpack.c.l.b16 %v5484
        %v5517 = vunpack.c.l.b16 %v5485
        %v5518 = vunpack.c.l.b16 %v5486
        %v5519 = vunpack.c.l.b16 %v5487
        %v5520 = vunpack.c.l.b16 %v5488
        %v5521 = vunpack.c.l.b16 %v5489
        %v5522 = vunpack.c.l.b16 %v5490
        %v5523 = vpack.c.b16 %v5508, %v5507
        %v5524 = vpack.c.b16 %v5510, %v5509
        %v5525 = vpack.c.b16 %v5512, %v5511
        %v5526 = vpack.c.b16 %v5514, %v5513
        %v5527 = vpack.c.b16 %v5516, %v5515
        %v5528 = vpack.c.b16 %v5518, %v5517
        %v5529 = vpack.c.b16 %v5520, %v5519
        %v5530 = vpack.c.b16 %v5522, %v5521
        %5539 = vmatprep.subr.bf16.mxu0 0
        %5540 = vmatpush1.bf16.msra.mxu0 %v5530
        %5541 = vmatprep.subr.bf16.mxu0 0
        %5542 = vmatpush1.bf16.msra.mxu0 %v5529
        %5543 = vmatprep.subr.bf16.mxu0 0
        %5544 = vmatpush1.bf16.msra.mxu0 %v5528
        %5545 = vmatprep.subr.bf16.mxu0 0
        %5546 = vmatpush1.bf16.msra.mxu0 %v5527
        %5547 = vmatprep.subr.bf16.mxu0 0
        %5548 = vmatpush1.bf16.msra.mxu0 %v5526
        %5549 = vmatprep.subr.bf16.mxu0 0
        %5550 = vmatpush1.bf16.msra.mxu0 %v5525
        %5551 = vmatprep.subr.bf16.mxu0 0
        %5552 = vmatpush1.bf16.msra.mxu0 %v5524
        %5553 = vmatprep.subr.bf16.mxu0 0
        %5554 = vmatpush1.bf16.msra.mxu0 %v5523
        %5555 = vmatprep.subr.bf16.mxu0 0
        %5556 = vmatpush2.bf16.msra.mxu0 0
        %5557 = vmatprep.subr.bf16.mxu0 0
        %5558 = vmatpush2.bf16.msra.mxu0 0
        %5559 = vmatprep.subr.bf16.mxu0 0
        %5560 = vmatpush2.bf16.msra.mxu0 0
        %5561 = vmatprep.subr.bf16.mxu0 0
        %5562 = vmatpush2.bf16.msra.mxu0 0
        %5563 = vmatprep.subr.bf16.mxu0 0
        %5564 = vmatpush2.bf16.msra.mxu0 0
        %5565 = vmatprep.subr.bf16.mxu0 0
        %5566 = vmatpush2.bf16.msra.mxu0 0
        %5567 = vmatprep.subr.bf16.mxu0 0
        %5568 = vmatpush2.bf16.msra.mxu0 0
        %5569 = vmatprep.subr.bf16.mxu0 0
        %5570 = vmatpush2.bf16.msra.mxu0 0
        %5571 = vmatprep.mubr.bf16.mxu0 0
        %5572 = vmatmul.mubr.bf16.gmra.mxu0 %v3604
        %v5573 = vpop.f32.mrf.mxu0
        %v5574 = vadd.f32 0.0, %v5573
        %v5575 = vpop.f32.mrf.mxu0
        %v5576 = vpop.f32.mrf.mxu0
        %v5577 = vadd.f32 0.0, %v5576
        %v5578 = vpop.f32.mrf.mxu0
        %5579 = vmatprep.mubr.bf16.mxu0 0
        %5580 = vmatmul.mubr.bf16.gmra.mxu0 %v3605
        %v5581 = vpop.f32.mrf.mxu0
        %v5582 = vadd.f32 0.0, %v5581
        %v5583 = vpop.f32.mrf.mxu0
        %v5584 = vpop.f32.mrf.mxu0
        %v5585 = vadd.f32 0.0, %v5584
        %v5586 = vpop.f32.mrf.mxu0
        %5587 = vmatprep.mubr.bf16.mxu0 0
        %5588 = vmatmul.mubr.bf16.gmra.mxu0 %v3606
        %v5589 = vpop.f32.mrf.mxu0
        %v5590 = vadd.f32 0.0, %v5589
        %v5591 = vpop.f32.mrf.mxu0
        %v5592 = vpop.f32.mrf.mxu0
        %v5593 = vadd.f32 0.0, %v5592
        %v5594 = vpop.f32.mrf.mxu0
        %5595 = vmatprep.mubr.bf16.mxu0 0
        %5596 = vmatmul.mubr.bf16.gmra.mxu0 %v3607
        %v5597 = vpop.f32.mrf.mxu0
        %v5598 = vadd.f32 0.0, %v5597
        %v5599 = vpop.f32.mrf.mxu0
        %v5600 = vpop.f32.mrf.mxu0
        %v5601 = vadd.f32 0.0, %v5600
        %v5602 = vpop.f32.mrf.mxu0
        %5603 = vdwg.mxu0
        %v5604 = vpack.c.bf16 %v5577, %v5574
        %v5605 = vpack.c.bf16 %v5585, %v5582
        %v5606 = vpack.c.bf16 %v5593, %v5590
        %v5607 = vpack.c.bf16 %v5601, %v5598
        %v5608 = vld [vmem:[#allocation11 + $0x18] sm:$0xf]
        %v5609 = vld [vmem:[#allocation11 + $0x38] sm:$0xf]
        %v5610 = vld [vmem:[#allocation11 + $0x58] sm:$0xf]
        %v5611 = vld [vmem:[#allocation11 + $0x78] sm:$0xf]
        %v5612 = vld [vmem:[#allocation11 + $0x98] sm:$0xf]
        %v5613 = vld [vmem:[#allocation11 + $0xb8] sm:$0xf]
        %v5614 = vld [vmem:[#allocation11 + $0xd8] sm:$0xf]
        %v5615 = vld [vmem:[#allocation11 + $0xf8] sm:$0xf]
        %v5616 = vld [vmem:[#allocation11 + $0x118] sm:$0xf]
        %v5617 = vld [vmem:[#allocation11 + $0x138] sm:$0xf]
        %v5618 = vld [vmem:[#allocation11 + $0x158] sm:$0xf]
        %v5619 = vld [vmem:[#allocation11 + $0x178] sm:$0xf]
        %v5620 = vld [vmem:[#allocation11 + $0x198] sm:$0xf]
        %v5621 = vld [vmem:[#allocation11 + $0x1b8] sm:$0xf]
        %v5622 = vld [vmem:[#allocation11 + $0x1d8] sm:$0xf]
        %v5623 = vld [vmem:[#allocation11 + $0x1f8] sm:$0xf]
        %v5640 = vunpack.c.l.b16 %v5608
        %v5641 = vunpack.c.l.b16 %v5609
        %v5642 = vunpack.c.l.b16 %v5610
        %v5643 = vunpack.c.l.b16 %v5611
        %v5644 = vunpack.c.l.b16 %v5612
        %v5645 = vunpack.c.l.b16 %v5613
        %v5646 = vunpack.c.l.b16 %v5614
        %v5647 = vunpack.c.l.b16 %v5615
        %v5648 = vunpack.c.l.b16 %v5616
        %v5649 = vunpack.c.l.b16 %v5617
        %v5650 = vunpack.c.l.b16 %v5618
        %v5651 = vunpack.c.l.b16 %v5619
        %v5652 = vunpack.c.l.b16 %v5620
        %v5653 = vunpack.c.l.b16 %v5621
        %v5654 = vunpack.c.l.b16 %v5622
        %v5655 = vunpack.c.l.b16 %v5623
        %v5656 = vpack.c.b16 %v5641, %v5640
        %v5657 = vpack.c.b16 %v5643, %v5642
        %v5658 = vpack.c.b16 %v5645, %v5644
        %v5659 = vpack.c.b16 %v5647, %v5646
        %v5660 = vpack.c.b16 %v5649, %v5648
        %v5661 = vpack.c.b16 %v5651, %v5650
        %v5662 = vpack.c.b16 %v5653, %v5652
        %v5663 = vpack.c.b16 %v5655, %v5654
        %5672 = vmatprep.subr.bf16.mxu0 0
        %5673 = vmatpush1.bf16.msra.mxu0 %v5663
        %5674 = vmatprep.subr.bf16.mxu0 0
        %5675 = vmatpush1.bf16.msra.mxu0 %v5662
        %5676 = vmatprep.subr.bf16.mxu0 0
        %5677 = vmatpush1.bf16.msra.mxu0 %v5661
        %5678 = vmatprep.subr.bf16.mxu0 0
        %5679 = vmatpush1.bf16.msra.mxu0 %v5660
        %5680 = vmatprep.subr.bf16.mxu0 0
        %5681 = vmatpush1.bf16.msra.mxu0 %v5659
        %5682 = vmatprep.subr.bf16.mxu0 0
        %5683 = vmatpush1.bf16.msra.mxu0 %v5658
        %5684 = vmatprep.subr.bf16.mxu0 0
        %5685 = vmatpush1.bf16.msra.mxu0 %v5657
        %5686 = vmatprep.subr.bf16.mxu0 0
        %5687 = vmatpush1.bf16.msra.mxu0 %v5656
        %5688 = vmatprep.subr.bf16.mxu0 0
        %5689 = vmatpush2.bf16.msra.mxu0 0
        %5690 = vmatprep.subr.bf16.mxu0 0
        %5691 = vmatpush2.bf16.msra.mxu0 0
        %5692 = vmatprep.subr.bf16.mxu0 0
        %5693 = vmatpush2.bf16.msra.mxu0 0
        %5694 = vmatprep.subr.bf16.mxu0 0
        %5695 = vmatpush2.bf16.msra.mxu0 0
        %5696 = vmatprep.subr.bf16.mxu0 0
        %5697 = vmatpush2.bf16.msra.mxu0 0
        %5698 = vmatprep.subr.bf16.mxu0 0
        %5699 = vmatpush2.bf16.msra.mxu0 0
        %5700 = vmatprep.subr.bf16.mxu0 0
        %5701 = vmatpush2.bf16.msra.mxu0 0
        %5702 = vmatprep.subr.bf16.mxu0 0
        %5703 = vmatpush2.bf16.msra.mxu0 0
        %5704 = vmatprep.mubr.bf16.mxu0 0
        %5705 = vmatmul.mubr.bf16.gmra.mxu0 %v3604
        %v5706 = vpop.f32.mrf.mxu0
        %v5707 = vadd.f32 0.0, %v5706
        %v5708 = vpop.f32.mrf.mxu0
        %v5709 = vpop.f32.mrf.mxu0
        %v5710 = vadd.f32 0.0, %v5709
        %v5711 = vpop.f32.mrf.mxu0
        %5712 = vmatprep.mubr.bf16.mxu0 0
        %5713 = vmatmul.mubr.bf16.gmra.mxu0 %v3605
        %v5714 = vpop.f32.mrf.mxu0
        %v5715 = vadd.f32 0.0, %v5714
        %v5716 = vpop.f32.mrf.mxu0
        %v5717 = vpop.f32.mrf.mxu0
        %v5718 = vadd.f32 0.0, %v5717
        %v5719 = vpop.f32.mrf.mxu0
        %5720 = vmatprep.mubr.bf16.mxu0 0
        %5721 = vmatmul.mubr.bf16.gmra.mxu0 %v3606
        %v5722 = vpop.f32.mrf.mxu0
        %v5723 = vadd.f32 0.0, %v5722
        %v5724 = vpop.f32.mrf.mxu0
        %v5725 = vpop.f32.mrf.mxu0
        %v5726 = vadd.f32 0.0, %v5725
        %v5727 = vpop.f32.mrf.mxu0
        %5728 = vmatprep.mubr.bf16.mxu0 0
        %5729 = vmatmul.mubr.bf16.gmra.mxu0 %v3607
        %v5730 = vpop.f32.mrf.mxu0
        %v5731 = vadd.f32 0.0, %v5730
        %v5732 = vpop.f32.mrf.mxu0
        %v5733 = vpop.f32.mrf.mxu0
        %v5734 = vadd.f32 0.0, %v5733
        %v5735 = vpop.f32.mrf.mxu0
        %5736 = vdwg.mxu0
        %v5737 = vpack.c.bf16 %v5710, %v5707
        %v5738 = vpack.c.bf16 %v5718, %v5715
        %v5739 = vpack.c.bf16 %v5726, %v5723
        %v5740 = vpack.c.bf16 %v5734, %v5731
        %v5741 = vld [vmem:[#allocation11 + $0x1c] sm:$0xf]
        %v5742 = vld [vmem:[#allocation11 + $0x3c] sm:$0xf]
        %v5743 = vld [vmem:[#allocation11 + $0x5c] sm:$0xf]
        %v5744 = vld [vmem:[#allocation11 + $0x7c] sm:$0xf]
        %v5745 = vld [vmem:[#allocation11 + $0x9c] sm:$0xf]
        %v5746 = vld [vmem:[#allocation11 + $0xbc] sm:$0xf]
        %v5747 = vld [vmem:[#allocation11 + $0xdc] sm:$0xf]
        %v5748 = vld [vmem:[#allocation11 + $0xfc] sm:$0xf]
        %v5749 = vld [vmem:[#allocation11 + $0x11c] sm:$0xf]
        %v5750 = vld [vmem:[#allocation11 + $0x13c] sm:$0xf]
        %v5751 = vld [vmem:[#allocation11 + $0x15c] sm:$0xf]
        %v5752 = vld [vmem:[#allocation11 + $0x17c] sm:$0xf]
        %v5753 = vld [vmem:[#allocation11 + $0x19c] sm:$0xf]
        %v5754 = vld [vmem:[#allocation11 + $0x1bc] sm:$0xf]
        %v5755 = vld [vmem:[#allocation11 + $0x1dc] sm:$0xf]
        %v5756 = vld [vmem:[#allocation11 + $0x1fc] sm:$0xf]
        %v5773 = vunpack.c.l.b16 %v5741
        %v5774 = vunpack.c.l.b16 %v5742
        %v5775 = vunpack.c.l.b16 %v5743
        %v5776 = vunpack.c.l.b16 %v5744
        %v5777 = vunpack.c.l.b16 %v5745
        %v5778 = vunpack.c.l.b16 %v5746
        %v5779 = vunpack.c.l.b16 %v5747
        %v5780 = vunpack.c.l.b16 %v5748
        %v5781 = vunpack.c.l.b16 %v5749
        %v5782 = vunpack.c.l.b16 %v5750
        %v5783 = vunpack.c.l.b16 %v5751
        %v5784 = vunpack.c.l.b16 %v5752
        %v5785 = vunpack.c.l.b16 %v5753
        %v5786 = vunpack.c.l.b16 %v5754
        %v5787 = vunpack.c.l.b16 %v5755
        %v5788 = vunpack.c.l.b16 %v5756
        %v5789 = vpack.c.b16 %v5774, %v5773
        %v5790 = vpack.c.b16 %v5776, %v5775
        %v5791 = vpack.c.b16 %v5778, %v5777
        %v5792 = vpack.c.b16 %v5780, %v5779
        %v5793 = vpack.c.b16 %v5782, %v5781
        %v5794 = vpack.c.b16 %v5784, %v5783
        %v5795 = vpack.c.b16 %v5786, %v5785
        %v5796 = vpack.c.b16 %v5788, %v5787
        %5805 = vmatprep.subr.bf16.mxu0 0
        %5806 = vmatpush1.bf16.msra.mxu0 %v5796
        %5807 = vmatprep.subr.bf16.mxu0 0
        %5808 = vmatpush1.bf16.msra.mxu0 %v5795
        %5809 = vmatprep.subr.bf16.mxu0 0
        %5810 = vmatpush1.bf16.msra.mxu0 %v5794
        %5811 = vmatprep.subr.bf16.mxu0 0
        %5812 = vmatpush1.bf16.msra.mxu0 %v5793
        %5813 = vmatprep.subr.bf16.mxu0 0
        %5814 = vmatpush1.bf16.msra.mxu0 %v5792
        %5815 = vmatprep.subr.bf16.mxu0 0
        %5816 = vmatpush1.bf16.msra.mxu0 %v5791
        %5817 = vmatprep.subr.bf16.mxu0 0
        %5818 = vmatpush1.bf16.msra.mxu0 %v5790
        %5819 = vmatprep.subr.bf16.mxu0 0
        %5820 = vmatpush1.bf16.msra.mxu0 %v5789
        %5821 = vmatprep.subr.bf16.mxu0 0
        %5822 = vmatpush2.bf16.msra.mxu0 0
        %5823 = vmatprep.subr.bf16.mxu0 0
        %5824 = vmatpush2.bf16.msra.mxu0 0
        %5825 = vmatprep.subr.bf16.mxu0 0
        %5826 = vmatpush2.bf16.msra.mxu0 0
        %5827 = vmatprep.subr.bf16.mxu0 0
        %5828 = vmatpush2.bf16.msra.mxu0 0
        %5829 = vmatprep.subr.bf16.mxu0 0
        %5830 = vmatpush2.bf16.msra.mxu0 0
        %5831 = vmatprep.subr.bf16.mxu0 0
        %5832 = vmatpush2.bf16.msra.mxu0 0
        %5833 = vmatprep.subr.bf16.mxu0 0
        %5834 = vmatpush2.bf16.msra.mxu0 0
        %5835 = vmatprep.subr.bf16.mxu0 0
        %5836 = vmatpush2.bf16.msra.mxu0 0
        %5837 = vmatprep.mubr.bf16.mxu0 0
        %5838 = vmatmul.mubr.bf16.gmra.mxu0 %v3604
        %v5839 = vpop.f32.mrf.mxu0
        %v5840 = vadd.f32 0.0, %v5839
        %v5841 = vpop.f32.mrf.mxu0
        %v5842 = vpop.f32.mrf.mxu0
        %v5843 = vadd.f32 0.0, %v5842
        %v5844 = vpop.f32.mrf.mxu0
        %5845 = vmatprep.mubr.bf16.mxu0 0
        %5846 = vmatmul.mubr.bf16.gmra.mxu0 %v3605
        %v5847 = vpop.f32.mrf.mxu0
        %v5848 = vadd.f32 0.0, %v5847
        %v5849 = vpop.f32.mrf.mxu0
        %v5850 = vpop.f32.mrf.mxu0
        %v5851 = vadd.f32 0.0, %v5850
        %v5852 = vpop.f32.mrf.mxu0
        %5853 = vmatprep.mubr.bf16.mxu0 0
        %5854 = vmatmul.mubr.bf16.gmra.mxu0 %v3606
        %v5855 = vpop.f32.mrf.mxu0
        %v5856 = vadd.f32 0.0, %v5855
        %v5857 = vpop.f32.mrf.mxu0
        %v5858 = vpop.f32.mrf.mxu0
        %v5859 = vadd.f32 0.0, %v5858
        %v5860 = vpop.f32.mrf.mxu0
        %5861 = vmatprep.mubr.bf16.mxu0 0
        %5862 = vmatmul.mubr.bf16.gmra.mxu0 %v3607
        %v5863 = vpop.f32.mrf.mxu0
        %v5864 = vadd.f32 0.0, %v5863
        %v5865 = vpop.f32.mrf.mxu0
        %v5866 = vpop.f32.mrf.mxu0
        %v5867 = vadd.f32 0.0, %v5866
        %v5868 = vpop.f32.mrf.mxu0
        %5869 = vdwg.mxu0
        %v5870 = vpack.c.bf16 %v5843, %v5840
        %v5871 = vpack.c.bf16 %v5851, %v5848
        %v5872 = vpack.c.bf16 %v5859, %v5856
        %v5873 = vpack.c.bf16 %v5867, %v5864
        %v5874 = vld [vmem:[%s12] sm:$0x1]
        %v5876 = vlaneseq
        %v5877 = vshrl.u32 %v5876, 7
        %v5878 = vsub.s32 0, %v5877
        %v5879 = vrot.slane %v5874, %v5878
        %5881 = vmatprep.subr.bf16.mxu0 0
        %5882 = vmatpush1.bf16.msra.mxu0 %v5075
        %5883 = vmatprep.subr.bf16.mxu0 0
        %5884 = vmatpush1.bf16.msra.mxu0 %v5074
        %5885 = vmatprep.subr.bf16.mxu0 0
        %5886 = vmatpush1.bf16.msra.mxu0 %v5073
        %5887 = vmatprep.subr.bf16.mxu0 0
        %5888 = vmatpush1.bf16.msra.mxu0 %v5072
        %5889 = vmatprep.subr.bf16.mxu0 0
        %5890 = vmatpush1.bf16.msra.mxu0 %v4942
        %5891 = vmatprep.subr.bf16.mxu0 0
        %5892 = vmatpush1.bf16.msra.mxu0 %v4941
        %5893 = vmatprep.subr.bf16.mxu0 0
        %5894 = vmatpush1.bf16.msra.mxu0 %v4940
        %5895 = vmatprep.subr.bf16.mxu0 0
        %5896 = vmatpush1.bf16.msra.mxu0 %v4939
        %5897 = vmatprep.subr.bf16.mxu0 0
        %5898 = vmatpush2.bf16.msra.mxu0 %v5341
        %5899 = vmatprep.subr.bf16.mxu0 0
        %5900 = vmatpush2.bf16.msra.mxu0 %v5340
        %5901 = vmatprep.subr.bf16.mxu0 0
        %5902 = vmatpush2.bf16.msra.mxu0 %v5339
        %5903 = vmatprep.subr.bf16.mxu0 0
        %5904 = vmatpush2.bf16.msra.mxu0 %v5338
        %5905 = vmatprep.subr.bf16.mxu0 0
        %5906 = vmatpush2.bf16.msra.mxu0 %v5208
        %5907 = vmatprep.subr.bf16.mxu0 0
        %5908 = vmatpush2.bf16.msra.mxu0 %v5207
        %5909 = vmatprep.subr.bf16.mxu0 0
        %5910 = vmatpush2.bf16.msra.mxu0 %v5206
        %5911 = vmatprep.subr.bf16.mxu0 0
        %5912 = vmatpush2.bf16.msra.mxu0 %v5205
        %5913 = vmatprep.mubr.bf16.mxu0 %v4795
        %5914 = vmatmul.mubr.bf16.gmra.mxu0 %v4794
        %v5915 = vpop.f32.mrf.mxu0
        %v5916 = vadd.f32 %v5879, %v5915
        %v5917 = vpop.f32.mrf.mxu0
        %v5918 = vpop.f32.mrf.mxu0
        %v5919 = vadd.f32 %v5879, %v5918
        %v5920 = vpop.f32.mrf.mxu0
        %5921 = vmatprep.mubr.bf16.mxu0 %v4799
        %5922 = vmatmul.mubr.bf16.gmra.mxu0 %v4798
        %v5923 = vpop.f32.mrf.mxu0
        %v5924 = vadd.f32 %v5879, %v5923
        %v5925 = vpop.f32.mrf.mxu0
        %v5926 = vpop.f32.mrf.mxu0
        %v5927 = vadd.f32 %v5879, %v5926
        %v5928 = vpop.f32.mrf.mxu0
        %5929 = vmatprep.mubr.bf16.mxu0 %v4803
        %5930 = vmatmul.mubr.bf16.gmra.mxu0 %v4802
        %v5931 = vpop.f32.mrf.mxu0
        %v5932 = vadd.f32 %v5879, %v5931
        %v5933 = vpop.f32.mrf.mxu0
        %v5934 = vpop.f32.mrf.mxu0
        %v5935 = vadd.f32 %v5879, %v5934
        %v5936 = vpop.f32.mrf.mxu0
        %5937 = vmatprep.mubr.bf16.mxu0 %v4807
        %5938 = vmatmul.mubr.bf16.gmra.mxu0 %v4806
        %v5939 = vpop.f32.mrf.mxu0
        %v5940 = vadd.f32 %v5879, %v5939
        %v5941 = vpop.f32.mrf.mxu0
        %v5942 = vpop.f32.mrf.mxu0
        %v5943 = vadd.f32 %v5879, %v5942
        %v5944 = vpop.f32.mrf.mxu0
        %5945 = vdwg.mxu0
        %5946 = vmatprep.subr.bf16.mxu0 0
        %5947 = vmatpush1.bf16.msra.mxu0 %v5607
        %5948 = vmatprep.subr.bf16.mxu0 0
        %5949 = vmatpush1.bf16.msra.mxu0 %v5606
        %5950 = vmatprep.subr.bf16.mxu0 0
        %5951 = vmatpush1.bf16.msra.mxu0 %v5605
        %5952 = vmatprep.subr.bf16.mxu0 0
        %5953 = vmatpush1.bf16.msra.mxu0 %v5604
        %5954 = vmatprep.subr.bf16.mxu0 0
        %5955 = vmatpush1.bf16.msra.mxu0 %v5474
        %5956 = vmatprep.subr.bf16.mxu0 0
        %5957 = vmatpush1.bf16.msra.mxu0 %v5473
        %5958 = vmatprep.subr.bf16.mxu0 0
        %5959 = vmatpush1.bf16.msra.mxu0 %v5472
        %5960 = vmatprep.subr.bf16.mxu0 0
        %5961 = vmatpush1.bf16.msra.mxu0 %v5471
        %5962 = vmatprep.subr.bf16.mxu0 0
        %5963 = vmatpush2.bf16.msra.mxu0 %v5873
        %5964 = vmatprep.subr.bf16.mxu0 0
        %5965 = vmatpush2.bf16.msra.mxu0 %v5872
        %5966 = vmatprep.subr.bf16.mxu0 0
        %5967 = vmatpush2.bf16.msra.mxu0 %v5871
        %5968 = vmatprep.subr.bf16.mxu0 0
        %5969 = vmatpush2.bf16.msra.mxu0 %v5870
        %5970 = vmatprep.subr.bf16.mxu0 0
        %5971 = vmatpush2.bf16.msra.mxu0 %v5740
        %5972 = vmatprep.subr.bf16.mxu0 0
        %5973 = vmatpush2.bf16.msra.mxu0 %v5739
        %5974 = vmatprep.subr.bf16.mxu0 0
        %5975 = vmatpush2.bf16.msra.mxu0 %v5738
        %5976 = vmatprep.subr.bf16.mxu0 0
        %5977 = vmatpush2.bf16.msra.mxu0 %v5737
        %5978 = vmatprep.mubr.bf16.mxu0 %v4797
        %5979 = vmatmul.mubr.bf16.gmra.mxu0 %v4796
        %v5980 = vpop.f32.mrf.mxu0
        %v5981 = vadd.f32 %v5916, %v5980
        %v5982 = vpop.f32.mrf.mxu0
        %v5983 = vpop.f32.mrf.mxu0
        %v5984 = vadd.f32 %v5919, %v5983
        %v5985 = vpop.f32.mrf.mxu0
        %5986 = vmatprep.mubr.bf16.mxu0 %v4801
        %5987 = vmatmul.mubr.bf16.gmra.mxu0 %v4800
        %v5988 = vpop.f32.mrf.mxu0
        %v5989 = vadd.f32 %v5924, %v5988
        %v5990 = vpop.f32.mrf.mxu0
        %v5991 = vpop.f32.mrf.mxu0
        %v5992 = vadd.f32 %v5927, %v5991
        %v5993 = vpop.f32.mrf.mxu0
        %5994 = vmatprep.mubr.bf16.mxu0 %v4805
        %5995 = vmatmul.mubr.bf16.gmra.mxu0 %v4804
        %v5996 = vpop.f32.mrf.mxu0
        %v5997 = vadd.f32 %v5932, %v5996
        %v5998 = vpop.f32.mrf.mxu0
        %v5999 = vpop.f32.mrf.mxu0
        %v6000 = vadd.f32 %v5935, %v5999
        %v6001 = vpop.f32.mrf.mxu0
        %6002 = vmatprep.mubr.bf16.mxu0 %v4809
        %6003 = vmatmul.mubr.bf16.gmra.mxu0 %v4808
        %v6004 = vpop.f32.mrf.mxu0
        %v6005 = vadd.f32 %v5940, %v6004
        %v6006 = vpop.f32.mrf.mxu0
        %v6007 = vpop.f32.mrf.mxu0
        %v6008 = vadd.f32 %v5943, %v6007
        %v6009 = vpop.f32.mrf.mxu0
        %6010 = vdwg.mxu0
        %v6011 = vmax.f32 %v5981, 0.0
        %v6012 = vmax.f32 %v5984, 0.0
        %v6013 = vmax.f32 %v5989, 0.0
        %v6014 = vmax.f32 %v5992, 0.0
        %v6015 = vmax.f32 %v5997, 0.0
        %v6016 = vmax.f32 %v6000, 0.0
        %v6017 = vmax.f32 %v6005, 0.0
        %v6018 = vmax.f32 %v6008, 0.0
        %v6019 = vpack.c.bf16 %v6012, %v6011
        %v6020 = vpack.c.bf16 %v6014, %v6013
        %v6021 = vpack.c.bf16 %v6016, %v6015
        %v6022 = vpack.c.bf16 %v6018, %v6017
        %v6023 = vld [vmem:[%s14] sm:$0xf]
        %v6024 = vld [vmem:[%s14 + $0x4] sm:$0xf]
        %v6025 = vld [vmem:[%s14 + $0x8] sm:$0xf]
        %v6026 = vld [vmem:[%s14 + $0xc] sm:$0xf]
        %v6027 = vld [vmem:[%s14 + $0x10] sm:$0xf]
        %v6028 = vld [vmem:[%s14 + $0x14] sm:$0xf]
        %v6029 = vld [vmem:[%s14 + $0x18] sm:$0xf]
        %v6030 = vld [vmem:[%s14 + $0x1c] sm:$0xf]
        %v6031 = vld [vmem:[%s14 + $0x20] sm:$0xf]
        %v6032 = vld [vmem:[%s14 + $0x24] sm:$0xf]
        %v6033 = vld [vmem:[%s14 + $0x28] sm:$0xf]
        %v6034 = vld [vmem:[%s14 + $0x2c] sm:$0xf]
        %v6035 = vld [vmem:[%s14 + $0x30] sm:$0xf]
        %v6036 = vld [vmem:[%s14 + $0x34] sm:$0xf]
        %v6037 = vld [vmem:[%s14 + $0x38] sm:$0xf]
        %v6038 = vld [vmem:[%s14 + $0x3c] sm:$0xf]
        %v6055 = vunpack.c.l.b16 %v6023
        %v6056 = vunpack.c.l.b16 %v6024
        %v6057 = vunpack.c.l.b16 %v6025
        %v6058 = vunpack.c.l.b16 %v6026
        %v6059 = vunpack.c.l.b16 %v6027
        %v6060 = vunpack.c.l.b16 %v6028
        %v6061 = vunpack.c.l.b16 %v6029
        %v6062 = vunpack.c.l.b16 %v6030
        %v6063 = vunpack.c.l.b16 %v6031
        %v6064 = vunpack.c.l.b16 %v6032
        %v6065 = vunpack.c.l.b16 %v6033
        %v6066 = vunpack.c.l.b16 %v6034
        %v6067 = vunpack.c.l.b16 %v6035
        %v6068 = vunpack.c.l.b16 %v6036
        %v6069 = vunpack.c.l.b16 %v6037
        %v6070 = vunpack.c.l.b16 %v6038
        %v6071 = vpack.c.b16 %v6056, %v6055
        %v6072 = vpack.c.b16 %v6058, %v6057
        %v6073 = vpack.c.b16 %v6060, %v6059
        %v6074 = vpack.c.b16 %v6062, %v6061
        %v6075 = vpack.c.b16 %v6064, %v6063
        %v6076 = vpack.c.b16 %v6066, %v6065
        %v6077 = vpack.c.b16 %v6068, %v6067
        %v6078 = vpack.c.b16 %v6070, %v6069
        %6087 = vmatprep.subr.bf16.mxu0 0
        %6088 = vmatpush1.bf16.msra.mxu0 %v6078
        %6089 = vmatprep.subr.bf16.mxu0 0
        %6090 = vmatpush1.bf16.msra.mxu0 %v6077
        %6091 = vmatprep.subr.bf16.mxu0 0
        %6092 = vmatpush1.bf16.msra.mxu0 %v6076
        %6093 = vmatprep.subr.bf16.mxu0 0
        %6094 = vmatpush1.bf16.msra.mxu0 %v6075
        %6095 = vmatprep.subr.bf16.mxu0 0
        %6096 = vmatpush1.bf16.msra.mxu0 %v6074
        %6097 = vmatprep.subr.bf16.mxu0 0
        %6098 = vmatpush1.bf16.msra.mxu0 %v6073
        %6099 = vmatprep.subr.bf16.mxu0 0
        %6100 = vmatpush1.bf16.msra.mxu0 %v6072
        %6101 = vmatprep.subr.bf16.mxu0 0
        %6102 = vmatpush1.bf16.msra.mxu0 %v6071
        %6103 = vmatprep.subr.bf16.mxu0 0
        %6104 = vmatpush2.bf16.msra.mxu0 0
        %6105 = vmatprep.subr.bf16.mxu0 0
        %6106 = vmatpush2.bf16.msra.mxu0 0
        %6107 = vmatprep.subr.bf16.mxu0 0
        %6108 = vmatpush2.bf16.msra.mxu0 0
        %6109 = vmatprep.subr.bf16.mxu0 0
        %6110 = vmatpush2.bf16.msra.mxu0 0
        %6111 = vmatprep.subr.bf16.mxu0 0
        %6112 = vmatpush2.bf16.msra.mxu0 0
        %6113 = vmatprep.subr.bf16.mxu0 0
        %6114 = vmatpush2.bf16.msra.mxu0 0
        %6115 = vmatprep.subr.bf16.mxu0 0
        %6116 = vmatpush2.bf16.msra.mxu0 0
        %6117 = vmatprep.subr.bf16.mxu0 0
        %6118 = vmatpush2.bf16.msra.mxu0 0
        %6119 = vmatprep.mubr.bf16.mxu0 0
        %6120 = vmatmul.mubr.bf16.gmra.mxu0 %v6019
        %v6121 = vpop.f32.mrf.mxu0
        %v6122 = vadd.f32 0.0, %v6121
        %v6123 = vpop.f32.mrf.mxu0
        %v6124 = vpop.f32.mrf.mxu0
        %v6125 = vadd.f32 0.0, %v6124
        %v6126 = vpop.f32.mrf.mxu0
        %6127 = vmatprep.mubr.bf16.mxu0 0
        %6128 = vmatmul.mubr.bf16.gmra.mxu0 %v6020
        %v6129 = vpop.f32.mrf.mxu0
        %v6130 = vadd.f32 0.0, %v6129
        %v6131 = vpop.f32.mrf.mxu0
        %v6132 = vpop.f32.mrf.mxu0
        %v6133 = vadd.f32 0.0, %v6132
        %v6134 = vpop.f32.mrf.mxu0
        %6135 = vmatprep.mubr.bf16.mxu0 0
        %6136 = vmatmul.mubr.bf16.gmra.mxu0 %v6021
        %v6137 = vpop.f32.mrf.mxu0
        %v6138 = vadd.f32 0.0, %v6137
        %v6139 = vpop.f32.mrf.mxu0
        %v6140 = vpop.f32.mrf.mxu0
        %v6141 = vadd.f32 0.0, %v6140
        %v6142 = vpop.f32.mrf.mxu0
        %6143 = vmatprep.mubr.bf16.mxu0 0
        %6144 = vmatmul.mubr.bf16.gmra.mxu0 %v6022
        %v6145 = vpop.f32.mrf.mxu0
        %v6146 = vadd.f32 0.0, %v6145
        %v6147 = vpop.f32.mrf.mxu0
        %v6148 = vpop.f32.mrf.mxu0
        %v6149 = vadd.f32 0.0, %v6148
        %v6150 = vpop.f32.mrf.mxu0
        %6151 = vdwg.mxu0
        %6160 = vrot.lane.b32.xlu0 %v6122, 127
        %v6161 = vpop.permute.xlu0 %6160
        %6162 = vrot.lane.b32.xlu0 %v6125, 127
        %v6163 = vpop.permute.xlu0 %6162
        %6164 = vrot.lane.b32.xlu0 %v6130, 127
        %v6165 = vpop.permute.xlu0 %6164
        %6166 = vrot.lane.b32.xlu0 %v6133, 127
        %v6167 = vpop.permute.xlu0 %6166
        %6168 = vrot.lane.b32.xlu0 %v6138, 127
        %v6169 = vpop.permute.xlu0 %6168
        %6170 = vrot.lane.b32.xlu0 %v6141, 127
        %v6171 = vpop.permute.xlu0 %6170
        %6172 = vrot.lane.b32.xlu0 %v6146, 127
        %v6173 = vpop.permute.xlu0 %6172
        %6174 = vrot.lane.b32.xlu0 %v6149, 127
        %v6175 = vpop.permute.xlu0 %6174
        %6184 = vxpose.xlu0.b32.start [1/16] %v6161, 128
        %6185 = vxpose.xlu0.b32.cont [2/16] %v6163, 128
        %6186 = vxpose.xlu0.b32.cont [3/16] %v6165, 128
        %6187 = vxpose.xlu0.b32.cont [4/16] %v6167, 128
        %6188 = vxpose.xlu0.b32.cont [5/16] %v6169, 128
        %6189 = vxpose.xlu0.b32.cont [6/16] %v6171, 128
        %6190 = vxpose.xlu0.b32.cont [7/16] %v6173, 128
        %6191 = vxpose.xlu0.b32.cont [8/16] %v6175, 128
        %6192 = vxpose.xlu0.b32.cont [9/16] 0.0, 128
        %6193 = vxpose.xlu0.b32.cont [10/16] 0.0, 128
        %6194 = vxpose.xlu0.b32.cont [11/16] 0.0, 128
        %6195 = vxpose.xlu0.b32.cont [12/16] 0.0, 128
        %6196 = vxpose.xlu0.b32.cont [13/16] 0.0, 128
        %6197 = vxpose.xlu0.b32.cont [14/16] 0.0, 128
        %6198 = vxpose.xlu0.b32.cont [15/16] 0.0, 128
        %6199 = vxpose.xlu0.b32.end [16/16] 0.0, 128
        %v6200 = vpop.trf.xlu0
        %v6201 = vpop.trf.xlu0
        %v6202 = vpop.trf.xlu0
        %v6203 = vpop.trf.xlu0
        %v6204 = vpop.trf.xlu0
        %v6205 = vpop.trf.xlu0
        %v6206 = vpop.trf.xlu0
        %v6207 = vpop.trf.xlu0
        %v6208 = vpop.trf.xlu0
        %v6209 = vpop.trf.xlu0
        %v6210 = vpop.trf.xlu0
        %v6211 = vpop.trf.xlu0
        %v6212 = vpop.trf.xlu0
        %v6213 = vpop.trf.xlu0
        %v6214 = vpop.trf.xlu0
        %v6215 = vpop.trf.xlu0
        %6216 = vset.pattern.permute.xlu0 0
        %6217 = vperm.xlu0 %6216, %v6122
        %v6218 = vpop.permute.xlu0 %6217
        %6220 = vset.pattern.permute.xlu0 0
        %6221 = vperm.xlu0 %6220, %v6125
        %v6222 = vpop.permute.xlu0 %6221
        %6224 = vset.pattern.permute.xlu0 0
        %6225 = vperm.xlu0 %6224, %v6130
        %v6226 = vpop.permute.xlu0 %6225
        %6228 = vset.pattern.permute.xlu0 0
        %6229 = vperm.xlu0 %6228, %v6133
        %v6230 = vpop.permute.xlu0 %6229
        %6232 = vset.pattern.permute.xlu0 0
        %6233 = vperm.xlu0 %6232, %v6138
        %v6234 = vpop.permute.xlu0 %6233
        %6236 = vset.pattern.permute.xlu0 0
        %6237 = vperm.xlu0 %6236, %v6141
        %v6238 = vpop.permute.xlu0 %6237
        %6240 = vset.pattern.permute.xlu0 0
        %6241 = vperm.xlu0 %6240, %v6146
        %v6242 = vpop.permute.xlu0 %6241
        %6244 = vset.pattern.permute.xlu0 0
        %6245 = vperm.xlu0 %6244, %v6149
        %v6246 = vpop.permute.xlu0 %6245
        %v6248 = vlaneseq
        %v6249 = vshrl.u32 %v6248, 7
        %v6250 = vsub.s32 0, %v6249
        %v6251 = vrot.slane %v6200, %v6250
        %v6252 = vadd.f32 %v6218, %v6251
        %v6253 = vadd.f32 %v6222, %v6251
        %v6254 = vadd.f32 %v6226, %v6251
        %v6255 = vadd.f32 %v6230, %v6251
        %v6256 = vadd.f32 %v6234, %v6251
        %v6257 = vadd.f32 %v6238, %v6251
        %v6258 = vadd.f32 %v6242, %v6251
        %v6259 = vadd.f32 %v6246, %v6251
        %vm6260 = vcmp.gt.f32.partialorder %v6252, 0.0
        %vm6261 = vcmp.gt.f32.partialorder %v6253, 0.0
        %vm6262 = vcmp.gt.f32.partialorder %v6254, 0.0
        %vm6263 = vcmp.gt.f32.partialorder %v6255, 0.0
        %vm6264 = vcmp.gt.f32.partialorder %v6256, 0.0
        %vm6265 = vcmp.gt.f32.partialorder %v6257, 0.0
        %vm6266 = vcmp.gt.f32.partialorder %v6258, 0.0
        %vm6267 = vcmp.gt.f32.partialorder %v6259, 0.0
        %v6268 = vmul.f32 %v6252, 0.2
        %v6269 = vmul.f32 %v6253, 0.2
        %v6270 = vmul.f32 %v6254, 0.2
        %v6271 = vmul.f32 %v6255, 0.2
        %v6272 = vmul.f32 %v6256, 0.2
        %v6273 = vmul.f32 %v6257, 0.2
        %v6274 = vmul.f32 %v6258, 0.2
        %v6275 = vmul.f32 %v6259, 0.2
        %v6276 = vsel %vm6260, %v6252, %v6268
        %v6277 = vsel %vm6261, %v6253, %v6269
        %v6278 = vsel %vm6262, %v6254, %v6270
        %v6279 = vsel %vm6263, %v6255, %v6271
        %v6280 = vsel %vm6264, %v6256, %v6272
        %v6281 = vsel %vm6265, %v6257, %v6273
        %v6282 = vsel %vm6266, %v6258, %v6274
        %v6283 = vsel %vm6267, %v6259, %v6275
        %v6284 = vld [vmem:[%s620] sm:$0xf]
        %v6285 = vld [vmem:[%s620 + $0x4] sm:$0xf]
        %v6286 = vld [vmem:[%s620 + $0x8] sm:$0xf]
        %v6287 = vld [vmem:[%s620 + $0xc] sm:$0xf]
        %v6288 = vld [vmem:[%s620 + $0x10] sm:$0xf]
        %v6289 = vld [vmem:[%s620 + $0x14] sm:$0xf]
        %v6290 = vld [vmem:[%s620 + $0x18] sm:$0xf]
        %v6291 = vld [vmem:[%s620 + $0x1c] sm:$0xf]
        %v6292 = vunpack.c.l.bf16 %v6284
        %v6293 = vunpack.c.l.bf16 %v6285
        %v6294 = vunpack.c.l.bf16 %v6286
        %v6295 = vunpack.c.l.bf16 %v6287
        %v6296 = vunpack.c.l.bf16 %v6288
        %v6297 = vunpack.c.l.bf16 %v6289
        %v6298 = vunpack.c.l.bf16 %v6290
        %v6299 = vunpack.c.l.bf16 %v6291
        %v6300 = vadd.f32 %v6276, %v6292
        %v6301 = vadd.f32 %v6277, %v6293
        %v6302 = vadd.f32 %v6278, %v6294
        %v6303 = vadd.f32 %v6279, %v6295
        %v6304 = vadd.f32 %v6280, %v6296
        %v6305 = vadd.f32 %v6281, %v6297
        %v6306 = vadd.f32 %v6282, %v6298
        %v6307 = vadd.f32 %v6283, %v6299
        %v6308 = vsel %vm1103, %v6300, -inf
        %6309 = vmax.xlane.f32.xlu0 %v6308
        %v6310 = vpop.xlane.xlu0 %6309
        %v6311 = vsel %vm1103, %v6301, -inf
        %6312 = vmax.xlane.f32.xlu0 %v6311
        %v6313 = vpop.xlane.xlu0 %6312
        %v6314 = vsel %vm1103, %v6302, -inf
        %6315 = vmax.xlane.f32.xlu0 %v6314
        %v6316 = vpop.xlane.xlu0 %6315
        %v6317 = vsel %vm1103, %v6303, -inf
        %6318 = vmax.xlane.f32.xlu0 %v6317
        %v6319 = vpop.xlane.xlu0 %6318
        %v6320 = vsel %vm1103, %v6304, -inf
        %6321 = vmax.xlane.f32.xlu0 %v6320
        %v6322 = vpop.xlane.xlu0 %6321
        %v6323 = vsel %vm1103, %v6305, -inf
        %6324 = vmax.xlane.f32.xlu0 %v6323
        %v6325 = vpop.xlane.xlu0 %6324
        %v6326 = vsel %vm1103, %v6306, -inf
        %6327 = vmax.xlane.f32.xlu0 %v6326
        %v6328 = vpop.xlane.xlu0 %6327
        %v6329 = vsel %vm1103, %v6307, -inf
        %6330 = vmax.xlane.f32.xlu0 %v6329
        %v6331 = vpop.xlane.xlu0 %6330
        %v6332 = vsub.f32 %v6300, %v6310
        %v6333 = vsub.f32 %v6301, %v6313
        %v6334 = vsub.f32 %v6302, %v6316
        %v6335 = vsub.f32 %v6303, %v6319
        %v6336 = vsub.f32 %v6304, %v6322
        %v6337 = vsub.f32 %v6305, %v6325
        %v6338 = vsub.f32 %v6306, %v6328
        %v6339 = vsub.f32 %v6307, %v6331
        %v6340 = vmul.f32 %v6332, 1.442695
        %v6341 = vpow.pop %v6340
        %v6342 = vmul.f32 %v6333, 1.442695
        %v6343 = vpow.pop %v6342
        %v6344 = vmul.f32 %v6334, 1.442695
        %v6345 = vpow.pop %v6344
        %v6346 = vmul.f32 %v6335, 1.442695
        %v6347 = vpow.pop %v6346
        %v6348 = vmul.f32 %v6336, 1.442695
        %v6349 = vpow.pop %v6348
        %v6350 = vmul.f32 %v6337, 1.442695
        %v6351 = vpow.pop %v6350
        %v6352 = vmul.f32 %v6338, 1.442695
        %v6353 = vpow.pop %v6352
        %v6354 = vmul.f32 %v6339, 1.442695
        %v6355 = vpow.pop %v6354
        %v6356 = vsel %vm1103, %v6341, 0.0
        %6357 = vadd.xlane.f32.xlu0 %v6356
        %v6358 = vpop.xlane.xlu0 %6357
        %v6359 = vsel %vm1103, %v6343, 0.0
        %6360 = vadd.xlane.f32.xlu0 %v6359
        %v6361 = vpop.xlane.xlu0 %6360
        %v6362 = vsel %vm1103, %v6345, 0.0
        %6363 = vadd.xlane.f32.xlu0 %v6362
        %v6364 = vpop.xlane.xlu0 %6363
        %v6365 = vsel %vm1103, %v6347, 0.0
        %6366 = vadd.xlane.f32.xlu0 %v6365
        %v6367 = vpop.xlane.xlu0 %6366
        %v6368 = vsel %vm1103, %v6349, 0.0
        %6369 = vadd.xlane.f32.xlu0 %v6368
        %v6370 = vpop.xlane.xlu0 %6369
        %v6371 = vsel %vm1103, %v6351, 0.0
        %6372 = vadd.xlane.f32.xlu0 %v6371
        %v6373 = vpop.xlane.xlu0 %6372
        %v6374 = vsel %vm1103, %v6353, 0.0
        %6375 = vadd.xlane.f32.xlu0 %v6374
        %v6376 = vpop.xlane.xlu0 %6375
        %v6377 = vsel %vm1103, %v6355, 0.0
        %6378 = vadd.xlane.f32.xlu0 %v6377
        %v6379 = vpop.xlane.xlu0 %6378
        %v6380 = vrcp.pop %v6358
        %v6381 = vrcp.pop %v6361
        %v6382 = vrcp.pop %v6364
        %v6383 = vrcp.pop %v6367
        %v6384 = vrcp.pop %v6370
        %v6385 = vrcp.pop %v6373
        %v6386 = vrcp.pop %v6376
        %v6387 = vrcp.pop %v6379
        %v6388 = vmul.f32 %v6341, %v6380
        %v6389 = vmul.f32 %v6343, %v6381
        %v6390 = vmul.f32 %v6345, %v6382
        %v6391 = vmul.f32 %v6347, %v6383
        %v6392 = vmul.f32 %v6349, %v6384
        %v6393 = vmul.f32 %v6351, %v6385
        %v6394 = vmul.f32 %v6353, %v6386
        %v6395 = vmul.f32 %v6355, %v6387
        %v6396 = vpack.c.bf16 %v6389, %v6388
        %v6397 = vpack.c.bf16 %v6391, %v6390
        %v6398 = vpack.c.bf16 %v6393, %v6392
        %v6399 = vpack.c.bf16 %v6395, %v6394
        %v6400 = vld [vmem:[#allocation13] sm:$0xf]
        %v6401 = vld [vmem:[#allocation13 + $0x4] sm:$0xf]
        %v6402 = vld [vmem:[#allocation13 + $0x8] sm:$0xf]
        %v6403 = vld [vmem:[#allocation13 + $0xc] sm:$0xf]
        %v6404 = vld [vmem:[#allocation13 + $0x10] sm:$0xf]
        %v6405 = vld [vmem:[#allocation13 + $0x14] sm:$0xf]
        %v6406 = vld [vmem:[#allocation13 + $0x18] sm:$0xf]
        %v6407 = vld [vmem:[#allocation13 + $0x1c] sm:$0xf]
        %v6408 = vld [vmem:[#allocation13 + $0x20] sm:$0xf]
        %v6409 = vld [vmem:[#allocation13 + $0x24] sm:$0xf]
        %v6410 = vld [vmem:[#allocation13 + $0x28] sm:$0xf]
        %v6411 = vld [vmem:[#allocation13 + $0x2c] sm:$0xf]
        %v6412 = vld [vmem:[#allocation13 + $0x30] sm:$0xf]
        %v6413 = vld [vmem:[#allocation13 + $0x34] sm:$0xf]
        %v6414 = vld [vmem:[#allocation13 + $0x38] sm:$0xf]
        %v6415 = vld [vmem:[#allocation13 + $0x3c] sm:$0xf]
        %v6432 = vunpack.c.l.b16 %v6400
        %v6433 = vunpack.c.l.b16 %v6401
        %v6434 = vunpack.c.l.b16 %v6402
        %v6435 = vunpack.c.l.b16 %v6403
        %v6436 = vunpack.c.l.b16 %v6404
        %v6437 = vunpack.c.l.b16 %v6405
        %v6438 = vunpack.c.l.b16 %v6406
        %v6439 = vunpack.c.l.b16 %v6407
        %v6440 = vunpack.c.l.b16 %v6408
        %v6441 = vunpack.c.l.b16 %v6409
        %v6442 = vunpack.c.l.b16 %v6410
        %v6443 = vunpack.c.l.b16 %v6411
        %v6444 = vunpack.c.l.b16 %v6412
        %v6445 = vunpack.c.l.b16 %v6413
        %v6446 = vunpack.c.l.b16 %v6414
        %v6447 = vunpack.c.l.b16 %v6415
        %v6448 = vpack.c.b16 %v6433, %v6432
        %v6449 = vpack.c.b16 %v6435, %v6434
        %v6450 = vpack.c.b16 %v6437, %v6436
        %v6451 = vpack.c.b16 %v6439, %v6438
        %v6452 = vpack.c.b16 %v6441, %v6440
        %v6453 = vpack.c.b16 %v6443, %v6442
        %v6454 = vpack.c.b16 %v6445, %v6444
        %v6455 = vpack.c.b16 %v6447, %v6446
        %6464 = vmatprep.subr.bf16.mxu0 0
        %6465 = vmatpush1.bf16.msra.mxu0 %v6455
        %6466 = vmatprep.subr.bf16.mxu0 0
        %6467 = vmatpush1.bf16.msra.mxu0 %v6454
        %6468 = vmatprep.subr.bf16.mxu0 0
        %6469 = vmatpush1.bf16.msra.mxu0 %v6453
        %6470 = vmatprep.subr.bf16.mxu0 0
        %6471 = vmatpush1.bf16.msra.mxu0 %v6452
        %6472 = vmatprep.subr.bf16.mxu0 0
        %6473 = vmatpush1.bf16.msra.mxu0 %v6451
        %6474 = vmatprep.subr.bf16.mxu0 0
        %6475 = vmatpush1.bf16.msra.mxu0 %v6450
        %6476 = vmatprep.subr.bf16.mxu0 0
        %6477 = vmatpush1.bf16.msra.mxu0 %v6449
        %6478 = vmatprep.subr.bf16.mxu0 0
        %6479 = vmatpush1.bf16.msra.mxu0 %v6448
        %6480 = vmatprep.subr.bf16.mxu0 0
        %6481 = vmatpush2.bf16.msra.mxu0 0
        %6482 = vmatprep.subr.bf16.mxu0 0
        %6483 = vmatpush2.bf16.msra.mxu0 0
        %6484 = vmatprep.subr.bf16.mxu0 0
        %6485 = vmatpush2.bf16.msra.mxu0 0
        %6486 = vmatprep.subr.bf16.mxu0 0
        %6487 = vmatpush2.bf16.msra.mxu0 0
        %6488 = vmatprep.subr.bf16.mxu0 0
        %6489 = vmatpush2.bf16.msra.mxu0 0
        %6490 = vmatprep.subr.bf16.mxu0 0
        %6491 = vmatpush2.bf16.msra.mxu0 0
        %6492 = vmatprep.subr.bf16.mxu0 0
        %6493 = vmatpush2.bf16.msra.mxu0 0
        %6494 = vmatprep.subr.bf16.mxu0 0
        %6495 = vmatpush2.bf16.msra.mxu0 0
        %6496 = vmatprep.mubr.bf16.mxu0 0
        %6497 = vmatmul.mubr.bf16.gmra.mxu0 %v6019
        %v6498 = vpop.f32.mrf.mxu0
        %v6499 = vadd.f32 0.0, %v6498
        %v6500 = vpop.f32.mrf.mxu0
        %v6501 = vpop.f32.mrf.mxu0
        %v6502 = vadd.f32 0.0, %v6501
        %v6503 = vpop.f32.mrf.mxu0
        %6504 = vmatprep.mubr.bf16.mxu0 0
        %6505 = vmatmul.mubr.bf16.gmra.mxu0 %v6020
        %v6506 = vpop.f32.mrf.mxu0
        %v6507 = vadd.f32 0.0, %v6506
        %v6508 = vpop.f32.mrf.mxu0
        %v6509 = vpop.f32.mrf.mxu0
        %v6510 = vadd.f32 0.0, %v6509
        %v6511 = vpop.f32.mrf.mxu0
        %6512 = vmatprep.mubr.bf16.mxu0 0
        %6513 = vmatmul.mubr.bf16.gmra.mxu0 %v6021
        %v6514 = vpop.f32.mrf.mxu0
        %v6515 = vadd.f32 0.0, %v6514
        %v6516 = vpop.f32.mrf.mxu0
        %v6517 = vpop.f32.mrf.mxu0
        %v6518 = vadd.f32 0.0, %v6517
        %v6519 = vpop.f32.mrf.mxu0
        %6520 = vmatprep.mubr.bf16.mxu0 0
        %6521 = vmatmul.mubr.bf16.gmra.mxu0 %v6022
        %v6522 = vpop.f32.mrf.mxu0
        %v6523 = vadd.f32 0.0, %v6522
        %v6524 = vpop.f32.mrf.mxu0
        %v6525 = vpop.f32.mrf.mxu0
        %v6526 = vadd.f32 0.0, %v6525
        %v6527 = vpop.f32.mrf.mxu0
        %6528 = vdwg.mxu0
        %v6529 = vpack.c.bf16 %v6502, %v6499
        %v6530 = vpack.c.bf16 %v6510, %v6507
        %v6531 = vpack.c.bf16 %v6518, %v6515
        %v6532 = vpack.c.bf16 %v6526, %v6523
        %v6533 = vld [vmem:[#allocation14] sm:$0x1]
        %v6535 = vlaneseq
        %v6536 = vshrl.u32 %v6535, 7
        %v6537 = vsub.s32 0, %v6536
        %v6538 = vrot.slane %v6533, %v6537
        %v6541 = vsel %vm1103, %v6396, 0
        %v6544 = vsel %vm1103, %v6397, 0
        %v6547 = vsel %vm1103, %v6398, 0
        %v6550 = vsel %vm1103, %v6399, 0
        %6552 = vmatprep.subr.bf16.mxu0 0
        %6553 = vmatpush1.bf16.msra.mxu0 0
        %6554 = vmatprep.subr.bf16.mxu0 0
        %6555 = vmatpush1.bf16.msra.mxu0 0
        %6556 = vmatprep.subr.bf16.mxu0 0
        %6557 = vmatpush1.bf16.msra.mxu0 0
        %6558 = vmatprep.subr.bf16.mxu0 0
        %6559 = vmatpush1.bf16.msra.mxu0 0
        %6560 = vmatprep.subr.bf16.mxu0 0
        %6561 = vmatpush1.bf16.msra.mxu0 %v6532
        %6562 = vmatprep.subr.bf16.mxu0 0
        %6563 = vmatpush1.bf16.msra.mxu0 %v6531
        %6564 = vmatprep.subr.bf16.mxu0 0
        %6565 = vmatpush1.bf16.msra.mxu0 %v6530
        %6566 = vmatprep.subr.bf16.mxu0 0
        %6567 = vmatpush1.bf16.msra.mxu0 %v6529
        %6568 = vmatprep.subr.bf16.mxu0 0
        %6569 = vmatpush2.bf16.msra.mxu0 0
        %6570 = vmatprep.subr.bf16.mxu0 0
        %6571 = vmatpush2.bf16.msra.mxu0 0
        %6572 = vmatprep.subr.bf16.mxu0 0
        %6573 = vmatpush2.bf16.msra.mxu0 0
        %6574 = vmatprep.subr.bf16.mxu0 0
        %6575 = vmatpush2.bf16.msra.mxu0 0
        %6576 = vmatprep.subr.bf16.mxu0 0
        %6577 = vmatpush2.bf16.msra.mxu0 0
        %6578 = vmatprep.subr.bf16.mxu0 0
        %6579 = vmatpush2.bf16.msra.mxu0 0
        %6580 = vmatprep.subr.bf16.mxu0 0
        %6581 = vmatpush2.bf16.msra.mxu0 0
        %6582 = vmatprep.subr.bf16.mxu0 0
        %6583 = vmatpush2.bf16.msra.mxu0 0
        %6584 = vmatprep.mubr.bf16.mxu0 0
        %6585 = vmatmul.mubr.bf16.gmra.mxu0 %v6541
        %v6586 = vpop.f32.mrf.mxu0
        %v6587 = vadd.f32 %v6538, %v6586
        %v6588 = vpop.f32.mrf.mxu0
        %v6589 = vpop.f32.mrf.mxu0
        %v6590 = vadd.f32 %v6538, %v6589
        %v6591 = vpop.f32.mrf.mxu0
        %6592 = vmatprep.mubr.bf16.mxu0 0
        %6593 = vmatmul.mubr.bf16.gmra.mxu0 %v6544
        %v6594 = vpop.f32.mrf.mxu0
        %v6595 = vadd.f32 %v6538, %v6594
        %v6596 = vpop.f32.mrf.mxu0
        %v6597 = vpop.f32.mrf.mxu0
        %v6598 = vadd.f32 %v6538, %v6597
        %v6599 = vpop.f32.mrf.mxu0
        %6600 = vmatprep.mubr.bf16.mxu0 0
        %6601 = vmatmul.mubr.bf16.gmra.mxu0 %v6547
        %v6602 = vpop.f32.mrf.mxu0
        %v6603 = vadd.f32 %v6538, %v6602
        %v6604 = vpop.f32.mrf.mxu0
        %v6605 = vpop.f32.mrf.mxu0
        %v6606 = vadd.f32 %v6538, %v6605
        %v6607 = vpop.f32.mrf.mxu0
        %6608 = vmatprep.mubr.bf16.mxu0 0
        %6609 = vmatmul.mubr.bf16.gmra.mxu0 %v6550
        %v6610 = vpop.f32.mrf.mxu0
        %v6611 = vadd.f32 %v6538, %v6610
        %v6612 = vpop.f32.mrf.mxu0
        %v6613 = vpop.f32.mrf.mxu0
        %v6614 = vadd.f32 %v6538, %v6613
        %v6615 = vpop.f32.mrf.mxu0
        %6616 = vdwg.mxu0
        %v6617 = vmax.f32 %v6587, 0.0
        %v6618 = vmax.f32 %v6590, 0.0
        %v6619 = vmax.f32 %v6595, 0.0
        %v6620 = vmax.f32 %v6598, 0.0
        %v6621 = vmax.f32 %v6603, 0.0
        %v6622 = vmax.f32 %v6606, 0.0
        %v6623 = vmax.f32 %v6611, 0.0
        %v6624 = vmax.f32 %v6614, 0.0
        %v6625 = vmax.f32 %v6617, %v6619
        %v6626 = vmax.f32 %v6618, %v6620
        %v6627 = vmax.f32 %v6625, %v6626
        %v6628 = vrot.slane %v6627, 4
        %v6629 = vmax.f32 %v6627, %v6628
        %v6630 = vrot.slane %v6629, 2
        %v6631 = vmax.f32 %v6629, %v6630
        %v6632 = vrot.slane %v6631, 1
        %v6633 = vmax.f32 %v6631, %v6632
        %v6634 = vmax.f32 %v6621, %v6623
        %v6635 = vmax.f32 %v6622, %v6624
        %v6636 = vmax.f32 %v6634, %v6635
        %v6637 = vrot.slane %v6636, 4
        %v6638 = vmax.f32 %v6636, %v6637
        %v6639 = vrot.slane %v6638, 2
        %v6640 = vmax.f32 %v6638, %v6639
        %v6641 = vrot.slane %v6640, 1
        %v6642 = vmax.f32 %v6640, %v6641
        %v6643 = vpack.c.bf16 %v6633, %v6633
        %v6644 = vpack.c.bf16 %v6642, %v6642
        %v6645 = vld [vmem:[%s16] sm:$0xf]
        %v6646 = vld [vmem:[%s16 + $0x4] sm:$0xf]
        %v6647 = vld [vmem:[%s16 + $0x8] sm:$0xf]
        %v6648 = vld [vmem:[%s16 + $0xc] sm:$0xf]
        %v6649 = vld [vmem:[%s16 + $0x10] sm:$0xf]
        %v6650 = vld [vmem:[%s16 + $0x14] sm:$0xf]
        %v6651 = vld [vmem:[%s16 + $0x18] sm:$0xf]
        %v6652 = vld [vmem:[%s16 + $0x1c] sm:$0xf]
        %v6653 = vld [vmem:[%s16 + $0x20] sm:$0xf]
        %v6654 = vld [vmem:[%s16 + $0x24] sm:$0xf]
        %v6655 = vld [vmem:[%s16 + $0x28] sm:$0xf]
        %v6656 = vld [vmem:[%s16 + $0x2c] sm:$0xf]
        %v6657 = vld [vmem:[%s16 + $0x30] sm:$0xf]
        %v6658 = vld [vmem:[%s16 + $0x34] sm:$0xf]
        %v6659 = vld [vmem:[%s16 + $0x38] sm:$0xf]
        %v6660 = vld [vmem:[%s16 + $0x3c] sm:$0xf]
        %v6663 = vunpack.c.l.b16 %v6643
        %v6664 = vunpack.c.l.b16 %v6644
        %vm6665 = vcmask 1041409
        %v6666 = vsel %vm6665, %v6664, %v6663
        %v6667 = vpack.c.b16 %v6666, %v6666
        %v6685 = vunpack.c.l.b16 %v6645
        %v6686 = vunpack.c.l.b16 %v6646
        %v6687 = vunpack.c.l.b16 %v6647
        %v6688 = vunpack.c.l.b16 %v6648
        %v6689 = vunpack.c.l.b16 %v6649
        %v6690 = vunpack.c.l.b16 %v6650
        %v6691 = vunpack.c.l.b16 %v6651
        %v6692 = vunpack.c.l.b16 %v6652
        %v6693 = vunpack.c.l.b16 %v6653
        %v6694 = vunpack.c.l.b16 %v6654
        %v6695 = vunpack.c.l.b16 %v6655
        %v6696 = vunpack.c.l.b16 %v6656
        %v6697 = vunpack.c.l.b16 %v6657
        %v6698 = vunpack.c.l.b16 %v6658
        %v6699 = vunpack.c.l.b16 %v6659
        %v6700 = vunpack.c.l.b16 %v6660
        %v6701 = vpack.c.b16 %v6686, %v6685
        %v6702 = vpack.c.b16 %v6688, %v6687
        %v6703 = vpack.c.b16 %v6690, %v6689
        %v6704 = vpack.c.b16 %v6692, %v6691
        %v6705 = vpack.c.b16 %v6694, %v6693
        %v6706 = vpack.c.b16 %v6696, %v6695
        %v6707 = vpack.c.b16 %v6698, %v6697
        %v6708 = vpack.c.b16 %v6700, %v6699
        %6717 = vmatprep.subr.bf16.mxu0 0
        %6718 = vmatpush1.bf16.msra.mxu0 %v6708
        %6719 = vmatprep.subr.bf16.mxu0 0
        %6720 = vmatpush1.bf16.msra.mxu0 %v6707
        %6721 = vmatprep.subr.bf16.mxu0 0
        %6722 = vmatpush1.bf16.msra.mxu0 %v6706
        %6723 = vmatprep.subr.bf16.mxu0 0
        %6724 = vmatpush1.bf16.msra.mxu0 %v6705
        %6725 = vmatprep.subr.bf16.mxu0 0
        %6726 = vmatpush1.bf16.msra.mxu0 %v6704
        %6727 = vmatprep.subr.bf16.mxu0 0
        %6728 = vmatpush1.bf16.msra.mxu0 %v6703
        %6729 = vmatprep.subr.bf16.mxu0 0
        %6730 = vmatpush1.bf16.msra.mxu0 %v6702
        %6731 = vmatprep.subr.bf16.mxu0 0
        %6732 = vmatpush1.bf16.msra.mxu0 %v6701
        %6733 = vmatprep.subr.bf16.mxu0 0
        %6734 = vmatpush2.bf16.msra.mxu0 0
        %6735 = vmatprep.subr.bf16.mxu0 0
        %6736 = vmatpush2.bf16.msra.mxu0 0
        %6737 = vmatprep.subr.bf16.mxu0 0
        %6738 = vmatpush2.bf16.msra.mxu0 0
        %6739 = vmatprep.subr.bf16.mxu0 0
        %6740 = vmatpush2.bf16.msra.mxu0 0
        %6741 = vmatprep.subr.bf16.mxu0 0
        %6742 = vmatpush2.bf16.msra.mxu0 0
        %6743 = vmatprep.subr.bf16.mxu0 0
        %6744 = vmatpush2.bf16.msra.mxu0 0
        %6745 = vmatprep.subr.bf16.mxu0 0
        %6746 = vmatpush2.bf16.msra.mxu0 0
        %6747 = vmatprep.subr.bf16.mxu0 0
        %6748 = vmatpush2.bf16.msra.mxu0 0
        %6749 = vmatprep.mubr.bf16.mxu0 0
        %6750 = vmatmul.mubr.bf16.gmra.mxu0 %v6667
        %v6751 = vpop.f32.mrf.mxu0
        %v6752 = vadd.f32 0.0, %v6751
        %v6753 = vpop.f32.mrf.mxu0
        %v6754 = vpop.f32.mrf.mxu0
        %v6755 = vpop.f32.mrf.mxu0
        %6756 = vdwg.mxu0
        %vm6757 = vcmask 74752
        %6758 = vst.msk [vmem:[%s704] sm:$0x3] %vm6757, %v6752
        %s6759 = sand.u32 %s420, 1
        %s6760 = scalar_lea.sflag [#allocation4], %s6759
        %s6761 = sand.u32 %s420, 1
        %s6762 = smul.addr %s6761, 2
        %s6763 = scalar_lea.vmem [#allocation16], %s6762
        // Predicated region
        $region121: #{tpu_custom_call.1} parent=87 // pred_check
          %p6764 = pneg %p430
        $region122: #{tpu_custom_call.1} parent=87 // pred_check_branch
          %6766 = sbr.rel (%p6764) target = $region124
        $region123: #{tpu_custom_call.1} parent=87 // pred_region
          %s6768 = ssub.s32 32, 32
          %6769 = vsyncadd %s6760, %s6768
          %s6770 = smul.addr %s40, 32
          %s6771 = scalar_lea.hbm %s17, %s6770
          %s6773 = sshll.u32 %s6763, 4
          %s6774 = int_to_ptr.vmem [resolvable:$true] %s6773
          %6776 = dma.vmem_to_hbm [thread:$0]  %s6774, 32, %s6771, %s6760
        $region124: #{tpu_custom_call.1} parent=87 // pred_fallthru
          _
      $region88: #{tpu_custom_call.1} parent=5 // pred_fallthru
        _
      %p6777 = scmp.le.s32.totalorder 2, %s35
      // Predicated region
      $region125: #{tpu_custom_call.1} parent=5 // pred_check
        %p6778 = pneg %p6777
      $region126: #{tpu_custom_call.1} parent=5 // pred_check_branch
        %6780 = sbr.rel (%p6778) target = $region128
      $region127: #{tpu_custom_call.1} parent=5 // pred_region
        %s6781 = ssub.s32 %s35, 2
        // Predicated region
        $region129: #{tpu_custom_call.1} parent=127 // pred_check
          %p6782 = pneg %p436
        $region130: #{tpu_custom_call.1} parent=127 // pred_check_branch
          %6784 = sbr.rel (%p6782) target = $region132
        $region131: #{tpu_custom_call.1} parent=127 // pred_region
          %s6785 = sand.u32 %s421, 1
          %s6786 = scalar_lea.sflag [#allocation4], %s6785
          %s6787 = sand.u32 %s421, 1
          %s6788 = smul.addr %s6787, 2
          %s6789 = scalar_lea.vmem [#allocation16], %s6788
          %6790 = dma.done %s6786, 32
        $region132: #{tpu_custom_call.1} parent=127 // pred_fallthru
          _
      $region128: #{tpu_custom_call.1} parent=5 // pred_fallthru
        _
    $region6: #{tpu_custom_call.1} parent=1 // loop_footer
      %s39 = sadd.s32 1, %s35
    $region7: #{tpu_custom_call.1} parent=1 // loop_footer_branch
      %34 = sbr.rel target = $region3
    $region8: #{tpu_custom_call.1} parent=1 // loop_exit
      _
    %6791 = vsyncpa [#allocation3], 1
    %s6792 = scalar_lea.sflag [#allocation3], 1
    %6793 = vsyncpa %s6792, 1
    %6794 = vsyncpa [#allocation6], 1
    %s6795 = scalar_lea.sflag [#allocation6], 1
    %6796 = vsyncpa %s6795, 1
    %6797 = vsyncpa [#allocation9], 1
    %6798 = vsyncpa [#allocation12], 1
    %6799 = vsyncpa [#allocation15], 1
    %6800 = vsyncpa [#allocation4], 1
    %s6801 = scalar_lea.sflag [#allocation4], 1
    %6802 = vsyncpa %s6801, 1

</llo_original>
